<compile_context>
chip_gen: v7x
topology: tpu7x:2x2x1
jax: 0.10.0
libtpu: 0.0.40
codegen_flags: <defaults>
</compile_context>

<pallas_src>
import functools
import math

import jax
import jax.numpy as jnp
from jax.experimental import pallas as pl
from jax.experimental.pallas import tpu as pltpu

_VMEM_LIMIT = 32 * 1024 * 1024          # safe on v5e (128 MiB), v6e (128 MiB), v7x (64 MiB)
_RESIDENT_W_BYTES = 4 * 1024 * 1024     # keep resident weights conservative for v7x/v5e


def _round_up(x, m):
    return (x + m - 1) // m * m


def _is_v7x():
    try:
        kind = jax.devices()[0].device_kind.lower()
        return ("v7" in kind) or ("tpu7" in kind)
    except Exception:
        return False


# ---------------------------------------------------------------------------
# Tap-folded 3x3 conv kernel:
#   grid = (m over bh-row strips, k = dy in 0..2)
#   x_stack[dy] = padded activation shifted by dy rows, block (bh, W+2, C) (lane-dense)
#   weight (3, 3C, Cout) is index-map invariant -> VMEM resident, DMA'd once
#   dx taps are in-kernel slices of the W+2 halo; f32 accumulator across dy
# ---------------------------------------------------------------------------
def _conv3_kernel(x_ref, w_ref, shift_ref, o_ref, acc_ref, *, relu):
    k = pl.program_id(1)
    bh, wp2, c = x_ref.shape
    w = wp2 - 2

    @pl.when(k == 0)
    def _():
        acc_ref[...] = jnp.zeros_like(acc_ref)

    xk = x_ref[...]                              # (bh, W+2, C)
    wk = w_ref[k]                                # (3C, Cout) slab for tap row dy = k
    part = None
    for dx in range(3):                          # dx taps folded in-kernel (VMEM only)
        xs = xk[:, dx:dx + w, :].reshape(bh * w, c)
        contrib = jnp.dot(xs, wk[dx * c:(dx + 1) * c, :],
                          preferred_element_type=jnp.float32)
        part = contrib if part is None else part + contrib
    acc_ref[...] += part

    @pl.when(k == pl.num_programs(1) - 1)
    def _():
        y = acc_ref[...] + shift_ref[...]
        if relu:
            y = jnp.maximum(y, 0.0)
        o_ref[...] = y.astype(o_ref.dtype)


def _pick_bh(BH, W, C, Cout, row_cap=1024):
    """Image rows per M block: BH % bh == 0, (bh*W) % 8 == 0, bounded working set."""
    best = None
    for bh in range(1, BH + 1):
        if BH % bh or (bh * W) % 8:
            continue
        bytes_est = bh * (W + 2) * C * 4 + bh * W * Cout * 8   # x(x2 bf16) + acc + out(x2)
        if best is None or (bh * W <= row_cap and bytes_est <= 8 * 1024 * 1024):
            best = bh
    return best if best is not None else BH


@functools.partial(jax.jit, static_argnames=("relu",))
def _conv3x3_core(x, w3, shift, *, relu):
    """3x3 / stride 1 / pad 1 conv (or rewritten transposed conv), NHWC bf16."""
    B, H, W, C = x.shape
    Cout = w3.shape[-1]
    BH = B * H

    # 3 dy-shifted slabs of the padded activation (single fused pad+stack under jit).
    xp = jnp.pad(x.astype(jnp.bfloat16), ((0, 0), (1, 1), (1, 1), (0, 0)))
    x_stack = jnp.stack([xp[:, dy:dy + H] for dy in range(3)], axis=0)
    x_stack = x_stack.reshape(3, BH, W + 2, C)

    bh = _pick_bh(BH, W, C, Cout)
    sp = shift.astype(jnp.float32).reshape(1, Cout)

    out = pl.pallas_call(
        functools.partial(_conv3_kernel, relu=relu),
        out_shape=jax.ShapeDtypeStruct((BH * W, Cout), jnp.bfloat16),
        grid_spec=pltpu.PrefetchScalarGridSpec(
            num_scalar_prefetch=0,
            grid=(BH // bh, 3),
            in_specs=[
                pl.BlockSpec((None, bh, W + 2, C), lambda m, k: (k, m, 0, 0)),
                pl.BlockSpec((3, 3 * C, Cout), lambda m, k: (0, 0, 0)),   # resident
                pl.BlockSpec((1, Cout), lambda m, k: (0, 0)),
            ],
            out_specs=pl.BlockSpec((bh * W, Cout), lambda m, k: (m, 0)),
            scratch_shapes=[pltpu.VMEM((bh * W, Cout), jnp.float32)],
        ),
        compiler_params=pltpu.CompilerParams(
            dimension_semantics=("parallel", "arbitrary"),
            vmem_limit_bytes=_VMEM_LIMIT),
    )(x_stack, w3, sp)
    return out.reshape(B, H, W, Cout)


# ---------------------------------------------------------------------------
# Fused GEMM kernels for 1x1 / full-extent / transposed-bottleneck / seg convs.
# Resident path: whole (K, N) weight in VMEM, single grid axis, no scratch.
# Streaming path: classic (i, j, k) grid with f32 accumulator for huge weights.
# ---------------------------------------------------------------------------
def _matmul_resident_kernel(x_ref, w_ref, s_ref, o_ref, *, relu):
    y = jnp.dot(x_ref[...], w_ref[...], preferred_element_type=jnp.float32) + s_ref[...]
    if relu:
        y = jnp.maximum(y, 0.0)
    o_ref[...] = y.astype(o_ref.dtype)


def _matmul_stream_kernel(x_ref, w_ref, s_ref, o_ref, acc_ref, *, relu):
    k = pl.program_id(2)

    @pl.when(k == 0)
    def _():
        acc_ref[...] = jnp.zeros_like(acc_ref)

    acc_ref[...] += jnp.dot(x_ref[...], w_ref[...], preferred_element_type=jnp.float32)

    @pl.when(k == pl.num_programs(2) - 1)
    def _():
        y = acc_ref[...] + s_ref[...]
        if relu:
            y = jnp.maximum(y, 0.0)
        o_ref[...] = y.astype(o_ref.dtype)


def _pick_m(M, cap=1024):
    if M <= cap:
        t = _round_up(M, 8)
        return t, t
    for c in (1024, 512, 256):
        if c <= cap and M % c == 0:
            return c, M
    return 512, _round_up(M, 512)     # review: floor tm (pad M) instead of tiny divisors


def _pick_k_stream(K):
    for c in (512, 256):              # prefer 256-multiples for the 2x256x256 MXU
        if K % c == 0:
            return c, K
    return 256, _round_up(K, 256)


def _pick_n_stream(N, m_blocks):
    if N <= 512:
        return N, N
    if N % 512 == 0:
        tn = 512
    elif N % 256 == 0:
        tn = 256
    else:
        return 256, _round_up(N, 256)
    # v7x only (2 TensorCores/chip): ensure >= 2 parallel N blocks on FC-like layers.
    if m_blocks == 1 and tn == 512 and N // tn < 2 and _is_v7x():
        tn = 256
    return tn, N


@functools.partial(jax.jit, static_argnames=("relu", "out_dtype"))
def fused_matmul(x, w, shift, *, relu, out_dtype=jnp.bfloat16):
    """maybe_relu(x @ w + shift).  x: (M, K), w: (K, N) bf16, shift: (N,) f32."""
    M, K = x.shape
    K2, N = w.shape
    assert K == K2
    x = x.astype(jnp.bfloat16)
    w = w.astype(jnp.bfloat16)
    sp = shift.astype(jnp.float32).reshape(1, N)

    if K * N * 2 <= _RESIDENT_W_BYTES and K <= 8192:
        # Whole weight VMEM-resident: weight is DMA'd once and reused across all M tiles.
        tm, Mp = _pick_m(M, cap=1024)
        if Mp != M:
            x = jnp.pad(x, ((0, Mp - M), (0, 0)))
        out = pl.pallas_call(
            functools.partial(_matmul_resident_kernel, relu=relu),
            out_shape=jax.ShapeDtypeStruct((Mp, N), out_dtype),
            grid_spec=pltpu.PrefetchScalarGridSpec(
                num_scalar_prefetch=0,
                grid=(Mp // tm,),
                in_specs=[
                    pl.BlockSpec((tm, K), lambda i: (i, 0)),
                    pl.BlockSpec((K, N), lambda i: (0, 0)),      # resident
                    pl.BlockSpec((1, N), lambda i: (0, 0)),
                ],
                out_specs=pl.BlockSpec((tm, N), lambda i: (i, 0)),
            ),
            compiler_params=pltpu.CompilerParams(
                dimension_semantics=("parallel",),
                vmem_limit_bytes=_VMEM_LIMIT),
        )(x, w, sp)
        return out[:M] if Mp != M else out

    # Streaming path (e.g. full-scale 25088x4096 bottleneck weights).
    tm, Mp = _pick_m(M, cap=512)
    tk, Kp = _pick_k_stream(K)
    tn, Np = _pick_n_stream(N, Mp // tm)
    if (Mp, Kp) != (M, K):
        x = jnp.pad(x, ((0, Mp - M), (0, Kp - K)))
    if (Kp, Np) != (K, N):
        w = jnp.pad(w, ((0, Kp - K), (0, Np - N)))
    if Np != N:
        sp = jnp.pad(sp, ((0, 0), (0, Np - N)))
    if Mp // tm == 1:
        # FC-like: pure weight-bandwidth bound -> deepen the weight pipeline.
        w_spec = pl.BlockSpec((tk, tn), lambda i, j, k: (k, j),
                              pipeline_mode=pl.Buffered(3))
    else:
        w_spec = pl.BlockSpec((tk, tn), lambda i, j, k: (k, j))
    out = pl.pallas_call(
        functools.partial(_matmul_stream_kernel, relu=relu),
        out_shape=jax.ShapeDtypeStruct((Mp, Np), out_dtype),
        grid_spec=pltpu.PrefetchScalarGridSpec(
            num_scalar_prefetch=0,
            grid=(Mp // tm, Np // tn, Kp // tk),
            in_specs=[
                pl.BlockSpec((tm, tk), lambda i, j, k: (i, k)),
                w_spec,
                pl.BlockSpec((1, tn), lambda i, j, k: (0, j)),
            ],
            out_specs=pl.BlockSpec((tm, tn), lambda i, j, k: (i, j)),
            scratch_shapes=[pltpu.VMEM((tm, tn), jnp.float32)],
        ),
        compiler_params=pltpu.CompilerParams(
            dimension_semantics=("parallel", "parallel", "arbitrary"),
            vmem_limit_bytes=_VMEM_LIMIT),
    )(x, w, sp)
    if (Mp, Np) != (M, N):
        out = out[:M, :N]
    return out


# ---------------------------------------------------------------------------
# Conv / deconv lowerings (NHWC glue around the Pallas kernels)
# ---------------------------------------------------------------------------
_TAP_CONV3_ENABLED = [True]     # flipped off if the tap-folded kernel fails to lower


def _conv3x3_im2col(x, layer):
    """Safety-net fallback: materialized im2col + plain fused GEMM."""
    B, H, W, C = x.shape
    Cout = layer["w3"].shape[-1]
    xp = jnp.pad(x, ((0, 0), (1, 1), (1, 1), (0, 0)))
    cols = jnp.concatenate(
        [xp[:, i:i + H, j:j + W, :] for i in range(3) for j in range(3)], axis=-1)
    y = fused_matmul(cols.reshape(B * H * W, 9 * C), layer["w3"].reshape(9 * C, Cout),
                     layer["shift"], relu=layer["relu"], out_dtype=jnp.bfloat16)
    return y.reshape(B, H, W, Cout)


def conv3x3_nhwc(x, layer):
    if _TAP_CONV3_ENABLED[0]:
        try:
            return _conv3x3_core(x, layer["w3"], layer["shift"], relu=layer["relu"])
        except Exception:
            _TAP_CONV3_ENABLED[0] = False
    return _conv3x3_im2col(x, layer)


def conv1x1_nhwc(x, layer, out_dtype=jnp.bfloat16):
    B, H, W, C = x.shape
    y = fused_matmul(x.reshape(B * H * W, C), layer["w"], layer["shift"],
                     relu=layer["relu"], out_dtype=out_dtype)
    return y.reshape(B, H, W, -1)


def conv_full_valid_nhwc(x, layer):
    """Valid conv whose kernel equals the input spatial size -> 1x1 output."""
    B, H, W, C = x.shape
    y = fused_matmul(x.reshape(B, H * W * C), layer["w"], layer["shift"],
                     relu=layer["relu"], out_dtype=jnp.bfloat16)
    return y.reshape(B, 1, 1, -1)


def deconv_full_nhwc(x, layer):
    """ConvTranspose2d(k=ks, s=1, p=0) applied to a 1x1 spatial input."""
    B, H, W, C = x.shape
    ks = layer["ks"]
    y = fused_matmul(x.reshape(B, C), layer["w"], layer["shift"],
                     relu=layer["relu"], out_dtype=jnp.bfloat16)
    return y.reshape(B, ks, ks, -1)


# ---------------------------------------------------------------------------
# MaxPool / MaxUnpool (scatter-free), bilinear upsample, log-softmax (NHWC glue)
# ---------------------------------------------------------------------------
def maxpool2x2_with_argmax(x):
    """2x2/stride-2 max pool from 4 strided slices; returns in-window argmax 0..3
    (= di*2 + dj, first max wins) -- equivalent to PyTorch's flat indices for unpool."""
    x00 = x[:, 0::2, 0::2, :]
    x01 = x[:, 0::2, 1::2, :]
    x10 = x[:, 1::2, 0::2, :]
    x11 = x[:, 1::2, 1::2, :]
    vals = x00
    arg = jnp.zeros(x00.shape, jnp.int8)
    for i, cand in ((1, x01), (2, x10), (3, x11)):
        upd = cand > vals
        vals = jnp.where(upd, cand, vals)
        arg = jnp.where(upd, jnp.int8(i), arg)
    return vals, arg


def maxunpool2x2(x, arg):
    """Scatter-free unpool: select per window position then interleave."""
    B, H, W, C = x.shape
    zero = jnp.zeros((), x.dtype)
    planes = [jnp.where(arg == i, x, zero) for i in range(4)]   # (di, dj) = (i//2, i%2)
    row0 = jnp.stack([planes[0], planes[1]], axis=3)            # (B, H, W, 2, C)
    row1 = jnp.stack([planes[2], planes[3]], axis=3)
    rows = jnp.stack([row0, row1], axis=2)                      # (B, H, 2, W, 2, C)
    return rows.reshape(B, 2 * H, 2 * W, C)


def upsample_bilinear_align_corners(x, size):
    """Bilinear, align_corners=True; lerps in the input dtype (bf16) per review."""
    B, H, W, C = x.shape

    def src(n_in):
        return jnp.arange(size, dtype=jnp.float32) * ((n_in - 1) / (size - 1))

    ys, xs = src(H), src(W)
    y0 = jnp.floor(ys).astype(jnp.int32)
    y1 = jnp.minimum(y0 + 1, H - 1)
    x0 = jnp.floor(xs).astype(jnp.int32)
    x1 = jnp.minimum(x0 + 1, W - 1)
    wy = (ys - y0.astype(jnp.float32)).astype(x.dtype)[None, :, None, None]
    wx = (xs - x0.astype(jnp.float32)).astype(x.dtype)[None, None, :, None]
    top = x[:, y0, :, :] * (1 - wy) + x[:, y1, :, :] * wy        # (B, S, W, C)
    return top[:, :, x0, :] * (1 - wx) + top[:, :, x1, :] * wx   # (B, S, S, C)


def log_softmax_channels_last(x):
    m = jnp.max(x, axis=-1, keepdims=True)
    z = (x - m).astype(jnp.float32)                 # only the reduction/output in f32
    return z - jnp.log(jnp.sum(jnp.exp(z), axis=-1, keepdims=True))


# ---------------------------------------------------------------------------
# Architecture (same layer structure as the PyTorch module, width-parameterized)
# ---------------------------------------------------------------------------
def make_arch(chs, fc):
    c1, c2, c3, c4, c5 = chs
    conv = [
        ("conv3", 3, c1), ("conv3", c1, c1), ("pool",),
        ("conv3", c1, c2), ("conv3", c2, c2), ("pool",),
        ("conv3", c2, c3), ("conv3", c3, c3), ("conv3", c3, c3), ("pool",),
        ("conv3", c3, c4), ("conv3", c4, c4), ("conv3", c4, c4), ("pool",),
        ("conv3", c4, c5), ("conv3", c5, c5), ("conv3", c5, c5), ("pool",),
        ("convK", c5, fc), ("conv1", fc, fc),
    ]
    deconv = [
        ("deconvK", fc, c5, False), ("unpool",),
        ("deconv3", c5, c5, True), ("deconv3", c5, c5, True), ("deconv3", c5, c5, True), ("unpool",),
        ("deconv3", c5, c5, True), ("deconv3", c5, c5, True), ("deconv3", c5, c3, True), ("unpool",),
        ("deconv3", c3, c3, True), ("deconv3", c3, c3, True), ("deconv3", c3, c2, True), ("unpool",),
        ("deconv3", c2, c2, True), ("deconv3", c2, c1, True), ("unpool",),
        ("deconv3", c1, c1, True), ("deconv3", c1, c1, True),
    ]
    return conv, deconv


def init_params(key, chs, fc, ks, class_num):
    """Deterministic synthetic weights, BN folded (eval mode), all weight-side prep
    (flip/transpose/reshape into (3, 3C, Cout) tap slabs, bf16 cast) done once here."""
    conv_arch, deconv_arch = make_arch(chs, fc)
    keys = iter(jax.random.split(key, 512))
    nk = lambda: next(keys)

    def bn_fold(cout, bias):
        gamma = 1.0 + 0.1 * jax.random.normal(nk(), (cout,), jnp.float32)
        beta = 0.1 * jax.random.normal(nk(), (cout,), jnp.float32)
        rmean = 0.1 * jax.random.normal(nk(), (cout,), jnp.float32)
        rvar = 0.5 + jax.random.uniform(nk(), (cout,), jnp.float32)
        scale = gamma * jax.lax.rsqrt(rvar + 1e-5)
        shift = beta + (bias - rmean) * scale
        return scale, shift

    def conv_weight(cin, cout, k, transpose=False):
        std = math.sqrt(2.0 / (cin * k * k))
        shape = (cin, cout, k, k) if transpose else (cout, cin, k, k)
        w = jax.random.normal(nk(), shape, jnp.float32) * std
        b = 0.01 * jax.random.normal(nk(), (cout,), jnp.float32)
        return w, b

    def as_matmul_conv(w):          # (Cout, Cin, kh, kw) -> (kh*kw*Cin, Cout) bf16
        cout = w.shape[0]
        return w.transpose(2, 3, 1, 0).reshape(-1, cout).astype(jnp.bfloat16)

    def as_w3(w):                   # (Cout, Cin, 3, 3) -> (3 dy-slabs of (3*Cin, Cout))
        cout, cin = w.shape[0], w.shape[1]
        return w.transpose(2, 3, 1, 0).reshape(3, 3 * cin, cout).astype(jnp.bfloat16)

    conv_layers = []
    for spec in conv_arch:
        if spec[0] == "pool":
            conv_layers.append({"kind": "pool"})
            continue
        kind, cin, cout = spec
        ksz = {"conv3": 3, "convK": ks, "conv1": 1}[kind]
        w, b = conv_weight(cin, cout, ksz)
        scale, shift = bn_fold(cout, b)
        w = w * scale[:, None, None, None]             # fold BN scale into weights
        layer = {"kind": kind, "relu": True, "shift": shift}
        if kind == "conv3":
            layer["w3"] = as_w3(w)
        else:
            layer["w"] = as_matmul_conv(w)
        conv_layers.append(layer)

    deconv_layers = []
    for spec in deconv_arch:
        if spec[0] == "unpool":
            deconv_layers.append({"kind": "unpool"})
            continue
        kind, cin, cout, relu = spec
        ksz = ks if kind == "deconvK" else 3
        w, b = conv_weight(cin, cout, ksz, transpose=True)   # (Cin, Cout, k, k)
        scale, shift = bn_fold(cout, b)
        w = w * scale[None, :, None, None]
        if kind == "deconvK":
            # 1x1 spatial input: y[b, i, j, o] = sum_c x[b, c] * w[c, o, i, j] + shift[o]
            wmat = w.transpose(0, 2, 3, 1).reshape(cin, ksz * ksz * cout).astype(jnp.bfloat16)
            deconv_layers.append({"kind": kind, "relu": relu, "w": wmat,
                                  "shift": jnp.tile(shift, ksz * ksz), "ks": ksz})
        else:
            # stride-1/pad-1 transposed conv == conv with flipped, channel-swapped weights
            w_conv = jnp.flip(w, axis=(2, 3)).transpose(1, 0, 2, 3)
            deconv_layers.append({"kind": kind, "relu": relu,
                                  "w3": as_w3(w_conv), "shift": shift})

    w, b = conv_weight(chs[0], class_num, 1)
    seg = {"kind": "conv1", "relu": False, "w": as_matmul_conv(w), "shift": b}
    return {"conv": conv_layers, "deconv": deconv_layers, "seg": seg}


# ---------------------------------------------------------------------------
# Full forward pass (mirrors conv_deconv.forward)
# ---------------------------------------------------------------------------
def conv_deconv_forward(x_nchw, params, upsample_size=769):
    out = jnp.transpose(x_nchw, (0, 2, 3, 1)).astype(jnp.bfloat16)   # NHWC, bf16
    pool_argmax = {}
    index_pool = 1
    for layer in params["conv"]:
        kind = layer["kind"]
        if kind == "pool":
            out, arg = maxpool2x2_with_argmax(out)
            pool_argmax[index_pool] = arg
            index_pool += 1
        elif kind == "conv3":
            out = conv3x3_nhwc(out, layer)
        elif kind == "conv1":
            out = conv1x1_nhwc(out, layer)
        elif kind == "convK":
            out = conv_full_valid_nhwc(out, layer)
    index_pool -= 1
    for layer in params["deconv"]:
        kind = layer["kind"]
        if kind == "unpool":
            out = maxunpool2x2(out, pool_argmax[index_pool])
            index_pool -= 1
        elif kind == "deconvK":
            out = deconv_full_nhwc(out, layer)
        else:                       # deconv3, pre-rewritten as an equivalent 3x3 conv
            out = conv3x3_nhwc(out, layer)

    seg = conv1x1_nhwc(out, params["seg"], out_dtype=jnp.bfloat16)
    up = upsample_bilinear_align_corners(seg, upsample_size)
    logp = log_softmax_channels_last(up)
    return jnp.transpose(logp, (0, 3, 1, 2))                         # NCHW, like the module


if __name__ == "__main__":
    # Same layer structure as the PyTorch module (13 conv3+BN+ReLU, 5 maxpools with
    # indices, full-extent bottleneck conv + 1x1 conv, mirrored deconvs + 5 unpools,
    # 1x1 seg conv, bilinear upsample align_corners=True to 769, LogSoftmax).
    # Channel widths / input resolution are scaled down so the demo fits the sandbox
    # budget; the full-size config is chs=(64,128,256,512,512), fc=4096, 224x224 input.
    class_num = 4
    chs = (8, 16, 32, 32, 32)
    fc = 64
    spatial = 64                    # 5 maxpools -> 2x2 bottleneck
    ks = spatial // 32              # full-extent bottleneck conv kernel (7 at 224x224)

    key = jax.random.PRNGKey(0)
    pkey, xkey = jax.random.split(key)
    params = init_params(pkey, chs, fc, ks, class_num)
    x = jax.random.normal(xkey, (2, 3, spatial, spatial), jnp.float32)

    out = conv_deconv_forward(x, params, upsample_size=769)
    out = jax.block_until_ready(out)

    assert out.shape == (2, class_num, 769, 769), out.shape
    assert bool(jnp.isfinite(out).all())
    # log-softmax sanity: exp(out) sums to 1 over the class axis
    probs_sum = jnp.exp(out).sum(axis=1)
    assert bool(jnp.allclose(probs_sum, 1.0, atol=1e-3))
    print("KERNEL_OK")
</pallas_src>

<mosaic_0001>
module attributes {stable_mosaic.version = 11 : i64} {
  func.func @_conv3_kernel(%arg0: i32, %arg1: i32, %arg2: memref<1x16x66x3xbf16, #tpu.memory_space<vmem>>, %arg3: memref<3x9x8xbf16, #tpu.memory_space<vmem>>, %arg4: memref<1x8xf32, #tpu.memory_space<vmem>>, %arg5: memref<1024x8xbf16, #tpu.memory_space<vmem>>, %arg6: memref<1024x8xf32, #tpu.memory_space<vmem>>) attributes {dimension_semantics = [#tpu.dimension_semantics<parallel>, #tpu.dimension_semantics<arbitrary>], iteration_bounds = array<i64: 8, 3>, scalar_prefetch = 0 : i64, scratch_operands = 1 : i64, tpu.core_type = #tpu.core_type<tc>, window_params = [{transform_indices = @transform_0, window_bounds = array<i64: 1, 16, 66, 3>}, {pipeline_mode = #tpu.pipeline_mode<synchronous>, transform_indices = @transform_1, window_bounds = array<i64: 3, 9, 8>}, {pipeline_mode = #tpu.pipeline_mode<synchronous>, transform_indices = @transform_2, window_bounds = array<i64: 1, 8>}, {transform_indices = @transform_3, window_bounds = array<i64: 1024, 8>}]} {
    %c0_i32 = arith.constant 0 : i32
    %0 = arith.cmpi eq, %arg1, %c0_i32 : i32
    %1 = arith.extui %0 : i1 to i32
    %c0_i32_0 = arith.constant 0 : i32
    %2 = arith.cmpi ne, %1, %c0_i32_0 : i32
    scf.if %2 {
      %cst_13 = arith.constant 0.000000e+00 : f32
      %28 = vector.broadcast %cst_13 : f32 to vector<1024x8xf32>
      %c0_14 = arith.constant 0 : index
      %c0_15 = arith.constant 0 : index
      %29 = vector.load %arg6[%c0_14, %c0_15] : memref<1024x8xf32, #tpu.memory_space<vmem>>, vector<1024x8xf32>
      tpu.vector_store %arg6[%c0_14, %c0_15], %28 {strides = array<i32>} : memref<1024x8xf32, #tpu.memory_space<vmem>>, vector<1024x8xf32>,
    } else {
    }
    %c0 = arith.constant 0 : index
    %c0_1 = arith.constant 0 : index
    %c0_2 = arith.constant 0 : index
    %c0_3 = arith.constant 0 : index
    %3 = vector.load %arg2[%c0, %c0_1, %c0_2, %c0_3] : memref<1x16x66x3xbf16, #tpu.memory_space<vmem>>, vector<1x16x66x3xbf16>
    %4 = vector.shape_cast %3 : vector<1x16x66x3xbf16> to vector<16x66x3xbf16>
    %5 = arith.index_cast %arg1 : i32 to index
    %c0_4 = arith.constant 0 : index
    %c0_5 = arith.constant 0 : index
    %6 = vector.load %arg3[%5, %c0_4, %c0_5] : memref<3x9x8xbf16, #tpu.memory_space<vmem>>, vector<1x9x8xbf16>
    %7 = vector.shape_cast %6 : vector<1x9x8xbf16> to vector<9x8xbf16>
    %8 = vector.extract_strided_slice %4 {offsets = [0, 0, 0], sizes = [16, 64, 3], strides = [1, 1, 1]} : vector<16x66x3xbf16> to vector<16x64x3xbf16>
    %9 = vector.shape_cast %8 : vector<16x64x3xbf16> to vector<1024x3xbf16>
    %10 = vector.extract_strided_slice %7 {offsets = [0, 0], sizes = [3, 8], strides = [1, 1]} : vector<9x8xbf16> to vector<3x8xbf16>
    %cst = arith.constant dense<0.000000e+00> : vector<1024x8xf32>
    %11 = tpu.matmul %9, %10, %cst {dimension_numbers = #tpu.dot_dimension_numbers<[1], [0], [0], [1], [0, 0, 1, 1], [], []>} : vector<1024x3xbf16>, vector<3x8xbf16>, vector<1024x8xf32> -> vector<1024x8xf32>
    %12 = vector.extract_strided_slice %4 {offsets = [0, 1, 0], sizes = [16, 64, 3], strides = [1, 1, 1]} : vector<16x66x3xbf16> to vector<16x64x3xbf16>
    %13 = vector.shape_cast %12 : vector<16x64x3xbf16> to vector<1024x3xbf16>
    %14 = vector.extract_strided_slice %7 {offsets = [3, 0], sizes = [3, 8], strides = [1, 1]} : vector<9x8xbf16> to vector<3x8xbf16>
    %cst_6 = arith.constant dense<0.000000e+00> : vector<1024x8xf32>
    %15 = tpu.matmul %13, %14, %cst_6 {dimension_numbers = #tpu.dot_dimension_numbers<[1], [0], [0], [1], [0, 0, 1, 1], [], []>} : vector<1024x3xbf16>, vector<3x8xbf16>, vector<1024x8xf32> -> vector<1024x8xf32>
    %16 = arith.addf %11, %15 : vector<1024x8xf32>
    %17 = vector.extract_strided_slice %4 {offsets = [0, 2, 0], sizes = [16, 64, 3], strides = [1, 1, 1]} : vector<16x66x3xbf16> to vector<16x64x3xbf16>
    %18 = vector.shape_cast %17 : vector<16x64x3xbf16> to vector<1024x3xbf16>
    %19 = vector.extract_strided_slice %7 {offsets = [6, 0], sizes = [3, 8], strides = [1, 1]} : vector<9x8xbf16> to vector<3x8xbf16>
    %cst_7 = arith.constant dense<0.000000e+00> : vector<1024x8xf32>
    %20 = tpu.matmul %18, %19, %cst_7 {dimension_numbers = #tpu.dot_dimension_numbers<[1], [0], [0], [1], [0, 0, 1, 1], [], []>} : vector<1024x3xbf16>, vector<3x8xbf16>, vector<1024x8xf32> -> vector<1024x8xf32>
    %21 = arith.addf %16, %20 : vector<1024x8xf32>
    %c0_8 = arith.constant 0 : index
    %c0_9 = arith.constant 0 : index
    %22 = vector.load %arg6[%c0_8, %c0_9] : memref<1024x8xf32, #tpu.memory_space<vmem>>, vector<1024x8xf32>
    %23 = arith.addf %22, %21 : vector<1024x8xf32>
    %c0_10 = arith.constant 0 : index
    %c0_11 = arith.constant 0 : index
    %24 = vector.load %arg6[%c0_10, %c0_11] : memref<1024x8xf32, #tpu.memory_space<vmem>>, vector<1024x8xf32>
    tpu.vector_store %arg6[%c0_10, %c0_11], %23 {strides = array<i32>} : memref<1024x8xf32, #tpu.memory_space<vmem>>, vector<1024x8xf32>,
    %c2_i32 = arith.constant 2 : i32
    %25 = arith.cmpi eq, %arg1, %c2_i32 : i32
    %26 = arith.extui %25 : i1 to i32
    %c0_i32_12 = arith.constant 0 : i32
    %27 = arith.cmpi ne, %26, %c0_i32_12 : i32
    scf.if %27 {
      %c0_13 = arith.constant 0 : index
      %c0_14 = arith.constant 0 : index
      %28 = vector.load %arg6[%c0_13, %c0_14] : memref<1024x8xf32, #tpu.memory_space<vmem>>, vector<1024x8xf32>
      %c0_15 = arith.constant 0 : index
      %c0_16 = arith.constant 0 : index
      %29 = vector.load %arg4[%c0_15, %c0_16] : memref<1x8xf32, #tpu.memory_space<vmem>>, vector<1x8xf32>
      %30 = vector.broadcast %29 : vector<1x8xf32> to vector<1024x8xf32>
      %31 = arith.addf %28, %30 : vector<1024x8xf32>
      %cst_17 = arith.constant 0.000000e+00 : f32
      %32 = vector.broadcast %cst_17 : f32 to vector<1024x8xf32>
      %33 = arith.maximumf %31, %32 : vector<1024x8xf32>
      %34 = arith.truncf %33 : vector<1024x8xf32> to vector<1024x8xbf16>
      %c0_18 = arith.constant 0 : index
      %c0_19 = arith.constant 0 : index
      %35 = vector.load %arg5[%c0_18, %c0_19] : memref<1024x8xbf16, #tpu.memory_space<vmem>>, vector<1024x8xbf16>
      tpu.vector_store %arg5[%c0_18, %c0_19], %34 {strides = array<i32>} : memref<1024x8xbf16, #tpu.memory_space<vmem>>, vector<1024x8xbf16>,
    } else {
    }
    return
  }
  func.func @transform_0(%arg0: i32, %arg1: i32) -> (i32, i32, i32, i32) {
    %c0_i32 = arith.constant 0 : i32
    %c0_i32_0 = arith.constant 0 : i32
    %c0_i32_1 = arith.constant 0 : i32
    return %arg1, %arg0, %c0_i32, %c0_i32_0 : i32, i32, i32, i32
  }
  func.func @transform_1(%arg0: i32, %arg1: i32) -> (i32, i32, i32) {
    %c0_i32 = arith.constant 0 : i32
    %c0_i32_0 = arith.constant 0 : i32
    %c0_i32_1 = arith.constant 0 : i32
    %c0_i32_2 = arith.constant 0 : i32
    return %c0_i32, %c0_i32_0, %c0_i32_1 : i32, i32, i32
  }
  func.func @transform_2(%arg0: i32, %arg1: i32) -> (i32, i32) {
    %c0_i32 = arith.constant 0 : i32
    %c0_i32_0 = arith.constant 0 : i32
    %c0_i32_1 = arith.constant 0 : i32
    return %c0_i32, %c0_i32_0 : i32, i32
  }
  func.func @transform_3(%arg0: i32, %arg1: i32) -> (i32, i32) {
    %c0_i32 = arith.constant 0 : i32
    %c0_i32_0 = arith.constant 0 : i32
    return %arg0, %c0_i32 : i32, i32
  }
}

module attributes {stable_mosaic.version = 11 : i64} {
  func.func @_matmul_resident_kernel(%arg0: i32, %arg1: memref<1024x27xbf16, #tpu.memory_space<vmem>>, %arg2: memref<27x8xbf16, #tpu.memory_space<vmem>>, %arg3: memref<1x8xf32, #tpu.memory_space<vmem>>, %arg4: memref<1024x8xbf16, #tpu.memory_space<vmem>>) attributes {dimension_semantics = [#tpu.dimension_semantics<parallel>], iteration_bounds = array<i64: 8>, scalar_prefetch = 0 : i64, scratch_operands = 0 : i64, tpu.core_type = #tpu.core_type<tc>, window_params = [{transform_indices = @transform_0, window_bounds = array<i64: 1024, 27>}, {pipeline_mode = #tpu.pipeline_mode<synchronous>, transform_indices = @transform_1, window_bounds = array<i64: 27, 8>}, {pipeline_mode = #tpu.pipeline_mode<synchronous>, transform_indices = @transform_2, window_bounds = array<i64: 1, 8>}, {transform_indices = @transform_3, window_bounds = array<i64: 1024, 8>}]} {
    %c0 = arith.constant 0 : index
    %c0_0 = arith.constant 0 : index
    %0 = vector.load %arg1[%c0, %c0_0] : memref<1024x27xbf16, #tpu.memory_space<vmem>>, vector<1024x27xbf16>
    %c0_1 = arith.constant 0 : index
    %c0_2 = arith.constant 0 : index
    %1 = vector.load %arg2[%c0_1, %c0_2] : memref<27x8xbf16, #tpu.memory_space<vmem>>, vector<27x8xbf16>
    %cst = arith.constant dense<0.000000e+00> : vector<1024x8xf32>
    %2 = tpu.matmul %0, %1, %cst {dimension_numbers = #tpu.dot_dimension_numbers<[1], [0], [0], [1], [0, 0, 1, 1], [], []>} : vector<1024x27xbf16>, vector<27x8xbf16>, vector<1024x8xf32> -> vector<1024x8xf32>
    %c0_3 = arith.constant 0 : index
    %c0_4 = arith.constant 0 : index
    %3 = vector.load %arg3[%c0_3, %c0_4] : memref<1x8xf32, #tpu.memory_space<vmem>>, vector<1x8xf32>
    %4 = vector.broadcast %3 : vector<1x8xf32> to vector<1024x8xf32>
    %5 = arith.addf %2, %4 : vector<1024x8xf32>
    %cst_5 = arith.constant 0.000000e+00 : f32
    %6 = vector.broadcast %cst_5 : f32 to vector<1024x8xf32>
    %7 = arith.maximumf %5, %6 : vector<1024x8xf32>
    %8 = arith.truncf %7 : vector<1024x8xf32> to vector<1024x8xbf16>
    %c0_6 = arith.constant 0 : index
    %c0_7 = arith.constant 0 : index
    %9 = vector.load %arg4[%c0_6, %c0_7] : memref<1024x8xbf16, #tpu.memory_space<vmem>>, vector<1024x8xbf16>
    tpu.vector_store %arg4[%c0_6, %c0_7], %8 {strides = array<i32>} : memref<1024x8xbf16, #tpu.memory_space<vmem>>, vector<1024x8xbf16>,
    return
  }
  func.func @transform_0(%arg0: i32) -> (i32, i32) {
    %c0_i32 = arith.constant 0 : i32
    %c0_i32_0 = arith.constant 0 : i32
    return %arg0, %c0_i32 : i32, i32
  }
  func.func @transform_1(%arg0: i32) -> (i32, i32) {
    %c0_i32 = arith.constant 0 : i32
    %c0_i32_0 = arith.constant 0 : i32
    %c0_i32_1 = arith.constant 0 : i32
    return %c0_i32, %c0_i32_0 : i32, i32
  }
  func.func @transform_2(%arg0: i32) -> (i32, i32) {
    %c0_i32 = arith.constant 0 : i32
    %c0_i32_0 = arith.constant 0 : i32
    %c0_i32_1 = arith.constant 0 : i32
    return %c0_i32, %c0_i32_0 : i32, i32
  }
  func.func @transform_3(%arg0: i32) -> (i32, i32) {
    %c0_i32 = arith.constant 0 : i32
    %c0_i32_0 = arith.constant 0 : i32
    return %arg0, %c0_i32 : i32, i32
  }
}

</mosaic_0001>

<llo_original>
// kernel: _conv3x3_core.1
$region0: #{_conv3x3_core.1}
  #allocation0 [shape = 'u32[]', space=smem, size = 0x4, offset = 0x4, fixed_abs, tag = 'smem constant byte address 0x4 - core index']
  #allocation1 [shape = 'u32[144,128]{1,0:T(1,128)}', space=vmem, size = 0x12000, scoped, tag = 'internal scratch']
  #allocation2 [shape = 'f32[1024,8]{1,0:T(8,128)}', space=vmem, size = 0x80000, scoped, tag = 'scratch operand']
  %s0 = inlined_call_operand.vmem [shape: bf16[3,128,66,3], index: 0, kind: input, shape index: {}]
  %s1 = inlined_call_operand.vmem [shape: bf16[3,9,8], index: 1, kind: input, shape index: {}]
  %s2 = inlined_call_operand.vmem [shape: f32[1,8], index: 2, kind: input, shape index: {}]
  %s3 = inlined_call_operand.vmem [shape: bf16[8192,8], index: 3, kind: output, shape index: {}]
  %s4 = sld [smem:[#allocation0]]
  $region53: #{_conv3x3_core.1} parent=0
    _
  %s6 = ssub.s32 1, %s4
  %s7 = scalar_select 0, %s6, %s4
  loop: start=0, step=1, limit=26
  $region2: #{_conv3x3_core.1} parent=0 // loop_pre_header
    _
  $region3: #{_conv3x3_core.1} parent=0 // loop_header
    %s9 = sphi 0, %s13
    %p10 = scmp.ge.s32.totalorder %s9, 26
    %s16 = sphi 0, %s28
    %s17 = sphi 0, %s24
    %s18 = sphi 0, %s16
    %s19 = sphi 0, %s17
    %s20 = sphi 0, %s18
    %s21 = sphi 0, %s19
    %s33 = sphi 0, %s35
    %s36 = sphi 0, %s33
    %s37 = sphi 0, %s36
    %s53 = sphi 0, %s37
    %s57 = sphi 0, %s57
    %s59 = sphi 0, %s57
    %s60 = sphi 0, %s59
    %s74 = sphi 0, %s60
    %s78 = sphi 0, %s78
    %s80 = sphi 0, %s78
    %s81 = sphi 0, %s80
    %s95 = sphi 0, %s81
    %s101 = sphi 0, %s103
    %s104 = sphi 0, %s101
    %s105 = sphi 0, %s104
    %s121 = sphi 0, %s105
  $region4: #{_conv3x3_core.1} parent=0 // loop_header_branch
    %12 = sbr.rel (%p10) target = $region8
  $region5: #{_conv3x3_core.1} parent=0 // loop_body
    %s14 = ssub.s32 %s9, 1
    %s15 = ssub.s32 %s9, 2
    %s22 = sadd.s32 1, %s17
    %p23 = scmp.ge.s32.totalorder %s22, 3
    %s24 = scalar_select %p23, 0, %s22
    %s25 = sadd.s32 1, %s16
    %s26 = scalar_select %p23, %s25, %s16
    %p27 = scmp.ge.s32.totalorder %s26, 8
    %s28 = scalar_select %p27, 0, %s26
    %s29 = ssub.s32 %s17, %s24
    %s30 = ssub.s32 %s16, %s28
    %s31 = sor.u32 %s29, %s30
    %p32 = scmp.eq.s32.totalorder %s31, 0
    %s34 = sadd.s32 %s33, 1
    %s35 = scalar_select %p32, %s33, %s34
    %p38 = pneg %p32
    %p39 = scmp.eq.s32.totalorder %s9, 23
    %p40 = por %p38, %p39
    %p41 = scmp.ne.s32.totalorder %s33, %s36
    %p42 = scmp.eq.s32.totalorder %s9, 0
    %p43 = por %p41, %p42
    %p44 = scmp.ne.s32.totalorder %s33, %s36
    %p45 = scmp.eq.s32.totalorder %s14, 23
    %p46 = por %p44, %p45
    %p47 = scmp.ne.s32.totalorder %s36, %s37
    %p48 = scmp.eq.s32.totalorder %s14, 0
    %p49 = por %p47, %p48
    %p50 = scmp.ne.s32.totalorder %s36, %s37
    %p51 = scmp.eq.s32.totalorder %s15, 23
    %p52 = por %p50, %p51
    %p54 = scmp.ne.s32.totalorder %s37, %s53
    %p55 = scmp.eq.s32.totalorder %s15, 0
    %p56 = por %p54, %p55
    %s58 = sadd.s32 %s57, 1
    %p61 = scmp.eq.s32.totalorder %s9, 23
    %p62 = scmp.ne.s32.totalorder %s57, %s59
    %p63 = scmp.eq.s32.totalorder %s9, 0
    %p64 = por %p62, %p63
    %p65 = scmp.ne.s32.totalorder %s57, %s59
    %p66 = scmp.eq.s32.totalorder %s14, 23
    %p67 = por %p65, %p66
    %p68 = scmp.ne.s32.totalorder %s59, %s60
    %p69 = scmp.eq.s32.totalorder %s14, 0
    %p70 = por %p68, %p69
    %p71 = scmp.ne.s32.totalorder %s59, %s60
    %p72 = scmp.eq.s32.totalorder %s15, 23
    %p73 = por %p71, %p72
    %p75 = scmp.ne.s32.totalorder %s60, %s74
    %p76 = scmp.eq.s32.totalorder %s15, 0
    %p77 = por %p75, %p76
    %s79 = sadd.s32 %s78, 1
    %p82 = scmp.eq.s32.totalorder %s9, 23
    %p83 = scmp.ne.s32.totalorder %s78, %s80
    %p84 = scmp.eq.s32.totalorder %s9, 0
    %p85 = por %p83, %p84
    %p86 = scmp.ne.s32.totalorder %s78, %s80
    %p87 = scmp.eq.s32.totalorder %s14, 23
    %p88 = por %p86, %p87
    %p89 = scmp.ne.s32.totalorder %s80, %s81
    %p90 = scmp.eq.s32.totalorder %s14, 0
    %p91 = por %p89, %p90
    %p92 = scmp.ne.s32.totalorder %s80, %s81
    %p93 = scmp.eq.s32.totalorder %s15, 23
    %p94 = por %p92, %p93
    %p96 = scmp.ne.s32.totalorder %s81, %s95
    %p97 = scmp.eq.s32.totalorder %s15, 0
    %p98 = por %p96, %p97
    %s99 = ssub.s32 %s16, %s28
    %p100 = scmp.eq.s32.totalorder %s99, 0
    %s102 = sadd.s32 %s101, 1
    %s103 = scalar_select %p100, %s101, %s102
    %p106 = pneg %p100
    %p107 = scmp.eq.s32.totalorder %s9, 23
    %p108 = por %p106, %p107
    %p109 = scmp.ne.s32.totalorder %s101, %s104
    %p110 = scmp.eq.s32.totalorder %s9, 0
    %p111 = por %p109, %p110
    %p112 = scmp.ne.s32.totalorder %s101, %s104
    %p113 = scmp.eq.s32.totalorder %s14, 23
    %p114 = por %p112, %p113
    %p115 = scmp.ne.s32.totalorder %s104, %s105
    %p116 = scmp.eq.s32.totalorder %s14, 0
    %p117 = por %p115, %p116
    %p118 = scmp.ne.s32.totalorder %s104, %s105
    %p119 = scmp.eq.s32.totalorder %s15, 23
    %p120 = por %p118, %p119
    %p122 = scmp.ne.s32.totalorder %s105, %s121
    %p123 = scmp.eq.s32.totalorder %s15, 0
    %p124 = por %p122, %p123
    %p125 = scmp.le.s32.totalorder 1, %s9
    %p126 = scmp.lt.s32.totalorder %s9, 25
    %p127 = pnand %p125, %p126
    %p128 = pneg %p127
    // Predicated region
    $region9: #{_conv3x3_core.1} parent=5 // pred_check
      _
    $region10: #{_conv3x3_core.1} parent=5 // pred_check_branch
      %130 = sbr.rel (%p127) target = $region12
    $region11: #{_conv3x3_core.1} parent=5 // pred_region
      %s131 = ssub.s32 %s9, 1
      // Predicated region
      $region13: #{_conv3x3_core.1} parent=11 // pred_check
        %p132 = pneg %p70
      $region14: #{_conv3x3_core.1} parent=11 // pred_check_branch
        %134 = sbr.rel (%p132) target = $region16
      $region15: #{_conv3x3_core.1} parent=11 // pred_region
        _
      $region16: #{_conv3x3_core.1} parent=11 // pred_fallthru
        _
      // Predicated region
      $region17: #{_conv3x3_core.1} parent=11 // pred_check
        %p135 = pneg %p91
      $region18: #{_conv3x3_core.1} parent=11 // pred_check_branch
        %137 = sbr.rel (%p135) target = $region20
      $region19: #{_conv3x3_core.1} parent=11 // pred_region
        _
      $region20: #{_conv3x3_core.1} parent=11 // pred_fallthru
        _
    $region12: #{_conv3x3_core.1} parent=5 // pred_fallthru
      _
    %p138 = scmp.lt.s32.totalorder %s9, 24
    // Predicated region
    $region21: #{_conv3x3_core.1} parent=5 // pred_check
      %p139 = pneg %p138
    $region22: #{_conv3x3_core.1} parent=5 // pred_check_branch
      %141 = sbr.rel (%p139) target = $region24
    $region23: #{_conv3x3_core.1} parent=5 // pred_region
      // Predicated region
      $region25: #{_conv3x3_core.1} parent=23 // pred_check
        %p142 = pneg %p43
      $region26: #{_conv3x3_core.1} parent=23 // pred_check_branch
        %144 = sbr.rel (%p142) target = $region28
      $region27: #{_conv3x3_core.1} parent=23 // pred_region
        %s145 = smul.u32 16, %s16
        %p146 = scmp.lt.s32.totalorder %s17, 2
        %s147 = scalar_select %p146, %s17, 2
        %p148 = scmp.lt.s32.totalorder %s145, 127
        %s149 = scalar_select %p148, %s145, 127
        %s150 = smul.addr %s149, 9
        %s151 = smul.addr %s147, 1152
        %s152 = sadd.s32 %s150, %s151
        %s153 = smul.addr %s152, 4
        %s154 = scalar_lea.vmem %s0, %s153
        %s155 = smul.u32 16, %s16
      $region28: #{_conv3x3_core.1} parent=23 // pred_fallthru
        _
    $region24: #{_conv3x3_core.1} parent=5 // pred_fallthru
      _
    %p156 = scmp.le.s32.totalorder 1, %s9
    %p157 = scmp.lt.s32.totalorder %s9, 25
    %p158 = pnand %p156, %p157
    %p159 = pneg %p158
    // Predicated region
    $region29: #{_conv3x3_core.1} parent=5 // pred_check
      _
    $region30: #{_conv3x3_core.1} parent=5 // pred_check_branch
      %161 = sbr.rel (%p158) target = $region32
    $region31: #{_conv3x3_core.1} parent=5 // pred_region
      %s162 = ssub.s32 %s9, 1
      %s163 = smul.u32 16, %s18
      %p164 = scmp.lt.s32.totalorder %s19, 2
      %s165 = scalar_select %p164, %s19, 2
      %p166 = scmp.lt.s32.totalorder %s163, 127
      %s167 = scalar_select %p166, %s163, 127
      %s168 = smul.addr %s167, 9
      %s169 = smul.addr %s165, 1152
      %s170 = sadd.s32 %s168, %s169
      %s171 = smul.addr %s170, 4
      %s172 = scalar_lea.vmem %s0, %s171
      %p173 = pneg %p49
      %p174 = pneg %p46
      %p175 = pneg %p70
      %p176 = pneg %p67
      %p177 = pneg %p91
      %p178 = pneg %p88
      %p179 = pneg %p117
      %p180 = pneg %p114
      %s181 = smul.u32 128, %s18
      %p182 = scmp.lt.s32.totalorder %s181, 1023
      %s183 = scalar_select %p182, %s181, 1023
      %s184 = smul.addr %s183, 4
      %s185 = scalar_lea.vmem %s3, %s184
      %s186 = smul.u32 16, %s18
      %p187 = scmp.lt.s32.totalorder %s19, 2
      %s188 = scalar_select %p187, %s19, 2
      %p189 = scmp.lt.s32.totalorder %s186, 127
      %s190 = scalar_select %p189, %s186, 127
      %s191 = smul.addr %s190, 9
      %s192 = smul.addr %s188, 1152
      %s193 = sadd.s32 %s191, %s192
      %s194 = smul.addr %s193, 4
      %s195 = scalar_lea.vmem %s0, %s194
      %s196 = smul.u32 16, %s18
      %s197 = smul.u32 128, %s18
      %p198 = scmp.lt.s32.totalorder %s197, 1023
      %s199 = scalar_select %p198, %s197, 1023
      %s200 = smul.addr %s199, 4
      %s201 = scalar_lea.vmem %s3, %s200
      %s202 = smul.u32 128, %s18
      %p204 = scmp.eq.s32.totalorder %s19, 0
      // Predicated region
      $region33: #{_conv3x3_core.1} parent=31 // pred_check
        %p205 = pneg %p204
      $region34: #{_conv3x3_core.1} parent=31 // pred_check_branch
        %207 = sbr.rel (%p205) target = $region36
      $region35: #{_conv3x3_core.1} parent=31 // pred_region
        %vm208 = vcmask 64512
        %209 = vst.msk [vmem:[#allocation2] sm:$0xff] %vm208, 0.0
        %210 = vst.msk [vmem:[#allocation2 + $0x8] sm:$0xff] %vm208, 0.0
        %211 = vst.msk [vmem:[#allocation2 + $0x10] sm:$0xff] %vm208, 0.0
        %212 = vst.msk [vmem:[#allocation2 + $0x18] sm:$0xff] %vm208, 0.0
        %213 = vst.msk [vmem:[#allocation2 + $0x20] sm:$0xff] %vm208, 0.0
        %214 = vst.msk [vmem:[#allocation2 + $0x28] sm:$0xff] %vm208, 0.0
        %215 = vst.msk [vmem:[#allocation2 + $0x30] sm:$0xff] %vm208, 0.0
        %216 = vst.msk [vmem:[#allocation2 + $0x38] sm:$0xff] %vm208, 0.0
        %217 = vst.msk [vmem:[#allocation2 + $0x40] sm:$0xff] %vm208, 0.0
        %218 = vst.msk [vmem:[#allocation2 + $0x48] sm:$0xff] %vm208, 0.0
        %219 = vst.msk [vmem:[#allocation2 + $0x50] sm:$0xff] %vm208, 0.0
        %220 = vst.msk [vmem:[#allocation2 + $0x58] sm:$0xff] %vm208, 0.0
        %221 = vst.msk [vmem:[#allocation2 + $0x60] sm:$0xff] %vm208, 0.0
        %222 = vst.msk [vmem:[#allocation2 + $0x68] sm:$0xff] %vm208, 0.0
        %223 = vst.msk [vmem:[#allocation2 + $0x70] sm:$0xff] %vm208, 0.0
        %224 = vst.msk [vmem:[#allocation2 + $0x78] sm:$0xff] %vm208, 0.0
        %225 = vst.msk [vmem:[#allocation2 + $0x80] sm:$0xff] %vm208, 0.0
        %226 = vst.msk [vmem:[#allocation2 + $0x88] sm:$0xff] %vm208, 0.0
        %227 = vst.msk [vmem:[#allocation2 + $0x90] sm:$0xff] %vm208, 0.0
        %228 = vst.msk [vmem:[#allocation2 + $0x98] sm:$0xff] %vm208, 0.0
        %229 = vst.msk [vmem:[#allocation2 + $0xa0] sm:$0xff] %vm208, 0.0
        %230 = vst.msk [vmem:[#allocation2 + $0xa8] sm:$0xff] %vm208, 0.0
        %231 = vst.msk [vmem:[#allocation2 + $0xb0] sm:$0xff] %vm208, 0.0
        %232 = vst.msk [vmem:[#allocation2 + $0xb8] sm:$0xff] %vm208, 0.0
        %233 = vst.msk [vmem:[#allocation2 + $0xc0] sm:$0xff] %vm208, 0.0
        %234 = vst.msk [vmem:[#allocation2 + $0xc8] sm:$0xff] %vm208, 0.0
        %235 = vst.msk [vmem:[#allocation2 + $0xd0] sm:$0xff] %vm208, 0.0
        %236 = vst.msk [vmem:[#allocation2 + $0xd8] sm:$0xff] %vm208, 0.0
        %237 = vst.msk [vmem:[#allocation2 + $0xe0] sm:$0xff] %vm208, 0.0
        %238 = vst.msk [vmem:[#allocation2 + $0xe8] sm:$0xff] %vm208, 0.0
        %239 = vst.msk [vmem:[#allocation2 + $0xf0] sm:$0xff] %vm208, 0.0
        %240 = vst.msk [vmem:[#allocation2 + $0xf8] sm:$0xff] %vm208, 0.0
        %241 = vst.msk [vmem:[#allocation2 + $0x100] sm:$0xff] %vm208, 0.0
        %242 = vst.msk [vmem:[#allocation2 + $0x108] sm:$0xff] %vm208, 0.0
        %243 = vst.msk [vmem:[#allocation2 + $0x110] sm:$0xff] %vm208, 0.0
        %244 = vst.msk [vmem:[#allocation2 + $0x118] sm:$0xff] %vm208, 0.0
        %245 = vst.msk [vmem:[#allocation2 + $0x120] sm:$0xff] %vm208, 0.0
        %246 = vst.msk [vmem:[#allocation2 + $0x128] sm:$0xff] %vm208, 0.0
        %247 = vst.msk [vmem:[#allocation2 + $0x130] sm:$0xff] %vm208, 0.0
        %248 = vst.msk [vmem:[#allocation2 + $0x138] sm:$0xff] %vm208, 0.0
        %249 = vst.msk [vmem:[#allocation2 + $0x140] sm:$0xff] %vm208, 0.0
        %250 = vst.msk [vmem:[#allocation2 + $0x148] sm:$0xff] %vm208, 0.0
        %251 = vst.msk [vmem:[#allocation2 + $0x150] sm:$0xff] %vm208, 0.0
        %252 = vst.msk [vmem:[#allocation2 + $0x158] sm:$0xff] %vm208, 0.0
        %253 = vst.msk [vmem:[#allocation2 + $0x160] sm:$0xff] %vm208, 0.0
        %254 = vst.msk [vmem:[#allocation2 + $0x168] sm:$0xff] %vm208, 0.0
        %255 = vst.msk [vmem:[#allocation2 + $0x170] sm:$0xff] %vm208, 0.0
        %256 = vst.msk [vmem:[#allocation2 + $0x178] sm:$0xff] %vm208, 0.0
        %257 = vst.msk [vmem:[#allocation2 + $0x180] sm:$0xff] %vm208, 0.0
        %258 = vst.msk [vmem:[#allocation2 + $0x188] sm:$0xff] %vm208, 0.0
        %259 = vst.msk [vmem:[#allocation2 + $0x190] sm:$0xff] %vm208, 0.0
        %260 = vst.msk [vmem:[#allocation2 + $0x198] sm:$0xff] %vm208, 0.0
        %261 = vst.msk [vmem:[#allocation2 + $0x1a0] sm:$0xff] %vm208, 0.0
        %262 = vst.msk [vmem:[#allocation2 + $0x1a8] sm:$0xff] %vm208, 0.0
        %263 = vst.msk [vmem:[#allocation2 + $0x1b0] sm:$0xff] %vm208, 0.0
        %264 = vst.msk [vmem:[#allocation2 + $0x1b8] sm:$0xff] %vm208, 0.0
        %265 = vst.msk [vmem:[#allocation2 + $0x1c0] sm:$0xff] %vm208, 0.0
        %266 = vst.msk [vmem:[#allocation2 + $0x1c8] sm:$0xff] %vm208, 0.0
        %267 = vst.msk [vmem:[#allocation2 + $0x1d0] sm:$0xff] %vm208, 0.0
        %268 = vst.msk [vmem:[#allocation2 + $0x1d8] sm:$0xff] %vm208, 0.0
        %269 = vst.msk [vmem:[#allocation2 + $0x1e0] sm:$0xff] %vm208, 0.0
        %270 = vst.msk [vmem:[#allocation2 + $0x1e8] sm:$0xff] %vm208, 0.0
        %271 = vst.msk [vmem:[#allocation2 + $0x1f0] sm:$0xff] %vm208, 0.0
        %272 = vst.msk [vmem:[#allocation2 + $0x1f8] sm:$0xff] %vm208, 0.0
        %273 = vst.msk [vmem:[#allocation2 + $0x200] sm:$0xff] %vm208, 0.0
        %274 = vst.msk [vmem:[#allocation2 + $0x208] sm:$0xff] %vm208, 0.0
        %275 = vst.msk [vmem:[#allocation2 + $0x210] sm:$0xff] %vm208, 0.0
        %276 = vst.msk [vmem:[#allocation2 + $0x218] sm:$0xff] %vm208, 0.0
        %277 = vst.msk [vmem:[#allocation2 + $0x220] sm:$0xff] %vm208, 0.0
        %278 = vst.msk [vmem:[#allocation2 + $0x228] sm:$0xff] %vm208, 0.0
        %279 = vst.msk [vmem:[#allocation2 + $0x230] sm:$0xff] %vm208, 0.0
        %280 = vst.msk [vmem:[#allocation2 + $0x238] sm:$0xff] %vm208, 0.0
        %281 = vst.msk [vmem:[#allocation2 + $0x240] sm:$0xff] %vm208, 0.0
        %282 = vst.msk [vmem:[#allocation2 + $0x248] sm:$0xff] %vm208, 0.0
        %283 = vst.msk [vmem:[#allocation2 + $0x250] sm:$0xff] %vm208, 0.0
        %284 = vst.msk [vmem:[#allocation2 + $0x258] sm:$0xff] %vm208, 0.0
        %285 = vst.msk [vmem:[#allocation2 + $0x260] sm:$0xff] %vm208, 0.0
        %286 = vst.msk [vmem:[#allocation2 + $0x268] sm:$0xff] %vm208, 0.0
        %287 = vst.msk [vmem:[#allocation2 + $0x270] sm:$0xff] %vm208, 0.0
        %288 = vst.msk [vmem:[#allocation2 + $0x278] sm:$0xff] %vm208, 0.0
        %289 = vst.msk [vmem:[#allocation2 + $0x280] sm:$0xff] %vm208, 0.0
        %290 = vst.msk [vmem:[#allocation2 + $0x288] sm:$0xff] %vm208, 0.0
        %291 = vst.msk [vmem:[#allocation2 + $0x290] sm:$0xff] %vm208, 0.0
        %292 = vst.msk [vmem:[#allocation2 + $0x298] sm:$0xff] %vm208, 0.0
        %293 = vst.msk [vmem:[#allocation2 + $0x2a0] sm:$0xff] %vm208, 0.0
        %294 = vst.msk [vmem:[#allocation2 + $0x2a8] sm:$0xff] %vm208, 0.0
        %295 = vst.msk [vmem:[#allocation2 + $0x2b0] sm:$0xff] %vm208, 0.0
        %296 = vst.msk [vmem:[#allocation2 + $0x2b8] sm:$0xff] %vm208, 0.0
        %297 = vst.msk [vmem:[#allocation2 + $0x2c0] sm:$0xff] %vm208, 0.0
        %298 = vst.msk [vmem:[#allocation2 + $0x2c8] sm:$0xff] %vm208, 0.0
        %299 = vst.msk [vmem:[#allocation2 + $0x2d0] sm:$0xff] %vm208, 0.0
        %300 = vst.msk [vmem:[#allocation2 + $0x2d8] sm:$0xff] %vm208, 0.0
        %301 = vst.msk [vmem:[#allocation2 + $0x2e0] sm:$0xff] %vm208, 0.0
        %302 = vst.msk [vmem:[#allocation2 + $0x2e8] sm:$0xff] %vm208, 0.0
        %303 = vst.msk [vmem:[#allocation2 + $0x2f0] sm:$0xff] %vm208, 0.0
        %304 = vst.msk [vmem:[#allocation2 + $0x2f8] sm:$0xff] %vm208, 0.0
        %305 = vst.msk [vmem:[#allocation2 + $0x300] sm:$0xff] %vm208, 0.0
        %306 = vst.msk [vmem:[#allocation2 + $0x308] sm:$0xff] %vm208, 0.0
        %307 = vst.msk [vmem:[#allocation2 + $0x310] sm:$0xff] %vm208, 0.0
        %308 = vst.msk [vmem:[#allocation2 + $0x318] sm:$0xff] %vm208, 0.0
        %309 = vst.msk [vmem:[#allocation2 + $0x320] sm:$0xff] %vm208, 0.0
        %310 = vst.msk [vmem:[#allocation2 + $0x328] sm:$0xff] %vm208, 0.0
        %311 = vst.msk [vmem:[#allocation2 + $0x330] sm:$0xff] %vm208, 0.0
        %312 = vst.msk [vmem:[#allocation2 + $0x338] sm:$0xff] %vm208, 0.0
        %313 = vst.msk [vmem:[#allocation2 + $0x340] sm:$0xff] %vm208, 0.0
        %314 = vst.msk [vmem:[#allocation2 + $0x348] sm:$0xff] %vm208, 0.0
        %315 = vst.msk [vmem:[#allocation2 + $0x350] sm:$0xff] %vm208, 0.0
        %316 = vst.msk [vmem:[#allocation2 + $0x358] sm:$0xff] %vm208, 0.0
        %317 = vst.msk [vmem:[#allocation2 + $0x360] sm:$0xff] %vm208, 0.0
        %318 = vst.msk [vmem:[#allocation2 + $0x368] sm:$0xff] %vm208, 0.0
        %319 = vst.msk [vmem:[#allocation2 + $0x370] sm:$0xff] %vm208, 0.0
        %320 = vst.msk [vmem:[#allocation2 + $0x378] sm:$0xff] %vm208, 0.0
        %321 = vst.msk [vmem:[#allocation2 + $0x380] sm:$0xff] %vm208, 0.0
        %322 = vst.msk [vmem:[#allocation2 + $0x388] sm:$0xff] %vm208, 0.0
        %323 = vst.msk [vmem:[#allocation2 + $0x390] sm:$0xff] %vm208, 0.0
        %324 = vst.msk [vmem:[#allocation2 + $0x398] sm:$0xff] %vm208, 0.0
        %325 = vst.msk [vmem:[#allocation2 + $0x3a0] sm:$0xff] %vm208, 0.0
        %326 = vst.msk [vmem:[#allocation2 + $0x3a8] sm:$0xff] %vm208, 0.0
        %327 = vst.msk [vmem:[#allocation2 + $0x3b0] sm:$0xff] %vm208, 0.0
        %328 = vst.msk [vmem:[#allocation2 + $0x3b8] sm:$0xff] %vm208, 0.0
        %329 = vst.msk [vmem:[#allocation2 + $0x3c0] sm:$0xff] %vm208, 0.0
        %330 = vst.msk [vmem:[#allocation2 + $0x3c8] sm:$0xff] %vm208, 0.0
        %331 = vst.msk [vmem:[#allocation2 + $0x3d0] sm:$0xff] %vm208, 0.0
        %332 = vst.msk [vmem:[#allocation2 + $0x3d8] sm:$0xff] %vm208, 0.0
        %333 = vst.msk [vmem:[#allocation2 + $0x3e0] sm:$0xff] %vm208, 0.0
        %334 = vst.msk [vmem:[#allocation2 + $0x3e8] sm:$0xff] %vm208, 0.0
        %335 = vst.msk [vmem:[#allocation2 + $0x3f0] sm:$0xff] %vm208, 0.0
        %336 = vst.msk [vmem:[#allocation2 + $0x3f8] sm:$0xff] %vm208, 0.0
      $region36: #{_conv3x3_core.1} parent=31 // pred_fallthru
        _
      %v337 = vld [vmem:[%s195] sm:$0xf]
      %v338 = vld [vmem:[%s195 + $0x4] sm:$0xf]
      %v339 = vld [vmem:[%s195 + $0x8] sm:$0xf]
      %v340 = vld [vmem:[%s195 + $0xc] sm:$0xf]
      %v341 = vld [vmem:[%s195 + $0x10] sm:$0xf]
      %v342 = vld [vmem:[%s195 + $0x14] sm:$0xf]
      %v343 = vld [vmem:[%s195 + $0x18] sm:$0xf]
      %v344 = vld [vmem:[%s195 + $0x1c] sm:$0xf]
      %v345 = vld [vmem:[%s195 + $0x20] sm:$0x1]
      %v346 = vld [vmem:[%s195 + $0x24] sm:$0xf]
      %v347 = vld [vmem:[%s195 + $0x28] sm:$0xf]
      %v348 = vld [vmem:[%s195 + $0x2c] sm:$0xf]
      %v349 = vld [vmem:[%s195 + $0x30] sm:$0xf]
      %v350 = vld [vmem:[%s195 + $0x34] sm:$0xf]
      %v351 = vld [vmem:[%s195 + $0x38] sm:$0xf]
      %v352 = vld [vmem:[%s195 + $0x3c] sm:$0xf]
      %v353 = vld [vmem:[%s195 + $0x40] sm:$0xf]
      %v354 = vld [vmem:[%s195 + $0x44] sm:$0x1]
      %v355 = vld [vmem:[%s195 + $0x48] sm:$0xf]
      %v356 = vld [vmem:[%s195 + $0x4c] sm:$0xf]
      %v357 = vld [vmem:[%s195 + $0x50] sm:$0xf]
      %v358 = vld [vmem:[%s195 + $0x54] sm:$0xf]
      %v359 = vld [vmem:[%s195 + $0x58] sm:$0xf]
      %v360 = vld [vmem:[%s195 + $0x5c] sm:$0xf]
      %v361 = vld [vmem:[%s195 + $0x60] sm:$0xf]
      %v362 = vld [vmem:[%s195 + $0x64] sm:$0xf]
      %v363 = vld [vmem:[%s195 + $0x68] sm:$0x1]
      %v364 = vld [vmem:[%s195 + $0x6c] sm:$0xf]
      %v365 = vld [vmem:[%s195 + $0x70] sm:$0xf]
      %v366 = vld [vmem:[%s195 + $0x74] sm:$0xf]
      %v367 = vld [vmem:[%s195 + $0x78] sm:$0xf]
      %v368 = vld [vmem:[%s195 + $0x7c] sm:$0xf]
      %v369 = vld [vmem:[%s195 + $0x80] sm:$0xf]
      %v370 = vld [vmem:[%s195 + $0x84] sm:$0xf]
      %v371 = vld [vmem:[%s195 + $0x88] sm:$0xf]
      %v372 = vld [vmem:[%s195 + $0x8c] sm:$0x1]
      %v373 = vld [vmem:[%s195 + $0x90] sm:$0xf]
      %v374 = vld [vmem:[%s195 + $0x94] sm:$0xf]
      %v375 = vld [vmem:[%s195 + $0x98] sm:$0xf]
      %v376 = vld [vmem:[%s195 + $0x9c] sm:$0xf]
      %v377 = vld [vmem:[%s195 + $0xa0] sm:$0xf]
      %v378 = vld [vmem:[%s195 + $0xa4] sm:$0xf]
      %v379 = vld [vmem:[%s195 + $0xa8] sm:$0xf]
      %v380 = vld [vmem:[%s195 + $0xac] sm:$0xf]
      %v381 = vld [vmem:[%s195 + $0xb0] sm:$0x1]
      %v382 = vld [vmem:[%s195 + $0xb4] sm:$0xf]
      %v383 = vld [vmem:[%s195 + $0xb8] sm:$0xf]
      %v384 = vld [vmem:[%s195 + $0xbc] sm:$0xf]
      %v385 = vld [vmem:[%s195 + $0xc0] sm:$0xf]
      %v386 = vld [vmem:[%s195 + $0xc4] sm:$0xf]
      %v387 = vld [vmem:[%s195 + $0xc8] sm:$0xf]
      %v388 = vld [vmem:[%s195 + $0xcc] sm:$0xf]
      %v389 = vld [vmem:[%s195 + $0xd0] sm:$0xf]
      %v390 = vld [vmem:[%s195 + $0xd4] sm:$0x1]
      %v391 = vld [vmem:[%s195 + $0xd8] sm:$0xf]
      %v392 = vld [vmem:[%s195 + $0xdc] sm:$0xf]
      %v393 = vld [vmem:[%s195 + $0xe0] sm:$0xf]
      %v394 = vld [vmem:[%s195 + $0xe4] sm:$0xf]
      %v395 = vld [vmem:[%s195 + $0xe8] sm:$0xf]
      %v396 = vld [vmem:[%s195 + $0xec] sm:$0xf]
      %v397 = vld [vmem:[%s195 + $0xf0] sm:$0xf]
      %v398 = vld [vmem:[%s195 + $0xf4] sm:$0xf]
      %v399 = vld [vmem:[%s195 + $0xf8] sm:$0x1]
      %v400 = vld [vmem:[%s195 + $0xfc] sm:$0xf]
      %v401 = vld [vmem:[%s195 + $0x100] sm:$0xf]
      %v402 = vld [vmem:[%s195 + $0x104] sm:$0xf]
      %v403 = vld [vmem:[%s195 + $0x108] sm:$0xf]
      %v404 = vld [vmem:[%s195 + $0x10c] sm:$0xf]
      %v405 = vld [vmem:[%s195 + $0x110] sm:$0xf]
      %v406 = vld [vmem:[%s195 + $0x114] sm:$0xf]
      %v407 = vld [vmem:[%s195 + $0x118] sm:$0xf]
      %v408 = vld [vmem:[%s195 + $0x11c] sm:$0x1]
      %v409 = vld [vmem:[%s195 + $0x120] sm:$0xf]
      %v410 = vld [vmem:[%s195 + $0x124] sm:$0xf]
      %v411 = vld [vmem:[%s195 + $0x128] sm:$0xf]
      %v412 = vld [vmem:[%s195 + $0x12c] sm:$0xf]
      %v413 = vld [vmem:[%s195 + $0x130] sm:$0xf]
      %v414 = vld [vmem:[%s195 + $0x134] sm:$0xf]
      %v415 = vld [vmem:[%s195 + $0x138] sm:$0xf]
      %v416 = vld [vmem:[%s195 + $0x13c] sm:$0xf]
      %v417 = vld [vmem:[%s195 + $0x140] sm:$0x1]
      %v418 = vld [vmem:[%s195 + $0x144] sm:$0xf]
      %v419 = vld [vmem:[%s195 + $0x148] sm:$0xf]
      %v420 = vld [vmem:[%s195 + $0x14c] sm:$0xf]
      %v421 = vld [vmem:[%s195 + $0x150] sm:$0xf]
      %v422 = vld [vmem:[%s195 + $0x154] sm:$0xf]
      %v423 = vld [vmem:[%s195 + $0x158] sm:$0xf]
      %v424 = vld [vmem:[%s195 + $0x15c] sm:$0xf]
      %v425 = vld [vmem:[%s195 + $0x160] sm:$0xf]
      %v426 = vld [vmem:[%s195 + $0x164] sm:$0x1]
      %v427 = vld [vmem:[%s195 + $0x168] sm:$0xf]
      %v428 = vld [vmem:[%s195 + $0x16c] sm:$0xf]
      %v429 = vld [vmem:[%s195 + $0x170] sm:$0xf]
      %v430 = vld [vmem:[%s195 + $0x174] sm:$0xf]
      %v431 = vld [vmem:[%s195 + $0x178] sm:$0xf]
      %v432 = vld [vmem:[%s195 + $0x17c] sm:$0xf]
      %v433 = vld [vmem:[%s195 + $0x180] sm:$0xf]
      %v434 = vld [vmem:[%s195 + $0x184] sm:$0xf]
      %v435 = vld [vmem:[%s195 + $0x188] sm:$0x1]
      %v436 = vld [vmem:[%s195 + $0x18c] sm:$0xf]
      %v437 = vld [vmem:[%s195 + $0x190] sm:$0xf]
      %v438 = vld [vmem:[%s195 + $0x194] sm:$0xf]
      %v439 = vld [vmem:[%s195 + $0x198] sm:$0xf]
      %v440 = vld [vmem:[%s195 + $0x19c] sm:$0xf]
      %v441 = vld [vmem:[%s195 + $0x1a0] sm:$0xf]
      %v442 = vld [vmem:[%s195 + $0x1a4] sm:$0xf]
      %v443 = vld [vmem:[%s195 + $0x1a8] sm:$0xf]
      %v444 = vld [vmem:[%s195 + $0x1ac] sm:$0x1]
      %v445 = vld [vmem:[%s195 + $0x1b0] sm:$0xf]
      %v446 = vld [vmem:[%s195 + $0x1b4] sm:$0xf]
      %v447 = vld [vmem:[%s195 + $0x1b8] sm:$0xf]
      %v448 = vld [vmem:[%s195 + $0x1bc] sm:$0xf]
      %v449 = vld [vmem:[%s195 + $0x1c0] sm:$0xf]
      %v450 = vld [vmem:[%s195 + $0x1c4] sm:$0xf]
      %v451 = vld [vmem:[%s195 + $0x1c8] sm:$0xf]
      %v452 = vld [vmem:[%s195 + $0x1cc] sm:$0xf]
      %v453 = vld [vmem:[%s195 + $0x1d0] sm:$0x1]
      %v454 = vld [vmem:[%s195 + $0x1d4] sm:$0xf]
      %v455 = vld [vmem:[%s195 + $0x1d8] sm:$0xf]
      %v456 = vld [vmem:[%s195 + $0x1dc] sm:$0xf]
      %v457 = vld [vmem:[%s195 + $0x1e0] sm:$0xf]
      %v458 = vld [vmem:[%s195 + $0x1e4] sm:$0xf]
      %v459 = vld [vmem:[%s195 + $0x1e8] sm:$0xf]
      %v460 = vld [vmem:[%s195 + $0x1ec] sm:$0xf]
      %v461 = vld [vmem:[%s195 + $0x1f0] sm:$0xf]
      %v462 = vld [vmem:[%s195 + $0x1f4] sm:$0x1]
      %v463 = vld [vmem:[%s195 + $0x1f8] sm:$0xf]
      %v464 = vld [vmem:[%s195 + $0x1fc] sm:$0xf]
      %v465 = vld [vmem:[%s195 + $0x200] sm:$0xf]
      %v466 = vld [vmem:[%s195 + $0x204] sm:$0xf]
      %v467 = vld [vmem:[%s195 + $0x208] sm:$0xf]
      %v468 = vld [vmem:[%s195 + $0x20c] sm:$0xf]
      %v469 = vld [vmem:[%s195 + $0x210] sm:$0xf]
      %v470 = vld [vmem:[%s195 + $0x214] sm:$0xf]
      %v471 = vld [vmem:[%s195 + $0x218] sm:$0x1]
      %v472 = vld [vmem:[%s195 + $0x21c] sm:$0xf]
      %v473 = vld [vmem:[%s195 + $0x220] sm:$0xf]
      %v474 = vld [vmem:[%s195 + $0x224] sm:$0xf]
      %v475 = vld [vmem:[%s195 + $0x228] sm:$0xf]
      %v476 = vld [vmem:[%s195 + $0x22c] sm:$0xf]
      %v477 = vld [vmem:[%s195 + $0x230] sm:$0xf]
      %v478 = vld [vmem:[%s195 + $0x234] sm:$0xf]
      %v479 = vld [vmem:[%s195 + $0x238] sm:$0xf]
      %v480 = vld [vmem:[%s195 + $0x23c] sm:$0x1]
      %s481 = smul.u32 %s19, 2
      %s482 = smul.addr %s481, 4
      %s483 = scalar_lea.vmem %s1, %s482
      %v484 = vld [vmem:[%s483] sm:$0xf]
      %v485 = vld [vmem:[%s483 + $0x4] sm:$0x1]
      %vm486 = vsmask.f32 3328
      %vm487 = vsmask.f32 7440
      %vm488 = vmor %vm486, %vm487
      %v490 = vshrl.u32 %v337, 16
      %v492 = vrot.slane %v490, 4
      %v493 = vshll.u32 %v337, 16
      %v495 = vrot.slane %v493, 5
      %v496 = vor.u32 %v492, %v495
      %v497 = vrot.slane %v496, 4
      %v499 = vshll.u32 %v338, 16
      %v501 = vrot.slane %v499, 5
      %v502 = vsel %vm488, %v497, %v501
      %v503 = vshrl.u32 %v338, 16
      %v505 = vrot.slane %v503, 4
      %v506 = vor.u32 %v505, %v501
      %v507 = vrot.slane %v506, 4
      %v509 = vshll.u32 %v339, 16
      %v511 = vrot.slane %v509, 5
      %v512 = vsel %vm488, %v507, %v511
      %v513 = vshrl.u32 %v339, 16
      %v515 = vrot.slane %v513, 4
      %v516 = vor.u32 %v515, %v511
      %v517 = vrot.slane %v516, 4
      %v519 = vshll.u32 %v340, 16
      %v521 = vrot.slane %v519, 5
      %v522 = vsel %vm488, %v517, %v521
      %v523 = vshrl.u32 %v340, 16
      %v525 = vrot.slane %v523, 4
      %v526 = vor.u32 %v525, %v521
      %v527 = vrot.slane %v526, 4
      %v529 = vshll.u32 %v341, 16
      %v531 = vrot.slane %v529, 5
      %v532 = vsel %vm488, %v527, %v531
      %v533 = vshrl.u32 %v341, 16
      %v535 = vrot.slane %v533, 4
      %v536 = vor.u32 %v535, %v531
      %v537 = vrot.slane %v536, 4
      %v539 = vshll.u32 %v342, 16
      %v541 = vrot.slane %v539, 5
      %v542 = vsel %vm488, %v537, %v541
      %v543 = vshrl.u32 %v342, 16
      %v545 = vrot.slane %v543, 4
      %v546 = vor.u32 %v545, %v541
      %v547 = vrot.slane %v546, 4
      %v549 = vshll.u32 %v343, 16
      %v551 = vrot.slane %v549, 5
      %v552 = vsel %vm488, %v547, %v551
      %v553 = vshrl.u32 %v343, 16
      %v555 = vrot.slane %v553, 4
      %v556 = vor.u32 %v555, %v551
      %v557 = vrot.slane %v556, 4
      %v559 = vshll.u32 %v344, 16
      %v561 = vrot.slane %v559, 5
      %v562 = vsel %vm488, %v557, %v561
      %v563 = vshrl.u32 %v344, 16
      %v565 = vrot.slane %v563, 4
      %v566 = vor.u32 %v565, %v561
      %v567 = vrot.slane %v566, 4
      %v569 = vshll.u32 %v345, 16
      %v571 = vrot.slane %v569, 5
      %v572 = vsel %vm488, %v567, %v571
      %v574 = vshrl.u32 %v346, 16
      %v576 = vrot.slane %v574, 4
      %v577 = vshll.u32 %v346, 16
      %v579 = vrot.slane %v577, 5
      %v580 = vor.u32 %v576, %v579
      %v581 = vrot.slane %v580, 4
      %v583 = vshll.u32 %v347, 16
      %v585 = vrot.slane %v583, 5
      %v586 = vsel %vm488, %v581, %v585
      %v587 = vshrl.u32 %v347, 16
      %v589 = vrot.slane %v587, 4
      %v590 = vor.u32 %v589, %v585
      %v591 = vrot.slane %v590, 4
      %v593 = vshll.u32 %v348, 16
      %v595 = vrot.slane %v593, 5
      %v596 = vsel %vm488, %v591, %v595
      %v597 = vshrl.u32 %v348, 16
      %v599 = vrot.slane %v597, 4
      %v600 = vor.u32 %v599, %v595
      %v601 = vrot.slane %v600, 4
      %v603 = vshll.u32 %v349, 16
      %v605 = vrot.slane %v603, 5
      %v606 = vsel %vm488, %v601, %v605
      %v607 = vshrl.u32 %v349, 16
      %v609 = vrot.slane %v607, 4
      %v610 = vor.u32 %v609, %v605
      %v611 = vrot.slane %v610, 4
      %v613 = vshll.u32 %v350, 16
      %v615 = vrot.slane %v613, 5
      %v616 = vsel %vm488, %v611, %v615
      %v617 = vshrl.u32 %v350, 16
      %v619 = vrot.slane %v617, 4
      %v620 = vor.u32 %v619, %v615
      %v621 = vrot.slane %v620, 4
      %v623 = vshll.u32 %v351, 16
      %v625 = vrot.slane %v623, 5
      %v626 = vsel %vm488, %v621, %v625
      %v627 = vshrl.u32 %v351, 16
      %v629 = vrot.slane %v627, 4
      %v630 = vor.u32 %v629, %v625
      %v631 = vrot.slane %v630, 4
      %v633 = vshll.u32 %v352, 16
      %v635 = vrot.slane %v633, 5
      %v636 = vsel %vm488, %v631, %v635
      %v637 = vshrl.u32 %v352, 16
      %v639 = vrot.slane %v637, 4
      %v640 = vor.u32 %v639, %v635
      %v641 = vrot.slane %v640, 4
      %v643 = vshll.u32 %v353, 16
      %v645 = vrot.slane %v643, 5
      %v646 = vsel %vm488, %v641, %v645
      %v647 = vshrl.u32 %v353, 16
      %v649 = vrot.slane %v647, 4
      %v650 = vor.u32 %v649, %v645
      %v651 = vrot.slane %v650, 4
      %v653 = vshll.u32 %v354, 16
      %v655 = vrot.slane %v653, 5
      %v656 = vsel %vm488, %v651, %v655
      %v658 = vshrl.u32 %v355, 16
      %v660 = vrot.slane %v658, 4
      %v661 = vshll.u32 %v355, 16
      %v663 = vrot.slane %v661, 5
      %v664 = vor.u32 %v660, %v663
      %v665 = vrot.slane %v664, 4
      %v667 = vshll.u32 %v356, 16
      %v669 = vrot.slane %v667, 5
      %v670 = vsel %vm488, %v665, %v669
      %v671 = vshrl.u32 %v356, 16
      %v673 = vrot.slane %v671, 4
      %v674 = vor.u32 %v673, %v669
      %v675 = vrot.slane %v674, 4
      %v677 = vshll.u32 %v357, 16
      %v679 = vrot.slane %v677, 5
      %v680 = vsel %vm488, %v675, %v679
      %v681 = vshrl.u32 %v357, 16
      %v683 = vrot.slane %v681, 4
      %v684 = vor.u32 %v683, %v679
      %v685 = vrot.slane %v684, 4
      %v687 = vshll.u32 %v358, 16
      %v689 = vrot.slane %v687, 5
      %v690 = vsel %vm488, %v685, %v689
      %v691 = vshrl.u32 %v358, 16
      %v693 = vrot.slane %v691, 4
      %v694 = vor.u32 %v693, %v689
      %v695 = vrot.slane %v694, 4
      %v697 = vshll.u32 %v359, 16
      %v699 = vrot.slane %v697, 5
      %v700 = vsel %vm488, %v695, %v699
      %v701 = vshrl.u32 %v359, 16
      %v703 = vrot.slane %v701, 4
      %v704 = vor.u32 %v703, %v699
      %v705 = vrot.slane %v704, 4
      %v707 = vshll.u32 %v360, 16
      %v709 = vrot.slane %v707, 5
      %v710 = vsel %vm488, %v705, %v709
      %v711 = vshrl.u32 %v360, 16
      %v713 = vrot.slane %v711, 4
      %v714 = vor.u32 %v713, %v709
      %v715 = vrot.slane %v714, 4
      %v717 = vshll.u32 %v361, 16
      %v719 = vrot.slane %v717, 5
      %v720 = vsel %vm488, %v715, %v719
      %v721 = vshrl.u32 %v361, 16
      %v723 = vrot.slane %v721, 4
      %v724 = vor.u32 %v723, %v719
      %v725 = vrot.slane %v724, 4
      %v727 = vshll.u32 %v362, 16
      %v729 = vrot.slane %v727, 5
      %v730 = vsel %vm488, %v725, %v729
      %v731 = vshrl.u32 %v362, 16
      %v733 = vrot.slane %v731, 4
      %v734 = vor.u32 %v733, %v729
      %v735 = vrot.slane %v734, 4
      %v737 = vshll.u32 %v363, 16
      %v739 = vrot.slane %v737, 5
      %v740 = vsel %vm488, %v735, %v739
      %v742 = vshrl.u32 %v364, 16
      %v744 = vrot.slane %v742, 4
      %v745 = vshll.u32 %v364, 16
      %v747 = vrot.slane %v745, 5
      %v748 = vor.u32 %v744, %v747
      %v749 = vrot.slane %v748, 4
      %v751 = vshll.u32 %v365, 16
      %v753 = vrot.slane %v751, 5
      %v754 = vsel %vm488, %v749, %v753
      %v755 = vshrl.u32 %v365, 16
      %v757 = vrot.slane %v755, 4
      %v758 = vor.u32 %v757, %v753
      %v759 = vrot.slane %v758, 4
      %v761 = vshll.u32 %v366, 16
      %v763 = vrot.slane %v761, 5
      %v764 = vsel %vm488, %v759, %v763
      %v765 = vshrl.u32 %v366, 16
      %v767 = vrot.slane %v765, 4
      %v768 = vor.u32 %v767, %v763
      %v769 = vrot.slane %v768, 4
      %v771 = vshll.u32 %v367, 16
      %v773 = vrot.slane %v771, 5
      %v774 = vsel %vm488, %v769, %v773
      %v775 = vshrl.u32 %v367, 16
      %v777 = vrot.slane %v775, 4
      %v778 = vor.u32 %v777, %v773
      %v779 = vrot.slane %v778, 4
      %v781 = vshll.u32 %v368, 16
      %v783 = vrot.slane %v781, 5
      %v784 = vsel %vm488, %v779, %v783
      %v785 = vshrl.u32 %v368, 16
      %v787 = vrot.slane %v785, 4
      %v788 = vor.u32 %v787, %v783
      %v789 = vrot.slane %v788, 4
      %v791 = vshll.u32 %v369, 16
      %v793 = vrot.slane %v791, 5
      %v794 = vsel %vm488, %v789, %v793
      %v795 = vshrl.u32 %v369, 16
      %v797 = vrot.slane %v795, 4
      %v798 = vor.u32 %v797, %v793
      %v799 = vrot.slane %v798, 4
      %v801 = vshll.u32 %v370, 16
      %v803 = vrot.slane %v801, 5
      %v804 = vsel %vm488, %v799, %v803
      %v805 = vshrl.u32 %v370, 16
      %v807 = vrot.slane %v805, 4
      %v808 = vor.u32 %v807, %v803
      %v809 = vrot.slane %v808, 4
      %v811 = vshll.u32 %v371, 16
      %v813 = vrot.slane %v811, 5
      %v814 = vsel %vm488, %v809, %v813
      %v815 = vshrl.u32 %v371, 16
      %v817 = vrot.slane %v815, 4
      %v818 = vor.u32 %v817, %v813
      %v819 = vrot.slane %v818, 4
      %v821 = vshll.u32 %v372, 16
      %v823 = vrot.slane %v821, 5
      %v824 = vsel %vm488, %v819, %v823
      %v826 = vshrl.u32 %v373, 16
      %v828 = vrot.slane %v826, 4
      %v829 = vshll.u32 %v373, 16
      %v831 = vrot.slane %v829, 5
      %v832 = vor.u32 %v828, %v831
      %v833 = vrot.slane %v832, 4
      %v835 = vshll.u32 %v374, 16
      %v837 = vrot.slane %v835, 5
      %v838 = vsel %vm488, %v833, %v837
      %v839 = vshrl.u32 %v374, 16
      %v841 = vrot.slane %v839, 4
      %v842 = vor.u32 %v841, %v837
      %v843 = vrot.slane %v842, 4
      %v845 = vshll.u32 %v375, 16
      %v847 = vrot.slane %v845, 5
      %v848 = vsel %vm488, %v843, %v847
      %v849 = vshrl.u32 %v375, 16
      %v851 = vrot.slane %v849, 4
      %v852 = vor.u32 %v851, %v847
      %v853 = vrot.slane %v852, 4
      %v855 = vshll.u32 %v376, 16
      %v857 = vrot.slane %v855, 5
      %v858 = vsel %vm488, %v853, %v857
      %v859 = vshrl.u32 %v376, 16
      %v861 = vrot.slane %v859, 4
      %v862 = vor.u32 %v861, %v857
      %v863 = vrot.slane %v862, 4
      %v865 = vshll.u32 %v377, 16
      %v867 = vrot.slane %v865, 5
      %v868 = vsel %vm488, %v863, %v867
      %v869 = vshrl.u32 %v377, 16
      %v871 = vrot.slane %v869, 4
      %v872 = vor.u32 %v871, %v867
      %v873 = vrot.slane %v872, 4
      %v875 = vshll.u32 %v378, 16
      %v877 = vrot.slane %v875, 5
      %v878 = vsel %vm488, %v873, %v877
      %v879 = vshrl.u32 %v378, 16
      %v881 = vrot.slane %v879, 4
      %v882 = vor.u32 %v881, %v877
      %v883 = vrot.slane %v882, 4
      %v885 = vshll.u32 %v379, 16
      %v887 = vrot.slane %v885, 5
      %v888 = vsel %vm488, %v883, %v887
      %v889 = vshrl.u32 %v379, 16
      %v891 = vrot.slane %v889, 4
      %v892 = vor.u32 %v891, %v887
      %v893 = vrot.slane %v892, 4
      %v895 = vshll.u32 %v380, 16
      %v897 = vrot.slane %v895, 5
      %v898 = vsel %vm488, %v893, %v897
      %v899 = vshrl.u32 %v380, 16
      %v901 = vrot.slane %v899, 4
      %v902 = vor.u32 %v901, %v897
      %v903 = vrot.slane %v902, 4
      %v905 = vshll.u32 %v381, 16
      %v907 = vrot.slane %v905, 5
      %v908 = vsel %vm488, %v903, %v907
      %v910 = vshrl.u32 %v382, 16
      %v912 = vrot.slane %v910, 4
      %v913 = vshll.u32 %v382, 16
      %v915 = vrot.slane %v913, 5
      %v916 = vor.u32 %v912, %v915
      %v917 = vrot.slane %v916, 4
      %v919 = vshll.u32 %v383, 16
      %v921 = vrot.slane %v919, 5
      %v922 = vsel %vm488, %v917, %v921
      %v923 = vshrl.u32 %v383, 16
      %v925 = vrot.slane %v923, 4
      %v926 = vor.u32 %v925, %v921
      %v927 = vrot.slane %v926, 4
      %v929 = vshll.u32 %v384, 16
      %v931 = vrot.slane %v929, 5
      %v932 = vsel %vm488, %v927, %v931
      %v933 = vshrl.u32 %v384, 16
      %v935 = vrot.slane %v933, 4
      %v936 = vor.u32 %v935, %v931
      %v937 = vrot.slane %v936, 4
      %v939 = vshll.u32 %v385, 16
      %v941 = vrot.slane %v939, 5
      %v942 = vsel %vm488, %v937, %v941
      %v943 = vshrl.u32 %v385, 16
      %v945 = vrot.slane %v943, 4
      %v946 = vor.u32 %v945, %v941
      %v947 = vrot.slane %v946, 4
      %v949 = vshll.u32 %v386, 16
      %v951 = vrot.slane %v949, 5
      %v952 = vsel %vm488, %v947, %v951
      %v953 = vshrl.u32 %v386, 16
      %v955 = vrot.slane %v953, 4
      %v956 = vor.u32 %v955, %v951
      %v957 = vrot.slane %v956, 4
      %v959 = vshll.u32 %v387, 16
      %v961 = vrot.slane %v959, 5
      %v962 = vsel %vm488, %v957, %v961
      %v963 = vshrl.u32 %v387, 16
      %v965 = vrot.slane %v963, 4
      %v966 = vor.u32 %v965, %v961
      %v967 = vrot.slane %v966, 4
      %v969 = vshll.u32 %v388, 16
      %v971 = vrot.slane %v969, 5
      %v972 = vsel %vm488, %v967, %v971
      %v973 = vshrl.u32 %v388, 16
      %v975 = vrot.slane %v973, 4
      %v976 = vor.u32 %v975, %v971
      %v977 = vrot.slane %v976, 4
      %v979 = vshll.u32 %v389, 16
      %v981 = vrot.slane %v979, 5
      %v982 = vsel %vm488, %v977, %v981
      %v983 = vshrl.u32 %v389, 16
      %v985 = vrot.slane %v983, 4
      %v986 = vor.u32 %v985, %v981
      %v987 = vrot.slane %v986, 4
      %v989 = vshll.u32 %v390, 16
      %v991 = vrot.slane %v989, 5
      %v992 = vsel %vm488, %v987, %v991
      %v994 = vshrl.u32 %v391, 16
      %v996 = vrot.slane %v994, 4
      %v997 = vshll.u32 %v391, 16
      %v999 = vrot.slane %v997, 5
      %v1000 = vor.u32 %v996, %v999
      %v1001 = vrot.slane %v1000, 4
      %v1003 = vshll.u32 %v392, 16
      %v1005 = vrot.slane %v1003, 5
      %v1006 = vsel %vm488, %v1001, %v1005
      %v1007 = vshrl.u32 %v392, 16
      %v1009 = vrot.slane %v1007, 4
      %v1010 = vor.u32 %v1009, %v1005
      %v1011 = vrot.slane %v1010, 4
      %v1013 = vshll.u32 %v393, 16
      %v1015 = vrot.slane %v1013, 5
      %v1016 = vsel %vm488, %v1011, %v1015
      %v1017 = vshrl.u32 %v393, 16
      %v1019 = vrot.slane %v1017, 4
      %v1020 = vor.u32 %v1019, %v1015
      %v1021 = vrot.slane %v1020, 4
      %v1023 = vshll.u32 %v394, 16
      %v1025 = vrot.slane %v1023, 5
      %v1026 = vsel %vm488, %v1021, %v1025
      %v1027 = vshrl.u32 %v394, 16
      %v1029 = vrot.slane %v1027, 4
      %v1030 = vor.u32 %v1029, %v1025
      %v1031 = vrot.slane %v1030, 4
      %v1033 = vshll.u32 %v395, 16
      %v1035 = vrot.slane %v1033, 5
      %v1036 = vsel %vm488, %v1031, %v1035
      %v1037 = vshrl.u32 %v395, 16
      %v1039 = vrot.slane %v1037, 4
      %v1040 = vor.u32 %v1039, %v1035
      %v1041 = vrot.slane %v1040, 4
      %v1043 = vshll.u32 %v396, 16
      %v1045 = vrot.slane %v1043, 5
      %v1046 = vsel %vm488, %v1041, %v1045
      %v1047 = vshrl.u32 %v396, 16
      %v1049 = vrot.slane %v1047, 4
      %v1050 = vor.u32 %v1049, %v1045
      %v1051 = vrot.slane %v1050, 4
      %v1053 = vshll.u32 %v397, 16
      %v1055 = vrot.slane %v1053, 5
      %v1056 = vsel %vm488, %v1051, %v1055
      %v1057 = vshrl.u32 %v397, 16
      %v1059 = vrot.slane %v1057, 4
      %v1060 = vor.u32 %v1059, %v1055
      %v1061 = vrot.slane %v1060, 4
      %v1063 = vshll.u32 %v398, 16
      %v1065 = vrot.slane %v1063, 5
      %v1066 = vsel %vm488, %v1061, %v1065
      %v1067 = vshrl.u32 %v398, 16
      %v1069 = vrot.slane %v1067, 4
      %v1070 = vor.u32 %v1069, %v1065
      %v1071 = vrot.slane %v1070, 4
      %v1073 = vshll.u32 %v399, 16
      %v1075 = vrot.slane %v1073, 5
      %v1076 = vsel %vm488, %v1071, %v1075
      %v1078 = vshrl.u32 %v400, 16
      %v1080 = vrot.slane %v1078, 4
      %v1081 = vshll.u32 %v400, 16
      %v1083 = vrot.slane %v1081, 5
      %v1084 = vor.u32 %v1080, %v1083
      %v1085 = vrot.slane %v1084, 4
      %v1087 = vshll.u32 %v401, 16
      %v1089 = vrot.slane %v1087, 5
      %v1090 = vsel %vm488, %v1085, %v1089
      %v1091 = vshrl.u32 %v401, 16
      %v1093 = vrot.slane %v1091, 4
      %v1094 = vor.u32 %v1093, %v1089
      %v1095 = vrot.slane %v1094, 4
      %v1097 = vshll.u32 %v402, 16
      %v1099 = vrot.slane %v1097, 5
      %v1100 = vsel %vm488, %v1095, %v1099
      %v1101 = vshrl.u32 %v402, 16
      %v1103 = vrot.slane %v1101, 4
      %v1104 = vor.u32 %v1103, %v1099
      %v1105 = vrot.slane %v1104, 4
      %v1107 = vshll.u32 %v403, 16
      %v1109 = vrot.slane %v1107, 5
      %v1110 = vsel %vm488, %v1105, %v1109
      %v1111 = vshrl.u32 %v403, 16
      %v1113 = vrot.slane %v1111, 4
      %v1114 = vor.u32 %v1113, %v1109
      %v1115 = vrot.slane %v1114, 4
      %v1117 = vshll.u32 %v404, 16
      %v1119 = vrot.slane %v1117, 5
      %v1120 = vsel %vm488, %v1115, %v1119
      %v1121 = vshrl.u32 %v404, 16
      %v1123 = vrot.slane %v1121, 4
      %v1124 = vor.u32 %v1123, %v1119
      %v1125 = vrot.slane %v1124, 4
      %v1127 = vshll.u32 %v405, 16
      %v1129 = vrot.slane %v1127, 5
      %v1130 = vsel %vm488, %v1125, %v1129
      %v1131 = vshrl.u32 %v405, 16
      %v1133 = vrot.slane %v1131, 4
      %v1134 = vor.u32 %v1133, %v1129
      %v1135 = vrot.slane %v1134, 4
      %v1137 = vshll.u32 %v406, 16
      %v1139 = vrot.slane %v1137, 5
      %v1140 = vsel %vm488, %v1135, %v1139
      %v1141 = vshrl.u32 %v406, 16
      %v1143 = vrot.slane %v1141, 4
      %v1144 = vor.u32 %v1143, %v1139
      %v1145 = vrot.slane %v1144, 4
      %v1147 = vshll.u32 %v407, 16
      %v1149 = vrot.slane %v1147, 5
      %v1150 = vsel %vm488, %v1145, %v1149
      %v1151 = vshrl.u32 %v407, 16
      %v1153 = vrot.slane %v1151, 4
      %v1154 = vor.u32 %v1153, %v1149
      %v1155 = vrot.slane %v1154, 4
      %v1157 = vshll.u32 %v408, 16
      %v1159 = vrot.slane %v1157, 5
      %v1160 = vsel %vm488, %v1155, %v1159
      %v1162 = vshrl.u32 %v409, 16
      %v1164 = vrot.slane %v1162, 4
      %v1165 = vshll.u32 %v409, 16
      %v1167 = vrot.slane %v1165, 5
      %v1168 = vor.u32 %v1164, %v1167
      %v1169 = vrot.slane %v1168, 4
      %v1171 = vshll.u32 %v410, 16
      %v1173 = vrot.slane %v1171, 5
      %v1174 = vsel %vm488, %v1169, %v1173
      %v1175 = vshrl.u32 %v410, 16
      %v1177 = vrot.slane %v1175, 4
      %v1178 = vor.u32 %v1177, %v1173
      %v1179 = vrot.slane %v1178, 4
      %v1181 = vshll.u32 %v411, 16
      %v1183 = vrot.slane %v1181, 5
      %v1184 = vsel %vm488, %v1179, %v1183
      %v1185 = vshrl.u32 %v411, 16
      %v1187 = vrot.slane %v1185, 4
      %v1188 = vor.u32 %v1187, %v1183
      %v1189 = vrot.slane %v1188, 4
      %v1191 = vshll.u32 %v412, 16
      %v1193 = vrot.slane %v1191, 5
      %v1194 = vsel %vm488, %v1189, %v1193
      %v1195 = vshrl.u32 %v412, 16
      %v1197 = vrot.slane %v1195, 4
      %v1198 = vor.u32 %v1197, %v1193
      %v1199 = vrot.slane %v1198, 4
      %v1201 = vshll.u32 %v413, 16
      %v1203 = vrot.slane %v1201, 5
      %v1204 = vsel %vm488, %v1199, %v1203
      %v1205 = vshrl.u32 %v413, 16
      %v1207 = vrot.slane %v1205, 4
      %v1208 = vor.u32 %v1207, %v1203
      %v1209 = vrot.slane %v1208, 4
      %v1211 = vshll.u32 %v414, 16
      %v1213 = vrot.slane %v1211, 5
      %v1214 = vsel %vm488, %v1209, %v1213
      %v1215 = vshrl.u32 %v414, 16
      %v1217 = vrot.slane %v1215, 4
      %v1218 = vor.u32 %v1217, %v1213
      %v1219 = vrot.slane %v1218, 4
      %v1221 = vshll.u32 %v415, 16
      %v1223 = vrot.slane %v1221, 5
      %v1224 = vsel %vm488, %v1219, %v1223
      %v1225 = vshrl.u32 %v415, 16
      %v1227 = vrot.slane %v1225, 4
      %v1228 = vor.u32 %v1227, %v1223
      %v1229 = vrot.slane %v1228, 4
      %v1231 = vshll.u32 %v416, 16
      %v1233 = vrot.slane %v1231, 5
      %v1234 = vsel %vm488, %v1229, %v1233
      %v1235 = vshrl.u32 %v416, 16
      %v1237 = vrot.slane %v1235, 4
      %v1238 = vor.u32 %v1237, %v1233
      %v1239 = vrot.slane %v1238, 4
      %v1241 = vshll.u32 %v417, 16
      %v1243 = vrot.slane %v1241, 5
      %v1244 = vsel %vm488, %v1239, %v1243
      %v1246 = vshrl.u32 %v418, 16
      %v1248 = vrot.slane %v1246, 4
      %v1249 = vshll.u32 %v418, 16
      %v1251 = vrot.slane %v1249, 5
      %v1252 = vor.u32 %v1248, %v1251
      %v1253 = vrot.slane %v1252, 4
      %v1255 = vshll.u32 %v419, 16
      %v1257 = vrot.slane %v1255, 5
      %v1258 = vsel %vm488, %v1253, %v1257
      %v1259 = vshrl.u32 %v419, 16
      %v1261 = vrot.slane %v1259, 4
      %v1262 = vor.u32 %v1261, %v1257
      %v1263 = vrot.slane %v1262, 4
      %v1265 = vshll.u32 %v420, 16
      %v1267 = vrot.slane %v1265, 5
      %v1268 = vsel %vm488, %v1263, %v1267
      %v1269 = vshrl.u32 %v420, 16
      %v1271 = vrot.slane %v1269, 4
      %v1272 = vor.u32 %v1271, %v1267
      %v1273 = vrot.slane %v1272, 4
      %v1275 = vshll.u32 %v421, 16
      %v1277 = vrot.slane %v1275, 5
      %v1278 = vsel %vm488, %v1273, %v1277
      %v1279 = vshrl.u32 %v421, 16
      %v1281 = vrot.slane %v1279, 4
      %v1282 = vor.u32 %v1281, %v1277
      %v1283 = vrot.slane %v1282, 4
      %v1285 = vshll.u32 %v422, 16
      %v1287 = vrot.slane %v1285, 5
      %v1288 = vsel %vm488, %v1283, %v1287
      %v1289 = vshrl.u32 %v422, 16
      %v1291 = vrot.slane %v1289, 4
      %v1292 = vor.u32 %v1291, %v1287
      %v1293 = vrot.slane %v1292, 4
      %v1295 = vshll.u32 %v423, 16
      %v1297 = vrot.slane %v1295, 5
      %v1298 = vsel %vm488, %v1293, %v1297
      %v1299 = vshrl.u32 %v423, 16
      %v1301 = vrot.slane %v1299, 4
      %v1302 = vor.u32 %v1301, %v1297
      %v1303 = vrot.slane %v1302, 4
      %v1305 = vshll.u32 %v424, 16
      %v1307 = vrot.slane %v1305, 5
      %v1308 = vsel %vm488, %v1303, %v1307
      %v1309 = vshrl.u32 %v424, 16
      %v1311 = vrot.slane %v1309, 4
      %v1312 = vor.u32 %v1311, %v1307
      %v1313 = vrot.slane %v1312, 4
      %v1315 = vshll.u32 %v425, 16
      %v1317 = vrot.slane %v1315, 5
      %v1318 = vsel %vm488, %v1313, %v1317
      %v1319 = vshrl.u32 %v425, 16
      %v1321 = vrot.slane %v1319, 4
      %v1322 = vor.u32 %v1321, %v1317
      %v1323 = vrot.slane %v1322, 4
      %v1325 = vshll.u32 %v426, 16
      %v1327 = vrot.slane %v1325, 5
      %v1328 = vsel %vm488, %v1323, %v1327
      %v1330 = vshrl.u32 %v427, 16
      %v1332 = vrot.slane %v1330, 4
      %v1333 = vshll.u32 %v427, 16
      %v1335 = vrot.slane %v1333, 5
      %v1336 = vor.u32 %v1332, %v1335
      %v1337 = vrot.slane %v1336, 4
      %v1339 = vshll.u32 %v428, 16
      %v1341 = vrot.slane %v1339, 5
      %v1342 = vsel %vm488, %v1337, %v1341
      %v1343 = vshrl.u32 %v428, 16
      %v1345 = vrot.slane %v1343, 4
      %v1346 = vor.u32 %v1345, %v1341
      %v1347 = vrot.slane %v1346, 4
      %v1349 = vshll.u32 %v429, 16
      %v1351 = vrot.slane %v1349, 5
      %v1352 = vsel %vm488, %v1347, %v1351
      %v1353 = vshrl.u32 %v429, 16
      %v1355 = vrot.slane %v1353, 4
      %v1356 = vor.u32 %v1355, %v1351
      %v1357 = vrot.slane %v1356, 4
      %v1359 = vshll.u32 %v430, 16
      %v1361 = vrot.slane %v1359, 5
      %v1362 = vsel %vm488, %v1357, %v1361
      %v1363 = vshrl.u32 %v430, 16
      %v1365 = vrot.slane %v1363, 4
      %v1366 = vor.u32 %v1365, %v1361
      %v1367 = vrot.slane %v1366, 4
      %v1369 = vshll.u32 %v431, 16
      %v1371 = vrot.slane %v1369, 5
      %v1372 = vsel %vm488, %v1367, %v1371
      %v1373 = vshrl.u32 %v431, 16
      %v1375 = vrot.slane %v1373, 4
      %v1376 = vor.u32 %v1375, %v1371
      %v1377 = vrot.slane %v1376, 4
      %v1379 = vshll.u32 %v432, 16
      %v1381 = vrot.slane %v1379, 5
      %v1382 = vsel %vm488, %v1377, %v1381
      %v1383 = vshrl.u32 %v432, 16
      %v1385 = vrot.slane %v1383, 4
      %v1386 = vor.u32 %v1385, %v1381
      %v1387 = vrot.slane %v1386, 4
      %v1389 = vshll.u32 %v433, 16
      %v1391 = vrot.slane %v1389, 5
      %v1392 = vsel %vm488, %v1387, %v1391
      %v1393 = vshrl.u32 %v433, 16
      %v1395 = vrot.slane %v1393, 4
      %v1396 = vor.u32 %v1395, %v1391
      %v1397 = vrot.slane %v1396, 4
      %v1399 = vshll.u32 %v434, 16
      %v1401 = vrot.slane %v1399, 5
      %v1402 = vsel %vm488, %v1397, %v1401
      %v1403 = vshrl.u32 %v434, 16
      %v1405 = vrot.slane %v1403, 4
      %v1406 = vor.u32 %v1405, %v1401
      %v1407 = vrot.slane %v1406, 4
      %v1409 = vshll.u32 %v435, 16
      %v1411 = vrot.slane %v1409, 5
      %v1412 = vsel %vm488, %v1407, %v1411
      %v1414 = vshrl.u32 %v436, 16
      %v1416 = vrot.slane %v1414, 4
      %v1417 = vshll.u32 %v436, 16
      %v1419 = vrot.slane %v1417, 5
      %v1420 = vor.u32 %v1416, %v1419
      %v1421 = vrot.slane %v1420, 4
      %v1423 = vshll.u32 %v437, 16
      %v1425 = vrot.slane %v1423, 5
      %v1426 = vsel %vm488, %v1421, %v1425
      %v1427 = vshrl.u32 %v437, 16
      %v1429 = vrot.slane %v1427, 4
      %v1430 = vor.u32 %v1429, %v1425
      %v1431 = vrot.slane %v1430, 4
      %v1433 = vshll.u32 %v438, 16
      %v1435 = vrot.slane %v1433, 5
      %v1436 = vsel %vm488, %v1431, %v1435
      %v1437 = vshrl.u32 %v438, 16
      %v1439 = vrot.slane %v1437, 4
      %v1440 = vor.u32 %v1439, %v1435
      %v1441 = vrot.slane %v1440, 4
      %v1443 = vshll.u32 %v439, 16
      %v1445 = vrot.slane %v1443, 5
      %v1446 = vsel %vm488, %v1441, %v1445
      %v1447 = vshrl.u32 %v439, 16
      %v1449 = vrot.slane %v1447, 4
      %v1450 = vor.u32 %v1449, %v1445
      %v1451 = vrot.slane %v1450, 4
      %v1453 = vshll.u32 %v440, 16
      %v1455 = vrot.slane %v1453, 5
      %v1456 = vsel %vm488, %v1451, %v1455
      %v1457 = vshrl.u32 %v440, 16
      %v1459 = vrot.slane %v1457, 4
      %v1460 = vor.u32 %v1459, %v1455
      %v1461 = vrot.slane %v1460, 4
      %v1463 = vshll.u32 %v441, 16
      %v1465 = vrot.slane %v1463, 5
      %v1466 = vsel %vm488, %v1461, %v1465
      %v1467 = vshrl.u32 %v441, 16
      %v1469 = vrot.slane %v1467, 4
      %v1470 = vor.u32 %v1469, %v1465
      %v1471 = vrot.slane %v1470, 4
      %v1473 = vshll.u32 %v442, 16
      %v1475 = vrot.slane %v1473, 5
      %v1476 = vsel %vm488, %v1471, %v1475
      %v1477 = vshrl.u32 %v442, 16
      %v1479 = vrot.slane %v1477, 4
      %v1480 = vor.u32 %v1479, %v1475
      %v1481 = vrot.slane %v1480, 4
      %v1483 = vshll.u32 %v443, 16
      %v1485 = vrot.slane %v1483, 5
      %v1486 = vsel %vm488, %v1481, %v1485
      %v1487 = vshrl.u32 %v443, 16
      %v1489 = vrot.slane %v1487, 4
      %v1490 = vor.u32 %v1489, %v1485
      %v1491 = vrot.slane %v1490, 4
      %v1493 = vshll.u32 %v444, 16
      %v1495 = vrot.slane %v1493, 5
      %v1496 = vsel %vm488, %v1491, %v1495
      %v1498 = vshrl.u32 %v445, 16
      %v1500 = vrot.slane %v1498, 4
      %v1501 = vshll.u32 %v445, 16
      %v1503 = vrot.slane %v1501, 5
      %v1504 = vor.u32 %v1500, %v1503
      %v1505 = vrot.slane %v1504, 4
      %v1507 = vshll.u32 %v446, 16
      %v1509 = vrot.slane %v1507, 5
      %v1510 = vsel %vm488, %v1505, %v1509
      %v1511 = vshrl.u32 %v446, 16
      %v1513 = vrot.slane %v1511, 4
      %v1514 = vor.u32 %v1513, %v1509
      %v1515 = vrot.slane %v1514, 4
      %v1517 = vshll.u32 %v447, 16
      %v1519 = vrot.slane %v1517, 5
      %v1520 = vsel %vm488, %v1515, %v1519
      %v1521 = vshrl.u32 %v447, 16
      %v1523 = vrot.slane %v1521, 4
      %v1524 = vor.u32 %v1523, %v1519
      %v1525 = vrot.slane %v1524, 4
      %v1527 = vshll.u32 %v448, 16
      %v1529 = vrot.slane %v1527, 5
      %v1530 = vsel %vm488, %v1525, %v1529
      %v1531 = vshrl.u32 %v448, 16
      %v1533 = vrot.slane %v1531, 4
      %v1534 = vor.u32 %v1533, %v1529
      %v1535 = vrot.slane %v1534, 4
      %v1537 = vshll.u32 %v449, 16
      %v1539 = vrot.slane %v1537, 5
      %v1540 = vsel %vm488, %v1535, %v1539
      %v1541 = vshrl.u32 %v449, 16
      %v1543 = vrot.slane %v1541, 4
      %v1544 = vor.u32 %v1543, %v1539
      %v1545 = vrot.slane %v1544, 4
      %v1547 = vshll.u32 %v450, 16
      %v1549 = vrot.slane %v1547, 5
      %v1550 = vsel %vm488, %v1545, %v1549
      %v1551 = vshrl.u32 %v450, 16
      %v1553 = vrot.slane %v1551, 4
      %v1554 = vor.u32 %v1553, %v1549
      %v1555 = vrot.slane %v1554, 4
      %v1557 = vshll.u32 %v451, 16
      %v1559 = vrot.slane %v1557, 5
      %v1560 = vsel %vm488, %v1555, %v1559
      %v1561 = vshrl.u32 %v451, 16
      %v1563 = vrot.slane %v1561, 4
      %v1564 = vor.u32 %v1563, %v1559
      %v1565 = vrot.slane %v1564, 4
      %v1567 = vshll.u32 %v452, 16
      %v1569 = vrot.slane %v1567, 5
      %v1570 = vsel %vm488, %v1565, %v1569
      %v1571 = vshrl.u32 %v452, 16
      %v1573 = vrot.slane %v1571, 4
      %v1574 = vor.u32 %v1573, %v1569
      %v1575 = vrot.slane %v1574, 4
      %v1577 = vshll.u32 %v453, 16
      %v1579 = vrot.slane %v1577, 5
      %v1580 = vsel %vm488, %v1575, %v1579
      %v1582 = vshrl.u32 %v454, 16
      %v1584 = vrot.slane %v1582, 4
      %v1585 = vshll.u32 %v454, 16
      %v1587 = vrot.slane %v1585, 5
      %v1588 = vor.u32 %v1584, %v1587
      %v1589 = vrot.slane %v1588, 4
      %v1591 = vshll.u32 %v455, 16
      %v1593 = vrot.slane %v1591, 5
      %v1594 = vsel %vm488, %v1589, %v1593
      %v1595 = vshrl.u32 %v455, 16
      %v1597 = vrot.slane %v1595, 4
      %v1598 = vor.u32 %v1597, %v1593
      %v1599 = vrot.slane %v1598, 4
      %v1601 = vshll.u32 %v456, 16
      %v1603 = vrot.slane %v1601, 5
      %v1604 = vsel %vm488, %v1599, %v1603
      %v1605 = vshrl.u32 %v456, 16
      %v1607 = vrot.slane %v1605, 4
      %v1608 = vor.u32 %v1607, %v1603
      %v1609 = vrot.slane %v1608, 4
      %v1611 = vshll.u32 %v457, 16
      %v1613 = vrot.slane %v1611, 5
      %v1614 = vsel %vm488, %v1609, %v1613
      %v1615 = vshrl.u32 %v457, 16
      %v1617 = vrot.slane %v1615, 4
      %v1618 = vor.u32 %v1617, %v1613
      %v1619 = vrot.slane %v1618, 4
      %v1621 = vshll.u32 %v458, 16
      %v1623 = vrot.slane %v1621, 5
      %v1624 = vsel %vm488, %v1619, %v1623
      %v1625 = vshrl.u32 %v458, 16
      %v1627 = vrot.slane %v1625, 4
      %v1628 = vor.u32 %v1627, %v1623
      %v1629 = vrot.slane %v1628, 4
      %v1631 = vshll.u32 %v459, 16
      %v1633 = vrot.slane %v1631, 5
      %v1634 = vsel %vm488, %v1629, %v1633
      %v1635 = vshrl.u32 %v459, 16
      %v1637 = vrot.slane %v1635, 4
      %v1638 = vor.u32 %v1637, %v1633
      %v1639 = vrot.slane %v1638, 4
      %v1641 = vshll.u32 %v460, 16
      %v1643 = vrot.slane %v1641, 5
      %v1644 = vsel %vm488, %v1639, %v1643
      %v1645 = vshrl.u32 %v460, 16
      %v1647 = vrot.slane %v1645, 4
      %v1648 = vor.u32 %v1647, %v1643
      %v1649 = vrot.slane %v1648, 4
      %v1651 = vshll.u32 %v461, 16
      %v1653 = vrot.slane %v1651, 5
      %v1654 = vsel %vm488, %v1649, %v1653
      %v1655 = vshrl.u32 %v461, 16
      %v1657 = vrot.slane %v1655, 4
      %v1658 = vor.u32 %v1657, %v1653
      %v1659 = vrot.slane %v1658, 4
      %v1661 = vshll.u32 %v462, 16
      %v1663 = vrot.slane %v1661, 5
      %v1664 = vsel %vm488, %v1659, %v1663
      %v1666 = vshrl.u32 %v463, 16
      %v1668 = vrot.slane %v1666, 4
      %v1669 = vshll.u32 %v463, 16
      %v1671 = vrot.slane %v1669, 5
      %v1672 = vor.u32 %v1668, %v1671
      %v1673 = vrot.slane %v1672, 4
      %v1675 = vshll.u32 %v464, 16
      %v1677 = vrot.slane %v1675, 5
      %v1678 = vsel %vm488, %v1673, %v1677
      %v1679 = vshrl.u32 %v464, 16
      %v1681 = vrot.slane %v1679, 4
      %v1682 = vor.u32 %v1681, %v1677
      %v1683 = vrot.slane %v1682, 4
      %v1685 = vshll.u32 %v465, 16
      %v1687 = vrot.slane %v1685, 5
      %v1688 = vsel %vm488, %v1683, %v1687
      %v1689 = vshrl.u32 %v465, 16
      %v1691 = vrot.slane %v1689, 4
      %v1692 = vor.u32 %v1691, %v1687
      %v1693 = vrot.slane %v1692, 4
      %v1695 = vshll.u32 %v466, 16
      %v1697 = vrot.slane %v1695, 5
      %v1698 = vsel %vm488, %v1693, %v1697
      %v1699 = vshrl.u32 %v466, 16
      %v1701 = vrot.slane %v1699, 4
      %v1702 = vor.u32 %v1701, %v1697
      %v1703 = vrot.slane %v1702, 4
      %v1705 = vshll.u32 %v467, 16
      %v1707 = vrot.slane %v1705, 5
      %v1708 = vsel %vm488, %v1703, %v1707
      %v1709 = vshrl.u32 %v467, 16
      %v1711 = vrot.slane %v1709, 4
      %v1712 = vor.u32 %v1711, %v1707
      %v1713 = vrot.slane %v1712, 4
      %v1715 = vshll.u32 %v468, 16
      %v1717 = vrot.slane %v1715, 5
      %v1718 = vsel %vm488, %v1713, %v1717
      %v1719 = vshrl.u32 %v468, 16
      %v1721 = vrot.slane %v1719, 4
      %v1722 = vor.u32 %v1721, %v1717
      %v1723 = vrot.slane %v1722, 4
      %v1725 = vshll.u32 %v469, 16
      %v1727 = vrot.slane %v1725, 5
      %v1728 = vsel %vm488, %v1723, %v1727
      %v1729 = vshrl.u32 %v469, 16
      %v1731 = vrot.slane %v1729, 4
      %v1732 = vor.u32 %v1731, %v1727
      %v1733 = vrot.slane %v1732, 4
      %v1735 = vshll.u32 %v470, 16
      %v1737 = vrot.slane %v1735, 5
      %v1738 = vsel %vm488, %v1733, %v1737
      %v1739 = vshrl.u32 %v470, 16
      %v1741 = vrot.slane %v1739, 4
      %v1742 = vor.u32 %v1741, %v1737
      %v1743 = vrot.slane %v1742, 4
      %v1745 = vshll.u32 %v471, 16
      %v1747 = vrot.slane %v1745, 5
      %v1748 = vsel %vm488, %v1743, %v1747
      %v1750 = vshrl.u32 %v472, 16
      %v1752 = vrot.slane %v1750, 4
      %v1753 = vshll.u32 %v472, 16
      %v1755 = vrot.slane %v1753, 5
      %v1756 = vor.u32 %v1752, %v1755
      %v1757 = vrot.slane %v1756, 4
      %v1759 = vshll.u32 %v473, 16
      %v1761 = vrot.slane %v1759, 5
      %v1762 = vsel %vm488, %v1757, %v1761
      %v1763 = vshrl.u32 %v473, 16
      %v1765 = vrot.slane %v1763, 4
      %v1766 = vor.u32 %v1765, %v1761
      %v1767 = vrot.slane %v1766, 4
      %v1769 = vshll.u32 %v474, 16
      %v1771 = vrot.slane %v1769, 5
      %v1772 = vsel %vm488, %v1767, %v1771
      %v1773 = vshrl.u32 %v474, 16
      %v1775 = vrot.slane %v1773, 4
      %v1776 = vor.u32 %v1775, %v1771
      %v1777 = vrot.slane %v1776, 4
      %v1779 = vshll.u32 %v475, 16
      %v1781 = vrot.slane %v1779, 5
      %v1782 = vsel %vm488, %v1777, %v1781
      %v1783 = vshrl.u32 %v475, 16
      %v1785 = vrot.slane %v1783, 4
      %v1786 = vor.u32 %v1785, %v1781
      %v1787 = vrot.slane %v1786, 4
      %v1789 = vshll.u32 %v476, 16
      %v1791 = vrot.slane %v1789, 5
      %v1792 = vsel %vm488, %v1787, %v1791
      %v1793 = vshrl.u32 %v476, 16
      %v1795 = vrot.slane %v1793, 4
      %v1796 = vor.u32 %v1795, %v1791
      %v1797 = vrot.slane %v1796, 4
      %v1799 = vshll.u32 %v477, 16
      %v1801 = vrot.slane %v1799, 5
      %v1802 = vsel %vm488, %v1797, %v1801
      %v1803 = vshrl.u32 %v477, 16
      %v1805 = vrot.slane %v1803, 4
      %v1806 = vor.u32 %v1805, %v1801
      %v1807 = vrot.slane %v1806, 4
      %v1809 = vshll.u32 %v478, 16
      %v1811 = vrot.slane %v1809, 5
      %v1812 = vsel %vm488, %v1807, %v1811
      %v1813 = vshrl.u32 %v478, 16
      %v1815 = vrot.slane %v1813, 4
      %v1816 = vor.u32 %v1815, %v1811
      %v1817 = vrot.slane %v1816, 4
      %v1819 = vshll.u32 %v479, 16
      %v1821 = vrot.slane %v1819, 5
      %v1822 = vsel %vm488, %v1817, %v1821
      %v1823 = vshrl.u32 %v479, 16
      %v1825 = vrot.slane %v1823, 4
      %v1826 = vor.u32 %v1825, %v1821
      %v1827 = vrot.slane %v1826, 4
      %v1829 = vshll.u32 %v480, 16
      %v1831 = vrot.slane %v1829, 5
      %v1832 = vsel %vm488, %v1827, %v1831
      %v1833 = vunpack.c.l.b16 %v502
      %v1834 = vunpack.c.l.b16 %v512
      %v1835 = vunpack.c.l.b16 %v522
      %v1836 = vunpack.c.l.b16 %v532
      %v1837 = vunpack.c.l.b16 %v542
      %v1838 = vunpack.c.l.b16 %v552
      %v1839 = vunpack.c.l.b16 %v562
      %v1840 = vunpack.c.l.b16 %v572
      %v1841 = vunpack.c.l.b16 %v586
      %v1842 = vunpack.c.l.b16 %v596
      %v1843 = vunpack.c.l.b16 %v606
      %v1844 = vunpack.c.l.b16 %v616
      %v1845 = vunpack.c.l.b16 %v626
      %v1846 = vunpack.c.l.b16 %v636
      %v1847 = vunpack.c.l.b16 %v646
      %v1848 = vunpack.c.l.b16 %v656
      %v1849 = vunpack.c.l.b16 %v670
      %v1850 = vunpack.c.l.b16 %v680
      %v1851 = vunpack.c.l.b16 %v690
      %v1852 = vunpack.c.l.b16 %v700
      %v1853 = vunpack.c.l.b16 %v710
      %v1854 = vunpack.c.l.b16 %v720
      %v1855 = vunpack.c.l.b16 %v730
      %v1856 = vunpack.c.l.b16 %v740
      %v1857 = vunpack.c.l.b16 %v754
      %v1858 = vunpack.c.l.b16 %v764
      %v1859 = vunpack.c.l.b16 %v774
      %v1860 = vunpack.c.l.b16 %v784
      %v1861 = vunpack.c.l.b16 %v794
      %v1862 = vunpack.c.l.b16 %v804
      %v1863 = vunpack.c.l.b16 %v814
      %v1864 = vunpack.c.l.b16 %v824
      %v1865 = vunpack.c.l.b16 %v838
      %v1866 = vunpack.c.l.b16 %v848
      %v1867 = vunpack.c.l.b16 %v858
      %v1868 = vunpack.c.l.b16 %v868
      %v1869 = vunpack.c.l.b16 %v878
      %v1870 = vunpack.c.l.b16 %v888
      %v1871 = vunpack.c.l.b16 %v898
      %v1872 = vunpack.c.l.b16 %v908
      %v1873 = vunpack.c.l.b16 %v922
      %v1874 = vunpack.c.l.b16 %v932
      %v1875 = vunpack.c.l.b16 %v942
      %v1876 = vunpack.c.l.b16 %v952
      %v1877 = vunpack.c.l.b16 %v962
      %v1878 = vunpack.c.l.b16 %v972
      %v1879 = vunpack.c.l.b16 %v982
      %v1880 = vunpack.c.l.b16 %v992
      %v1881 = vunpack.c.l.b16 %v1006
      %v1882 = vunpack.c.l.b16 %v1016
      %v1883 = vunpack.c.l.b16 %v1026
      %v1884 = vunpack.c.l.b16 %v1036
      %v1885 = vunpack.c.l.b16 %v1046
      %v1886 = vunpack.c.l.b16 %v1056
      %v1887 = vunpack.c.l.b16 %v1066
      %v1888 = vunpack.c.l.b16 %v1076
      %v1889 = vunpack.c.l.b16 %v1090
      %v1890 = vunpack.c.l.b16 %v1100
      %v1891 = vunpack.c.l.b16 %v1110
      %v1892 = vunpack.c.l.b16 %v1120
      %v1893 = vunpack.c.l.b16 %v1130
      %v1894 = vunpack.c.l.b16 %v1140
      %v1895 = vunpack.c.l.b16 %v1150
      %v1896 = vunpack.c.l.b16 %v1160
      %v1897 = vunpack.c.l.b16 %v1174
      %v1898 = vunpack.c.l.b16 %v1184
      %v1899 = vunpack.c.l.b16 %v1194
      %v1900 = vunpack.c.l.b16 %v1204
      %v1901 = vunpack.c.l.b16 %v1214
      %v1902 = vunpack.c.l.b16 %v1224
      %v1903 = vunpack.c.l.b16 %v1234
      %v1904 = vunpack.c.l.b16 %v1244
      %v1905 = vunpack.c.l.b16 %v1258
      %v1906 = vunpack.c.l.b16 %v1268
      %v1907 = vunpack.c.l.b16 %v1278
      %v1908 = vunpack.c.l.b16 %v1288
      %v1909 = vunpack.c.l.b16 %v1298
      %v1910 = vunpack.c.l.b16 %v1308
      %v1911 = vunpack.c.l.b16 %v1318
      %v1912 = vunpack.c.l.b16 %v1328
      %v1913 = vunpack.c.l.b16 %v1342
      %v1914 = vunpack.c.l.b16 %v1352
      %v1915 = vunpack.c.l.b16 %v1362
      %v1916 = vunpack.c.l.b16 %v1372
      %v1917 = vunpack.c.l.b16 %v1382
      %v1918 = vunpack.c.l.b16 %v1392
      %v1919 = vunpack.c.l.b16 %v1402
      %v1920 = vunpack.c.l.b16 %v1412
      %v1921 = vunpack.c.l.b16 %v1426
      %v1922 = vunpack.c.l.b16 %v1436
      %v1923 = vunpack.c.l.b16 %v1446
      %v1924 = vunpack.c.l.b16 %v1456
      %v1925 = vunpack.c.l.b16 %v1466
      %v1926 = vunpack.c.l.b16 %v1476
      %v1927 = vunpack.c.l.b16 %v1486
      %v1928 = vunpack.c.l.b16 %v1496
      %v1929 = vunpack.c.l.b16 %v1510
      %v1930 = vunpack.c.l.b16 %v1520
      %v1931 = vunpack.c.l.b16 %v1530
      %v1932 = vunpack.c.l.b16 %v1540
      %v1933 = vunpack.c.l.b16 %v1550
      %v1934 = vunpack.c.l.b16 %v1560
      %v1935 = vunpack.c.l.b16 %v1570
      %v1936 = vunpack.c.l.b16 %v1580
      %v1937 = vunpack.c.l.b16 %v1594
      %v1938 = vunpack.c.l.b16 %v1604
      %v1939 = vunpack.c.l.b16 %v1614
      %v1940 = vunpack.c.l.b16 %v1624
      %v1941 = vunpack.c.l.b16 %v1634
      %v1942 = vunpack.c.l.b16 %v1644
      %v1943 = vunpack.c.l.b16 %v1654
      %v1944 = vunpack.c.l.b16 %v1664
      %v1945 = vunpack.c.l.b16 %v1678
      %v1946 = vunpack.c.l.b16 %v1688
      %v1947 = vunpack.c.l.b16 %v1698
      %v1948 = vunpack.c.l.b16 %v1708
      %v1949 = vunpack.c.l.b16 %v1718
      %v1950 = vunpack.c.l.b16 %v1728
      %v1951 = vunpack.c.l.b16 %v1738
      %v1952 = vunpack.c.l.b16 %v1748
      %v1953 = vunpack.c.l.b16 %v1762
      %v1954 = vunpack.c.l.b16 %v1772
      %v1955 = vunpack.c.l.b16 %v1782
      %v1956 = vunpack.c.l.b16 %v1792
      %v1957 = vunpack.c.l.b16 %v1802
      %v1958 = vunpack.c.l.b16 %v1812
      %v1959 = vunpack.c.l.b16 %v1822
      %v1960 = vunpack.c.l.b16 %v1832
      %v1961 = vpack.c.b16 %v1834, %v1833
      %v1962 = vpack.c.b16 %v1836, %v1835
      %v1963 = vpack.c.b16 %v1838, %v1837
      %v1964 = vpack.c.b16 %v1840, %v1839
      %v1965 = vpack.c.b16 %v1842, %v1841
      %v1966 = vpack.c.b16 %v1844, %v1843
      %v1967 = vpack.c.b16 %v1846, %v1845
      %v1968 = vpack.c.b16 %v1848, %v1847
      %v1969 = vpack.c.b16 %v1850, %v1849
      %v1970 = vpack.c.b16 %v1852, %v1851
      %v1971 = vpack.c.b16 %v1854, %v1853
      %v1972 = vpack.c.b16 %v1856, %v1855
      %v1973 = vpack.c.b16 %v1858, %v1857
      %v1974 = vpack.c.b16 %v1860, %v1859
      %v1975 = vpack.c.b16 %v1862, %v1861
      %v1976 = vpack.c.b16 %v1864, %v1863
      %v1977 = vpack.c.b16 %v1866, %v1865
      %v1978 = vpack.c.b16 %v1868, %v1867
      %v1979 = vpack.c.b16 %v1870, %v1869
      %v1980 = vpack.c.b16 %v1872, %v1871
      %v1981 = vpack.c.b16 %v1874, %v1873
      %v1982 = vpack.c.b16 %v1876, %v1875
      %v1983 = vpack.c.b16 %v1878, %v1877
      %v1984 = vpack.c.b16 %v1880, %v1879
      %v1985 = vpack.c.b16 %v1882, %v1881
      %v1986 = vpack.c.b16 %v1884, %v1883
      %v1987 = vpack.c.b16 %v1886, %v1885
      %v1988 = vpack.c.b16 %v1888, %v1887
      %v1989 = vpack.c.b16 %v1890, %v1889
      %v1990 = vpack.c.b16 %v1892, %v1891
      %v1991 = vpack.c.b16 %v1894, %v1893
      %v1992 = vpack.c.b16 %v1896, %v1895
      %v1993 = vpack.c.b16 %v1898, %v1897
      %v1994 = vpack.c.b16 %v1900, %v1899
      %v1995 = vpack.c.b16 %v1902, %v1901
      %v1996 = vpack.c.b16 %v1904, %v1903
      %v1997 = vpack.c.b16 %v1906, %v1905
      %v1998 = vpack.c.b16 %v1908, %v1907
      %v1999 = vpack.c.b16 %v1910, %v1909
      %v2000 = vpack.c.b16 %v1912, %v1911
      %v2001 = vpack.c.b16 %v1914, %v1913
      %v2002 = vpack.c.b16 %v1916, %v1915
      %v2003 = vpack.c.b16 %v1918, %v1917
      %v2004 = vpack.c.b16 %v1920, %v1919
      %v2005 = vpack.c.b16 %v1922, %v1921
      %v2006 = vpack.c.b16 %v1924, %v1923
      %v2007 = vpack.c.b16 %v1926, %v1925
      %v2008 = vpack.c.b16 %v1928, %v1927
      %v2009 = vpack.c.b16 %v1930, %v1929
      %v2010 = vpack.c.b16 %v1932, %v1931
      %v2011 = vpack.c.b16 %v1934, %v1933
      %v2012 = vpack.c.b16 %v1936, %v1935
      %v2013 = vpack.c.b16 %v1938, %v1937
      %v2014 = vpack.c.b16 %v1940, %v1939
      %v2015 = vpack.c.b16 %v1942, %v1941
      %v2016 = vpack.c.b16 %v1944, %v1943
      %v2017 = vpack.c.b16 %v1946, %v1945
      %v2018 = vpack.c.b16 %v1948, %v1947
      %v2019 = vpack.c.b16 %v1950, %v1949
      %v2020 = vpack.c.b16 %v1952, %v1951
      %v2021 = vpack.c.b16 %v1954, %v1953
      %v2022 = vpack.c.b16 %v1956, %v1955
      %v2023 = vpack.c.b16 %v1958, %v1957
      %v2024 = vpack.c.b16 %v1960, %v1959
      %v2026 = vunpack.c.l.b16 %v484
      %v2027 = vpack.c.b16 %v2026, %v2026
      %v2029 = vshrl.u32 %v2027, 16
      %v2031 = vrot.slane %v2029, 1
      %v2032 = vshll.u32 %v2027, 16
      %v2034 = vrot.slane %v2032, 2
      %v2035 = vor.u32 %v2031, %v2034
      %vm2036 = vcmask 23552
      %v2038 = vsel %vm2036, %v1961, 0
      %v2041 = vsel %vm2036, %v1962, 0
      %v2044 = vsel %vm2036, %v1963, 0
      %v2047 = vsel %vm2036, %v1964, 0
      %v2050 = vsel %vm2036, %v1965, 0
      %v2053 = vsel %vm2036, %v1966, 0
      %v2056 = vsel %vm2036, %v1967, 0
      %v2059 = vsel %vm2036, %v1968, 0
      %v2062 = vsel %vm2036, %v1969, 0
      %v2065 = vsel %vm2036, %v1970, 0
      %v2068 = vsel %vm2036, %v1971, 0
      %v2071 = vsel %vm2036, %v1972, 0
      %v2074 = vsel %vm2036, %v1973, 0
      %v2077 = vsel %vm2036, %v1974, 0
      %v2080 = vsel %vm2036, %v1975, 0
      %v2083 = vsel %vm2036, %v1976, 0
      %v2086 = vsel %vm2036, %v1977, 0
      %v2089 = vsel %vm2036, %v1978, 0
      %v2092 = vsel %vm2036, %v1979, 0
      %v2095 = vsel %vm2036, %v1980, 0
      %v2098 = vsel %vm2036, %v1981, 0
      %v2101 = vsel %vm2036, %v1982, 0
      %v2104 = vsel %vm2036, %v1983, 0
      %v2107 = vsel %vm2036, %v1984, 0
      %v2110 = vsel %vm2036, %v1985, 0
      %v2113 = vsel %vm2036, %v1986, 0
      %v2116 = vsel %vm2036, %v1987, 0
      %v2119 = vsel %vm2036, %v1988, 0
      %v2122 = vsel %vm2036, %v1989, 0
      %v2125 = vsel %vm2036, %v1990, 0
      %v2128 = vsel %vm2036, %v1991, 0
      %v2131 = vsel %vm2036, %v1992, 0
      %v2134 = vsel %vm2036, %v1993, 0
      %v2137 = vsel %vm2036, %v1994, 0
      %v2140 = vsel %vm2036, %v1995, 0
      %v2143 = vsel %vm2036, %v1996, 0
      %v2146 = vsel %vm2036, %v1997, 0
      %v2149 = vsel %vm2036, %v1998, 0
      %v2152 = vsel %vm2036, %v1999, 0
      %v2155 = vsel %vm2036, %v2000, 0
      %v2158 = vsel %vm2036, %v2001, 0
      %v2161 = vsel %vm2036, %v2002, 0
      %v2164 = vsel %vm2036, %v2003, 0
      %v2167 = vsel %vm2036, %v2004, 0
      %v2170 = vsel %vm2036, %v2005, 0
      %v2173 = vsel %vm2036, %v2006, 0
      %v2176 = vsel %vm2036, %v2007, 0
      %v2179 = vsel %vm2036, %v2008, 0
      %v2182 = vsel %vm2036, %v2009, 0
      %v2185 = vsel %vm2036, %v2010, 0
      %v2188 = vsel %vm2036, %v2011, 0
      %v2191 = vsel %vm2036, %v2012, 0
      %v2194 = vsel %vm2036, %v2013, 0
      %v2197 = vsel %vm2036, %v2014, 0
      %v2200 = vsel %vm2036, %v2015, 0
      %v2203 = vsel %vm2036, %v2016, 0
      %v2206 = vsel %vm2036, %v2017, 0
      %v2209 = vsel %vm2036, %v2018, 0
      %v2212 = vsel %vm2036, %v2019, 0
      %v2215 = vsel %vm2036, %v2020, 0
      %v2218 = vsel %vm2036, %v2021, 0
      %v2221 = vsel %vm2036, %v2022, 0
      %v2224 = vsel %vm2036, %v2023, 0
      %v2227 = vsel %vm2036, %v2024, 0
      %vm2229 = vcmask 1040384
      %vm2230 = vcmask 1041408
      %v2231 = vsel %vm2229, 4294967295, 65535
      %v2232 = vsel %vm2230, %v2231, 0
      %v2234 = vand.u32 %v2035, %v2232
      %2236 = vmatprep.subr.bf16.mxu0 0
      %2237 = vmatpush1.bf16.msra.mxu0 %v2234
      %2238 = vmatprep.subr.bf16.mxu0 0
      %2239 = vmatpush1.bf16.msra.mxu0 0
      %2240 = vmatprep.subr.bf16.mxu0 0
      %2241 = vmatpush1.bf16.msra.mxu0 0
      %2242 = vmatprep.subr.bf16.mxu0 0
      %2243 = vmatpush1.bf16.msra.mxu0 0
      %2244 = vmatprep.subr.bf16.mxu0 0
      %2245 = vmatpush1.bf16.msra.mxu0 0
      %2246 = vmatprep.subr.bf16.mxu0 0
      %2247 = vmatpush1.bf16.msra.mxu0 0
      %2248 = vmatprep.subr.bf16.mxu0 0
      %2249 = vmatpush1.bf16.msra.mxu0 0
      %2250 = vmatprep.subr.bf16.mxu0 0
      %2251 = vmatpush1.bf16.msra.mxu0 0
      %2252 = vmatprep.subr.bf16.mxu0 0
      %2253 = vmatpush1.bf16.msra.mxu0 0
      %2254 = vmatprep.subr.bf16.mxu0 0
      %2255 = vmatpush1.bf16.msra.mxu0 0
      %2256 = vmatprep.subr.bf16.mxu0 0
      %2257 = vmatpush1.bf16.msra.mxu0 0
      %2258 = vmatprep.subr.bf16.mxu0 0
      %2259 = vmatpush1.bf16.msra.mxu0 0
      %2260 = vmatprep.subr.bf16.mxu0 0
      %2261 = vmatpush1.bf16.msra.mxu0 0
      %2262 = vmatprep.subr.bf16.mxu0 0
      %2263 = vmatpush1.bf16.msra.mxu0 0
      %2264 = vmatprep.subr.bf16.mxu0 0
      %2265 = vmatpush1.bf16.msra.mxu0 0
      %2266 = vmatprep.subr.bf16.mxu0 0
      %2267 = vmatpush1.bf16.msra.mxu0 0
      %2268 = vmatprep.mubr.bf16.mxu0 0
      %2269 = vmatmul.mubr.bf16.gmra.mrb[0].mxu0 %v2038
      %v2270 = vpop.f32.mrb[0].mxu0
      %v2271 = vadd.f32 0.0, %v2270
      %v2272 = vpop.f32.mrb[0].mxu0
      %v2273 = vpop.f32.mrb[0].mxu0
      %v2274 = vadd.f32 0.0, %v2273
      %v2275 = vpop.f32.mrb[0].mxu0
      %2276 = vmatprep.mubr.bf16.mxu0 0
      %2277 = vmatmul.mubr.bf16.gmra.mrb[0].mxu0 %v2041
      %v2278 = vpop.f32.mrb[0].mxu0
      %v2279 = vadd.f32 0.0, %v2278
      %v2280 = vpop.f32.mrb[0].mxu0
      %v2281 = vpop.f32.mrb[0].mxu0
      %v2282 = vadd.f32 0.0, %v2281
      %v2283 = vpop.f32.mrb[0].mxu0
      %2284 = vmatprep.mubr.bf16.mxu0 0
      %2285 = vmatmul.mubr.bf16.gmra.mrb[0].mxu0 %v2044
      %v2286 = vpop.f32.mrb[0].mxu0
      %v2287 = vadd.f32 0.0, %v2286
      %v2288 = vpop.f32.mrb[0].mxu0
      %v2289 = vpop.f32.mrb[0].mxu0
      %v2290 = vadd.f32 0.0, %v2289
      %v2291 = vpop.f32.mrb[0].mxu0
      %2292 = vmatprep.mubr.bf16.mxu0 0
      %2293 = vmatmul.mubr.bf16.gmra.mrb[0].mxu0 %v2047
      %v2294 = vpop.f32.mrb[0].mxu0
      %v2295 = vadd.f32 0.0, %v2294
      %v2296 = vpop.f32.mrb[0].mxu0
      %v2297 = vpop.f32.mrb[0].mxu0
      %v2298 = vadd.f32 0.0, %v2297
      %v2299 = vpop.f32.mrb[0].mxu0
      %2300 = vmatprep.mubr.bf16.mxu0 0
      %2301 = vmatmul.mubr.bf16.gmra.mrb[0].mxu0 %v2050
      %v2302 = vpop.f32.mrb[0].mxu0
      %v2303 = vadd.f32 0.0, %v2302
      %v2304 = vpop.f32.mrb[0].mxu0
      %v2305 = vpop.f32.mrb[0].mxu0
      %v2306 = vadd.f32 0.0, %v2305
      %v2307 = vpop.f32.mrb[0].mxu0
      %2308 = vmatprep.mubr.bf16.mxu0 0
      %2309 = vmatmul.mubr.bf16.gmra.mrb[0].mxu0 %v2053
      %v2310 = vpop.f32.mrb[0].mxu0
      %v2311 = vadd.f32 0.0, %v2310
      %v2312 = vpop.f32.mrb[0].mxu0
      %v2313 = vpop.f32.mrb[0].mxu0
      %v2314 = vadd.f32 0.0, %v2313
      %v2315 = vpop.f32.mrb[0].mxu0
      %2316 = vmatprep.mubr.bf16.mxu0 0
      %2317 = vmatmul.mubr.bf16.gmra.mrb[0].mxu0 %v2056
      %v2318 = vpop.f32.mrb[0].mxu0
      %v2319 = vadd.f32 0.0, %v2318
      %v2320 = vpop.f32.mrb[0].mxu0
      %v2321 = vpop.f32.mrb[0].mxu0
      %v2322 = vadd.f32 0.0, %v2321
      %v2323 = vpop.f32.mrb[0].mxu0
      %2324 = vmatprep.mubr.bf16.mxu0 0
      %2325 = vmatmul.mubr.bf16.gmra.mrb[0].mxu0 %v2059
      %v2326 = vpop.f32.mrb[0].mxu0
      %v2327 = vadd.f32 0.0, %v2326
      %v2328 = vpop.f32.mrb[0].mxu0
      %v2329 = vpop.f32.mrb[0].mxu0
      %v2330 = vadd.f32 0.0, %v2329
      %v2331 = vpop.f32.mrb[0].mxu0
      %2332 = vmatprep.mubr.bf16.mxu0 0
      %2333 = vmatmul.mubr.bf16.gmra.mrb[0].mxu0 %v2062
      %v2334 = vpop.f32.mrb[0].mxu0
      %v2335 = vadd.f32 0.0, %v2334
      %v2336 = vpop.f32.mrb[0].mxu0
      %v2337 = vpop.f32.mrb[0].mxu0
      %v2338 = vadd.f32 0.0, %v2337
      %v2339 = vpop.f32.mrb[0].mxu0
      %2340 = vmatprep.mubr.bf16.mxu0 0
      %2341 = vmatmul.mubr.bf16.gmra.mrb[0].mxu0 %v2065
      %v2342 = vpop.f32.mrb[0].mxu0
      %v2343 = vadd.f32 0.0, %v2342
      %v2344 = vpop.f32.mrb[0].mxu0
      %v2345 = vpop.f32.mrb[0].mxu0
      %v2346 = vadd.f32 0.0, %v2345
      %v2347 = vpop.f32.mrb[0].mxu0
      %2348 = vmatprep.mubr.bf16.mxu0 0
      %2349 = vmatmul.mubr.bf16.gmra.mrb[0].mxu0 %v2068
      %v2350 = vpop.f32.mrb[0].mxu0
      %v2351 = vadd.f32 0.0, %v2350
      %v2352 = vpop.f32.mrb[0].mxu0
      %v2353 = vpop.f32.mrb[0].mxu0
      %v2354 = vadd.f32 0.0, %v2353
      %v2355 = vpop.f32.mrb[0].mxu0
      %2356 = vmatprep.mubr.bf16.mxu0 0
      %2357 = vmatmul.mubr.bf16.gmra.mrb[0].mxu0 %v2071
      %v2358 = vpop.f32.mrb[0].mxu0
      %v2359 = vadd.f32 0.0, %v2358
      %v2360 = vpop.f32.mrb[0].mxu0
      %v2361 = vpop.f32.mrb[0].mxu0
      %v2362 = vadd.f32 0.0, %v2361
      %v2363 = vpop.f32.mrb[0].mxu0
      %2364 = vmatprep.mubr.bf16.mxu0 0
      %2365 = vmatmul.mubr.bf16.gmra.mrb[0].mxu0 %v2074
      %v2366 = vpop.f32.mrb[0].mxu0
      %v2367 = vadd.f32 0.0, %v2366
      %v2368 = vpop.f32.mrb[0].mxu0
      %v2369 = vpop.f32.mrb[0].mxu0
      %v2370 = vadd.f32 0.0, %v2369
      %v2371 = vpop.f32.mrb[0].mxu0
      %2372 = vmatprep.mubr.bf16.mxu0 0
      %2373 = vmatmul.mubr.bf16.gmra.mrb[0].mxu0 %v2077
      %v2374 = vpop.f32.mrb[0].mxu0
      %v2375 = vadd.f32 0.0, %v2374
      %v2376 = vpop.f32.mrb[0].mxu0
      %v2377 = vpop.f32.mrb[0].mxu0
      %v2378 = vadd.f32 0.0, %v2377
      %v2379 = vpop.f32.mrb[0].mxu0
      %2380 = vmatprep.mubr.bf16.mxu0 0
      %2381 = vmatmul.mubr.bf16.gmra.mrb[0].mxu0 %v2080
      %v2382 = vpop.f32.mrb[0].mxu0
      %v2383 = vadd.f32 0.0, %v2382
      %v2384 = vpop.f32.mrb[0].mxu0
      %v2385 = vpop.f32.mrb[0].mxu0
      %v2386 = vadd.f32 0.0, %v2385
      %v2387 = vpop.f32.mrb[0].mxu0
      %2388 = vmatprep.mubr.bf16.mxu0 0
      %2389 = vmatmul.mubr.bf16.gmra.mrb[0].mxu0 %v2083
      %v2390 = vpop.f32.mrb[0].mxu0
      %v2391 = vadd.f32 0.0, %v2390
      %v2392 = vpop.f32.mrb[0].mxu0
      %v2393 = vpop.f32.mrb[0].mxu0
      %v2394 = vadd.f32 0.0, %v2393
      %v2395 = vpop.f32.mrb[0].mxu0
      %2396 = vmatprep.mubr.bf16.mxu0 0
      %2397 = vmatmul.mubr.bf16.gmra.mrb[0].mxu0 %v2086
      %v2398 = vpop.f32.mrb[0].mxu0
      %v2399 = vadd.f32 0.0, %v2398
      %v2400 = vpop.f32.mrb[0].mxu0
      %v2401 = vpop.f32.mrb[0].mxu0
      %v2402 = vadd.f32 0.0, %v2401
      %v2403 = vpop.f32.mrb[0].mxu0
      %2404 = vmatprep.mubr.bf16.mxu0 0
      %2405 = vmatmul.mubr.bf16.gmra.mrb[0].mxu0 %v2089
      %v2406 = vpop.f32.mrb[0].mxu0
      %v2407 = vadd.f32 0.0, %v2406
      %v2408 = vpop.f32.mrb[0].mxu0
      %v2409 = vpop.f32.mrb[0].mxu0
      %v2410 = vadd.f32 0.0, %v2409
      %v2411 = vpop.f32.mrb[0].mxu0
      %2412 = vmatprep.mubr.bf16.mxu0 0
      %2413 = vmatmul.mubr.bf16.gmra.mrb[0].mxu0 %v2092
      %v2414 = vpop.f32.mrb[0].mxu0
      %v2415 = vadd.f32 0.0, %v2414
      %v2416 = vpop.f32.mrb[0].mxu0
      %v2417 = vpop.f32.mrb[0].mxu0
      %v2418 = vadd.f32 0.0, %v2417
      %v2419 = vpop.f32.mrb[0].mxu0
      %2420 = vmatprep.mubr.bf16.mxu0 0
      %2421 = vmatmul.mubr.bf16.gmra.mrb[0].mxu0 %v2095
      %v2422 = vpop.f32.mrb[0].mxu0
      %v2423 = vadd.f32 0.0, %v2422
      %v2424 = vpop.f32.mrb[0].mxu0
      %v2425 = vpop.f32.mrb[0].mxu0
      %v2426 = vadd.f32 0.0, %v2425
      %v2427 = vpop.f32.mrb[0].mxu0
      %2428 = vmatprep.mubr.bf16.mxu0 0
      %2429 = vmatmul.mubr.bf16.gmra.mrb[0].mxu0 %v2098
      %v2430 = vpop.f32.mrb[0].mxu0
      %v2431 = vadd.f32 0.0, %v2430
      %v2432 = vpop.f32.mrb[0].mxu0
      %v2433 = vpop.f32.mrb[0].mxu0
      %v2434 = vadd.f32 0.0, %v2433
      %v2435 = vpop.f32.mrb[0].mxu0
      %2436 = vmatprep.mubr.bf16.mxu0 0
      %2437 = vmatmul.mubr.bf16.gmra.mrb[0].mxu0 %v2101
      %v2438 = vpop.f32.mrb[0].mxu0
      %v2439 = vadd.f32 0.0, %v2438
      %v2440 = vpop.f32.mrb[0].mxu0
      %v2441 = vpop.f32.mrb[0].mxu0
      %v2442 = vadd.f32 0.0, %v2441
      %v2443 = vpop.f32.mrb[0].mxu0
      %2444 = vmatprep.mubr.bf16.mxu0 0
      %2445 = vmatmul.mubr.bf16.gmra.mrb[0].mxu0 %v2104
      %v2446 = vpop.f32.mrb[0].mxu0
      %v2447 = vadd.f32 0.0, %v2446
      %v2448 = vpop.f32.mrb[0].mxu0
      %v2449 = vpop.f32.mrb[0].mxu0
      %v2450 = vadd.f32 0.0, %v2449
      %v2451 = vpop.f32.mrb[0].mxu0
      %2452 = vmatprep.mubr.bf16.mxu0 0
      %2453 = vmatmul.mubr.bf16.gmra.mrb[0].mxu0 %v2107
      %v2454 = vpop.f32.mrb[0].mxu0
      %v2455 = vadd.f32 0.0, %v2454
      %v2456 = vpop.f32.mrb[0].mxu0
      %v2457 = vpop.f32.mrb[0].mxu0
      %v2458 = vadd.f32 0.0, %v2457
      %v2459 = vpop.f32.mrb[0].mxu0
      %2460 = vmatprep.mubr.bf16.mxu0 0
      %2461 = vmatmul.mubr.bf16.gmra.mrb[0].mxu0 %v2110
      %v2462 = vpop.f32.mrb[0].mxu0
      %v2463 = vadd.f32 0.0, %v2462
      %v2464 = vpop.f32.mrb[0].mxu0
      %v2465 = vpop.f32.mrb[0].mxu0
      %v2466 = vadd.f32 0.0, %v2465
      %v2467 = vpop.f32.mrb[0].mxu0
      %2468 = vmatprep.mubr.bf16.mxu0 0
      %2469 = vmatmul.mubr.bf16.gmra.mrb[0].mxu0 %v2113
      %v2470 = vpop.f32.mrb[0].mxu0
      %v2471 = vadd.f32 0.0, %v2470
      %v2472 = vpop.f32.mrb[0].mxu0
      %v2473 = vpop.f32.mrb[0].mxu0
      %v2474 = vadd.f32 0.0, %v2473
      %v2475 = vpop.f32.mrb[0].mxu0
      %2476 = vmatprep.mubr.bf16.mxu0 0
      %2477 = vmatmul.mubr.bf16.gmra.mrb[0].mxu0 %v2116
      %v2478 = vpop.f32.mrb[0].mxu0
      %v2479 = vadd.f32 0.0, %v2478
      %v2480 = vpop.f32.mrb[0].mxu0
      %v2481 = vpop.f32.mrb[0].mxu0
      %v2482 = vadd.f32 0.0, %v2481
      %v2483 = vpop.f32.mrb[0].mxu0
      %2484 = vmatprep.mubr.bf16.mxu0 0
      %2485 = vmatmul.mubr.bf16.gmra.mrb[0].mxu0 %v2119
      %v2486 = vpop.f32.mrb[0].mxu0
      %v2487 = vadd.f32 0.0, %v2486
      %v2488 = vpop.f32.mrb[0].mxu0
      %v2489 = vpop.f32.mrb[0].mxu0
      %v2490 = vadd.f32 0.0, %v2489
      %v2491 = vpop.f32.mrb[0].mxu0
      %2492 = vmatprep.mubr.bf16.mxu0 0
      %2493 = vmatmul.mubr.bf16.gmra.mrb[0].mxu0 %v2122
      %v2494 = vpop.f32.mrb[0].mxu0
      %v2495 = vadd.f32 0.0, %v2494
      %v2496 = vpop.f32.mrb[0].mxu0
      %v2497 = vpop.f32.mrb[0].mxu0
      %v2498 = vadd.f32 0.0, %v2497
      %v2499 = vpop.f32.mrb[0].mxu0
      %2500 = vmatprep.mubr.bf16.mxu0 0
      %2501 = vmatmul.mubr.bf16.gmra.mrb[0].mxu0 %v2125
      %v2502 = vpop.f32.mrb[0].mxu0
      %v2503 = vadd.f32 0.0, %v2502
      %v2504 = vpop.f32.mrb[0].mxu0
      %v2505 = vpop.f32.mrb[0].mxu0
      %v2506 = vadd.f32 0.0, %v2505
      %v2507 = vpop.f32.mrb[0].mxu0
      %2508 = vmatprep.mubr.bf16.mxu0 0
      %2509 = vmatmul.mubr.bf16.gmra.mrb[0].mxu0 %v2128
      %v2510 = vpop.f32.mrb[0].mxu0
      %v2511 = vadd.f32 0.0, %v2510
      %v2512 = vpop.f32.mrb[0].mxu0
      %v2513 = vpop.f32.mrb[0].mxu0
      %v2514 = vadd.f32 0.0, %v2513
      %v2515 = vpop.f32.mrb[0].mxu0
      %2516 = vmatprep.mubr.bf16.mxu0 0
      %2517 = vmatmul.mubr.bf16.gmra.mrb[0].mxu0 %v2131
      %v2518 = vpop.f32.mrb[0].mxu0
      %v2519 = vadd.f32 0.0, %v2518
      %v2520 = vpop.f32.mrb[0].mxu0
      %v2521 = vpop.f32.mrb[0].mxu0
      %v2522 = vadd.f32 0.0, %v2521
      %v2523 = vpop.f32.mrb[0].mxu0
      %2524 = vmatprep.mubr.bf16.mxu0 0
      %2525 = vmatmul.mubr.bf16.gmra.mrb[0].mxu0 %v2134
      %v2526 = vpop.f32.mrb[0].mxu0
      %v2527 = vadd.f32 0.0, %v2526
      %v2528 = vpop.f32.mrb[0].mxu0
      %v2529 = vpop.f32.mrb[0].mxu0
      %v2530 = vadd.f32 0.0, %v2529
      %v2531 = vpop.f32.mrb[0].mxu0
      %2532 = vmatprep.mubr.bf16.mxu0 0
      %2533 = vmatmul.mubr.bf16.gmra.mrb[0].mxu0 %v2137
      %v2534 = vpop.f32.mrb[0].mxu0
      %v2535 = vadd.f32 0.0, %v2534
      %v2536 = vpop.f32.mrb[0].mxu0
      %v2537 = vpop.f32.mrb[0].mxu0
      %v2538 = vadd.f32 0.0, %v2537
      %v2539 = vpop.f32.mrb[0].mxu0
      %2540 = vmatprep.mubr.bf16.mxu0 0
      %2541 = vmatmul.mubr.bf16.gmra.mrb[0].mxu0 %v2140
      %v2542 = vpop.f32.mrb[0].mxu0
      %v2543 = vadd.f32 0.0, %v2542
      %v2544 = vpop.f32.mrb[0].mxu0
      %v2545 = vpop.f32.mrb[0].mxu0
      %v2546 = vadd.f32 0.0, %v2545
      %v2547 = vpop.f32.mrb[0].mxu0
      %2548 = vmatprep.mubr.bf16.mxu0 0
      %2549 = vmatmul.mubr.bf16.gmra.mrb[0].mxu0 %v2143
      %v2550 = vpop.f32.mrb[0].mxu0
      %v2551 = vadd.f32 0.0, %v2550
      %v2552 = vpop.f32.mrb[0].mxu0
      %v2553 = vpop.f32.mrb[0].mxu0
      %v2554 = vadd.f32 0.0, %v2553
      %v2555 = vpop.f32.mrb[0].mxu0
      %2556 = vmatprep.mubr.bf16.mxu0 0
      %2557 = vmatmul.mubr.bf16.gmra.mrb[0].mxu0 %v2146
      %v2558 = vpop.f32.mrb[0].mxu0
      %v2559 = vadd.f32 0.0, %v2558
      %v2560 = vpop.f32.mrb[0].mxu0
      %v2561 = vpop.f32.mrb[0].mxu0
      %v2562 = vadd.f32 0.0, %v2561
      %v2563 = vpop.f32.mrb[0].mxu0
      %2564 = vmatprep.mubr.bf16.mxu0 0
      %2565 = vmatmul.mubr.bf16.gmra.mrb[0].mxu0 %v2149
      %v2566 = vpop.f32.mrb[0].mxu0
      %v2567 = vadd.f32 0.0, %v2566
      %v2568 = vpop.f32.mrb[0].mxu0
      %v2569 = vpop.f32.mrb[0].mxu0
      %v2570 = vadd.f32 0.0, %v2569
      %v2571 = vpop.f32.mrb[0].mxu0
      %2572 = vmatprep.mubr.bf16.mxu0 0
      %2573 = vmatmul.mubr.bf16.gmra.mrb[0].mxu0 %v2152
      %v2574 = vpop.f32.mrb[0].mxu0
      %v2575 = vadd.f32 0.0, %v2574
      %v2576 = vpop.f32.mrb[0].mxu0
      %v2577 = vpop.f32.mrb[0].mxu0
      %v2578 = vadd.f32 0.0, %v2577
      %v2579 = vpop.f32.mrb[0].mxu0
      %2580 = vmatprep.mubr.bf16.mxu0 0
      %2581 = vmatmul.mubr.bf16.gmra.mrb[0].mxu0 %v2155
      %v2582 = vpop.f32.mrb[0].mxu0
      %v2583 = vadd.f32 0.0, %v2582
      %v2584 = vpop.f32.mrb[0].mxu0
      %v2585 = vpop.f32.mrb[0].mxu0
      %v2586 = vadd.f32 0.0, %v2585
      %v2587 = vpop.f32.mrb[0].mxu0
      %2588 = vmatprep.mubr.bf16.mxu0 0
      %2589 = vmatmul.mubr.bf16.gmra.mrb[0].mxu0 %v2158
      %v2590 = vpop.f32.mrb[0].mxu0
      %v2591 = vadd.f32 0.0, %v2590
      %v2592 = vpop.f32.mrb[0].mxu0
      %v2593 = vpop.f32.mrb[0].mxu0
      %v2594 = vadd.f32 0.0, %v2593
      %v2595 = vpop.f32.mrb[0].mxu0
      %2596 = vmatprep.mubr.bf16.mxu0 0
      %2597 = vmatmul.mubr.bf16.gmra.mrb[0].mxu0 %v2161
      %v2598 = vpop.f32.mrb[0].mxu0
      %v2599 = vadd.f32 0.0, %v2598
      %v2600 = vpop.f32.mrb[0].mxu0
      %v2601 = vpop.f32.mrb[0].mxu0
      %v2602 = vadd.f32 0.0, %v2601
      %v2603 = vpop.f32.mrb[0].mxu0
      %2604 = vmatprep.mubr.bf16.mxu0 0
      %2605 = vmatmul.mubr.bf16.gmra.mrb[0].mxu0 %v2164
      %v2606 = vpop.f32.mrb[0].mxu0
      %v2607 = vadd.f32 0.0, %v2606
      %v2608 = vpop.f32.mrb[0].mxu0
      %v2609 = vpop.f32.mrb[0].mxu0
      %v2610 = vadd.f32 0.0, %v2609
      %v2611 = vpop.f32.mrb[0].mxu0
      %2612 = vmatprep.mubr.bf16.mxu0 0
      %2613 = vmatmul.mubr.bf16.gmra.mrb[0].mxu0 %v2167
      %v2614 = vpop.f32.mrb[0].mxu0
      %v2615 = vadd.f32 0.0, %v2614
      %v2616 = vpop.f32.mrb[0].mxu0
      %v2617 = vpop.f32.mrb[0].mxu0
      %v2618 = vadd.f32 0.0, %v2617
      %v2619 = vpop.f32.mrb[0].mxu0
      %2620 = vmatprep.mubr.bf16.mxu0 0
      %2621 = vmatmul.mubr.bf16.gmra.mrb[0].mxu0 %v2170
      %v2622 = vpop.f32.mrb[0].mxu0
      %v2623 = vadd.f32 0.0, %v2622
      %v2624 = vpop.f32.mrb[0].mxu0
      %v2625 = vpop.f32.mrb[0].mxu0
      %v2626 = vadd.f32 0.0, %v2625
      %v2627 = vpop.f32.mrb[0].mxu0
      %2628 = vmatprep.mubr.bf16.mxu0 0
      %2629 = vmatmul.mubr.bf16.gmra.mrb[0].mxu0 %v2173
      %v2630 = vpop.f32.mrb[0].mxu0
      %v2631 = vadd.f32 0.0, %v2630
      %v2632 = vpop.f32.mrb[0].mxu0
      %v2633 = vpop.f32.mrb[0].mxu0
      %v2634 = vadd.f32 0.0, %v2633
      %v2635 = vpop.f32.mrb[0].mxu0
      %2636 = vmatprep.mubr.bf16.mxu0 0
      %2637 = vmatmul.mubr.bf16.gmra.mrb[0].mxu0 %v2176
      %v2638 = vpop.f32.mrb[0].mxu0
      %v2639 = vadd.f32 0.0, %v2638
      %v2640 = vpop.f32.mrb[0].mxu0
      %v2641 = vpop.f32.mrb[0].mxu0
      %v2642 = vadd.f32 0.0, %v2641
      %v2643 = vpop.f32.mrb[0].mxu0
      %2644 = vmatprep.mubr.bf16.mxu0 0
      %2645 = vmatmul.mubr.bf16.gmra.mrb[0].mxu0 %v2179
      %v2646 = vpop.f32.mrb[0].mxu0
      %v2647 = vadd.f32 0.0, %v2646
      %v2648 = vpop.f32.mrb[0].mxu0
      %v2649 = vpop.f32.mrb[0].mxu0
      %v2650 = vadd.f32 0.0, %v2649
      %v2651 = vpop.f32.mrb[0].mxu0
      %2652 = vmatprep.mubr.bf16.mxu0 0
      %2653 = vmatmul.mubr.bf16.gmra.mrb[0].mxu0 %v2182
      %v2654 = vpop.f32.mrb[0].mxu0
      %v2655 = vadd.f32 0.0, %v2654
      %v2656 = vpop.f32.mrb[0].mxu0
      %v2657 = vpop.f32.mrb[0].mxu0
      %v2658 = vadd.f32 0.0, %v2657
      %v2659 = vpop.f32.mrb[0].mxu0
      %2660 = vmatprep.mubr.bf16.mxu0 0
      %2661 = vmatmul.mubr.bf16.gmra.mrb[0].mxu0 %v2185
      %v2662 = vpop.f32.mrb[0].mxu0
      %v2663 = vadd.f32 0.0, %v2662
      %v2664 = vpop.f32.mrb[0].mxu0
      %v2665 = vpop.f32.mrb[0].mxu0
      %v2666 = vadd.f32 0.0, %v2665
      %v2667 = vpop.f32.mrb[0].mxu0
      %2668 = vmatprep.mubr.bf16.mxu0 0
      %2669 = vmatmul.mubr.bf16.gmra.mrb[0].mxu0 %v2188
      %v2670 = vpop.f32.mrb[0].mxu0
      %v2671 = vadd.f32 0.0, %v2670
      %v2672 = vpop.f32.mrb[0].mxu0
      %v2673 = vpop.f32.mrb[0].mxu0
      %v2674 = vadd.f32 0.0, %v2673
      %v2675 = vpop.f32.mrb[0].mxu0
      %2676 = vmatprep.mubr.bf16.mxu0 0
      %2677 = vmatmul.mubr.bf16.gmra.mrb[0].mxu0 %v2191
      %v2678 = vpop.f32.mrb[0].mxu0
      %v2679 = vadd.f32 0.0, %v2678
      %v2680 = vpop.f32.mrb[0].mxu0
      %v2681 = vpop.f32.mrb[0].mxu0
      %v2682 = vadd.f32 0.0, %v2681
      %v2683 = vpop.f32.mrb[0].mxu0
      %2684 = vmatprep.mubr.bf16.mxu0 0
      %2685 = vmatmul.mubr.bf16.gmra.mrb[0].mxu0 %v2194
      %v2686 = vpop.f32.mrb[0].mxu0
      %v2687 = vadd.f32 0.0, %v2686
      %v2688 = vpop.f32.mrb[0].mxu0
      %v2689 = vpop.f32.mrb[0].mxu0
      %v2690 = vadd.f32 0.0, %v2689
      %v2691 = vpop.f32.mrb[0].mxu0
      %2692 = vmatprep.mubr.bf16.mxu0 0
      %2693 = vmatmul.mubr.bf16.gmra.mrb[0].mxu0 %v2197
      %v2694 = vpop.f32.mrb[0].mxu0
      %v2695 = vadd.f32 0.0, %v2694
      %v2696 = vpop.f32.mrb[0].mxu0
      %v2697 = vpop.f32.mrb[0].mxu0
      %v2698 = vadd.f32 0.0, %v2697
      %v2699 = vpop.f32.mrb[0].mxu0
      %2700 = vmatprep.mubr.bf16.mxu0 0
      %2701 = vmatmul.mubr.bf16.gmra.mrb[0].mxu0 %v2200
      %v2702 = vpop.f32.mrb[0].mxu0
      %v2703 = vadd.f32 0.0, %v2702
      %v2704 = vpop.f32.mrb[0].mxu0
      %v2705 = vpop.f32.mrb[0].mxu0
      %v2706 = vadd.f32 0.0, %v2705
      %v2707 = vpop.f32.mrb[0].mxu0
      %2708 = vmatprep.mubr.bf16.mxu0 0
      %2709 = vmatmul.mubr.bf16.gmra.mrb[0].mxu0 %v2203
      %v2710 = vpop.f32.mrb[0].mxu0
      %v2711 = vadd.f32 0.0, %v2710
      %v2712 = vpop.f32.mrb[0].mxu0
      %v2713 = vpop.f32.mrb[0].mxu0
      %v2714 = vadd.f32 0.0, %v2713
      %v2715 = vpop.f32.mrb[0].mxu0
      %2716 = vmatprep.mubr.bf16.mxu0 0
      %2717 = vmatmul.mubr.bf16.gmra.mrb[0].mxu0 %v2206
      %v2718 = vpop.f32.mrb[0].mxu0
      %v2719 = vadd.f32 0.0, %v2718
      %v2720 = vpop.f32.mrb[0].mxu0
      %v2721 = vpop.f32.mrb[0].mxu0
      %v2722 = vadd.f32 0.0, %v2721
      %v2723 = vpop.f32.mrb[0].mxu0
      %2724 = vmatprep.mubr.bf16.mxu0 0
      %2725 = vmatmul.mubr.bf16.gmra.mrb[0].mxu0 %v2209
      %v2726 = vpop.f32.mrb[0].mxu0
      %v2727 = vadd.f32 0.0, %v2726
      %v2728 = vpop.f32.mrb[0].mxu0
      %v2729 = vpop.f32.mrb[0].mxu0
      %v2730 = vadd.f32 0.0, %v2729
      %v2731 = vpop.f32.mrb[0].mxu0
      %2732 = vmatprep.mubr.bf16.mxu0 0
      %2733 = vmatmul.mubr.bf16.gmra.mrb[0].mxu0 %v2212
      %v2734 = vpop.f32.mrb[0].mxu0
      %v2735 = vadd.f32 0.0, %v2734
      %v2736 = vpop.f32.mrb[0].mxu0
      %v2737 = vpop.f32.mrb[0].mxu0
      %v2738 = vadd.f32 0.0, %v2737
      %v2739 = vpop.f32.mrb[0].mxu0
      %2740 = vmatprep.mubr.bf16.mxu0 0
      %2741 = vmatmul.mubr.bf16.gmra.mrb[0].mxu0 %v2215
      %v2742 = vpop.f32.mrb[0].mxu0
      %v2743 = vadd.f32 0.0, %v2742
      %v2744 = vpop.f32.mrb[0].mxu0
      %v2745 = vpop.f32.mrb[0].mxu0
      %v2746 = vadd.f32 0.0, %v2745
      %v2747 = vpop.f32.mrb[0].mxu0
      %2748 = vmatprep.mubr.bf16.mxu0 0
      %2749 = vmatmul.mubr.bf16.gmra.mrb[0].mxu0 %v2218
      %v2750 = vpop.f32.mrb[0].mxu0
      %v2751 = vadd.f32 0.0, %v2750
      %v2752 = vpop.f32.mrb[0].mxu0
      %v2753 = vpop.f32.mrb[0].mxu0
      %v2754 = vadd.f32 0.0, %v2753
      %v2755 = vpop.f32.mrb[0].mxu0
      %2756 = vmatprep.mubr.bf16.mxu0 0
      %2757 = vmatmul.mubr.bf16.gmra.mrb[0].mxu0 %v2221
      %v2758 = vpop.f32.mrb[0].mxu0
      %v2759 = vadd.f32 0.0, %v2758
      %v2760 = vpop.f32.mrb[0].mxu0
      %v2761 = vpop.f32.mrb[0].mxu0
      %v2762 = vadd.f32 0.0, %v2761
      %v2763 = vpop.f32.mrb[0].mxu0
      %2764 = vmatprep.mubr.bf16.mxu0 0
      %2765 = vmatmul.mubr.bf16.gmra.mrb[0].mxu0 %v2224
      %v2766 = vpop.f32.mrb[0].mxu0
      %v2767 = vadd.f32 0.0, %v2766
      %v2768 = vpop.f32.mrb[0].mxu0
      %v2769 = vpop.f32.mrb[0].mxu0
      %v2770 = vadd.f32 0.0, %v2769
      %v2771 = vpop.f32.mrb[0].mxu0
      %2772 = vmatprep.mubr.bf16.mxu0 0
      %2773 = vmatmul.mubr.bf16.gmra.mrb[0].mxu0 %v2227
      %v2774 = vpop.f32.mrb[0].mxu0
      %v2775 = vadd.f32 0.0, %v2774
      %v2776 = vpop.f32.mrb[0].mxu0
      %v2777 = vpop.f32.mrb[0].mxu0
      %v2778 = vadd.f32 0.0, %v2777
      %v2779 = vpop.f32.mrb[0].mxu0
      %2780 = vdwg.mxu0
      %v2909 = vunpack.c.l.b16 %v337
      %v2910 = vunpack.c.l.b16 %v338
      %v2911 = vunpack.c.l.b16 %v339
      %v2912 = vunpack.c.l.b16 %v340
      %v2913 = vunpack.c.l.b16 %v341
      %v2914 = vunpack.c.l.b16 %v342
      %v2915 = vunpack.c.l.b16 %v343
      %v2916 = vunpack.c.l.b16 %v344
      %v2917 = vunpack.c.l.b16 %v346
      %v2918 = vunpack.c.l.b16 %v347
      %v2919 = vunpack.c.l.b16 %v348
      %v2920 = vunpack.c.l.b16 %v349
      %v2921 = vunpack.c.l.b16 %v350
      %v2922 = vunpack.c.l.b16 %v351
      %v2923 = vunpack.c.l.b16 %v352
      %v2924 = vunpack.c.l.b16 %v353
      %v2925 = vunpack.c.l.b16 %v355
      %v2926 = vunpack.c.l.b16 %v356
      %v2927 = vunpack.c.l.b16 %v357
      %v2928 = vunpack.c.l.b16 %v358
      %v2929 = vunpack.c.l.b16 %v359
      %v2930 = vunpack.c.l.b16 %v360
      %v2931 = vunpack.c.l.b16 %v361
      %v2932 = vunpack.c.l.b16 %v362
      %v2933 = vunpack.c.l.b16 %v364
      %v2934 = vunpack.c.l.b16 %v365
      %v2935 = vunpack.c.l.b16 %v366
      %v2936 = vunpack.c.l.b16 %v367
      %v2937 = vunpack.c.l.b16 %v368
      %v2938 = vunpack.c.l.b16 %v369
      %v2939 = vunpack.c.l.b16 %v370
      %v2940 = vunpack.c.l.b16 %v371
      %v2941 = vunpack.c.l.b16 %v373
      %v2942 = vunpack.c.l.b16 %v374
      %v2943 = vunpack.c.l.b16 %v375
      %v2944 = vunpack.c.l.b16 %v376
      %v2945 = vunpack.c.l.b16 %v377
      %v2946 = vunpack.c.l.b16 %v378
      %v2947 = vunpack.c.l.b16 %v379
      %v2948 = vunpack.c.l.b16 %v380
      %v2949 = vunpack.c.l.b16 %v382
      %v2950 = vunpack.c.l.b16 %v383
      %v2951 = vunpack.c.l.b16 %v384
      %v2952 = vunpack.c.l.b16 %v385
      %v2953 = vunpack.c.l.b16 %v386
      %v2954 = vunpack.c.l.b16 %v387
      %v2955 = vunpack.c.l.b16 %v388
      %v2956 = vunpack.c.l.b16 %v389
      %v2957 = vunpack.c.l.b16 %v391
      %v2958 = vunpack.c.l.b16 %v392
      %v2959 = vunpack.c.l.b16 %v393
      %v2960 = vunpack.c.l.b16 %v394
      %v2961 = vunpack.c.l.b16 %v395
      %v2962 = vunpack.c.l.b16 %v396
      %v2963 = vunpack.c.l.b16 %v397
      %v2964 = vunpack.c.l.b16 %v398
      %v2965 = vunpack.c.l.b16 %v400
      %v2966 = vunpack.c.l.b16 %v401
      %v2967 = vunpack.c.l.b16 %v402
      %v2968 = vunpack.c.l.b16 %v403
      %v2969 = vunpack.c.l.b16 %v404
      %v2970 = vunpack.c.l.b16 %v405
      %v2971 = vunpack.c.l.b16 %v406
      %v2972 = vunpack.c.l.b16 %v407
      %v2973 = vunpack.c.l.b16 %v409
      %v2974 = vunpack.c.l.b16 %v410
      %v2975 = vunpack.c.l.b16 %v411
      %v2976 = vunpack.c.l.b16 %v412
      %v2977 = vunpack.c.l.b16 %v413
      %v2978 = vunpack.c.l.b16 %v414
      %v2979 = vunpack.c.l.b16 %v415
      %v2980 = vunpack.c.l.b16 %v416
      %v2981 = vunpack.c.l.b16 %v418
      %v2982 = vunpack.c.l.b16 %v419
      %v2983 = vunpack.c.l.b16 %v420
      %v2984 = vunpack.c.l.b16 %v421
      %v2985 = vunpack.c.l.b16 %v422
      %v2986 = vunpack.c.l.b16 %v423
      %v2987 = vunpack.c.l.b16 %v424
      %v2988 = vunpack.c.l.b16 %v425
      %v2989 = vunpack.c.l.b16 %v427
      %v2990 = vunpack.c.l.b16 %v428
      %v2991 = vunpack.c.l.b16 %v429
      %v2992 = vunpack.c.l.b16 %v430
      %v2993 = vunpack.c.l.b16 %v431
      %v2994 = vunpack.c.l.b16 %v432
      %v2995 = vunpack.c.l.b16 %v433
      %v2996 = vunpack.c.l.b16 %v434
      %v2997 = vunpack.c.l.b16 %v436
      %v2998 = vunpack.c.l.b16 %v437
      %v2999 = vunpack.c.l.b16 %v438
      %v3000 = vunpack.c.l.b16 %v439
      %v3001 = vunpack.c.l.b16 %v440
      %v3002 = vunpack.c.l.b16 %v441
      %v3003 = vunpack.c.l.b16 %v442
      %v3004 = vunpack.c.l.b16 %v443
      %v3005 = vunpack.c.l.b16 %v445
      %v3006 = vunpack.c.l.b16 %v446
      %v3007 = vunpack.c.l.b16 %v447
      %v3008 = vunpack.c.l.b16 %v448
      %v3009 = vunpack.c.l.b16 %v449
      %v3010 = vunpack.c.l.b16 %v450
      %v3011 = vunpack.c.l.b16 %v451
      %v3012 = vunpack.c.l.b16 %v452
      %v3013 = vunpack.c.l.b16 %v454
      %v3014 = vunpack.c.l.b16 %v455
      %v3015 = vunpack.c.l.b16 %v456
      %v3016 = vunpack.c.l.b16 %v457
      %v3017 = vunpack.c.l.b16 %v458
      %v3018 = vunpack.c.l.b16 %v459
      %v3019 = vunpack.c.l.b16 %v460
      %v3020 = vunpack.c.l.b16 %v461
      %v3021 = vunpack.c.l.b16 %v463
      %v3022 = vunpack.c.l.b16 %v464
      %v3023 = vunpack.c.l.b16 %v465
      %v3024 = vunpack.c.l.b16 %v466
      %v3025 = vunpack.c.l.b16 %v467
      %v3026 = vunpack.c.l.b16 %v468
      %v3027 = vunpack.c.l.b16 %v469
      %v3028 = vunpack.c.l.b16 %v470
      %v3029 = vunpack.c.l.b16 %v472
      %v3030 = vunpack.c.l.b16 %v473
      %v3031 = vunpack.c.l.b16 %v474
      %v3032 = vunpack.c.l.b16 %v475
      %v3033 = vunpack.c.l.b16 %v476
      %v3034 = vunpack.c.l.b16 %v477
      %v3035 = vunpack.c.l.b16 %v478
      %v3036 = vunpack.c.l.b16 %v479
      %v3037 = vpack.c.b16 %v2910, %v2909
      %v3038 = vpack.c.b16 %v2912, %v2911
      %v3039 = vpack.c.b16 %v2914, %v2913
      %v3040 = vpack.c.b16 %v2916, %v2915
      %v3041 = vpack.c.b16 %v2918, %v2917
      %v3042 = vpack.c.b16 %v2920, %v2919
      %v3043 = vpack.c.b16 %v2922, %v2921
      %v3044 = vpack.c.b16 %v2924, %v2923
      %v3045 = vpack.c.b16 %v2926, %v2925
      %v3046 = vpack.c.b16 %v2928, %v2927
      %v3047 = vpack.c.b16 %v2930, %v2929
      %v3048 = vpack.c.b16 %v2932, %v2931
      %v3049 = vpack.c.b16 %v2934, %v2933
      %v3050 = vpack.c.b16 %v2936, %v2935
      %v3051 = vpack.c.b16 %v2938, %v2937
      %v3052 = vpack.c.b16 %v2940, %v2939
      %v3053 = vpack.c.b16 %v2942, %v2941
      %v3054 = vpack.c.b16 %v2944, %v2943
      %v3055 = vpack.c.b16 %v2946, %v2945
      %v3056 = vpack.c.b16 %v2948, %v2947
      %v3057 = vpack.c.b16 %v2950, %v2949
      %v3058 = vpack.c.b16 %v2952, %v2951
      %v3059 = vpack.c.b16 %v2954, %v2953
      %v3060 = vpack.c.b16 %v2956, %v2955
      %v3061 = vpack.c.b16 %v2958, %v2957
      %v3062 = vpack.c.b16 %v2960, %v2959
      %v3063 = vpack.c.b16 %v2962, %v2961
      %v3064 = vpack.c.b16 %v2964, %v2963
      %v3065 = vpack.c.b16 %v2966, %v2965
      %v3066 = vpack.c.b16 %v2968, %v2967
      %v3067 = vpack.c.b16 %v2970, %v2969
      %v3068 = vpack.c.b16 %v2972, %v2971
      %v3069 = vpack.c.b16 %v2974, %v2973
      %v3070 = vpack.c.b16 %v2976, %v2975
      %v3071 = vpack.c.b16 %v2978, %v2977
      %v3072 = vpack.c.b16 %v2980, %v2979
      %v3073 = vpack.c.b16 %v2982, %v2981
      %v3074 = vpack.c.b16 %v2984, %v2983
      %v3075 = vpack.c.b16 %v2986, %v2985
      %v3076 = vpack.c.b16 %v2988, %v2987
      %v3077 = vpack.c.b16 %v2990, %v2989
      %v3078 = vpack.c.b16 %v2992, %v2991
      %v3079 = vpack.c.b16 %v2994, %v2993
      %v3080 = vpack.c.b16 %v2996, %v2995
      %v3081 = vpack.c.b16 %v2998, %v2997
      %v3082 = vpack.c.b16 %v3000, %v2999
      %v3083 = vpack.c.b16 %v3002, %v3001
      %v3084 = vpack.c.b16 %v3004, %v3003
      %v3085 = vpack.c.b16 %v3006, %v3005
      %v3086 = vpack.c.b16 %v3008, %v3007
      %v3087 = vpack.c.b16 %v3010, %v3009
      %v3088 = vpack.c.b16 %v3012, %v3011
      %v3089 = vpack.c.b16 %v3014, %v3013
      %v3090 = vpack.c.b16 %v3016, %v3015
      %v3091 = vpack.c.b16 %v3018, %v3017
      %v3092 = vpack.c.b16 %v3020, %v3019
      %v3093 = vpack.c.b16 %v3022, %v3021
      %v3094 = vpack.c.b16 %v3024, %v3023
      %v3095 = vpack.c.b16 %v3026, %v3025
      %v3096 = vpack.c.b16 %v3028, %v3027
      %v3097 = vpack.c.b16 %v3030, %v3029
      %v3098 = vpack.c.b16 %v3032, %v3031
      %v3099 = vpack.c.b16 %v3034, %v3033
      %v3100 = vpack.c.b16 %v3036, %v3035
      %v3102 = vsel %vm2036, %v3037, 0
      %v3105 = vsel %vm2036, %v3038, 0
      %v3108 = vsel %vm2036, %v3039, 0
      %v3111 = vsel %vm2036, %v3040, 0
      %v3114 = vsel %vm2036, %v3041, 0
      %v3117 = vsel %vm2036, %v3042, 0
      %v3120 = vsel %vm2036, %v3043, 0
      %v3123 = vsel %vm2036, %v3044, 0
      %v3126 = vsel %vm2036, %v3045, 0
      %v3129 = vsel %vm2036, %v3046, 0
      %v3132 = vsel %vm2036, %v3047, 0
      %v3135 = vsel %vm2036, %v3048, 0
      %v3138 = vsel %vm2036, %v3049, 0
      %v3141 = vsel %vm2036, %v3050, 0
      %v3144 = vsel %vm2036, %v3051, 0
      %v3147 = vsel %vm2036, %v3052, 0
      %v3150 = vsel %vm2036, %v3053, 0
      %v3153 = vsel %vm2036, %v3054, 0
      %v3156 = vsel %vm2036, %v3055, 0
      %v3159 = vsel %vm2036, %v3056, 0
      %v3162 = vsel %vm2036, %v3057, 0
      %v3165 = vsel %vm2036, %v3058, 0
      %v3168 = vsel %vm2036, %v3059, 0
      %v3171 = vsel %vm2036, %v3060, 0
      %v3174 = vsel %vm2036, %v3061, 0
      %v3177 = vsel %vm2036, %v3062, 0
      %v3180 = vsel %vm2036, %v3063, 0
      %v3183 = vsel %vm2036, %v3064, 0
      %v3186 = vsel %vm2036, %v3065, 0
      %v3189 = vsel %vm2036, %v3066, 0
      %v3192 = vsel %vm2036, %v3067, 0
      %v3195 = vsel %vm2036, %v3068, 0
      %v3198 = vsel %vm2036, %v3069, 0
      %v3201 = vsel %vm2036, %v3070, 0
      %v3204 = vsel %vm2036, %v3071, 0
      %v3207 = vsel %vm2036, %v3072, 0
      %v3210 = vsel %vm2036, %v3073, 0
      %v3213 = vsel %vm2036, %v3074, 0
      %v3216 = vsel %vm2036, %v3075, 0
      %v3219 = vsel %vm2036, %v3076, 0
      %v3222 = vsel %vm2036, %v3077, 0
      %v3225 = vsel %vm2036, %v3078, 0
      %v3228 = vsel %vm2036, %v3079, 0
      %v3231 = vsel %vm2036, %v3080, 0
      %v3234 = vsel %vm2036, %v3081, 0
      %v3237 = vsel %vm2036, %v3082, 0
      %v3240 = vsel %vm2036, %v3083, 0
      %v3243 = vsel %vm2036, %v3084, 0
      %v3246 = vsel %vm2036, %v3085, 0
      %v3249 = vsel %vm2036, %v3086, 0
      %v3252 = vsel %vm2036, %v3087, 0
      %v3255 = vsel %vm2036, %v3088, 0
      %v3258 = vsel %vm2036, %v3089, 0
      %v3261 = vsel %vm2036, %v3090, 0
      %v3264 = vsel %vm2036, %v3091, 0
      %v3267 = vsel %vm2036, %v3092, 0
      %v3270 = vsel %vm2036, %v3093, 0
      %v3273 = vsel %vm2036, %v3094, 0
      %v3276 = vsel %vm2036, %v3095, 0
      %v3279 = vsel %vm2036, %v3096, 0
      %v3282 = vsel %vm2036, %v3097, 0
      %v3285 = vsel %vm2036, %v3098, 0
      %v3288 = vsel %vm2036, %v3099, 0
      %v3291 = vsel %vm2036, %v3100, 0
      %v3294 = vand.u32 %v484, %v2232
      %3296 = vmatprep.subr.bf16.mxu0 0
      %3297 = vmatpush1.bf16.msra.mxu0 %v3294
      %3298 = vmatprep.subr.bf16.mxu0 0
      %3299 = vmatpush1.bf16.msra.mxu0 0
      %3300 = vmatprep.subr.bf16.mxu0 0
      %3301 = vmatpush1.bf16.msra.mxu0 0
      %3302 = vmatprep.subr.bf16.mxu0 0
      %3303 = vmatpush1.bf16.msra.mxu0 0
      %3304 = vmatprep.subr.bf16.mxu0 0
      %3305 = vmatpush1.bf16.msra.mxu0 0
      %3306 = vmatprep.subr.bf16.mxu0 0
      %3307 = vmatpush1.bf16.msra.mxu0 0
      %3308 = vmatprep.subr.bf16.mxu0 0
      %3309 = vmatpush1.bf16.msra.mxu0 0
      %3310 = vmatprep.subr.bf16.mxu0 0
      %3311 = vmatpush1.bf16.msra.mxu0 0
      %3312 = vmatprep.subr.bf16.mxu0 0
      %3313 = vmatpush1.bf16.msra.mxu0 0
      %3314 = vmatprep.subr.bf16.mxu0 0
      %3315 = vmatpush1.bf16.msra.mxu0 0
      %3316 = vmatprep.subr.bf16.mxu0 0
      %3317 = vmatpush1.bf16.msra.mxu0 0
      %3318 = vmatprep.subr.bf16.mxu0 0
      %3319 = vmatpush1.bf16.msra.mxu0 0
      %3320 = vmatprep.subr.bf16.mxu0 0
      %3321 = vmatpush1.bf16.msra.mxu0 0
      %3322 = vmatprep.subr.bf16.mxu0 0
      %3323 = vmatpush1.bf16.msra.mxu0 0
      %3324 = vmatprep.subr.bf16.mxu0 0
      %3325 = vmatpush1.bf16.msra.mxu0 0
      %3326 = vmatprep.subr.bf16.mxu0 0
      %3327 = vmatpush1.bf16.msra.mxu0 0
      %3328 = vmatprep.mubr.bf16.mxu0 0
      %3329 = vmatmul.mubr.bf16.gmra.mrb[0].mxu0 %v3102
      %v3330 = vpop.f32.mrb[0].mxu0
      %v3331 = vadd.f32 %v2271, %v3330
      %v3332 = vpop.f32.mrb[0].mxu0
      %v3333 = vpop.f32.mrb[0].mxu0
      %v3334 = vadd.f32 %v2274, %v3333
      %v3335 = vpop.f32.mrb[0].mxu0
      %3336 = vmatprep.mubr.bf16.mxu0 0
      %3337 = vmatmul.mubr.bf16.gmra.mrb[0].mxu0 %v3105
      %v3338 = vpop.f32.mrb[0].mxu0
      %v3339 = vadd.f32 %v2279, %v3338
      %v3340 = vpop.f32.mrb[0].mxu0
      %v3341 = vpop.f32.mrb[0].mxu0
      %v3342 = vadd.f32 %v2282, %v3341
      %v3343 = vpop.f32.mrb[0].mxu0
      %3344 = vmatprep.mubr.bf16.mxu0 0
      %3345 = vmatmul.mubr.bf16.gmra.mrb[0].mxu0 %v3108
      %v3346 = vpop.f32.mrb[0].mxu0
      %v3347 = vadd.f32 %v2287, %v3346
      %v3348 = vpop.f32.mrb[0].mxu0
      %v3349 = vpop.f32.mrb[0].mxu0
      %v3350 = vadd.f32 %v2290, %v3349
      %v3351 = vpop.f32.mrb[0].mxu0
      %3352 = vmatprep.mubr.bf16.mxu0 0
      %3353 = vmatmul.mubr.bf16.gmra.mrb[0].mxu0 %v3111
      %v3354 = vpop.f32.mrb[0].mxu0
      %v3355 = vadd.f32 %v2295, %v3354
      %v3356 = vpop.f32.mrb[0].mxu0
      %v3357 = vpop.f32.mrb[0].mxu0
      %v3358 = vadd.f32 %v2298, %v3357
      %v3359 = vpop.f32.mrb[0].mxu0
      %3360 = vmatprep.mubr.bf16.mxu0 0
      %3361 = vmatmul.mubr.bf16.gmra.mrb[0].mxu0 %v3114
      %v3362 = vpop.f32.mrb[0].mxu0
      %v3363 = vadd.f32 %v2303, %v3362
      %v3364 = vpop.f32.mrb[0].mxu0
      %v3365 = vpop.f32.mrb[0].mxu0
      %v3366 = vadd.f32 %v2306, %v3365
      %v3367 = vpop.f32.mrb[0].mxu0
      %3368 = vmatprep.mubr.bf16.mxu0 0
      %3369 = vmatmul.mubr.bf16.gmra.mrb[0].mxu0 %v3117
      %v3370 = vpop.f32.mrb[0].mxu0
      %v3371 = vadd.f32 %v2311, %v3370
      %v3372 = vpop.f32.mrb[0].mxu0
      %v3373 = vpop.f32.mrb[0].mxu0
      %v3374 = vadd.f32 %v2314, %v3373
      %v3375 = vpop.f32.mrb[0].mxu0
      %3376 = vmatprep.mubr.bf16.mxu0 0
      %3377 = vmatmul.mubr.bf16.gmra.mrb[0].mxu0 %v3120
      %v3378 = vpop.f32.mrb[0].mxu0
      %v3379 = vadd.f32 %v2319, %v3378
      %v3380 = vpop.f32.mrb[0].mxu0
      %v3381 = vpop.f32.mrb[0].mxu0
      %v3382 = vadd.f32 %v2322, %v3381
      %v3383 = vpop.f32.mrb[0].mxu0
      %3384 = vmatprep.mubr.bf16.mxu0 0
      %3385 = vmatmul.mubr.bf16.gmra.mrb[0].mxu0 %v3123
      %v3386 = vpop.f32.mrb[0].mxu0
      %v3387 = vadd.f32 %v2327, %v3386
      %v3388 = vpop.f32.mrb[0].mxu0
      %v3389 = vpop.f32.mrb[0].mxu0
      %v3390 = vadd.f32 %v2330, %v3389
      %v3391 = vpop.f32.mrb[0].mxu0
      %3392 = vmatprep.mubr.bf16.mxu0 0
      %3393 = vmatmul.mubr.bf16.gmra.mrb[0].mxu0 %v3126
      %v3394 = vpop.f32.mrb[0].mxu0
      %v3395 = vadd.f32 %v2335, %v3394
      %v3396 = vpop.f32.mrb[0].mxu0
      %v3397 = vpop.f32.mrb[0].mxu0
      %v3398 = vadd.f32 %v2338, %v3397
      %v3399 = vpop.f32.mrb[0].mxu0
      %3400 = vmatprep.mubr.bf16.mxu0 0
      %3401 = vmatmul.mubr.bf16.gmra.mrb[0].mxu0 %v3129
      %v3402 = vpop.f32.mrb[0].mxu0
      %v3403 = vadd.f32 %v2343, %v3402
      %v3404 = vpop.f32.mrb[0].mxu0
      %v3405 = vpop.f32.mrb[0].mxu0
      %v3406 = vadd.f32 %v2346, %v3405
      %v3407 = vpop.f32.mrb[0].mxu0
      %3408 = vmatprep.mubr.bf16.mxu0 0
      %3409 = vmatmul.mubr.bf16.gmra.mrb[0].mxu0 %v3132
      %v3410 = vpop.f32.mrb[0].mxu0
      %v3411 = vadd.f32 %v2351, %v3410
      %v3412 = vpop.f32.mrb[0].mxu0
      %v3413 = vpop.f32.mrb[0].mxu0
      %v3414 = vadd.f32 %v2354, %v3413
      %v3415 = vpop.f32.mrb[0].mxu0
      %3416 = vmatprep.mubr.bf16.mxu0 0
      %3417 = vmatmul.mubr.bf16.gmra.mrb[0].mxu0 %v3135
      %v3418 = vpop.f32.mrb[0].mxu0
      %v3419 = vadd.f32 %v2359, %v3418
      %v3420 = vpop.f32.mrb[0].mxu0
      %v3421 = vpop.f32.mrb[0].mxu0
      %v3422 = vadd.f32 %v2362, %v3421
      %v3423 = vpop.f32.mrb[0].mxu0
      %3424 = vmatprep.mubr.bf16.mxu0 0
      %3425 = vmatmul.mubr.bf16.gmra.mrb[0].mxu0 %v3138
      %v3426 = vpop.f32.mrb[0].mxu0
      %v3427 = vadd.f32 %v2367, %v3426
      %v3428 = vpop.f32.mrb[0].mxu0
      %v3429 = vpop.f32.mrb[0].mxu0
      %v3430 = vadd.f32 %v2370, %v3429
      %v3431 = vpop.f32.mrb[0].mxu0
      %3432 = vmatprep.mubr.bf16.mxu0 0
      %3433 = vmatmul.mubr.bf16.gmra.mrb[0].mxu0 %v3141
      %v3434 = vpop.f32.mrb[0].mxu0
      %v3435 = vadd.f32 %v2375, %v3434
      %v3436 = vpop.f32.mrb[0].mxu0
      %v3437 = vpop.f32.mrb[0].mxu0
      %v3438 = vadd.f32 %v2378, %v3437
      %v3439 = vpop.f32.mrb[0].mxu0
      %3440 = vmatprep.mubr.bf16.mxu0 0
      %3441 = vmatmul.mubr.bf16.gmra.mrb[0].mxu0 %v3144
      %v3442 = vpop.f32.mrb[0].mxu0
      %v3443 = vadd.f32 %v2383, %v3442
      %v3444 = vpop.f32.mrb[0].mxu0
      %v3445 = vpop.f32.mrb[0].mxu0
      %v3446 = vadd.f32 %v2386, %v3445
      %v3447 = vpop.f32.mrb[0].mxu0
      %3448 = vmatprep.mubr.bf16.mxu0 0
      %3449 = vmatmul.mubr.bf16.gmra.mrb[0].mxu0 %v3147
      %v3450 = vpop.f32.mrb[0].mxu0
      %v3451 = vadd.f32 %v2391, %v3450
      %v3452 = vpop.f32.mrb[0].mxu0
      %v3453 = vpop.f32.mrb[0].mxu0
      %v3454 = vadd.f32 %v2394, %v3453
      %v3455 = vpop.f32.mrb[0].mxu0
      %3456 = vmatprep.mubr.bf16.mxu0 0
      %3457 = vmatmul.mubr.bf16.gmra.mrb[0].mxu0 %v3150
      %v3458 = vpop.f32.mrb[0].mxu0
      %v3459 = vadd.f32 %v2399, %v3458
      %v3460 = vpop.f32.mrb[0].mxu0
      %v3461 = vpop.f32.mrb[0].mxu0
      %v3462 = vadd.f32 %v2402, %v3461
      %v3463 = vpop.f32.mrb[0].mxu0
      %3464 = vmatprep.mubr.bf16.mxu0 0
      %3465 = vmatmul.mubr.bf16.gmra.mrb[0].mxu0 %v3153
      %v3466 = vpop.f32.mrb[0].mxu0
      %v3467 = vadd.f32 %v2407, %v3466
      %v3468 = vpop.f32.mrb[0].mxu0
      %v3469 = vpop.f32.mrb[0].mxu0
      %v3470 = vadd.f32 %v2410, %v3469
      %v3471 = vpop.f32.mrb[0].mxu0
      %3472 = vmatprep.mubr.bf16.mxu0 0
      %3473 = vmatmul.mubr.bf16.gmra.mrb[0].mxu0 %v3156
      %v3474 = vpop.f32.mrb[0].mxu0
      %v3475 = vadd.f32 %v2415, %v3474
      %v3476 = vpop.f32.mrb[0].mxu0
      %v3477 = vpop.f32.mrb[0].mxu0
      %v3478 = vadd.f32 %v2418, %v3477
      %v3479 = vpop.f32.mrb[0].mxu0
      %3480 = vmatprep.mubr.bf16.mxu0 0
      %3481 = vmatmul.mubr.bf16.gmra.mrb[0].mxu0 %v3159
      %v3482 = vpop.f32.mrb[0].mxu0
      %v3483 = vadd.f32 %v2423, %v3482
      %v3484 = vpop.f32.mrb[0].mxu0
      %v3485 = vpop.f32.mrb[0].mxu0
      %v3486 = vadd.f32 %v2426, %v3485
      %v3487 = vpop.f32.mrb[0].mxu0
      %3488 = vmatprep.mubr.bf16.mxu0 0
      %3489 = vmatmul.mubr.bf16.gmra.mrb[0].mxu0 %v3162
      %v3490 = vpop.f32.mrb[0].mxu0
      %v3491 = vadd.f32 %v2431, %v3490
      %v3492 = vpop.f32.mrb[0].mxu0
      %v3493 = vpop.f32.mrb[0].mxu0
      %v3494 = vadd.f32 %v2434, %v3493
      %v3495 = vpop.f32.mrb[0].mxu0
      %3496 = vmatprep.mubr.bf16.mxu0 0
      %3497 = vmatmul.mubr.bf16.gmra.mrb[0].mxu0 %v3165
      %v3498 = vpop.f32.mrb[0].mxu0
      %v3499 = vadd.f32 %v2439, %v3498
      %v3500 = vpop.f32.mrb[0].mxu0
      %v3501 = vpop.f32.mrb[0].mxu0
      %v3502 = vadd.f32 %v2442, %v3501
      %v3503 = vpop.f32.mrb[0].mxu0
      %3504 = vmatprep.mubr.bf16.mxu0 0
      %3505 = vmatmul.mubr.bf16.gmra.mrb[0].mxu0 %v3168
      %v3506 = vpop.f32.mrb[0].mxu0
      %v3507 = vadd.f32 %v2447, %v3506
      %v3508 = vpop.f32.mrb[0].mxu0
      %v3509 = vpop.f32.mrb[0].mxu0
      %v3510 = vadd.f32 %v2450, %v3509
      %v3511 = vpop.f32.mrb[0].mxu0
      %3512 = vmatprep.mubr.bf16.mxu0 0
      %3513 = vmatmul.mubr.bf16.gmra.mrb[0].mxu0 %v3171
      %v3514 = vpop.f32.mrb[0].mxu0
      %v3515 = vadd.f32 %v2455, %v3514
      %v3516 = vpop.f32.mrb[0].mxu0
      %v3517 = vpop.f32.mrb[0].mxu0
      %v3518 = vadd.f32 %v2458, %v3517
      %v3519 = vpop.f32.mrb[0].mxu0
      %3520 = vmatprep.mubr.bf16.mxu0 0
      %3521 = vmatmul.mubr.bf16.gmra.mrb[0].mxu0 %v3174
      %v3522 = vpop.f32.mrb[0].mxu0
      %v3523 = vadd.f32 %v2463, %v3522
      %v3524 = vpop.f32.mrb[0].mxu0
      %v3525 = vpop.f32.mrb[0].mxu0
      %v3526 = vadd.f32 %v2466, %v3525
      %v3527 = vpop.f32.mrb[0].mxu0
      %3528 = vmatprep.mubr.bf16.mxu0 0
      %3529 = vmatmul.mubr.bf16.gmra.mrb[0].mxu0 %v3177
      %v3530 = vpop.f32.mrb[0].mxu0
      %v3531 = vadd.f32 %v2471, %v3530
      %v3532 = vpop.f32.mrb[0].mxu0
      %v3533 = vpop.f32.mrb[0].mxu0
      %v3534 = vadd.f32 %v2474, %v3533
      %v3535 = vpop.f32.mrb[0].mxu0
      %3536 = vmatprep.mubr.bf16.mxu0 0
      %3537 = vmatmul.mubr.bf16.gmra.mrb[0].mxu0 %v3180
      %v3538 = vpop.f32.mrb[0].mxu0
      %v3539 = vadd.f32 %v2479, %v3538
      %v3540 = vpop.f32.mrb[0].mxu0
      %v3541 = vpop.f32.mrb[0].mxu0
      %v3542 = vadd.f32 %v2482, %v3541
      %v3543 = vpop.f32.mrb[0].mxu0
      %3544 = vmatprep.mubr.bf16.mxu0 0
      %3545 = vmatmul.mubr.bf16.gmra.mrb[0].mxu0 %v3183
      %v3546 = vpop.f32.mrb[0].mxu0
      %v3547 = vadd.f32 %v2487, %v3546
      %v3548 = vpop.f32.mrb[0].mxu0
      %v3549 = vpop.f32.mrb[0].mxu0
      %v3550 = vadd.f32 %v2490, %v3549
      %v3551 = vpop.f32.mrb[0].mxu0
      %3552 = vmatprep.mubr.bf16.mxu0 0
      %3553 = vmatmul.mubr.bf16.gmra.mrb[0].mxu0 %v3186
      %v3554 = vpop.f32.mrb[0].mxu0
      %v3555 = vadd.f32 %v2495, %v3554
      %v3556 = vpop.f32.mrb[0].mxu0
      %v3557 = vpop.f32.mrb[0].mxu0
      %v3558 = vadd.f32 %v2498, %v3557
      %v3559 = vpop.f32.mrb[0].mxu0
      %3560 = vmatprep.mubr.bf16.mxu0 0
      %3561 = vmatmul.mubr.bf16.gmra.mrb[0].mxu0 %v3189
      %v3562 = vpop.f32.mrb[0].mxu0
      %v3563 = vadd.f32 %v2503, %v3562
      %v3564 = vpop.f32.mrb[0].mxu0
      %v3565 = vpop.f32.mrb[0].mxu0
      %v3566 = vadd.f32 %v2506, %v3565
      %v3567 = vpop.f32.mrb[0].mxu0
      %3568 = vmatprep.mubr.bf16.mxu0 0
      %3569 = vmatmul.mubr.bf16.gmra.mrb[0].mxu0 %v3192
      %v3570 = vpop.f32.mrb[0].mxu0
      %v3571 = vadd.f32 %v2511, %v3570
      %v3572 = vpop.f32.mrb[0].mxu0
      %v3573 = vpop.f32.mrb[0].mxu0
      %v3574 = vadd.f32 %v2514, %v3573
      %v3575 = vpop.f32.mrb[0].mxu0
      %3576 = vmatprep.mubr.bf16.mxu0 0
      %3577 = vmatmul.mubr.bf16.gmra.mrb[0].mxu0 %v3195
      %v3578 = vpop.f32.mrb[0].mxu0
      %v3579 = vadd.f32 %v2519, %v3578
      %v3580 = vpop.f32.mrb[0].mxu0
      %v3581 = vpop.f32.mrb[0].mxu0
      %v3582 = vadd.f32 %v2522, %v3581
      %v3583 = vpop.f32.mrb[0].mxu0
      %3584 = vmatprep.mubr.bf16.mxu0 0
      %3585 = vmatmul.mubr.bf16.gmra.mrb[0].mxu0 %v3198
      %v3586 = vpop.f32.mrb[0].mxu0
      %v3587 = vadd.f32 %v2527, %v3586
      %v3588 = vpop.f32.mrb[0].mxu0
      %v3589 = vpop.f32.mrb[0].mxu0
      %v3590 = vadd.f32 %v2530, %v3589
      %v3591 = vpop.f32.mrb[0].mxu0
      %3592 = vmatprep.mubr.bf16.mxu0 0
      %3593 = vmatmul.mubr.bf16.gmra.mrb[0].mxu0 %v3201
      %v3594 = vpop.f32.mrb[0].mxu0
      %v3595 = vadd.f32 %v2535, %v3594
      %v3596 = vpop.f32.mrb[0].mxu0
      %v3597 = vpop.f32.mrb[0].mxu0
      %v3598 = vadd.f32 %v2538, %v3597
      %v3599 = vpop.f32.mrb[0].mxu0
      %3600 = vmatprep.mubr.bf16.mxu0 0
      %3601 = vmatmul.mubr.bf16.gmra.mrb[0].mxu0 %v3204
      %v3602 = vpop.f32.mrb[0].mxu0
      %v3603 = vadd.f32 %v2543, %v3602
      %v3604 = vpop.f32.mrb[0].mxu0
      %v3605 = vpop.f32.mrb[0].mxu0
      %v3606 = vadd.f32 %v2546, %v3605
      %v3607 = vpop.f32.mrb[0].mxu0
      %3608 = vmatprep.mubr.bf16.mxu0 0
      %3609 = vmatmul.mubr.bf16.gmra.mrb[0].mxu0 %v3207
      %v3610 = vpop.f32.mrb[0].mxu0
      %v3611 = vadd.f32 %v2551, %v3610
      %v3612 = vpop.f32.mrb[0].mxu0
      %v3613 = vpop.f32.mrb[0].mxu0
      %v3614 = vadd.f32 %v2554, %v3613
      %v3615 = vpop.f32.mrb[0].mxu0
      %3616 = vmatprep.mubr.bf16.mxu0 0
      %3617 = vmatmul.mubr.bf16.gmra.mrb[0].mxu0 %v3210
      %v3618 = vpop.f32.mrb[0].mxu0
      %v3619 = vadd.f32 %v2559, %v3618
      %v3620 = vpop.f32.mrb[0].mxu0
      %v3621 = vpop.f32.mrb[0].mxu0
      %v3622 = vadd.f32 %v2562, %v3621
      %v3623 = vpop.f32.mrb[0].mxu0
      %3624 = vmatprep.mubr.bf16.mxu0 0
      %3625 = vmatmul.mubr.bf16.gmra.mrb[0].mxu0 %v3213
      %v3626 = vpop.f32.mrb[0].mxu0
      %v3627 = vadd.f32 %v2567, %v3626
      %v3628 = vpop.f32.mrb[0].mxu0
      %v3629 = vpop.f32.mrb[0].mxu0
      %v3630 = vadd.f32 %v2570, %v3629
      %v3631 = vpop.f32.mrb[0].mxu0
      %3632 = vmatprep.mubr.bf16.mxu0 0
      %3633 = vmatmul.mubr.bf16.gmra.mrb[0].mxu0 %v3216
      %v3634 = vpop.f32.mrb[0].mxu0
      %v3635 = vadd.f32 %v2575, %v3634
      %v3636 = vpop.f32.mrb[0].mxu0
      %v3637 = vpop.f32.mrb[0].mxu0
      %v3638 = vadd.f32 %v2578, %v3637
      %v3639 = vpop.f32.mrb[0].mxu0
      %3640 = vmatprep.mubr.bf16.mxu0 0
      %3641 = vmatmul.mubr.bf16.gmra.mrb[0].mxu0 %v3219
      %v3642 = vpop.f32.mrb[0].mxu0
      %v3643 = vadd.f32 %v2583, %v3642
      %v3644 = vpop.f32.mrb[0].mxu0
      %v3645 = vpop.f32.mrb[0].mxu0
      %v3646 = vadd.f32 %v2586, %v3645
      %v3647 = vpop.f32.mrb[0].mxu0
      %3648 = vmatprep.mubr.bf16.mxu0 0
      %3649 = vmatmul.mubr.bf16.gmra.mrb[0].mxu0 %v3222
      %v3650 = vpop.f32.mrb[0].mxu0
      %v3651 = vadd.f32 %v2591, %v3650
      %v3652 = vpop.f32.mrb[0].mxu0
      %v3653 = vpop.f32.mrb[0].mxu0
      %v3654 = vadd.f32 %v2594, %v3653
      %v3655 = vpop.f32.mrb[0].mxu0
      %3656 = vmatprep.mubr.bf16.mxu0 0
      %3657 = vmatmul.mubr.bf16.gmra.mrb[0].mxu0 %v3225
      %v3658 = vpop.f32.mrb[0].mxu0
      %v3659 = vadd.f32 %v2599, %v3658
      %v3660 = vpop.f32.mrb[0].mxu0
      %v3661 = vpop.f32.mrb[0].mxu0
      %v3662 = vadd.f32 %v2602, %v3661
      %v3663 = vpop.f32.mrb[0].mxu0
      %3664 = vmatprep.mubr.bf16.mxu0 0
      %3665 = vmatmul.mubr.bf16.gmra.mrb[0].mxu0 %v3228
      %v3666 = vpop.f32.mrb[0].mxu0
      %v3667 = vadd.f32 %v2607, %v3666
      %v3668 = vpop.f32.mrb[0].mxu0
      %v3669 = vpop.f32.mrb[0].mxu0
      %v3670 = vadd.f32 %v2610, %v3669
      %v3671 = vpop.f32.mrb[0].mxu0
      %3672 = vmatprep.mubr.bf16.mxu0 0
      %3673 = vmatmul.mubr.bf16.gmra.mrb[0].mxu0 %v3231
      %v3674 = vpop.f32.mrb[0].mxu0
      %v3675 = vadd.f32 %v2615, %v3674
      %v3676 = vpop.f32.mrb[0].mxu0
      %v3677 = vpop.f32.mrb[0].mxu0
      %v3678 = vadd.f32 %v2618, %v3677
      %v3679 = vpop.f32.mrb[0].mxu0
      %3680 = vmatprep.mubr.bf16.mxu0 0
      %3681 = vmatmul.mubr.bf16.gmra.mrb[0].mxu0 %v3234
      %v3682 = vpop.f32.mrb[0].mxu0
      %v3683 = vadd.f32 %v2623, %v3682
      %v3684 = vpop.f32.mrb[0].mxu0
      %v3685 = vpop.f32.mrb[0].mxu0
      %v3686 = vadd.f32 %v2626, %v3685
      %v3687 = vpop.f32.mrb[0].mxu0
      %3688 = vmatprep.mubr.bf16.mxu0 0
      %3689 = vmatmul.mubr.bf16.gmra.mrb[0].mxu0 %v3237
      %v3690 = vpop.f32.mrb[0].mxu0
      %v3691 = vadd.f32 %v2631, %v3690
      %v3692 = vpop.f32.mrb[0].mxu0
      %v3693 = vpop.f32.mrb[0].mxu0
      %v3694 = vadd.f32 %v2634, %v3693
      %v3695 = vpop.f32.mrb[0].mxu0
      %3696 = vmatprep.mubr.bf16.mxu0 0
      %3697 = vmatmul.mubr.bf16.gmra.mrb[0].mxu0 %v3240
      %v3698 = vpop.f32.mrb[0].mxu0
      %v3699 = vadd.f32 %v2639, %v3698
      %v3700 = vpop.f32.mrb[0].mxu0
      %v3701 = vpop.f32.mrb[0].mxu0
      %v3702 = vadd.f32 %v2642, %v3701
      %v3703 = vpop.f32.mrb[0].mxu0
      %3704 = vmatprep.mubr.bf16.mxu0 0
      %3705 = vmatmul.mubr.bf16.gmra.mrb[0].mxu0 %v3243
      %v3706 = vpop.f32.mrb[0].mxu0
      %v3707 = vadd.f32 %v2647, %v3706
      %v3708 = vpop.f32.mrb[0].mxu0
      %v3709 = vpop.f32.mrb[0].mxu0
      %v3710 = vadd.f32 %v2650, %v3709
      %v3711 = vpop.f32.mrb[0].mxu0
      %3712 = vmatprep.mubr.bf16.mxu0 0
      %3713 = vmatmul.mubr.bf16.gmra.mrb[0].mxu0 %v3246
      %v3714 = vpop.f32.mrb[0].mxu0
      %v3715 = vadd.f32 %v2655, %v3714
      %v3716 = vpop.f32.mrb[0].mxu0
      %v3717 = vpop.f32.mrb[0].mxu0
      %v3718 = vadd.f32 %v2658, %v3717
      %v3719 = vpop.f32.mrb[0].mxu0
      %3720 = vmatprep.mubr.bf16.mxu0 0
      %3721 = vmatmul.mubr.bf16.gmra.mrb[0].mxu0 %v3249
      %v3722 = vpop.f32.mrb[0].mxu0
      %v3723 = vadd.f32 %v2663, %v3722
      %v3724 = vpop.f32.mrb[0].mxu0
      %v3725 = vpop.f32.mrb[0].mxu0
      %v3726 = vadd.f32 %v2666, %v3725
      %v3727 = vpop.f32.mrb[0].mxu0
      %3728 = vmatprep.mubr.bf16.mxu0 0
      %3729 = vmatmul.mubr.bf16.gmra.mrb[0].mxu0 %v3252
      %v3730 = vpop.f32.mrb[0].mxu0
      %v3731 = vadd.f32 %v2671, %v3730
      %v3732 = vpop.f32.mrb[0].mxu0
      %v3733 = vpop.f32.mrb[0].mxu0
      %v3734 = vadd.f32 %v2674, %v3733
      %v3735 = vpop.f32.mrb[0].mxu0
      %3736 = vmatprep.mubr.bf16.mxu0 0
      %3737 = vmatmul.mubr.bf16.gmra.mrb[0].mxu0 %v3255
      %v3738 = vpop.f32.mrb[0].mxu0
      %v3739 = vadd.f32 %v2679, %v3738
      %v3740 = vpop.f32.mrb[0].mxu0
      %v3741 = vpop.f32.mrb[0].mxu0
      %v3742 = vadd.f32 %v2682, %v3741
      %v3743 = vpop.f32.mrb[0].mxu0
      %3744 = vmatprep.mubr.bf16.mxu0 0
      %3745 = vmatmul.mubr.bf16.gmra.mrb[0].mxu0 %v3258
      %v3746 = vpop.f32.mrb[0].mxu0
      %v3747 = vadd.f32 %v2687, %v3746
      %v3748 = vpop.f32.mrb[0].mxu0
      %v3749 = vpop.f32.mrb[0].mxu0
      %v3750 = vadd.f32 %v2690, %v3749
      %v3751 = vpop.f32.mrb[0].mxu0
      %3752 = vmatprep.mubr.bf16.mxu0 0
      %3753 = vmatmul.mubr.bf16.gmra.mrb[0].mxu0 %v3261
      %v3754 = vpop.f32.mrb[0].mxu0
      %v3755 = vadd.f32 %v2695, %v3754
      %v3756 = vpop.f32.mrb[0].mxu0
      %v3757 = vpop.f32.mrb[0].mxu0
      %v3758 = vadd.f32 %v2698, %v3757
      %v3759 = vpop.f32.mrb[0].mxu0
      %3760 = vmatprep.mubr.bf16.mxu0 0
      %3761 = vmatmul.mubr.bf16.gmra.mrb[0].mxu0 %v3264
      %v3762 = vpop.f32.mrb[0].mxu0
      %v3763 = vadd.f32 %v2703, %v3762
      %v3764 = vpop.f32.mrb[0].mxu0
      %v3765 = vpop.f32.mrb[0].mxu0
      %v3766 = vadd.f32 %v2706, %v3765
      %v3767 = vpop.f32.mrb[0].mxu0
      %3768 = vmatprep.mubr.bf16.mxu0 0
      %3769 = vmatmul.mubr.bf16.gmra.mrb[0].mxu0 %v3267
      %v3770 = vpop.f32.mrb[0].mxu0
      %v3771 = vadd.f32 %v2711, %v3770
      %v3772 = vpop.f32.mrb[0].mxu0
      %v3773 = vpop.f32.mrb[0].mxu0
      %v3774 = vadd.f32 %v2714, %v3773
      %v3775 = vpop.f32.mrb[0].mxu0
      %3776 = vmatprep.mubr.bf16.mxu0 0
      %3777 = vmatmul.mubr.bf16.gmra.mrb[0].mxu0 %v3270
      %v3778 = vpop.f32.mrb[0].mxu0
      %v3779 = vadd.f32 %v2719, %v3778
      %v3780 = vpop.f32.mrb[0].mxu0
      %v3781 = vpop.f32.mrb[0].mxu0
      %v3782 = vadd.f32 %v2722, %v3781
      %v3783 = vpop.f32.mrb[0].mxu0
      %3784 = vmatprep.mubr.bf16.mxu0 0
      %3785 = vmatmul.mubr.bf16.gmra.mrb[0].mxu0 %v3273
      %v3786 = vpop.f32.mrb[0].mxu0
      %v3787 = vadd.f32 %v2727, %v3786
      %v3788 = vpop.f32.mrb[0].mxu0
      %v3789 = vpop.f32.mrb[0].mxu0
      %v3790 = vadd.f32 %v2730, %v3789
      %v3791 = vpop.f32.mrb[0].mxu0
      %3792 = vmatprep.mubr.bf16.mxu0 0
      %3793 = vmatmul.mubr.bf16.gmra.mrb[0].mxu0 %v3276
      %v3794 = vpop.f32.mrb[0].mxu0
      %v3795 = vadd.f32 %v2735, %v3794
      %v3796 = vpop.f32.mrb[0].mxu0
      %v3797 = vpop.f32.mrb[0].mxu0
      %v3798 = vadd.f32 %v2738, %v3797
      %v3799 = vpop.f32.mrb[0].mxu0
      %3800 = vmatprep.mubr.bf16.mxu0 0
      %3801 = vmatmul.mubr.bf16.gmra.mrb[0].mxu0 %v3279
      %v3802 = vpop.f32.mrb[0].mxu0
      %v3803 = vadd.f32 %v2743, %v3802
      %v3804 = vpop.f32.mrb[0].mxu0
      %v3805 = vpop.f32.mrb[0].mxu0
      %v3806 = vadd.f32 %v2746, %v3805
      %v3807 = vpop.f32.mrb[0].mxu0
      %3808 = vmatprep.mubr.bf16.mxu0 0
      %3809 = vmatmul.mubr.bf16.gmra.mrb[0].mxu0 %v3282
      %v3810 = vpop.f32.mrb[0].mxu0
      %v3811 = vadd.f32 %v2751, %v3810
      %v3812 = vpop.f32.mrb[0].mxu0
      %v3813 = vpop.f32.mrb[0].mxu0
      %v3814 = vadd.f32 %v2754, %v3813
      %v3815 = vpop.f32.mrb[0].mxu0
      %3816 = vmatprep.mubr.bf16.mxu0 0
      %3817 = vmatmul.mubr.bf16.gmra.mrb[0].mxu0 %v3285
      %v3818 = vpop.f32.mrb[0].mxu0
      %v3819 = vadd.f32 %v2759, %v3818
      %v3820 = vpop.f32.mrb[0].mxu0
      %v3821 = vpop.f32.mrb[0].mxu0
      %v3822 = vadd.f32 %v2762, %v3821
      %v3823 = vpop.f32.mrb[0].mxu0
      %3824 = vmatprep.mubr.bf16.mxu0 0
      %3825 = vmatmul.mubr.bf16.gmra.mrb[0].mxu0 %v3288
      %v3826 = vpop.f32.mrb[0].mxu0
      %v3827 = vadd.f32 %v2767, %v3826
      %v3828 = vpop.f32.mrb[0].mxu0
      %v3829 = vpop.f32.mrb[0].mxu0
      %v3830 = vadd.f32 %v2770, %v3829
      %v3831 = vpop.f32.mrb[0].mxu0
      %3832 = vmatprep.mubr.bf16.mxu0 0
      %3833 = vmatmul.mubr.bf16.gmra.mrb[0].mxu0 %v3291
      %v3834 = vpop.f32.mrb[0].mxu0
      %v3835 = vadd.f32 %v2775, %v3834
      %v3836 = vpop.f32.mrb[0].mxu0
      %v3837 = vpop.f32.mrb[0].mxu0
      %v3838 = vadd.f32 %v2778, %v3837
      %v3839 = vpop.f32.mrb[0].mxu0
      %3840 = vdwg.mxu0
      %vm3857 = vcmask 1042432
      %vm3858 = vcmask 1046532
      %vm3859 = vmor %vm3857, %vm3858
      %v3860 = vrot.slane %v337, 5
      %v3861 = vrot.slane %v3860, 4
      %v3862 = vrot.slane %v338, 5
      %v3863 = vsel %vm3859, %v3861, %v3862
      %v3864 = vrot.slane %v3862, 4
      %v3865 = vrot.slane %v339, 5
      %v3866 = vsel %vm3859, %v3864, %v3865
      %v3867 = vrot.slane %v3865, 4
      %v3868 = vrot.slane %v340, 5
      %v3869 = vsel %vm3859, %v3867, %v3868
      %v3870 = vrot.slane %v3868, 4
      %v3871 = vrot.slane %v341, 5
      %v3872 = vsel %vm3859, %v3870, %v3871
      %v3873 = vrot.slane %v3871, 4
      %v3874 = vrot.slane %v342, 5
      %v3875 = vsel %vm3859, %v3873, %v3874
      %v3876 = vrot.slane %v3874, 4
      %v3877 = vrot.slane %v343, 5
      %v3878 = vsel %vm3859, %v3876, %v3877
      %v3879 = vrot.slane %v3877, 4
      %v3880 = vrot.slane %v344, 5
      %v3881 = vsel %vm3859, %v3879, %v3880
      %v3882 = vrot.slane %v3880, 4
      %v3883 = vrot.slane %v345, 5
      %v3884 = vsel %vm3859, %v3882, %v3883
      %v3885 = vrot.slane %v346, 5
      %v3886 = vrot.slane %v3885, 4
      %v3887 = vrot.slane %v347, 5
      %v3888 = vsel %vm3859, %v3886, %v3887
      %v3889 = vrot.slane %v3887, 4
      %v3890 = vrot.slane %v348, 5
      %v3891 = vsel %vm3859, %v3889, %v3890
      %v3892 = vrot.slane %v3890, 4
      %v3893 = vrot.slane %v349, 5
      %v3894 = vsel %vm3859, %v3892, %v3893
      %v3895 = vrot.slane %v3893, 4
      %v3896 = vrot.slane %v350, 5
      %v3897 = vsel %vm3859, %v3895, %v3896
      %v3898 = vrot.slane %v3896, 4
      %v3899 = vrot.slane %v351, 5
      %v3900 = vsel %vm3859, %v3898, %v3899
      %v3901 = vrot.slane %v3899, 4
      %v3902 = vrot.slane %v352, 5
      %v3903 = vsel %vm3859, %v3901, %v3902
      %v3904 = vrot.slane %v3902, 4
      %v3905 = vrot.slane %v353, 5
      %v3906 = vsel %vm3859, %v3904, %v3905
      %v3907 = vrot.slane %v3905, 4
      %v3908 = vrot.slane %v354, 5
      %v3909 = vsel %vm3859, %v3907, %v3908
      %v3910 = vrot.slane %v355, 5
      %v3911 = vrot.slane %v3910, 4
      %v3912 = vrot.slane %v356, 5
      %v3913 = vsel %vm3859, %v3911, %v3912
      %v3914 = vrot.slane %v3912, 4
      %v3915 = vrot.slane %v357, 5
      %v3916 = vsel %vm3859, %v3914, %v3915
      %v3917 = vrot.slane %v3915, 4
      %v3918 = vrot.slane %v358, 5
      %v3919 = vsel %vm3859, %v3917, %v3918
      %v3920 = vrot.slane %v3918, 4
      %v3921 = vrot.slane %v359, 5
      %v3922 = vsel %vm3859, %v3920, %v3921
      %v3923 = vrot.slane %v3921, 4
      %v3924 = vrot.slane %v360, 5
      %v3925 = vsel %vm3859, %v3923, %v3924
      %v3926 = vrot.slane %v3924, 4
      %v3927 = vrot.slane %v361, 5
      %v3928 = vsel %vm3859, %v3926, %v3927
      %v3929 = vrot.slane %v3927, 4
      %v3930 = vrot.slane %v362, 5
      %v3931 = vsel %vm3859, %v3929, %v3930
      %v3932 = vrot.slane %v3930, 4
      %v3933 = vrot.slane %v363, 5
      %v3934 = vsel %vm3859, %v3932, %v3933
      %v3935 = vrot.slane %v364, 5
      %v3936 = vrot.slane %v3935, 4
      %v3937 = vrot.slane %v365, 5
      %v3938 = vsel %vm3859, %v3936, %v3937
      %v3939 = vrot.slane %v3937, 4
      %v3940 = vrot.slane %v366, 5
      %v3941 = vsel %vm3859, %v3939, %v3940
      %v3942 = vrot.slane %v3940, 4
      %v3943 = vrot.slane %v367, 5
      %v3944 = vsel %vm3859, %v3942, %v3943
      %v3945 = vrot.slane %v3943, 4
      %v3946 = vrot.slane %v368, 5
      %v3947 = vsel %vm3859, %v3945, %v3946
      %v3948 = vrot.slane %v3946, 4
      %v3949 = vrot.slane %v369, 5
      %v3950 = vsel %vm3859, %v3948, %v3949
      %v3951 = vrot.slane %v3949, 4
      %v3952 = vrot.slane %v370, 5
      %v3953 = vsel %vm3859, %v3951, %v3952
      %v3954 = vrot.slane %v3952, 4
      %v3955 = vrot.slane %v371, 5
      %v3956 = vsel %vm3859, %v3954, %v3955
      %v3957 = vrot.slane %v3955, 4
      %v3958 = vrot.slane %v372, 5
      %v3959 = vsel %vm3859, %v3957, %v3958
      %v3960 = vrot.slane %v373, 5
      %v3961 = vrot.slane %v3960, 4
      %v3962 = vrot.slane %v374, 5
      %v3963 = vsel %vm3859, %v3961, %v3962
      %v3964 = vrot.slane %v3962, 4
      %v3965 = vrot.slane %v375, 5
      %v3966 = vsel %vm3859, %v3964, %v3965
      %v3967 = vrot.slane %v3965, 4
      %v3968 = vrot.slane %v376, 5
      %v3969 = vsel %vm3859, %v3967, %v3968
      %v3970 = vrot.slane %v3968, 4
      %v3971 = vrot.slane %v377, 5
      %v3972 = vsel %vm3859, %v3970, %v3971
      %v3973 = vrot.slane %v3971, 4
      %v3974 = vrot.slane %v378, 5
      %v3975 = vsel %vm3859, %v3973, %v3974
      %v3976 = vrot.slane %v3974, 4
      %v3977 = vrot.slane %v379, 5
      %v3978 = vsel %vm3859, %v3976, %v3977
      %v3979 = vrot.slane %v3977, 4
      %v3980 = vrot.slane %v380, 5
      %v3981 = vsel %vm3859, %v3979, %v3980
      %v3982 = vrot.slane %v3980, 4
      %v3983 = vrot.slane %v381, 5
      %v3984 = vsel %vm3859, %v3982, %v3983
      %v3985 = vrot.slane %v382, 5
      %v3986 = vrot.slane %v3985, 4
      %v3987 = vrot.slane %v383, 5
      %v3988 = vsel %vm3859, %v3986, %v3987
      %v3989 = vrot.slane %v3987, 4
      %v3990 = vrot.slane %v384, 5
      %v3991 = vsel %vm3859, %v3989, %v3990
      %v3992 = vrot.slane %v3990, 4
      %v3993 = vrot.slane %v385, 5
      %v3994 = vsel %vm3859, %v3992, %v3993
      %v3995 = vrot.slane %v3993, 4
      %v3996 = vrot.slane %v386, 5
      %v3997 = vsel %vm3859, %v3995, %v3996
      %v3998 = vrot.slane %v3996, 4
      %v3999 = vrot.slane %v387, 5
      %v4000 = vsel %vm3859, %v3998, %v3999
      %v4001 = vrot.slane %v3999, 4
      %v4002 = vrot.slane %v388, 5
      %v4003 = vsel %vm3859, %v4001, %v4002
      %v4004 = vrot.slane %v4002, 4
      %v4005 = vrot.slane %v389, 5
      %v4006 = vsel %vm3859, %v4004, %v4005
      %v4007 = vrot.slane %v4005, 4
      %v4008 = vrot.slane %v390, 5
      %v4009 = vsel %vm3859, %v4007, %v4008
      %v4010 = vrot.slane %v391, 5
      %v4011 = vrot.slane %v4010, 4
      %v4012 = vrot.slane %v392, 5
      %v4013 = vsel %vm3859, %v4011, %v4012
      %v4014 = vrot.slane %v4012, 4
      %v4015 = vrot.slane %v393, 5
      %v4016 = vsel %vm3859, %v4014, %v4015
      %v4017 = vrot.slane %v4015, 4
      %v4018 = vrot.slane %v394, 5
      %v4019 = vsel %vm3859, %v4017, %v4018
      %v4020 = vrot.slane %v4018, 4
      %v4021 = vrot.slane %v395, 5
      %v4022 = vsel %vm3859, %v4020, %v4021
      %v4023 = vrot.slane %v4021, 4
      %v4024 = vrot.slane %v396, 5
      %v4025 = vsel %vm3859, %v4023, %v4024
      %v4026 = vrot.slane %v4024, 4
      %v4027 = vrot.slane %v397, 5
      %v4028 = vsel %vm3859, %v4026, %v4027
      %v4029 = vrot.slane %v4027, 4
      %v4030 = vrot.slane %v398, 5
      %v4031 = vsel %vm3859, %v4029, %v4030
      %v4032 = vrot.slane %v4030, 4
      %v4033 = vrot.slane %v399, 5
      %v4034 = vsel %vm3859, %v4032, %v4033
      %v4035 = vrot.slane %v400, 5
      %v4036 = vrot.slane %v4035, 4
      %v4037 = vrot.slane %v401, 5
      %v4038 = vsel %vm3859, %v4036, %v4037
      %v4039 = vrot.slane %v4037, 4
      %v4040 = vrot.slane %v402, 5
      %v4041 = vsel %vm3859, %v4039, %v4040
      %v4042 = vrot.slane %v4040, 4
      %v4043 = vrot.slane %v403, 5
      %v4044 = vsel %vm3859, %v4042, %v4043
      %v4045 = vrot.slane %v4043, 4
      %v4046 = vrot.slane %v404, 5
      %v4047 = vsel %vm3859, %v4045, %v4046
      %v4048 = vrot.slane %v4046, 4
      %v4049 = vrot.slane %v405, 5
      %v4050 = vsel %vm3859, %v4048, %v4049
      %v4051 = vrot.slane %v4049, 4
      %v4052 = vrot.slane %v406, 5
      %v4053 = vsel %vm3859, %v4051, %v4052
      %v4054 = vrot.slane %v4052, 4
      %v4055 = vrot.slane %v407, 5
      %v4056 = vsel %vm3859, %v4054, %v4055
      %v4057 = vrot.slane %v4055, 4
      %v4058 = vrot.slane %v408, 5
      %v4059 = vsel %vm3859, %v4057, %v4058
      %v4060 = vrot.slane %v409, 5
      %v4061 = vrot.slane %v4060, 4
      %v4062 = vrot.slane %v410, 5
      %v4063 = vsel %vm3859, %v4061, %v4062
      %v4064 = vrot.slane %v4062, 4
      %v4065 = vrot.slane %v411, 5
      %v4066 = vsel %vm3859, %v4064, %v4065
      %v4067 = vrot.slane %v4065, 4
      %v4068 = vrot.slane %v412, 5
      %v4069 = vsel %vm3859, %v4067, %v4068
      %v4070 = vrot.slane %v4068, 4
      %v4071 = vrot.slane %v413, 5
      %v4072 = vsel %vm3859, %v4070, %v4071
      %v4073 = vrot.slane %v4071, 4
      %v4074 = vrot.slane %v414, 5
      %v4075 = vsel %vm3859, %v4073, %v4074
      %v4076 = vrot.slane %v4074, 4
      %v4077 = vrot.slane %v415, 5
      %v4078 = vsel %vm3859, %v4076, %v4077
      %v4079 = vrot.slane %v4077, 4
      %v4080 = vrot.slane %v416, 5
      %v4081 = vsel %vm3859, %v4079, %v4080
      %v4082 = vrot.slane %v4080, 4
      %v4083 = vrot.slane %v417, 5
      %v4084 = vsel %vm3859, %v4082, %v4083
      %v4085 = vrot.slane %v418, 5
      %v4086 = vrot.slane %v4085, 4
      %v4087 = vrot.slane %v419, 5
      %v4088 = vsel %vm3859, %v4086, %v4087
      %v4089 = vrot.slane %v4087, 4
      %v4090 = vrot.slane %v420, 5
      %v4091 = vsel %vm3859, %v4089, %v4090
      %v4092 = vrot.slane %v4090, 4
      %v4093 = vrot.slane %v421, 5
      %v4094 = vsel %vm3859, %v4092, %v4093
      %v4095 = vrot.slane %v4093, 4
      %v4096 = vrot.slane %v422, 5
      %v4097 = vsel %vm3859, %v4095, %v4096
      %v4098 = vrot.slane %v4096, 4
      %v4099 = vrot.slane %v423, 5
      %v4100 = vsel %vm3859, %v4098, %v4099
      %v4101 = vrot.slane %v4099, 4
      %v4102 = vrot.slane %v424, 5
      %v4103 = vsel %vm3859, %v4101, %v4102
      %v4104 = vrot.slane %v4102, 4
      %v4105 = vrot.slane %v425, 5
      %v4106 = vsel %vm3859, %v4104, %v4105
      %v4107 = vrot.slane %v4105, 4
      %v4108 = vrot.slane %v426, 5
      %v4109 = vsel %vm3859, %v4107, %v4108
      %v4110 = vrot.slane %v427, 5
      %v4111 = vrot.slane %v4110, 4
      %v4112 = vrot.slane %v428, 5
      %v4113 = vsel %vm3859, %v4111, %v4112
      %v4114 = vrot.slane %v4112, 4
      %v4115 = vrot.slane %v429, 5
      %v4116 = vsel %vm3859, %v4114, %v4115
      %v4117 = vrot.slane %v4115, 4
      %v4118 = vrot.slane %v430, 5
      %v4119 = vsel %vm3859, %v4117, %v4118
      %v4120 = vrot.slane %v4118, 4
      %v4121 = vrot.slane %v431, 5
      %v4122 = vsel %vm3859, %v4120, %v4121
      %v4123 = vrot.slane %v4121, 4
      %v4124 = vrot.slane %v432, 5
      %v4125 = vsel %vm3859, %v4123, %v4124
      %v4126 = vrot.slane %v4124, 4
      %v4127 = vrot.slane %v433, 5
      %v4128 = vsel %vm3859, %v4126, %v4127
      %v4129 = vrot.slane %v4127, 4
      %v4130 = vrot.slane %v434, 5
      %v4131 = vsel %vm3859, %v4129, %v4130
      %v4132 = vrot.slane %v4130, 4
      %v4133 = vrot.slane %v435, 5
      %v4134 = vsel %vm3859, %v4132, %v4133
      %v4135 = vrot.slane %v436, 5
      %v4136 = vrot.slane %v4135, 4
      %v4137 = vrot.slane %v437, 5
      %v4138 = vsel %vm3859, %v4136, %v4137
      %v4139 = vrot.slane %v4137, 4
      %v4140 = vrot.slane %v438, 5
      %v4141 = vsel %vm3859, %v4139, %v4140
      %v4142 = vrot.slane %v4140, 4
      %v4143 = vrot.slane %v439, 5
      %v4144 = vsel %vm3859, %v4142, %v4143
      %v4145 = vrot.slane %v4143, 4
      %v4146 = vrot.slane %v440, 5
      %v4147 = vsel %vm3859, %v4145, %v4146
      %v4148 = vrot.slane %v4146, 4
      %v4149 = vrot.slane %v441, 5
      %v4150 = vsel %vm3859, %v4148, %v4149
      %v4151 = vrot.slane %v4149, 4
      %v4152 = vrot.slane %v442, 5
      %v4153 = vsel %vm3859, %v4151, %v4152
      %v4154 = vrot.slane %v4152, 4
      %v4155 = vrot.slane %v443, 5
      %v4156 = vsel %vm3859, %v4154, %v4155
      %v4157 = vrot.slane %v4155, 4
      %v4158 = vrot.slane %v444, 5
      %v4159 = vsel %vm3859, %v4157, %v4158
      %v4160 = vrot.slane %v445, 5
      %v4161 = vrot.slane %v4160, 4
      %v4162 = vrot.slane %v446, 5
      %v4163 = vsel %vm3859, %v4161, %v4162
      %v4164 = vrot.slane %v4162, 4
      %v4165 = vrot.slane %v447, 5
      %v4166 = vsel %vm3859, %v4164, %v4165
      %v4167 = vrot.slane %v4165, 4
      %v4168 = vrot.slane %v448, 5
      %v4169 = vsel %vm3859, %v4167, %v4168
      %v4170 = vrot.slane %v4168, 4
      %v4171 = vrot.slane %v449, 5
      %v4172 = vsel %vm3859, %v4170, %v4171
      %v4173 = vrot.slane %v4171, 4
      %v4174 = vrot.slane %v450, 5
      %v4175 = vsel %vm3859, %v4173, %v4174
      %v4176 = vrot.slane %v4174, 4
      %v4177 = vrot.slane %v451, 5
      %v4178 = vsel %vm3859, %v4176, %v4177
      %v4179 = vrot.slane %v4177, 4
      %v4180 = vrot.slane %v452, 5
      %v4181 = vsel %vm3859, %v4179, %v4180
      %v4182 = vrot.slane %v4180, 4
      %v4183 = vrot.slane %v453, 5
      %v4184 = vsel %vm3859, %v4182, %v4183
      %v4185 = vrot.slane %v454, 5
      %v4186 = vrot.slane %v4185, 4
      %v4187 = vrot.slane %v455, 5
      %v4188 = vsel %vm3859, %v4186, %v4187
      %v4189 = vrot.slane %v4187, 4
      %v4190 = vrot.slane %v456, 5
      %v4191 = vsel %vm3859, %v4189, %v4190
      %v4192 = vrot.slane %v4190, 4
      %v4193 = vrot.slane %v457, 5
      %v4194 = vsel %vm3859, %v4192, %v4193
      %v4195 = vrot.slane %v4193, 4
      %v4196 = vrot.slane %v458, 5
      %v4197 = vsel %vm3859, %v4195, %v4196
      %v4198 = vrot.slane %v4196, 4
      %v4199 = vrot.slane %v459, 5
      %v4200 = vsel %vm3859, %v4198, %v4199
      %v4201 = vrot.slane %v4199, 4
      %v4202 = vrot.slane %v460, 5
      %v4203 = vsel %vm3859, %v4201, %v4202
      %v4204 = vrot.slane %v4202, 4
      %v4205 = vrot.slane %v461, 5
      %v4206 = vsel %vm3859, %v4204, %v4205
      %v4207 = vrot.slane %v4205, 4
      %v4208 = vrot.slane %v462, 5
      %v4209 = vsel %vm3859, %v4207, %v4208
      %v4210 = vrot.slane %v463, 5
      %v4211 = vrot.slane %v4210, 4
      %v4212 = vrot.slane %v464, 5
      %v4213 = vsel %vm3859, %v4211, %v4212
      %v4214 = vrot.slane %v4212, 4
      %v4215 = vrot.slane %v465, 5
      %v4216 = vsel %vm3859, %v4214, %v4215
      %v4217 = vrot.slane %v4215, 4
      %v4218 = vrot.slane %v466, 5
      %v4219 = vsel %vm3859, %v4217, %v4218
      %v4220 = vrot.slane %v4218, 4
      %v4221 = vrot.slane %v467, 5
      %v4222 = vsel %vm3859, %v4220, %v4221
      %v4223 = vrot.slane %v4221, 4
      %v4224 = vrot.slane %v468, 5
      %v4225 = vsel %vm3859, %v4223, %v4224
      %v4226 = vrot.slane %v4224, 4
      %v4227 = vrot.slane %v469, 5
      %v4228 = vsel %vm3859, %v4226, %v4227
      %v4229 = vrot.slane %v4227, 4
      %v4230 = vrot.slane %v470, 5
      %v4231 = vsel %vm3859, %v4229, %v4230
      %v4232 = vrot.slane %v4230, 4
      %v4233 = vrot.slane %v471, 5
      %v4234 = vsel %vm3859, %v4232, %v4233
      %v4235 = vrot.slane %v472, 5
      %v4236 = vrot.slane %v4235, 4
      %v4237 = vrot.slane %v473, 5
      %v4238 = vsel %vm3859, %v4236, %v4237
      %v4239 = vrot.slane %v4237, 4
      %v4240 = vrot.slane %v474, 5
      %v4241 = vsel %vm3859, %v4239, %v4240
      %v4242 = vrot.slane %v4240, 4
      %v4243 = vrot.slane %v475, 5
      %v4244 = vsel %vm3859, %v4242, %v4243
      %v4245 = vrot.slane %v4243, 4
      %v4246 = vrot.slane %v476, 5
      %v4247 = vsel %vm3859, %v4245, %v4246
      %v4248 = vrot.slane %v4246, 4
      %v4249 = vrot.slane %v477, 5
      %v4250 = vsel %vm3859, %v4248, %v4249
      %v4251 = vrot.slane %v4249, 4
      %v4252 = vrot.slane %v478, 5
      %v4253 = vsel %vm3859, %v4251, %v4252
      %v4254 = vrot.slane %v4252, 4
      %v4255 = vrot.slane %v479, 5
      %v4256 = vsel %vm3859, %v4254, %v4255
      %v4257 = vrot.slane %v4255, 4
      %v4258 = vrot.slane %v480, 5
      %v4259 = vsel %vm3859, %v4257, %v4258
      %v4260 = vunpack.c.l.b16 %v3863
      %v4261 = vunpack.c.l.b16 %v3866
      %v4262 = vunpack.c.l.b16 %v3869
      %v4263 = vunpack.c.l.b16 %v3872
      %v4264 = vunpack.c.l.b16 %v3875
      %v4265 = vunpack.c.l.b16 %v3878
      %v4266 = vunpack.c.l.b16 %v3881
      %v4267 = vunpack.c.l.b16 %v3884
      %v4268 = vunpack.c.l.b16 %v3888
      %v4269 = vunpack.c.l.b16 %v3891
      %v4270 = vunpack.c.l.b16 %v3894
      %v4271 = vunpack.c.l.b16 %v3897
      %v4272 = vunpack.c.l.b16 %v3900
      %v4273 = vunpack.c.l.b16 %v3903
      %v4274 = vunpack.c.l.b16 %v3906
      %v4275 = vunpack.c.l.b16 %v3909
      %v4276 = vunpack.c.l.b16 %v3913
      %v4277 = vunpack.c.l.b16 %v3916
      %v4278 = vunpack.c.l.b16 %v3919
      %v4279 = vunpack.c.l.b16 %v3922
      %v4280 = vunpack.c.l.b16 %v3925
      %v4281 = vunpack.c.l.b16 %v3928
      %v4282 = vunpack.c.l.b16 %v3931
      %v4283 = vunpack.c.l.b16 %v3934
      %v4284 = vunpack.c.l.b16 %v3938
      %v4285 = vunpack.c.l.b16 %v3941
      %v4286 = vunpack.c.l.b16 %v3944
      %v4287 = vunpack.c.l.b16 %v3947
      %v4288 = vunpack.c.l.b16 %v3950
      %v4289 = vunpack.c.l.b16 %v3953
      %v4290 = vunpack.c.l.b16 %v3956
      %v4291 = vunpack.c.l.b16 %v3959
      %v4292 = vunpack.c.l.b16 %v3963
      %v4293 = vunpack.c.l.b16 %v3966
      %v4294 = vunpack.c.l.b16 %v3969
      %v4295 = vunpack.c.l.b16 %v3972
      %v4296 = vunpack.c.l.b16 %v3975
      %v4297 = vunpack.c.l.b16 %v3978
      %v4298 = vunpack.c.l.b16 %v3981
      %v4299 = vunpack.c.l.b16 %v3984
      %v4300 = vunpack.c.l.b16 %v3988
      %v4301 = vunpack.c.l.b16 %v3991
      %v4302 = vunpack.c.l.b16 %v3994
      %v4303 = vunpack.c.l.b16 %v3997
      %v4304 = vunpack.c.l.b16 %v4000
      %v4305 = vunpack.c.l.b16 %v4003
      %v4306 = vunpack.c.l.b16 %v4006
      %v4307 = vunpack.c.l.b16 %v4009
      %v4308 = vunpack.c.l.b16 %v4013
      %v4309 = vunpack.c.l.b16 %v4016
      %v4310 = vunpack.c.l.b16 %v4019
      %v4311 = vunpack.c.l.b16 %v4022
      %v4312 = vunpack.c.l.b16 %v4025
      %v4313 = vunpack.c.l.b16 %v4028
      %v4314 = vunpack.c.l.b16 %v4031
      %v4315 = vunpack.c.l.b16 %v4034
      %v4316 = vunpack.c.l.b16 %v4038
      %v4317 = vunpack.c.l.b16 %v4041
      %v4318 = vunpack.c.l.b16 %v4044
      %v4319 = vunpack.c.l.b16 %v4047
      %v4320 = vunpack.c.l.b16 %v4050
      %v4321 = vunpack.c.l.b16 %v4053
      %v4322 = vunpack.c.l.b16 %v4056
      %v4323 = vunpack.c.l.b16 %v4059
      %v4324 = vunpack.c.l.b16 %v4063
      %v4325 = vunpack.c.l.b16 %v4066
      %v4326 = vunpack.c.l.b16 %v4069
      %v4327 = vunpack.c.l.b16 %v4072
      %v4328 = vunpack.c.l.b16 %v4075
      %v4329 = vunpack.c.l.b16 %v4078
      %v4330 = vunpack.c.l.b16 %v4081
      %v4331 = vunpack.c.l.b16 %v4084
      %v4332 = vunpack.c.l.b16 %v4088
      %v4333 = vunpack.c.l.b16 %v4091
      %v4334 = vunpack.c.l.b16 %v4094
      %v4335 = vunpack.c.l.b16 %v4097
      %v4336 = vunpack.c.l.b16 %v4100
      %v4337 = vunpack.c.l.b16 %v4103
      %v4338 = vunpack.c.l.b16 %v4106
      %v4339 = vunpack.c.l.b16 %v4109
      %v4340 = vunpack.c.l.b16 %v4113
      %v4341 = vunpack.c.l.b16 %v4116
      %v4342 = vunpack.c.l.b16 %v4119
      %v4343 = vunpack.c.l.b16 %v4122
      %v4344 = vunpack.c.l.b16 %v4125
      %v4345 = vunpack.c.l.b16 %v4128
      %v4346 = vunpack.c.l.b16 %v4131
      %v4347 = vunpack.c.l.b16 %v4134
      %v4348 = vunpack.c.l.b16 %v4138
      %v4349 = vunpack.c.l.b16 %v4141
      %v4350 = vunpack.c.l.b16 %v4144
      %v4351 = vunpack.c.l.b16 %v4147
      %v4352 = vunpack.c.l.b16 %v4150
      %v4353 = vunpack.c.l.b16 %v4153
      %v4354 = vunpack.c.l.b16 %v4156
      %v4355 = vunpack.c.l.b16 %v4159
      %v4356 = vunpack.c.l.b16 %v4163
      %v4357 = vunpack.c.l.b16 %v4166
      %v4358 = vunpack.c.l.b16 %v4169
      %v4359 = vunpack.c.l.b16 %v4172
      %v4360 = vunpack.c.l.b16 %v4175
      %v4361 = vunpack.c.l.b16 %v4178
      %v4362 = vunpack.c.l.b16 %v4181
      %v4363 = vunpack.c.l.b16 %v4184
      %v4364 = vunpack.c.l.b16 %v4188
      %v4365 = vunpack.c.l.b16 %v4191
      %v4366 = vunpack.c.l.b16 %v4194
      %v4367 = vunpack.c.l.b16 %v4197
      %v4368 = vunpack.c.l.b16 %v4200
      %v4369 = vunpack.c.l.b16 %v4203
      %v4370 = vunpack.c.l.b16 %v4206
      %v4371 = vunpack.c.l.b16 %v4209
      %v4372 = vunpack.c.l.b16 %v4213
      %v4373 = vunpack.c.l.b16 %v4216
      %v4374 = vunpack.c.l.b16 %v4219
      %v4375 = vunpack.c.l.b16 %v4222
      %v4376 = vunpack.c.l.b16 %v4225
      %v4377 = vunpack.c.l.b16 %v4228
      %v4378 = vunpack.c.l.b16 %v4231
      %v4379 = vunpack.c.l.b16 %v4234
      %v4380 = vunpack.c.l.b16 %v4238
      %v4381 = vunpack.c.l.b16 %v4241
      %v4382 = vunpack.c.l.b16 %v4244
      %v4383 = vunpack.c.l.b16 %v4247
      %v4384 = vunpack.c.l.b16 %v4250
      %v4385 = vunpack.c.l.b16 %v4253
      %v4386 = vunpack.c.l.b16 %v4256
      %v4387 = vunpack.c.l.b16 %v4259
      %v4388 = vpack.c.b16 %v4261, %v4260
      %v4389 = vpack.c.b16 %v4263, %v4262
      %v4390 = vpack.c.b16 %v4265, %v4264
      %v4391 = vpack.c.b16 %v4267, %v4266
      %v4392 = vpack.c.b16 %v4269, %v4268
      %v4393 = vpack.c.b16 %v4271, %v4270
      %v4394 = vpack.c.b16 %v4273, %v4272
      %v4395 = vpack.c.b16 %v4275, %v4274
      %v4396 = vpack.c.b16 %v4277, %v4276
      %v4397 = vpack.c.b16 %v4279, %v4278
      %v4398 = vpack.c.b16 %v4281, %v4280
      %v4399 = vpack.c.b16 %v4283, %v4282
      %v4400 = vpack.c.b16 %v4285, %v4284
      %v4401 = vpack.c.b16 %v4287, %v4286
      %v4402 = vpack.c.b16 %v4289, %v4288
      %v4403 = vpack.c.b16 %v4291, %v4290
      %v4404 = vpack.c.b16 %v4293, %v4292
      %v4405 = vpack.c.b16 %v4295, %v4294
      %v4406 = vpack.c.b16 %v4297, %v4296
      %v4407 = vpack.c.b16 %v4299, %v4298
      %v4408 = vpack.c.b16 %v4301, %v4300
      %v4409 = vpack.c.b16 %v4303, %v4302
      %v4410 = vpack.c.b16 %v4305, %v4304
      %v4411 = vpack.c.b16 %v4307, %v4306
      %v4412 = vpack.c.b16 %v4309, %v4308
      %v4413 = vpack.c.b16 %v4311, %v4310
      %v4414 = vpack.c.b16 %v4313, %v4312
      %v4415 = vpack.c.b16 %v4315, %v4314
      %v4416 = vpack.c.b16 %v4317, %v4316
      %v4417 = vpack.c.b16 %v4319, %v4318
      %v4418 = vpack.c.b16 %v4321, %v4320
      %v4419 = vpack.c.b16 %v4323, %v4322
      %v4420 = vpack.c.b16 %v4325, %v4324
      %v4421 = vpack.c.b16 %v4327, %v4326
      %v4422 = vpack.c.b16 %v4329, %v4328
      %v4423 = vpack.c.b16 %v4331, %v4330
      %v4424 = vpack.c.b16 %v4333, %v4332
      %v4425 = vpack.c.b16 %v4335, %v4334
      %v4426 = vpack.c.b16 %v4337, %v4336
      %v4427 = vpack.c.b16 %v4339, %v4338
      %v4428 = vpack.c.b16 %v4341, %v4340
      %v4429 = vpack.c.b16 %v4343, %v4342
      %v4430 = vpack.c.b16 %v4345, %v4344
      %v4431 = vpack.c.b16 %v4347, %v4346
      %v4432 = vpack.c.b16 %v4349, %v4348
      %v4433 = vpack.c.b16 %v4351, %v4350
      %v4434 = vpack.c.b16 %v4353, %v4352
      %v4435 = vpack.c.b16 %v4355, %v4354
      %v4436 = vpack.c.b16 %v4357, %v4356
      %v4437 = vpack.c.b16 %v4359, %v4358
      %v4438 = vpack.c.b16 %v4361, %v4360
      %v4439 = vpack.c.b16 %v4363, %v4362
      %v4440 = vpack.c.b16 %v4365, %v4364
      %v4441 = vpack.c.b16 %v4367, %v4366
      %v4442 = vpack.c.b16 %v4369, %v4368
      %v4443 = vpack.c.b16 %v4371, %v4370
      %v4444 = vpack.c.b16 %v4373, %v4372
      %v4445 = vpack.c.b16 %v4375, %v4374
      %v4446 = vpack.c.b16 %v4377, %v4376
      %v4447 = vpack.c.b16 %v4379, %v4378
      %v4448 = vpack.c.b16 %v4381, %v4380
      %v4449 = vpack.c.b16 %v4383, %v4382
      %v4450 = vpack.c.b16 %v4385, %v4384
      %v4451 = vpack.c.b16 %v4387, %v4386
      %v4453 = vunpack.c.l.b16 %v485
      %v4454 = vpack.c.b16 %v4453, %v2026
      %v4455 = vrot.slane %v4454, 3
      %v4457 = vsel %vm2036, %v4388, 0
      %v4460 = vsel %vm2036, %v4389, 0
      %v4463 = vsel %vm2036, %v4390, 0
      %v4466 = vsel %vm2036, %v4391, 0
      %v4469 = vsel %vm2036, %v4392, 0
      %v4472 = vsel %vm2036, %v4393, 0
      %v4475 = vsel %vm2036, %v4394, 0
      %v4478 = vsel %vm2036, %v4395, 0
      %v4481 = vsel %vm2036, %v4396, 0
      %v4484 = vsel %vm2036, %v4397, 0
      %v4487 = vsel %vm2036, %v4398, 0
      %v4490 = vsel %vm2036, %v4399, 0
      %v4493 = vsel %vm2036, %v4400, 0
      %v4496 = vsel %vm2036, %v4401, 0
      %v4499 = vsel %vm2036, %v4402, 0
      %v4502 = vsel %vm2036, %v4403, 0
      %v4505 = vsel %vm2036, %v4404, 0
      %v4508 = vsel %vm2036, %v4405, 0
      %v4511 = vsel %vm2036, %v4406, 0
      %v4514 = vsel %vm2036, %v4407, 0
      %v4517 = vsel %vm2036, %v4408, 0
      %v4520 = vsel %vm2036, %v4409, 0
      %v4523 = vsel %vm2036, %v4410, 0
      %v4526 = vsel %vm2036, %v4411, 0
      %v4529 = vsel %vm2036, %v4412, 0
      %v4532 = vsel %vm2036, %v4413, 0
      %v4535 = vsel %vm2036, %v4414, 0
      %v4538 = vsel %vm2036, %v4415, 0
      %v4541 = vsel %vm2036, %v4416, 0
      %v4544 = vsel %vm2036, %v4417, 0
      %v4547 = vsel %vm2036, %v4418, 0
      %v4550 = vsel %vm2036, %v4419, 0
      %v4553 = vsel %vm2036, %v4420, 0
      %v4556 = vsel %vm2036, %v4421, 0
      %v4559 = vsel %vm2036, %v4422, 0
      %v4562 = vsel %vm2036, %v4423, 0
      %v4565 = vsel %vm2036, %v4424, 0
      %v4568 = vsel %vm2036, %v4425, 0
      %v4571 = vsel %vm2036, %v4426, 0
      %v4574 = vsel %vm2036, %v4427, 0
      %v4577 = vsel %vm2036, %v4428, 0
      %v4580 = vsel %vm2036, %v4429, 0
      %v4583 = vsel %vm2036, %v4430, 0
      %v4586 = vsel %vm2036, %v4431, 0
      %v4589 = vsel %vm2036, %v4432, 0
      %v4592 = vsel %vm2036, %v4433, 0
      %v4595 = vsel %vm2036, %v4434, 0
      %v4598 = vsel %vm2036, %v4435, 0
      %v4601 = vsel %vm2036, %v4436, 0
      %v4604 = vsel %vm2036, %v4437, 0
      %v4607 = vsel %vm2036, %v4438, 0
      %v4610 = vsel %vm2036, %v4439, 0
      %v4613 = vsel %vm2036, %v4440, 0
      %v4616 = vsel %vm2036, %v4441, 0
      %v4619 = vsel %vm2036, %v4442, 0
      %v4622 = vsel %vm2036, %v4443, 0
      %v4625 = vsel %vm2036, %v4444, 0
      %v4628 = vsel %vm2036, %v4445, 0
      %v4631 = vsel %vm2036, %v4446, 0
      %v4634 = vsel %vm2036, %v4447, 0
      %v4637 = vsel %vm2036, %v4448, 0
      %v4640 = vsel %vm2036, %v4449, 0
      %v4643 = vsel %vm2036, %v4450, 0
      %v4646 = vsel %vm2036, %v4451, 0
      %v4649 = vand.u32 %v4455, %v2232
      %4651 = vmatprep.subr.bf16.mxu0 0
      %4652 = vmatpush1.bf16.msra.mxu0 %v4649
      %4653 = vmatprep.subr.bf16.mxu0 0
      %4654 = vmatpush1.bf16.msra.mxu0 0
      %4655 = vmatprep.subr.bf16.mxu0 0
      %4656 = vmatpush1.bf16.msra.mxu0 0
      %4657 = vmatprep.subr.bf16.mxu0 0
      %4658 = vmatpush1.bf16.msra.mxu0 0
      %4659 = vmatprep.subr.bf16.mxu0 0
      %4660 = vmatpush1.bf16.msra.mxu0 0
      %4661 = vmatprep.subr.bf16.mxu0 0
      %4662 = vmatpush1.bf16.msra.mxu0 0
      %4663 = vmatprep.subr.bf16.mxu0 0
      %4664 = vmatpush1.bf16.msra.mxu0 0
      %4665 = vmatprep.subr.bf16.mxu0 0
      %4666 = vmatpush1.bf16.msra.mxu0 0
      %4667 = vmatprep.subr.bf16.mxu0 0
      %4668 = vmatpush1.bf16.msra.mxu0 0
      %4669 = vmatprep.subr.bf16.mxu0 0
      %4670 = vmatpush1.bf16.msra.mxu0 0
      %4671 = vmatprep.subr.bf16.mxu0 0
      %4672 = vmatpush1.bf16.msra.mxu0 0
      %4673 = vmatprep.subr.bf16.mxu0 0
      %4674 = vmatpush1.bf16.msra.mxu0 0
      %4675 = vmatprep.subr.bf16.mxu0 0
      %4676 = vmatpush1.bf16.msra.mxu0 0
      %4677 = vmatprep.subr.bf16.mxu0 0
      %4678 = vmatpush1.bf16.msra.mxu0 0
      %4679 = vmatprep.subr.bf16.mxu0 0
      %4680 = vmatpush1.bf16.msra.mxu0 0
      %4681 = vmatprep.subr.bf16.mxu0 0
      %4682 = vmatpush1.bf16.msra.mxu0 0
      %4683 = vmatprep.mubr.bf16.mxu0 0
      %4684 = vmatmul.mubr.bf16.gmra.mrb[0].mxu0 %v4457
      %v4685 = vpop.f32.mrb[0].mxu0
      %v4686 = vadd.f32 0.0, %v4685
      %v4687 = vpop.f32.mrb[0].mxu0
      %v4688 = vpop.f32.mrb[0].mxu0
      %v4689 = vadd.f32 0.0, %v4688
      %v4690 = vpop.f32.mrb[0].mxu0
      %4691 = vmatprep.mubr.bf16.mxu0 0
      %4692 = vmatmul.mubr.bf16.gmra.mrb[0].mxu0 %v4460
      %v4693 = vpop.f32.mrb[0].mxu0
      %v4694 = vadd.f32 0.0, %v4693
      %v4695 = vpop.f32.mrb[0].mxu0
      %v4696 = vpop.f32.mrb[0].mxu0
      %v4697 = vadd.f32 0.0, %v4696
      %v4698 = vpop.f32.mrb[0].mxu0
      %4699 = vmatprep.mubr.bf16.mxu0 0
      %4700 = vmatmul.mubr.bf16.gmra.mrb[0].mxu0 %v4463
      %v4701 = vpop.f32.mrb[0].mxu0
      %v4702 = vadd.f32 0.0, %v4701
      %v4703 = vpop.f32.mrb[0].mxu0
      %v4704 = vpop.f32.mrb[0].mxu0
      %v4705 = vadd.f32 0.0, %v4704
      %v4706 = vpop.f32.mrb[0].mxu0
      %4707 = vmatprep.mubr.bf16.mxu0 0
      %4708 = vmatmul.mubr.bf16.gmra.mrb[0].mxu0 %v4466
      %v4709 = vpop.f32.mrb[0].mxu0
      %v4710 = vadd.f32 0.0, %v4709
      %v4711 = vpop.f32.mrb[0].mxu0
      %v4712 = vpop.f32.mrb[0].mxu0
      %v4713 = vadd.f32 0.0, %v4712
      %v4714 = vpop.f32.mrb[0].mxu0
      %4715 = vmatprep.mubr.bf16.mxu0 0
      %4716 = vmatmul.mubr.bf16.gmra.mrb[0].mxu0 %v4469
      %v4717 = vpop.f32.mrb[0].mxu0
      %v4718 = vadd.f32 0.0, %v4717
      %v4719 = vpop.f32.mrb[0].mxu0
      %v4720 = vpop.f32.mrb[0].mxu0
      %v4721 = vadd.f32 0.0, %v4720
      %v4722 = vpop.f32.mrb[0].mxu0
      %4723 = vmatprep.mubr.bf16.mxu0 0
      %4724 = vmatmul.mubr.bf16.gmra.mrb[0].mxu0 %v4472
      %v4725 = vpop.f32.mrb[0].mxu0
      %v4726 = vadd.f32 0.0, %v4725
      %v4727 = vpop.f32.mrb[0].mxu0
      %v4728 = vpop.f32.mrb[0].mxu0
      %v4729 = vadd.f32 0.0, %v4728
      %v4730 = vpop.f32.mrb[0].mxu0
      %4731 = vmatprep.mubr.bf16.mxu0 0
      %4732 = vmatmul.mubr.bf16.gmra.mrb[0].mxu0 %v4475
      %v4733 = vpop.f32.mrb[0].mxu0
      %v4734 = vadd.f32 0.0, %v4733
      %v4735 = vpop.f32.mrb[0].mxu0
      %v4736 = vpop.f32.mrb[0].mxu0
      %v4737 = vadd.f32 0.0, %v4736
      %v4738 = vpop.f32.mrb[0].mxu0
      %4739 = vmatprep.mubr.bf16.mxu0 0
      %4740 = vmatmul.mubr.bf16.gmra.mrb[0].mxu0 %v4478
      %v4741 = vpop.f32.mrb[0].mxu0
      %v4742 = vadd.f32 0.0, %v4741
      %v4743 = vpop.f32.mrb[0].mxu0
      %v4744 = vpop.f32.mrb[0].mxu0
      %v4745 = vadd.f32 0.0, %v4744
      %v4746 = vpop.f32.mrb[0].mxu0
      %4747 = vmatprep.mubr.bf16.mxu0 0
      %4748 = vmatmul.mubr.bf16.gmra.mrb[0].mxu0 %v4481
      %v4749 = vpop.f32.mrb[0].mxu0
      %v4750 = vadd.f32 0.0, %v4749
      %v4751 = vpop.f32.mrb[0].mxu0
      %v4752 = vpop.f32.mrb[0].mxu0
      %v4753 = vadd.f32 0.0, %v4752
      %v4754 = vpop.f32.mrb[0].mxu0
      %4755 = vmatprep.mubr.bf16.mxu0 0
      %4756 = vmatmul.mubr.bf16.gmra.mrb[0].mxu0 %v4484
      %v4757 = vpop.f32.mrb[0].mxu0
      %v4758 = vadd.f32 0.0, %v4757
      %v4759 = vpop.f32.mrb[0].mxu0
      %v4760 = vpop.f32.mrb[0].mxu0
      %v4761 = vadd.f32 0.0, %v4760
      %v4762 = vpop.f32.mrb[0].mxu0
      %4763 = vmatprep.mubr.bf16.mxu0 0
      %4764 = vmatmul.mubr.bf16.gmra.mrb[0].mxu0 %v4487
      %v4765 = vpop.f32.mrb[0].mxu0
      %v4766 = vadd.f32 0.0, %v4765
      %v4767 = vpop.f32.mrb[0].mxu0
      %v4768 = vpop.f32.mrb[0].mxu0
      %v4769 = vadd.f32 0.0, %v4768
      %v4770 = vpop.f32.mrb[0].mxu0
      %4771 = vmatprep.mubr.bf16.mxu0 0
      %4772 = vmatmul.mubr.bf16.gmra.mrb[0].mxu0 %v4490
      %v4773 = vpop.f32.mrb[0].mxu0
      %v4774 = vadd.f32 0.0, %v4773
      %v4775 = vpop.f32.mrb[0].mxu0
      %v4776 = vpop.f32.mrb[0].mxu0
      %v4777 = vadd.f32 0.0, %v4776
      %v4778 = vpop.f32.mrb[0].mxu0
      %4779 = vmatprep.mubr.bf16.mxu0 0
      %4780 = vmatmul.mubr.bf16.gmra.mrb[0].mxu0 %v4493
      %v4781 = vpop.f32.mrb[0].mxu0
      %v4782 = vadd.f32 0.0, %v4781
      %v4783 = vpop.f32.mrb[0].mxu0
      %v4784 = vpop.f32.mrb[0].mxu0
      %v4785 = vadd.f32 0.0, %v4784
      %v4786 = vpop.f32.mrb[0].mxu0
      %4787 = vmatprep.mubr.bf16.mxu0 0
      %4788 = vmatmul.mubr.bf16.gmra.mrb[0].mxu0 %v4496
      %v4789 = vpop.f32.mrb[0].mxu0
      %v4790 = vadd.f32 0.0, %v4789
      %v4791 = vpop.f32.mrb[0].mxu0
      %v4792 = vpop.f32.mrb[0].mxu0
      %v4793 = vadd.f32 0.0, %v4792
      %v4794 = vpop.f32.mrb[0].mxu0
      %4795 = vmatprep.mubr.bf16.mxu0 0
      %4796 = vmatmul.mubr.bf16.gmra.mrb[0].mxu0 %v4499
      %v4797 = vpop.f32.mrb[0].mxu0
      %v4798 = vadd.f32 0.0, %v4797
      %v4799 = vpop.f32.mrb[0].mxu0
      %v4800 = vpop.f32.mrb[0].mxu0
      %v4801 = vadd.f32 0.0, %v4800
      %v4802 = vpop.f32.mrb[0].mxu0
      %4803 = vmatprep.mubr.bf16.mxu0 0
      %4804 = vmatmul.mubr.bf16.gmra.mrb[0].mxu0 %v4502
      %v4805 = vpop.f32.mrb[0].mxu0
      %v4806 = vadd.f32 0.0, %v4805
      %v4807 = vpop.f32.mrb[0].mxu0
      %v4808 = vpop.f32.mrb[0].mxu0
      %v4809 = vadd.f32 0.0, %v4808
      %v4810 = vpop.f32.mrb[0].mxu0
      %4811 = vmatprep.mubr.bf16.mxu0 0
      %4812 = vmatmul.mubr.bf16.gmra.mrb[0].mxu0 %v4505
      %v4813 = vpop.f32.mrb[0].mxu0
      %v4814 = vadd.f32 0.0, %v4813
      %v4815 = vpop.f32.mrb[0].mxu0
      %v4816 = vpop.f32.mrb[0].mxu0
      %v4817 = vadd.f32 0.0, %v4816
      %v4818 = vpop.f32.mrb[0].mxu0
      %4819 = vmatprep.mubr.bf16.mxu0 0
      %4820 = vmatmul.mubr.bf16.gmra.mrb[0].mxu0 %v4508
      %v4821 = vpop.f32.mrb[0].mxu0
      %v4822 = vadd.f32 0.0, %v4821
      %v4823 = vpop.f32.mrb[0].mxu0
      %v4824 = vpop.f32.mrb[0].mxu0
      %v4825 = vadd.f32 0.0, %v4824
      %v4826 = vpop.f32.mrb[0].mxu0
      %4827 = vmatprep.mubr.bf16.mxu0 0
      %4828 = vmatmul.mubr.bf16.gmra.mrb[0].mxu0 %v4511
      %v4829 = vpop.f32.mrb[0].mxu0
      %v4830 = vadd.f32 0.0, %v4829
      %v4831 = vpop.f32.mrb[0].mxu0
      %v4832 = vpop.f32.mrb[0].mxu0
      %v4833 = vadd.f32 0.0, %v4832
      %v4834 = vpop.f32.mrb[0].mxu0
      %4835 = vmatprep.mubr.bf16.mxu0 0
      %4836 = vmatmul.mubr.bf16.gmra.mrb[0].mxu0 %v4514
      %v4837 = vpop.f32.mrb[0].mxu0
      %v4838 = vadd.f32 0.0, %v4837
      %v4839 = vpop.f32.mrb[0].mxu0
      %v4840 = vpop.f32.mrb[0].mxu0
      %v4841 = vadd.f32 0.0, %v4840
      %v4842 = vpop.f32.mrb[0].mxu0
      %4843 = vmatprep.mubr.bf16.mxu0 0
      %4844 = vmatmul.mubr.bf16.gmra.mrb[0].mxu0 %v4517
      %v4845 = vpop.f32.mrb[0].mxu0
      %v4846 = vadd.f32 0.0, %v4845
      %v4847 = vpop.f32.mrb[0].mxu0
      %v4848 = vpop.f32.mrb[0].mxu0
      %v4849 = vadd.f32 0.0, %v4848
      %v4850 = vpop.f32.mrb[0].mxu0
      %4851 = vmatprep.mubr.bf16.mxu0 0
      %4852 = vmatmul.mubr.bf16.gmra.mrb[0].mxu0 %v4520
      %v4853 = vpop.f32.mrb[0].mxu0
      %v4854 = vadd.f32 0.0, %v4853
      %v4855 = vpop.f32.mrb[0].mxu0
      %v4856 = vpop.f32.mrb[0].mxu0
      %v4857 = vadd.f32 0.0, %v4856
      %v4858 = vpop.f32.mrb[0].mxu0
      %4859 = vmatprep.mubr.bf16.mxu0 0
      %4860 = vmatmul.mubr.bf16.gmra.mrb[0].mxu0 %v4523
      %v4861 = vpop.f32.mrb[0].mxu0
      %v4862 = vadd.f32 0.0, %v4861
      %v4863 = vpop.f32.mrb[0].mxu0
      %v4864 = vpop.f32.mrb[0].mxu0
      %v4865 = vadd.f32 0.0, %v4864
      %v4866 = vpop.f32.mrb[0].mxu0
      %4867 = vmatprep.mubr.bf16.mxu0 0
      %4868 = vmatmul.mubr.bf16.gmra.mrb[0].mxu0 %v4526
      %v4869 = vpop.f32.mrb[0].mxu0
      %v4870 = vadd.f32 0.0, %v4869
      %v4871 = vpop.f32.mrb[0].mxu0
      %v4872 = vpop.f32.mrb[0].mxu0
      %v4873 = vadd.f32 0.0, %v4872
      %v4874 = vpop.f32.mrb[0].mxu0
      %4875 = vmatprep.mubr.bf16.mxu0 0
      %4876 = vmatmul.mubr.bf16.gmra.mrb[0].mxu0 %v4529
      %v4877 = vpop.f32.mrb[0].mxu0
      %v4878 = vadd.f32 0.0, %v4877
      %v4879 = vpop.f32.mrb[0].mxu0
      %v4880 = vpop.f32.mrb[0].mxu0
      %v4881 = vadd.f32 0.0, %v4880
      %v4882 = vpop.f32.mrb[0].mxu0
      %4883 = vmatprep.mubr.bf16.mxu0 0
      %4884 = vmatmul.mubr.bf16.gmra.mrb[0].mxu0 %v4532
      %v4885 = vpop.f32.mrb[0].mxu0
      %v4886 = vadd.f32 0.0, %v4885
      %v4887 = vpop.f32.mrb[0].mxu0
      %v4888 = vpop.f32.mrb[0].mxu0
      %v4889 = vadd.f32 0.0, %v4888
      %v4890 = vpop.f32.mrb[0].mxu0
      %4891 = vmatprep.mubr.bf16.mxu0 0
      %4892 = vmatmul.mubr.bf16.gmra.mrb[0].mxu0 %v4535
      %v4893 = vpop.f32.mrb[0].mxu0
      %v4894 = vadd.f32 0.0, %v4893
      %v4895 = vpop.f32.mrb[0].mxu0
      %v4896 = vpop.f32.mrb[0].mxu0
      %v4897 = vadd.f32 0.0, %v4896
      %v4898 = vpop.f32.mrb[0].mxu0
      %4899 = vmatprep.mubr.bf16.mxu0 0
      %4900 = vmatmul.mubr.bf16.gmra.mrb[0].mxu0 %v4538
      %v4901 = vpop.f32.mrb[0].mxu0
      %v4902 = vadd.f32 0.0, %v4901
      %v4903 = vpop.f32.mrb[0].mxu0
      %v4904 = vpop.f32.mrb[0].mxu0
      %v4905 = vadd.f32 0.0, %v4904
      %v4906 = vpop.f32.mrb[0].mxu0
      %4907 = vmatprep.mubr.bf16.mxu0 0
      %4908 = vmatmul.mubr.bf16.gmra.mrb[0].mxu0 %v4541
      %v4909 = vpop.f32.mrb[0].mxu0
      %v4910 = vadd.f32 0.0, %v4909
      %v4911 = vpop.f32.mrb[0].mxu0
      %v4912 = vpop.f32.mrb[0].mxu0
      %v4913 = vadd.f32 0.0, %v4912
      %v4914 = vpop.f32.mrb[0].mxu0
      %4915 = vmatprep.mubr.bf16.mxu0 0
      %4916 = vmatmul.mubr.bf16.gmra.mrb[0].mxu0 %v4544
      %v4917 = vpop.f32.mrb[0].mxu0
      %v4918 = vadd.f32 0.0, %v4917
      %v4919 = vpop.f32.mrb[0].mxu0
      %v4920 = vpop.f32.mrb[0].mxu0
      %v4921 = vadd.f32 0.0, %v4920
      %v4922 = vpop.f32.mrb[0].mxu0
      %4923 = vmatprep.mubr.bf16.mxu0 0
      %4924 = vmatmul.mubr.bf16.gmra.mrb[0].mxu0 %v4547
      %v4925 = vpop.f32.mrb[0].mxu0
      %v4926 = vadd.f32 0.0, %v4925
      %v4927 = vpop.f32.mrb[0].mxu0
      %v4928 = vpop.f32.mrb[0].mxu0
      %v4929 = vadd.f32 0.0, %v4928
      %v4930 = vpop.f32.mrb[0].mxu0
      %4931 = vmatprep.mubr.bf16.mxu0 0
      %4932 = vmatmul.mubr.bf16.gmra.mrb[0].mxu0 %v4550
      %v4933 = vpop.f32.mrb[0].mxu0
      %v4934 = vadd.f32 0.0, %v4933
      %v4935 = vpop.f32.mrb[0].mxu0
      %v4936 = vpop.f32.mrb[0].mxu0
      %v4937 = vadd.f32 0.0, %v4936
      %v4938 = vpop.f32.mrb[0].mxu0
      %4939 = vmatprep.mubr.bf16.mxu0 0
      %4940 = vmatmul.mubr.bf16.gmra.mrb[0].mxu0 %v4553
      %v4941 = vpop.f32.mrb[0].mxu0
      %v4942 = vadd.f32 0.0, %v4941
      %v4943 = vpop.f32.mrb[0].mxu0
      %v4944 = vpop.f32.mrb[0].mxu0
      %v4945 = vadd.f32 0.0, %v4944
      %v4946 = vpop.f32.mrb[0].mxu0
      %4947 = vmatprep.mubr.bf16.mxu0 0
      %4948 = vmatmul.mubr.bf16.gmra.mrb[0].mxu0 %v4556
      %v4949 = vpop.f32.mrb[0].mxu0
      %v4950 = vadd.f32 0.0, %v4949
      %v4951 = vpop.f32.mrb[0].mxu0
      %v4952 = vpop.f32.mrb[0].mxu0
      %v4953 = vadd.f32 0.0, %v4952
      %v4954 = vpop.f32.mrb[0].mxu0
      %4955 = vmatprep.mubr.bf16.mxu0 0
      %4956 = vmatmul.mubr.bf16.gmra.mrb[0].mxu0 %v4559
      %v4957 = vpop.f32.mrb[0].mxu0
      %v4958 = vadd.f32 0.0, %v4957
      %v4959 = vpop.f32.mrb[0].mxu0
      %v4960 = vpop.f32.mrb[0].mxu0
      %v4961 = vadd.f32 0.0, %v4960
      %v4962 = vpop.f32.mrb[0].mxu0
      %4963 = vmatprep.mubr.bf16.mxu0 0
      %4964 = vmatmul.mubr.bf16.gmra.mrb[0].mxu0 %v4562
      %v4965 = vpop.f32.mrb[0].mxu0
      %v4966 = vadd.f32 0.0, %v4965
      %v4967 = vpop.f32.mrb[0].mxu0
      %v4968 = vpop.f32.mrb[0].mxu0
      %v4969 = vadd.f32 0.0, %v4968
      %v4970 = vpop.f32.mrb[0].mxu0
      %4971 = vmatprep.mubr.bf16.mxu0 0
      %4972 = vmatmul.mubr.bf16.gmra.mrb[0].mxu0 %v4565
      %v4973 = vpop.f32.mrb[0].mxu0
      %v4974 = vadd.f32 0.0, %v4973
      %v4975 = vpop.f32.mrb[0].mxu0
      %v4976 = vpop.f32.mrb[0].mxu0
      %v4977 = vadd.f32 0.0, %v4976
      %v4978 = vpop.f32.mrb[0].mxu0
      %4979 = vmatprep.mubr.bf16.mxu0 0
      %4980 = vmatmul.mubr.bf16.gmra.mrb[0].mxu0 %v4568
      %v4981 = vpop.f32.mrb[0].mxu0
      %v4982 = vadd.f32 0.0, %v4981
      %v4983 = vpop.f32.mrb[0].mxu0
      %v4984 = vpop.f32.mrb[0].mxu0
      %v4985 = vadd.f32 0.0, %v4984
      %v4986 = vpop.f32.mrb[0].mxu0
      %4987 = vmatprep.mubr.bf16.mxu0 0
      %4988 = vmatmul.mubr.bf16.gmra.mrb[0].mxu0 %v4571
      %v4989 = vpop.f32.mrb[0].mxu0
      %v4990 = vadd.f32 0.0, %v4989
      %v4991 = vpop.f32.mrb[0].mxu0
      %v4992 = vpop.f32.mrb[0].mxu0
      %v4993 = vadd.f32 0.0, %v4992
      %v4994 = vpop.f32.mrb[0].mxu0
      %4995 = vmatprep.mubr.bf16.mxu0 0
      %4996 = vmatmul.mubr.bf16.gmra.mrb[0].mxu0 %v4574
      %v4997 = vpop.f32.mrb[0].mxu0
      %v4998 = vadd.f32 0.0, %v4997
      %v4999 = vpop.f32.mrb[0].mxu0
      %v5000 = vpop.f32.mrb[0].mxu0
      %v5001 = vadd.f32 0.0, %v5000
      %v5002 = vpop.f32.mrb[0].mxu0
      %5003 = vmatprep.mubr.bf16.mxu0 0
      %5004 = vmatmul.mubr.bf16.gmra.mrb[0].mxu0 %v4577
      %v5005 = vpop.f32.mrb[0].mxu0
      %v5006 = vadd.f32 0.0, %v5005
      %v5007 = vpop.f32.mrb[0].mxu0
      %v5008 = vpop.f32.mrb[0].mxu0
      %v5009 = vadd.f32 0.0, %v5008
      %v5010 = vpop.f32.mrb[0].mxu0
      %5011 = vmatprep.mubr.bf16.mxu0 0
      %5012 = vmatmul.mubr.bf16.gmra.mrb[0].mxu0 %v4580
      %v5013 = vpop.f32.mrb[0].mxu0
      %v5014 = vadd.f32 0.0, %v5013
      %v5015 = vpop.f32.mrb[0].mxu0
      %v5016 = vpop.f32.mrb[0].mxu0
      %v5017 = vadd.f32 0.0, %v5016
      %v5018 = vpop.f32.mrb[0].mxu0
      %5019 = vmatprep.mubr.bf16.mxu0 0
      %5020 = vmatmul.mubr.bf16.gmra.mrb[0].mxu0 %v4583
      %v5021 = vpop.f32.mrb[0].mxu0
      %v5022 = vadd.f32 0.0, %v5021
      %v5023 = vpop.f32.mrb[0].mxu0
      %v5024 = vpop.f32.mrb[0].mxu0
      %v5025 = vadd.f32 0.0, %v5024
      %v5026 = vpop.f32.mrb[0].mxu0
      %5027 = vmatprep.mubr.bf16.mxu0 0
      %5028 = vmatmul.mubr.bf16.gmra.mrb[0].mxu0 %v4586
      %v5029 = vpop.f32.mrb[0].mxu0
      %v5030 = vadd.f32 0.0, %v5029
      %v5031 = vpop.f32.mrb[0].mxu0
      %v5032 = vpop.f32.mrb[0].mxu0
      %v5033 = vadd.f32 0.0, %v5032
      %v5034 = vpop.f32.mrb[0].mxu0
      %5035 = vmatprep.mubr.bf16.mxu0 0
      %5036 = vmatmul.mubr.bf16.gmra.mrb[0].mxu0 %v4589
      %v5037 = vpop.f32.mrb[0].mxu0
      %v5038 = vadd.f32 0.0, %v5037
      %v5039 = vpop.f32.mrb[0].mxu0
      %v5040 = vpop.f32.mrb[0].mxu0
      %v5041 = vadd.f32 0.0, %v5040
      %v5042 = vpop.f32.mrb[0].mxu0
      %5043 = vmatprep.mubr.bf16.mxu0 0
      %5044 = vmatmul.mubr.bf16.gmra.mrb[0].mxu0 %v4592
      %v5045 = vpop.f32.mrb[0].mxu0
      %v5046 = vadd.f32 0.0, %v5045
      %v5047 = vpop.f32.mrb[0].mxu0
      %v5048 = vpop.f32.mrb[0].mxu0
      %v5049 = vadd.f32 0.0, %v5048
      %v5050 = vpop.f32.mrb[0].mxu0
      %5051 = vmatprep.mubr.bf16.mxu0 0
      %5052 = vmatmul.mubr.bf16.gmra.mrb[0].mxu0 %v4595
      %v5053 = vpop.f32.mrb[0].mxu0
      %v5054 = vadd.f32 0.0, %v5053
      %v5055 = vpop.f32.mrb[0].mxu0
      %v5056 = vpop.f32.mrb[0].mxu0
      %v5057 = vadd.f32 0.0, %v5056
      %v5058 = vpop.f32.mrb[0].mxu0
      %5059 = vmatprep.mubr.bf16.mxu0 0
      %5060 = vmatmul.mubr.bf16.gmra.mrb[0].mxu0 %v4598
      %v5061 = vpop.f32.mrb[0].mxu0
      %v5062 = vadd.f32 0.0, %v5061
      %v5063 = vpop.f32.mrb[0].mxu0
      %v5064 = vpop.f32.mrb[0].mxu0
      %v5065 = vadd.f32 0.0, %v5064
      %v5066 = vpop.f32.mrb[0].mxu0
      %5067 = vmatprep.mubr.bf16.mxu0 0
      %5068 = vmatmul.mubr.bf16.gmra.mrb[0].mxu0 %v4601
      %v5069 = vpop.f32.mrb[0].mxu0
      %v5070 = vadd.f32 0.0, %v5069
      %v5071 = vpop.f32.mrb[0].mxu0
      %v5072 = vpop.f32.mrb[0].mxu0
      %v5073 = vadd.f32 0.0, %v5072
      %v5074 = vpop.f32.mrb[0].mxu0
      %5075 = vmatprep.mubr.bf16.mxu0 0
      %5076 = vmatmul.mubr.bf16.gmra.mrb[0].mxu0 %v4604
      %v5077 = vpop.f32.mrb[0].mxu0
      %v5078 = vadd.f32 0.0, %v5077
      %v5079 = vpop.f32.mrb[0].mxu0
      %v5080 = vpop.f32.mrb[0].mxu0
      %v5081 = vadd.f32 0.0, %v5080
      %v5082 = vpop.f32.mrb[0].mxu0
      %5083 = vmatprep.mubr.bf16.mxu0 0
      %5084 = vmatmul.mubr.bf16.gmra.mrb[0].mxu0 %v4607
      %v5085 = vpop.f32.mrb[0].mxu0
      %v5086 = vadd.f32 0.0, %v5085
      %v5087 = vpop.f32.mrb[0].mxu0
      %v5088 = vpop.f32.mrb[0].mxu0
      %v5089 = vadd.f32 0.0, %v5088
      %v5090 = vpop.f32.mrb[0].mxu0
      %5091 = vmatprep.mubr.bf16.mxu0 0
      %5092 = vmatmul.mubr.bf16.gmra.mrb[0].mxu0 %v4610
      %v5093 = vpop.f32.mrb[0].mxu0
      %v5094 = vadd.f32 0.0, %v5093
      %v5095 = vpop.f32.mrb[0].mxu0
      %v5096 = vpop.f32.mrb[0].mxu0
      %v5097 = vadd.f32 0.0, %v5096
      %v5098 = vpop.f32.mrb[0].mxu0
      %5099 = vmatprep.mubr.bf16.mxu0 0
      %5100 = vmatmul.mubr.bf16.gmra.mrb[0].mxu0 %v4613
      %v5101 = vpop.f32.mrb[0].mxu0
      %v5102 = vadd.f32 0.0, %v5101
      %v5103 = vpop.f32.mrb[0].mxu0
      %v5104 = vpop.f32.mrb[0].mxu0
      %v5105 = vadd.f32 0.0, %v5104
      %v5106 = vpop.f32.mrb[0].mxu0
      %5107 = vmatprep.mubr.bf16.mxu0 0
      %5108 = vmatmul.mubr.bf16.gmra.mrb[0].mxu0 %v4616
      %v5109 = vpop.f32.mrb[0].mxu0
      %v5110 = vadd.f32 0.0, %v5109
      %v5111 = vpop.f32.mrb[0].mxu0
      %v5112 = vpop.f32.mrb[0].mxu0
      %v5113 = vadd.f32 0.0, %v5112
      %v5114 = vpop.f32.mrb[0].mxu0
      %5115 = vmatprep.mubr.bf16.mxu0 0
      %5116 = vmatmul.mubr.bf16.gmra.mrb[0].mxu0 %v4619
      %v5117 = vpop.f32.mrb[0].mxu0
      %v5118 = vadd.f32 0.0, %v5117
      %v5119 = vpop.f32.mrb[0].mxu0
      %v5120 = vpop.f32.mrb[0].mxu0
      %v5121 = vadd.f32 0.0, %v5120
      %v5122 = vpop.f32.mrb[0].mxu0
      %5123 = vmatprep.mubr.bf16.mxu0 0
      %5124 = vmatmul.mubr.bf16.gmra.mrb[0].mxu0 %v4622
      %v5125 = vpop.f32.mrb[0].mxu0
      %v5126 = vadd.f32 0.0, %v5125
      %v5127 = vpop.f32.mrb[0].mxu0
      %v5128 = vpop.f32.mrb[0].mxu0
      %v5129 = vadd.f32 0.0, %v5128
      %v5130 = vpop.f32.mrb[0].mxu0
      %5131 = vmatprep.mubr.bf16.mxu0 0
      %5132 = vmatmul.mubr.bf16.gmra.mrb[0].mxu0 %v4625
      %v5133 = vpop.f32.mrb[0].mxu0
      %v5134 = vadd.f32 0.0, %v5133
      %v5135 = vpop.f32.mrb[0].mxu0
      %v5136 = vpop.f32.mrb[0].mxu0
      %v5137 = vadd.f32 0.0, %v5136
      %v5138 = vpop.f32.mrb[0].mxu0
      %5139 = vmatprep.mubr.bf16.mxu0 0
      %5140 = vmatmul.mubr.bf16.gmra.mrb[0].mxu0 %v4628
      %v5141 = vpop.f32.mrb[0].mxu0
      %v5142 = vadd.f32 0.0, %v5141
      %v5143 = vpop.f32.mrb[0].mxu0
      %v5144 = vpop.f32.mrb[0].mxu0
      %v5145 = vadd.f32 0.0, %v5144
      %v5146 = vpop.f32.mrb[0].mxu0
      %5147 = vmatprep.mubr.bf16.mxu0 0
      %5148 = vmatmul.mubr.bf16.gmra.mrb[0].mxu0 %v4631
      %v5149 = vpop.f32.mrb[0].mxu0
      %v5150 = vadd.f32 0.0, %v5149
      %v5151 = vpop.f32.mrb[0].mxu0
      %v5152 = vpop.f32.mrb[0].mxu0
      %v5153 = vadd.f32 0.0, %v5152
      %v5154 = vpop.f32.mrb[0].mxu0
      %5155 = vmatprep.mubr.bf16.mxu0 0
      %5156 = vmatmul.mubr.bf16.gmra.mrb[0].mxu0 %v4634
      %v5157 = vpop.f32.mrb[0].mxu0
      %v5158 = vadd.f32 0.0, %v5157
      %v5159 = vpop.f32.mrb[0].mxu0
      %v5160 = vpop.f32.mrb[0].mxu0
      %v5161 = vadd.f32 0.0, %v5160
      %v5162 = vpop.f32.mrb[0].mxu0
      %5163 = vmatprep.mubr.bf16.mxu0 0
      %5164 = vmatmul.mubr.bf16.gmra.mrb[0].mxu0 %v4637
      %v5165 = vpop.f32.mrb[0].mxu0
      %v5166 = vadd.f32 0.0, %v5165
      %v5167 = vpop.f32.mrb[0].mxu0
      %v5168 = vpop.f32.mrb[0].mxu0
      %v5169 = vadd.f32 0.0, %v5168
      %v5170 = vpop.f32.mrb[0].mxu0
      %5171 = vmatprep.mubr.bf16.mxu0 0
      %5172 = vmatmul.mubr.bf16.gmra.mrb[0].mxu0 %v4640
      %v5173 = vpop.f32.mrb[0].mxu0
      %v5174 = vadd.f32 0.0, %v5173
      %v5175 = vpop.f32.mrb[0].mxu0
      %v5176 = vpop.f32.mrb[0].mxu0
      %v5177 = vadd.f32 0.0, %v5176
      %v5178 = vpop.f32.mrb[0].mxu0
      %5179 = vmatprep.mubr.bf16.mxu0 0
      %5180 = vmatmul.mubr.bf16.gmra.mrb[0].mxu0 %v4643
      %v5181 = vpop.f32.mrb[0].mxu0
      %v5182 = vadd.f32 0.0, %v5181
      %v5183 = vpop.f32.mrb[0].mxu0
      %v5184 = vpop.f32.mrb[0].mxu0
      %v5185 = vadd.f32 0.0, %v5184
      %v5186 = vpop.f32.mrb[0].mxu0
      %5187 = vmatprep.mubr.bf16.mxu0 0
      %5188 = vmatmul.mubr.bf16.gmra.mrb[0].mxu0 %v4646
      %v5189 = vpop.f32.mrb[0].mxu0
      %v5190 = vadd.f32 0.0, %v5189
      %v5191 = vpop.f32.mrb[0].mxu0
      %v5192 = vpop.f32.mrb[0].mxu0
      %v5193 = vadd.f32 0.0, %v5192
      %v5194 = vpop.f32.mrb[0].mxu0
      %5195 = vdwg.mxu0
      %v5196 = vadd.f32 %v3331, %v4686
      %v5197 = vadd.f32 %v3334, %v4689
      %v5198 = vadd.f32 %v3339, %v4694
      %v5199 = vadd.f32 %v3342, %v4697
      %v5200 = vadd.f32 %v3347, %v4702
      %v5201 = vadd.f32 %v3350, %v4705
      %v5202 = vadd.f32 %v3355, %v4710
      %v5203 = vadd.f32 %v3358, %v4713
      %v5204 = vadd.f32 %v3363, %v4718
      %v5205 = vadd.f32 %v3366, %v4721
      %v5206 = vadd.f32 %v3371, %v4726
      %v5207 = vadd.f32 %v3374, %v4729
      %v5208 = vadd.f32 %v3379, %v4734
      %v5209 = vadd.f32 %v3382, %v4737
      %v5210 = vadd.f32 %v3387, %v4742
      %v5211 = vadd.f32 %v3390, %v4745
      %v5212 = vadd.f32 %v3395, %v4750
      %v5213 = vadd.f32 %v3398, %v4753
      %v5214 = vadd.f32 %v3403, %v4758
      %v5215 = vadd.f32 %v3406, %v4761
      %v5216 = vadd.f32 %v3411, %v4766
      %v5217 = vadd.f32 %v3414, %v4769
      %v5218 = vadd.f32 %v3419, %v4774
      %v5219 = vadd.f32 %v3422, %v4777
      %v5220 = vadd.f32 %v3427, %v4782
      %v5221 = vadd.f32 %v3430, %v4785
      %v5222 = vadd.f32 %v3435, %v4790
      %v5223 = vadd.f32 %v3438, %v4793
      %v5224 = vadd.f32 %v3443, %v4798
      %v5225 = vadd.f32 %v3446, %v4801
      %v5226 = vadd.f32 %v3451, %v4806
      %v5227 = vadd.f32 %v3454, %v4809
      %v5228 = vadd.f32 %v3459, %v4814
      %v5229 = vadd.f32 %v3462, %v4817
      %v5230 = vadd.f32 %v3467, %v4822
      %v5231 = vadd.f32 %v3470, %v4825
      %v5232 = vadd.f32 %v3475, %v4830
      %v5233 = vadd.f32 %v3478, %v4833
      %v5234 = vadd.f32 %v3483, %v4838
      %v5235 = vadd.f32 %v3486, %v4841
      %v5236 = vadd.f32 %v3491, %v4846
      %v5237 = vadd.f32 %v3494, %v4849
      %v5238 = vadd.f32 %v3499, %v4854
      %v5239 = vadd.f32 %v3502, %v4857
      %v5240 = vadd.f32 %v3507, %v4862
      %v5241 = vadd.f32 %v3510, %v4865
      %v5242 = vadd.f32 %v3515, %v4870
      %v5243 = vadd.f32 %v3518, %v4873
      %v5244 = vadd.f32 %v3523, %v4878
      %v5245 = vadd.f32 %v3526, %v4881
      %v5246 = vadd.f32 %v3531, %v4886
      %v5247 = vadd.f32 %v3534, %v4889
      %v5248 = vadd.f32 %v3539, %v4894
      %v5249 = vadd.f32 %v3542, %v4897
      %v5250 = vadd.f32 %v3547, %v4902
      %v5251 = vadd.f32 %v3550, %v4905
      %v5252 = vadd.f32 %v3555, %v4910
      %v5253 = vadd.f32 %v3558, %v4913
      %v5254 = vadd.f32 %v3563, %v4918
      %v5255 = vadd.f32 %v3566, %v4921
      %v5256 = vadd.f32 %v3571, %v4926
      %v5257 = vadd.f32 %v3574, %v4929
      %v5258 = vadd.f32 %v3579, %v4934
      %v5259 = vadd.f32 %v3582, %v4937
      %v5260 = vadd.f32 %v3587, %v4942
      %v5261 = vadd.f32 %v3590, %v4945
      %v5262 = vadd.f32 %v3595, %v4950
      %v5263 = vadd.f32 %v3598, %v4953
      %v5264 = vadd.f32 %v3603, %v4958
      %v5265 = vadd.f32 %v3606, %v4961
      %v5266 = vadd.f32 %v3611, %v4966
      %v5267 = vadd.f32 %v3614, %v4969
      %v5268 = vadd.f32 %v3619, %v4974
      %v5269 = vadd.f32 %v3622, %v4977
      %v5270 = vadd.f32 %v3627, %v4982
      %v5271 = vadd.f32 %v3630, %v4985
      %v5272 = vadd.f32 %v3635, %v4990
      %v5273 = vadd.f32 %v3638, %v4993
      %v5274 = vadd.f32 %v3643, %v4998
      %v5275 = vadd.f32 %v3646, %v5001
      %v5276 = vadd.f32 %v3651, %v5006
      %v5277 = vadd.f32 %v3654, %v5009
      %v5278 = vadd.f32 %v3659, %v5014
      %v5279 = vadd.f32 %v3662, %v5017
      %v5280 = vadd.f32 %v3667, %v5022
      %v5281 = vadd.f32 %v3670, %v5025
      %v5282 = vadd.f32 %v3675, %v5030
      %v5283 = vadd.f32 %v3678, %v5033
      %v5284 = vadd.f32 %v3683, %v5038
      %v5285 = vadd.f32 %v3686, %v5041
      %v5286 = vadd.f32 %v3691, %v5046
      %v5287 = vadd.f32 %v3694, %v5049
      %v5288 = vadd.f32 %v3699, %v5054
      %v5289 = vadd.f32 %v3702, %v5057
      %v5290 = vadd.f32 %v3707, %v5062
      %v5291 = vadd.f32 %v3710, %v5065
      %v5292 = vadd.f32 %v3715, %v5070
      %v5293 = vadd.f32 %v3718, %v5073
      %v5294 = vadd.f32 %v3723, %v5078
      %v5295 = vadd.f32 %v3726, %v5081
      %v5296 = vadd.f32 %v3731, %v5086
      %v5297 = vadd.f32 %v3734, %v5089
      %v5298 = vadd.f32 %v3739, %v5094
      %v5299 = vadd.f32 %v3742, %v5097
      %v5300 = vadd.f32 %v3747, %v5102
      %v5301 = vadd.f32 %v3750, %v5105
      %v5302 = vadd.f32 %v3755, %v5110
      %v5303 = vadd.f32 %v3758, %v5113
      %v5304 = vadd.f32 %v3763, %v5118
      %v5305 = vadd.f32 %v3766, %v5121
      %v5306 = vadd.f32 %v3771, %v5126
      %v5307 = vadd.f32 %v3774, %v5129
      %v5308 = vadd.f32 %v3779, %v5134
      %v5309 = vadd.f32 %v3782, %v5137
      %v5310 = vadd.f32 %v3787, %v5142
      %v5311 = vadd.f32 %v3790, %v5145
      %v5312 = vadd.f32 %v3795, %v5150
      %v5313 = vadd.f32 %v3798, %v5153
      %v5314 = vadd.f32 %v3803, %v5158
      %v5315 = vadd.f32 %v3806, %v5161
      %v5316 = vadd.f32 %v3811, %v5166
      %v5317 = vadd.f32 %v3814, %v5169
      %v5318 = vadd.f32 %v3819, %v5174
      %v5319 = vadd.f32 %v3822, %v5177
      %v5320 = vadd.f32 %v3827, %v5182
      %v5321 = vadd.f32 %v3830, %v5185
      %v5322 = vadd.f32 %v3835, %v5190
      %v5323 = vadd.f32 %v3838, %v5193
      %v5324 = vld [vmem:[#allocation2] sm:$0xff]
      %v5325 = vld [vmem:[#allocation2 + $0x8] sm:$0xff]
      %v5326 = vld [vmem:[#allocation2 + $0x10] sm:$0xff]
      %v5327 = vld [vmem:[#allocation2 + $0x18] sm:$0xff]
      %v5328 = vld [vmem:[#allocation2 + $0x20] sm:$0xff]
      %v5329 = vld [vmem:[#allocation2 + $0x28] sm:$0xff]
      %v5330 = vld [vmem:[#allocation2 + $0x30] sm:$0xff]
      %v5331 = vld [vmem:[#allocation2 + $0x38] sm:$0xff]
      %v5332 = vld [vmem:[#allocation2 + $0x40] sm:$0xff]
      %v5333 = vld [vmem:[#allocation2 + $0x48] sm:$0xff]
      %v5334 = vld [vmem:[#allocation2 + $0x50] sm:$0xff]
      %v5335 = vld [vmem:[#allocation2 + $0x58] sm:$0xff]
      %v5336 = vld [vmem:[#allocation2 + $0x60] sm:$0xff]
      %v5337 = vld [vmem:[#allocation2 + $0x68] sm:$0xff]
      %v5338 = vld [vmem:[#allocation2 + $0x70] sm:$0xff]
      %v5339 = vld [vmem:[#allocation2 + $0x78] sm:$0xff]
      %v5340 = vld [vmem:[#allocation2 + $0x80] sm:$0xff]
      %v5341 = vld [vmem:[#allocation2 + $0x88] sm:$0xff]
      %v5342 = vld [vmem:[#allocation2 + $0x90] sm:$0xff]
      %v5343 = vld [vmem:[#allocation2 + $0x98] sm:$0xff]
      %v5344 = vld [vmem:[#allocation2 + $0xa0] sm:$0xff]
      %v5345 = vld [vmem:[#allocation2 + $0xa8] sm:$0xff]
      %v5346 = vld [vmem:[#allocation2 + $0xb0] sm:$0xff]
      %v5347 = vld [vmem:[#allocation2 + $0xb8] sm:$0xff]
      %v5348 = vld [vmem:[#allocation2 + $0xc0] sm:$0xff]
      %v5349 = vld [vmem:[#allocation2 + $0xc8] sm:$0xff]
      %v5350 = vld [vmem:[#allocation2 + $0xd0] sm:$0xff]
      %v5351 = vld [vmem:[#allocation2 + $0xd8] sm:$0xff]
      %v5352 = vld [vmem:[#allocation2 + $0xe0] sm:$0xff]
      %v5353 = vld [vmem:[#allocation2 + $0xe8] sm:$0xff]
      %v5354 = vld [vmem:[#allocation2 + $0xf0] sm:$0xff]
      %v5355 = vld [vmem:[#allocation2 + $0xf8] sm:$0xff]
      %v5356 = vld [vmem:[#allocation2 + $0x100] sm:$0xff]
      %v5357 = vld [vmem:[#allocation2 + $0x108] sm:$0xff]
      %v5358 = vld [vmem:[#allocation2 + $0x110] sm:$0xff]
      %v5359 = vld [vmem:[#allocation2 + $0x118] sm:$0xff]
      %v5360 = vld [vmem:[#allocation2 + $0x120] sm:$0xff]
      %v5361 = vld [vmem:[#allocation2 + $0x128] sm:$0xff]
      %v5362 = vld [vmem:[#allocation2 + $0x130] sm:$0xff]
      %v5363 = vld [vmem:[#allocation2 + $0x138] sm:$0xff]
      %v5364 = vld [vmem:[#allocation2 + $0x140] sm:$0xff]
      %v5365 = vld [vmem:[#allocation2 + $0x148] sm:$0xff]
      %v5366 = vld [vmem:[#allocation2 + $0x150] sm:$0xff]
      %v5367 = vld [vmem:[#allocation2 + $0x158] sm:$0xff]
      %v5368 = vld [vmem:[#allocation2 + $0x160] sm:$0xff]
      %v5369 = vld [vmem:[#allocation2 + $0x168] sm:$0xff]
      %v5370 = vld [vmem:[#allocation2 + $0x170] sm:$0xff]
      %v5371 = vld [vmem:[#allocation2 + $0x178] sm:$0xff]
      %v5372 = vld [vmem:[#allocation2 + $0x180] sm:$0xff]
      %v5373 = vld [vmem:[#allocation2 + $0x188] sm:$0xff]
      %v5374 = vld [vmem:[#allocation2 + $0x190] sm:$0xff]
      %v5375 = vld [vmem:[#allocation2 + $0x198] sm:$0xff]
      %v5376 = vld [vmem:[#allocation2 + $0x1a0] sm:$0xff]
      %v5377 = vld [vmem:[#allocation2 + $0x1a8] sm:$0xff]
      %v5378 = vld [vmem:[#allocation2 + $0x1b0] sm:$0xff]
      %v5379 = vld [vmem:[#allocation2 + $0x1b8] sm:$0xff]
      %v5380 = vld [vmem:[#allocation2 + $0x1c0] sm:$0xff]
      %v5381 = vld [vmem:[#allocation2 + $0x1c8] sm:$0xff]
      %v5382 = vld [vmem:[#allocation2 + $0x1d0] sm:$0xff]
      %v5383 = vld [vmem:[#allocation2 + $0x1d8] sm:$0xff]
      %v5384 = vld [vmem:[#allocation2 + $0x1e0] sm:$0xff]
      %v5385 = vld [vmem:[#allocation2 + $0x1e8] sm:$0xff]
      %v5386 = vld [vmem:[#allocation2 + $0x1f0] sm:$0xff]
      %v5387 = vld [vmem:[#allocation2 + $0x1f8] sm:$0xff]
      %v5388 = vld [vmem:[#allocation2 + $0x200] sm:$0xff]
      %v5389 = vld [vmem:[#allocation2 + $0x208] sm:$0xff]
      %v5390 = vld [vmem:[#allocation2 + $0x210] sm:$0xff]
      %v5391 = vld [vmem:[#allocation2 + $0x218] sm:$0xff]
      %v5392 = vld [vmem:[#allocation2 + $0x220] sm:$0xff]
      %v5393 = vld [vmem:[#allocation2 + $0x228] sm:$0xff]
      %v5394 = vld [vmem:[#allocation2 + $0x230] sm:$0xff]
      %v5395 = vld [vmem:[#allocation2 + $0x238] sm:$0xff]
      %v5396 = vld [vmem:[#allocation2 + $0x240] sm:$0xff]
      %v5397 = vld [vmem:[#allocation2 + $0x248] sm:$0xff]
      %v5398 = vld [vmem:[#allocation2 + $0x250] sm:$0xff]
      %v5399 = vld [vmem:[#allocation2 + $0x258] sm:$0xff]
      %v5400 = vld [vmem:[#allocation2 + $0x260] sm:$0xff]
      %v5401 = vld [vmem:[#allocation2 + $0x268] sm:$0xff]
      %v5402 = vld [vmem:[#allocation2 + $0x270] sm:$0xff]
      %v5403 = vld [vmem:[#allocation2 + $0x278] sm:$0xff]
      %v5404 = vld [vmem:[#allocation2 + $0x280] sm:$0xff]
      %v5405 = vld [vmem:[#allocation2 + $0x288] sm:$0xff]
      %v5406 = vld [vmem:[#allocation2 + $0x290] sm:$0xff]
      %v5407 = vld [vmem:[#allocation2 + $0x298] sm:$0xff]
      %v5408 = vld [vmem:[#allocation2 + $0x2a0] sm:$0xff]
      %v5409 = vld [vmem:[#allocation2 + $0x2a8] sm:$0xff]
      %v5410 = vld [vmem:[#allocation2 + $0x2b0] sm:$0xff]
      %v5411 = vld [vmem:[#allocation2 + $0x2b8] sm:$0xff]
      %v5412 = vld [vmem:[#allocation2 + $0x2c0] sm:$0xff]
      %v5413 = vld [vmem:[#allocation2 + $0x2c8] sm:$0xff]
      %v5414 = vld [vmem:[#allocation2 + $0x2d0] sm:$0xff]
      %v5415 = vld [vmem:[#allocation2 + $0x2d8] sm:$0xff]
      %v5416 = vld [vmem:[#allocation2 + $0x2e0] sm:$0xff]
      %v5417 = vld [vmem:[#allocation2 + $0x2e8] sm:$0xff]
      %v5418 = vld [vmem:[#allocation2 + $0x2f0] sm:$0xff]
      %v5419 = vld [vmem:[#allocation2 + $0x2f8] sm:$0xff]
      %v5420 = vld [vmem:[#allocation2 + $0x300] sm:$0xff]
      %v5421 = vld [vmem:[#allocation2 + $0x308] sm:$0xff]
      %v5422 = vld [vmem:[#allocation2 + $0x310] sm:$0xff]
      %v5423 = vld [vmem:[#allocation2 + $0x318] sm:$0xff]
      %v5424 = vld [vmem:[#allocation2 + $0x320] sm:$0xff]
      %v5425 = vld [vmem:[#allocation2 + $0x328] sm:$0xff]
      %v5426 = vld [vmem:[#allocation2 + $0x330] sm:$0xff]
      %v5427 = vld [vmem:[#allocation2 + $0x338] sm:$0xff]
      %v5428 = vld [vmem:[#allocation2 + $0x340] sm:$0xff]
      %v5429 = vld [vmem:[#allocation2 + $0x348] sm:$0xff]
      %v5430 = vld [vmem:[#allocation2 + $0x350] sm:$0xff]
      %v5431 = vld [vmem:[#allocation2 + $0x358] sm:$0xff]
      %v5432 = vld [vmem:[#allocation2 + $0x360] sm:$0xff]
      %v5433 = vld [vmem:[#allocation2 + $0x368] sm:$0xff]
      %v5434 = vld [vmem:[#allocation2 + $0x370] sm:$0xff]
      %v5435 = vld [vmem:[#allocation2 + $0x378] sm:$0xff]
      %v5436 = vld [vmem:[#allocation2 + $0x380] sm:$0xff]
      %v5437 = vld [vmem:[#allocation2 + $0x388] sm:$0xff]
      %v5438 = vld [vmem:[#allocation2 + $0x390] sm:$0xff]
      %v5439 = vld [vmem:[#allocation2 + $0x398] sm:$0xff]
      %v5440 = vld [vmem:[#allocation2 + $0x3a0] sm:$0xff]
      %v5441 = vld [vmem:[#allocation2 + $0x3a8] sm:$0xff]
      %v5442 = vld [vmem:[#allocation2 + $0x3b0] sm:$0xff]
      %v5443 = vld [vmem:[#allocation2 + $0x3b8] sm:$0xff]
      %v5444 = vld [vmem:[#allocation2 + $0x3c0] sm:$0xff]
      %v5445 = vld [vmem:[#allocation2 + $0x3c8] sm:$0xff]
      %v5446 = vld [vmem:[#allocation2 + $0x3d0] sm:$0xff]
      %v5447 = vld [vmem:[#allocation2 + $0x3d8] sm:$0xff]
      %v5448 = vld [vmem:[#allocation2 + $0x3e0] sm:$0xff]
      %v5449 = vld [vmem:[#allocation2 + $0x3e8] sm:$0xff]
      %v5450 = vld [vmem:[#allocation2 + $0x3f0] sm:$0xff]
      %v5451 = vld [vmem:[#allocation2 + $0x3f8] sm:$0xff]
      %v5452 = vadd.f32 %v5324, %v5196
      %v5453 = vadd.f32 %v5325, %v5197
      %v5454 = vadd.f32 %v5326, %v5198
      %v5455 = vadd.f32 %v5327, %v5199
      %v5456 = vadd.f32 %v5328, %v5200
      %v5457 = vadd.f32 %v5329, %v5201
      %v5458 = vadd.f32 %v5330, %v5202
      %v5459 = vadd.f32 %v5331, %v5203
      %v5460 = vadd.f32 %v5332, %v5204
      %v5461 = vadd.f32 %v5333, %v5205
      %v5462 = vadd.f32 %v5334, %v5206
      %v5463 = vadd.f32 %v5335, %v5207
      %v5464 = vadd.f32 %v5336, %v5208
      %v5465 = vadd.f32 %v5337, %v5209
      %v5466 = vadd.f32 %v5338, %v5210
      %v5467 = vadd.f32 %v5339, %v5211
      %v5468 = vadd.f32 %v5340, %v5212
      %v5469 = vadd.f32 %v5341, %v5213
      %v5470 = vadd.f32 %v5342, %v5214
      %v5471 = vadd.f32 %v5343, %v5215
      %v5472 = vadd.f32 %v5344, %v5216
      %v5473 = vadd.f32 %v5345, %v5217
      %v5474 = vadd.f32 %v5346, %v5218
      %v5475 = vadd.f32 %v5347, %v5219
      %v5476 = vadd.f32 %v5348, %v5220
      %v5477 = vadd.f32 %v5349, %v5221
      %v5478 = vadd.f32 %v5350, %v5222
      %v5479 = vadd.f32 %v5351, %v5223
      %v5480 = vadd.f32 %v5352, %v5224
      %v5481 = vadd.f32 %v5353, %v5225
      %v5482 = vadd.f32 %v5354, %v5226
      %v5483 = vadd.f32 %v5355, %v5227
      %v5484 = vadd.f32 %v5356, %v5228
      %v5485 = vadd.f32 %v5357, %v5229
      %v5486 = vadd.f32 %v5358, %v5230
      %v5487 = vadd.f32 %v5359, %v5231
      %v5488 = vadd.f32 %v5360, %v5232
      %v5489 = vadd.f32 %v5361, %v5233
      %v5490 = vadd.f32 %v5362, %v5234
      %v5491 = vadd.f32 %v5363, %v5235
      %v5492 = vadd.f32 %v5364, %v5236
      %v5493 = vadd.f32 %v5365, %v5237
      %v5494 = vadd.f32 %v5366, %v5238
      %v5495 = vadd.f32 %v5367, %v5239
      %v5496 = vadd.f32 %v5368, %v5240
      %v5497 = vadd.f32 %v5369, %v5241
      %v5498 = vadd.f32 %v5370, %v5242
      %v5499 = vadd.f32 %v5371, %v5243
      %v5500 = vadd.f32 %v5372, %v5244
      %v5501 = vadd.f32 %v5373, %v5245
      %v5502 = vadd.f32 %v5374, %v5246
      %v5503 = vadd.f32 %v5375, %v5247
      %v5504 = vadd.f32 %v5376, %v5248
      %v5505 = vadd.f32 %v5377, %v5249
      %v5506 = vadd.f32 %v5378, %v5250
      %v5507 = vadd.f32 %v5379, %v5251
      %v5508 = vadd.f32 %v5380, %v5252
      %v5509 = vadd.f32 %v5381, %v5253
      %v5510 = vadd.f32 %v5382, %v5254
      %v5511 = vadd.f32 %v5383, %v5255
      %v5512 = vadd.f32 %v5384, %v5256
      %v5513 = vadd.f32 %v5385, %v5257
      %v5514 = vadd.f32 %v5386, %v5258
      %v5515 = vadd.f32 %v5387, %v5259
      %v5516 = vadd.f32 %v5388, %v5260
      %v5517 = vadd.f32 %v5389, %v5261
      %v5518 = vadd.f32 %v5390, %v5262
      %v5519 = vadd.f32 %v5391, %v5263
      %v5520 = vadd.f32 %v5392, %v5264
      %v5521 = vadd.f32 %v5393, %v5265
      %v5522 = vadd.f32 %v5394, %v5266
      %v5523 = vadd.f32 %v5395, %v5267
      %v5524 = vadd.f32 %v5396, %v5268
      %v5525 = vadd.f32 %v5397, %v5269
      %v5526 = vadd.f32 %v5398, %v5270
      %v5527 = vadd.f32 %v5399, %v5271
      %v5528 = vadd.f32 %v5400, %v5272
      %v5529 = vadd.f32 %v5401, %v5273
      %v5530 = vadd.f32 %v5402, %v5274
      %v5531 = vadd.f32 %v5403, %v5275
      %v5532 = vadd.f32 %v5404, %v5276
      %v5533 = vadd.f32 %v5405, %v5277
      %v5534 = vadd.f32 %v5406, %v5278
      %v5535 = vadd.f32 %v5407, %v5279
      %v5536 = vadd.f32 %v5408, %v5280
      %v5537 = vadd.f32 %v5409, %v5281
      %v5538 = vadd.f32 %v5410, %v5282
      %v5539 = vadd.f32 %v5411, %v5283
      %v5540 = vadd.f32 %v5412, %v5284
      %v5541 = vadd.f32 %v5413, %v5285
      %v5542 = vadd.f32 %v5414, %v5286
      %v5543 = vadd.f32 %v5415, %v5287
      %v5544 = vadd.f32 %v5416, %v5288
      %v5545 = vadd.f32 %v5417, %v5289
      %v5546 = vadd.f32 %v5418, %v5290
      %v5547 = vadd.f32 %v5419, %v5291
      %v5548 = vadd.f32 %v5420, %v5292
      %v5549 = vadd.f32 %v5421, %v5293
      %v5550 = vadd.f32 %v5422, %v5294
      %v5551 = vadd.f32 %v5423, %v5295
      %v5552 = vadd.f32 %v5424, %v5296
      %v5553 = vadd.f32 %v5425, %v5297
      %v5554 = vadd.f32 %v5426, %v5298
      %v5555 = vadd.f32 %v5427, %v5299
      %v5556 = vadd.f32 %v5428, %v5300
      %v5557 = vadd.f32 %v5429, %v5301
      %v5558 = vadd.f32 %v5430, %v5302
      %v5559 = vadd.f32 %v5431, %v5303
      %v5560 = vadd.f32 %v5432, %v5304
      %v5561 = vadd.f32 %v5433, %v5305
      %v5562 = vadd.f32 %v5434, %v5306
      %v5563 = vadd.f32 %v5435, %v5307
      %v5564 = vadd.f32 %v5436, %v5308
      %v5565 = vadd.f32 %v5437, %v5309
      %v5566 = vadd.f32 %v5438, %v5310
      %v5567 = vadd.f32 %v5439, %v5311
      %v5568 = vadd.f32 %v5440, %v5312
      %v5569 = vadd.f32 %v5441, %v5313
      %v5570 = vadd.f32 %v5442, %v5314
      %v5571 = vadd.f32 %v5443, %v5315
      %v5572 = vadd.f32 %v5444, %v5316
      %v5573 = vadd.f32 %v5445, %v5317
      %v5574 = vadd.f32 %v5446, %v5318
      %v5575 = vadd.f32 %v5447, %v5319
      %v5576 = vadd.f32 %v5448, %v5320
      %v5577 = vadd.f32 %v5449, %v5321
      %v5578 = vadd.f32 %v5450, %v5322
      %v5579 = vadd.f32 %v5451, %v5323
      %vm5580 = vcmask 64512
      %5581 = vst.msk [vmem:[#allocation2] sm:$0xff] %vm5580, %v5452
      %5582 = vst.msk [vmem:[#allocation2 + $0x8] sm:$0xff] %vm5580, %v5453
      %5583 = vst.msk [vmem:[#allocation2 + $0x10] sm:$0xff] %vm5580, %v5454
      %5584 = vst.msk [vmem:[#allocation2 + $0x18] sm:$0xff] %vm5580, %v5455
      %5585 = vst.msk [vmem:[#allocation2 + $0x20] sm:$0xff] %vm5580, %v5456
      %5586 = vst.msk [vmem:[#allocation2 + $0x28] sm:$0xff] %vm5580, %v5457
      %5587 = vst.msk [vmem:[#allocation2 + $0x30] sm:$0xff] %vm5580, %v5458
      %5588 = vst.msk [vmem:[#allocation2 + $0x38] sm:$0xff] %vm5580, %v5459
      %5589 = vst.msk [vmem:[#allocation2 + $0x40] sm:$0xff] %vm5580, %v5460
      %5590 = vst.msk [vmem:[#allocation2 + $0x48] sm:$0xff] %vm5580, %v5461
      %5591 = vst.msk [vmem:[#allocation2 + $0x50] sm:$0xff] %vm5580, %v5462
      %5592 = vst.msk [vmem:[#allocation2 + $0x58] sm:$0xff] %vm5580, %v5463
      %5593 = vst.msk [vmem:[#allocation2 + $0x60] sm:$0xff] %vm5580, %v5464
      %5594 = vst.msk [vmem:[#allocation2 + $0x68] sm:$0xff] %vm5580, %v5465
      %5595 = vst.msk [vmem:[#allocation2 + $0x70] sm:$0xff] %vm5580, %v5466
      %5596 = vst.msk [vmem:[#allocation2 + $0x78] sm:$0xff] %vm5580, %v5467
      %5597 = vst.msk [vmem:[#allocation2 + $0x80] sm:$0xff] %vm5580, %v5468
      %5598 = vst.msk [vmem:[#allocation2 + $0x88] sm:$0xff] %vm5580, %v5469
      %5599 = vst.msk [vmem:[#allocation2 + $0x90] sm:$0xff] %vm5580, %v5470
      %5600 = vst.msk [vmem:[#allocation2 + $0x98] sm:$0xff] %vm5580, %v5471
      %5601 = vst.msk [vmem:[#allocation2 + $0xa0] sm:$0xff] %vm5580, %v5472
      %5602 = vst.msk [vmem:[#allocation2 + $0xa8] sm:$0xff] %vm5580, %v5473
      %5603 = vst.msk [vmem:[#allocation2 + $0xb0] sm:$0xff] %vm5580, %v5474
      %5604 = vst.msk [vmem:[#allocation2 + $0xb8] sm:$0xff] %vm5580, %v5475
      %5605 = vst.msk [vmem:[#allocation2 + $0xc0] sm:$0xff] %vm5580, %v5476
      %5606 = vst.msk [vmem:[#allocation2 + $0xc8] sm:$0xff] %vm5580, %v5477
      %5607 = vst.msk [vmem:[#allocation2 + $0xd0] sm:$0xff] %vm5580, %v5478
      %5608 = vst.msk [vmem:[#allocation2 + $0xd8] sm:$0xff] %vm5580, %v5479
      %5609 = vst.msk [vmem:[#allocation2 + $0xe0] sm:$0xff] %vm5580, %v5480
      %5610 = vst.msk [vmem:[#allocation2 + $0xe8] sm:$0xff] %vm5580, %v5481
      %5611 = vst.msk [vmem:[#allocation2 + $0xf0] sm:$0xff] %vm5580, %v5482
      %5612 = vst.msk [vmem:[#allocation2 + $0xf8] sm:$0xff] %vm5580, %v5483
      %5613 = vst.msk [vmem:[#allocation2 + $0x100] sm:$0xff] %vm5580, %v5484
      %5614 = vst.msk [vmem:[#allocation2 + $0x108] sm:$0xff] %vm5580, %v5485
      %5615 = vst.msk [vmem:[#allocation2 + $0x110] sm:$0xff] %vm5580, %v5486
      %5616 = vst.msk [vmem:[#allocation2 + $0x118] sm:$0xff] %vm5580, %v5487
      %5617 = vst.msk [vmem:[#allocation2 + $0x120] sm:$0xff] %vm5580, %v5488
      %5618 = vst.msk [vmem:[#allocation2 + $0x128] sm:$0xff] %vm5580, %v5489
      %5619 = vst.msk [vmem:[#allocation2 + $0x130] sm:$0xff] %vm5580, %v5490
      %5620 = vst.msk [vmem:[#allocation2 + $0x138] sm:$0xff] %vm5580, %v5491
      %5621 = vst.msk [vmem:[#allocation2 + $0x140] sm:$0xff] %vm5580, %v5492
      %5622 = vst.msk [vmem:[#allocation2 + $0x148] sm:$0xff] %vm5580, %v5493
      %5623 = vst.msk [vmem:[#allocation2 + $0x150] sm:$0xff] %vm5580, %v5494
      %5624 = vst.msk [vmem:[#allocation2 + $0x158] sm:$0xff] %vm5580, %v5495
      %5625 = vst.msk [vmem:[#allocation2 + $0x160] sm:$0xff] %vm5580, %v5496
      %5626 = vst.msk [vmem:[#allocation2 + $0x168] sm:$0xff] %vm5580, %v5497
      %5627 = vst.msk [vmem:[#allocation2 + $0x170] sm:$0xff] %vm5580, %v5498
      %5628 = vst.msk [vmem:[#allocation2 + $0x178] sm:$0xff] %vm5580, %v5499
      %5629 = vst.msk [vmem:[#allocation2 + $0x180] sm:$0xff] %vm5580, %v5500
      %5630 = vst.msk [vmem:[#allocation2 + $0x188] sm:$0xff] %vm5580, %v5501
      %5631 = vst.msk [vmem:[#allocation2 + $0x190] sm:$0xff] %vm5580, %v5502
      %5632 = vst.msk [vmem:[#allocation2 + $0x198] sm:$0xff] %vm5580, %v5503
      %5633 = vst.msk [vmem:[#allocation2 + $0x1a0] sm:$0xff] %vm5580, %v5504
      %5634 = vst.msk [vmem:[#allocation2 + $0x1a8] sm:$0xff] %vm5580, %v5505
      %5635 = vst.msk [vmem:[#allocation2 + $0x1b0] sm:$0xff] %vm5580, %v5506
      %5636 = vst.msk [vmem:[#allocation2 + $0x1b8] sm:$0xff] %vm5580, %v5507
      %5637 = vst.msk [vmem:[#allocation2 + $0x1c0] sm:$0xff] %vm5580, %v5508
      %5638 = vst.msk [vmem:[#allocation2 + $0x1c8] sm:$0xff] %vm5580, %v5509
      %5639 = vst.msk [vmem:[#allocation2 + $0x1d0] sm:$0xff] %vm5580, %v5510
      %5640 = vst.msk [vmem:[#allocation2 + $0x1d8] sm:$0xff] %vm5580, %v5511
      %5641 = vst.msk [vmem:[#allocation2 + $0x1e0] sm:$0xff] %vm5580, %v5512
      %5642 = vst.msk [vmem:[#allocation2 + $0x1e8] sm:$0xff] %vm5580, %v5513
      %5643 = vst.msk [vmem:[#allocation2 + $0x1f0] sm:$0xff] %vm5580, %v5514
      %5644 = vst.msk [vmem:[#allocation2 + $0x1f8] sm:$0xff] %vm5580, %v5515
      %5645 = vst.msk [vmem:[#allocation2 + $0x200] sm:$0xff] %vm5580, %v5516
      %5646 = vst.msk [vmem:[#allocation2 + $0x208] sm:$0xff] %vm5580, %v5517
      %5647 = vst.msk [vmem:[#allocation2 + $0x210] sm:$0xff] %vm5580, %v5518
      %5648 = vst.msk [vmem:[#allocation2 + $0x218] sm:$0xff] %vm5580, %v5519
      %5649 = vst.msk [vmem:[#allocation2 + $0x220] sm:$0xff] %vm5580, %v5520
      %5650 = vst.msk [vmem:[#allocation2 + $0x228] sm:$0xff] %vm5580, %v5521
      %5651 = vst.msk [vmem:[#allocation2 + $0x230] sm:$0xff] %vm5580, %v5522
      %5652 = vst.msk [vmem:[#allocation2 + $0x238] sm:$0xff] %vm5580, %v5523
      %5653 = vst.msk [vmem:[#allocation2 + $0x240] sm:$0xff] %vm5580, %v5524
      %5654 = vst.msk [vmem:[#allocation2 + $0x248] sm:$0xff] %vm5580, %v5525
      %5655 = vst.msk [vmem:[#allocation2 + $0x250] sm:$0xff] %vm5580, %v5526
      %5656 = vst.msk [vmem:[#allocation2 + $0x258] sm:$0xff] %vm5580, %v5527
      %5657 = vst.msk [vmem:[#allocation2 + $0x260] sm:$0xff] %vm5580, %v5528
      %5658 = vst.msk [vmem:[#allocation2 + $0x268] sm:$0xff] %vm5580, %v5529
      %5659 = vst.msk [vmem:[#allocation2 + $0x270] sm:$0xff] %vm5580, %v5530
      %5660 = vst.msk [vmem:[#allocation2 + $0x278] sm:$0xff] %vm5580, %v5531
      %5661 = vst.msk [vmem:[#allocation2 + $0x280] sm:$0xff] %vm5580, %v5532
      %5662 = vst.msk [vmem:[#allocation2 + $0x288] sm:$0xff] %vm5580, %v5533
      %5663 = vst.msk [vmem:[#allocation2 + $0x290] sm:$0xff] %vm5580, %v5534
      %5664 = vst.msk [vmem:[#allocation2 + $0x298] sm:$0xff] %vm5580, %v5535
      %5665 = vst.msk [vmem:[#allocation2 + $0x2a0] sm:$0xff] %vm5580, %v5536
      %5666 = vst.msk [vmem:[#allocation2 + $0x2a8] sm:$0xff] %vm5580, %v5537
      %5667 = vst.msk [vmem:[#allocation2 + $0x2b0] sm:$0xff] %vm5580, %v5538
      %5668 = vst.msk [vmem:[#allocation2 + $0x2b8] sm:$0xff] %vm5580, %v5539
      %5669 = vst.msk [vmem:[#allocation2 + $0x2c0] sm:$0xff] %vm5580, %v5540
      %5670 = vst.msk [vmem:[#allocation2 + $0x2c8] sm:$0xff] %vm5580, %v5541
      %5671 = vst.msk [vmem:[#allocation2 + $0x2d0] sm:$0xff] %vm5580, %v5542
      %5672 = vst.msk [vmem:[#allocation2 + $0x2d8] sm:$0xff] %vm5580, %v5543
      %5673 = vst.msk [vmem:[#allocation2 + $0x2e0] sm:$0xff] %vm5580, %v5544
      %5674 = vst.msk [vmem:[#allocation2 + $0x2e8] sm:$0xff] %vm5580, %v5545
      %5675 = vst.msk [vmem:[#allocation2 + $0x2f0] sm:$0xff] %vm5580, %v5546
      %5676 = vst.msk [vmem:[#allocation2 + $0x2f8] sm:$0xff] %vm5580, %v5547
      %5677 = vst.msk [vmem:[#allocation2 + $0x300] sm:$0xff] %vm5580, %v5548
      %5678 = vst.msk [vmem:[#allocation2 + $0x308] sm:$0xff] %vm5580, %v5549
      %5679 = vst.msk [vmem:[#allocation2 + $0x310] sm:$0xff] %vm5580, %v5550
      %5680 = vst.msk [vmem:[#allocation2 + $0x318] sm:$0xff] %vm5580, %v5551
      %5681 = vst.msk [vmem:[#allocation2 + $0x320] sm:$0xff] %vm5580, %v5552
      %5682 = vst.msk [vmem:[#allocation2 + $0x328] sm:$0xff] %vm5580, %v5553
      %5683 = vst.msk [vmem:[#allocation2 + $0x330] sm:$0xff] %vm5580, %v5554
      %5684 = vst.msk [vmem:[#allocation2 + $0x338] sm:$0xff] %vm5580, %v5555
      %5685 = vst.msk [vmem:[#allocation2 + $0x340] sm:$0xff] %vm5580, %v5556
      %5686 = vst.msk [vmem:[#allocation2 + $0x348] sm:$0xff] %vm5580, %v5557
      %5687 = vst.msk [vmem:[#allocation2 + $0x350] sm:$0xff] %vm5580, %v5558
      %5688 = vst.msk [vmem:[#allocation2 + $0x358] sm:$0xff] %vm5580, %v5559
      %5689 = vst.msk [vmem:[#allocation2 + $0x360] sm:$0xff] %vm5580, %v5560
      %5690 = vst.msk [vmem:[#allocation2 + $0x368] sm:$0xff] %vm5580, %v5561
      %5691 = vst.msk [vmem:[#allocation2 + $0x370] sm:$0xff] %vm5580, %v5562
      %5692 = vst.msk [vmem:[#allocation2 + $0x378] sm:$0xff] %vm5580, %v5563
      %5693 = vst.msk [vmem:[#allocation2 + $0x380] sm:$0xff] %vm5580, %v5564
      %5694 = vst.msk [vmem:[#allocation2 + $0x388] sm:$0xff] %vm5580, %v5565
      %5695 = vst.msk [vmem:[#allocation2 + $0x390] sm:$0xff] %vm5580, %v5566
      %5696 = vst.msk [vmem:[#allocation2 + $0x398] sm:$0xff] %vm5580, %v5567
      %5697 = vst.msk [vmem:[#allocation2 + $0x3a0] sm:$0xff] %vm5580, %v5568
      %5698 = vst.msk [vmem:[#allocation2 + $0x3a8] sm:$0xff] %vm5580, %v5569
      %5699 = vst.msk [vmem:[#allocation2 + $0x3b0] sm:$0xff] %vm5580, %v5570
      %5700 = vst.msk [vmem:[#allocation2 + $0x3b8] sm:$0xff] %vm5580, %v5571
      %5701 = vst.msk [vmem:[#allocation2 + $0x3c0] sm:$0xff] %vm5580, %v5572
      %5702 = vst.msk [vmem:[#allocation2 + $0x3c8] sm:$0xff] %vm5580, %v5573
      %5703 = vst.msk [vmem:[#allocation2 + $0x3d0] sm:$0xff] %vm5580, %v5574
      %5704 = vst.msk [vmem:[#allocation2 + $0x3d8] sm:$0xff] %vm5580, %v5575
      %5705 = vst.msk [vmem:[#allocation2 + $0x3e0] sm:$0xff] %vm5580, %v5576
      %5706 = vst.msk [vmem:[#allocation2 + $0x3e8] sm:$0xff] %vm5580, %v5577
      %5707 = vst.msk [vmem:[#allocation2 + $0x3f0] sm:$0xff] %vm5580, %v5578
      %5708 = vst.msk [vmem:[#allocation2 + $0x3f8] sm:$0xff] %vm5580, %v5579
      %p5709 = scmp.eq.s32.totalorder %s19, 2
      // Predicated region
      $region37: #{_conv3x3_core.1} parent=31 // pred_check
        %p5710 = pneg %p5709
      $region38: #{_conv3x3_core.1} parent=31 // pred_check_branch
        %5712 = sbr.rel (%p5710) target = $region40
      $region39: #{_conv3x3_core.1} parent=31 // pred_region
        %v5713 = vld [vmem:[#allocation2] sm:$0xff]
        %v5714 = vld [vmem:[#allocation2 + $0x8] sm:$0xff]
        %v5715 = vld [vmem:[#allocation2 + $0x10] sm:$0xff]
        %v5716 = vld [vmem:[#allocation2 + $0x18] sm:$0xff]
        %v5717 = vld [vmem:[#allocation2 + $0x20] sm:$0xff]
        %v5718 = vld [vmem:[#allocation2 + $0x28] sm:$0xff]
        %v5719 = vld [vmem:[#allocation2 + $0x30] sm:$0xff]
        %v5720 = vld [vmem:[#allocation2 + $0x38] sm:$0xff]
        %v5721 = vld [vmem:[#allocation2 + $0x40] sm:$0xff]
        %v5722 = vld [vmem:[#allocation2 + $0x48] sm:$0xff]
        %v5723 = vld [vmem:[#allocation2 + $0x50] sm:$0xff]
        %v5724 = vld [vmem:[#allocation2 + $0x58] sm:$0xff]
        %v5725 = vld [vmem:[#allocation2 + $0x60] sm:$0xff]
        %v5726 = vld [vmem:[#allocation2 + $0x68] sm:$0xff]
        %v5727 = vld [vmem:[#allocation2 + $0x70] sm:$0xff]
        %v5728 = vld [vmem:[#allocation2 + $0x78] sm:$0xff]
        %v5729 = vld [vmem:[#allocation2 + $0x80] sm:$0xff]
        %v5730 = vld [vmem:[#allocation2 + $0x88] sm:$0xff]
        %v5731 = vld [vmem:[#allocation2 + $0x90] sm:$0xff]
        %v5732 = vld [vmem:[#allocation2 + $0x98] sm:$0xff]
        %v5733 = vld [vmem:[#allocation2 + $0xa0] sm:$0xff]
        %v5734 = vld [vmem:[#allocation2 + $0xa8] sm:$0xff]
        %v5735 = vld [vmem:[#allocation2 + $0xb0] sm:$0xff]
        %v5736 = vld [vmem:[#allocation2 + $0xb8] sm:$0xff]
        %v5737 = vld [vmem:[#allocation2 + $0xc0] sm:$0xff]
        %v5738 = vld [vmem:[#allocation2 + $0xc8] sm:$0xff]
        %v5739 = vld [vmem:[#allocation2 + $0xd0] sm:$0xff]
        %v5740 = vld [vmem:[#allocation2 + $0xd8] sm:$0xff]
        %v5741 = vld [vmem:[#allocation2 + $0xe0] sm:$0xff]
        %v5742 = vld [vmem:[#allocation2 + $0xe8] sm:$0xff]
        %v5743 = vld [vmem:[#allocation2 + $0xf0] sm:$0xff]
        %v5744 = vld [vmem:[#allocation2 + $0xf8] sm:$0xff]
        %v5745 = vld [vmem:[#allocation2 + $0x100] sm:$0xff]
        %v5746 = vld [vmem:[#allocation2 + $0x108] sm:$0xff]
        %v5747 = vld [vmem:[#allocation2 + $0x110] sm:$0xff]
        %v5748 = vld [vmem:[#allocation2 + $0x118] sm:$0xff]
        %v5749 = vld [vmem:[#allocation2 + $0x120] sm:$0xff]
        %v5750 = vld [vmem:[#allocation2 + $0x128] sm:$0xff]
        %v5751 = vld [vmem:[#allocation2 + $0x130] sm:$0xff]
        %v5752 = vld [vmem:[#allocation2 + $0x138] sm:$0xff]
        %v5753 = vld [vmem:[#allocation2 + $0x140] sm:$0xff]
        %v5754 = vld [vmem:[#allocation2 + $0x148] sm:$0xff]
        %v5755 = vld [vmem:[#allocation2 + $0x150] sm:$0xff]
        %v5756 = vld [vmem:[#allocation2 + $0x158] sm:$0xff]
        %v5757 = vld [vmem:[#allocation2 + $0x160] sm:$0xff]
        %v5758 = vld [vmem:[#allocation2 + $0x168] sm:$0xff]
        %v5759 = vld [vmem:[#allocation2 + $0x170] sm:$0xff]
        %v5760 = vld [vmem:[#allocation2 + $0x178] sm:$0xff]
        %v5761 = vld [vmem:[#allocation2 + $0x180] sm:$0xff]
        %v5762 = vld [vmem:[#allocation2 + $0x188] sm:$0xff]
        %v5763 = vld [vmem:[#allocation2 + $0x190] sm:$0xff]
        %v5764 = vld [vmem:[#allocation2 + $0x198] sm:$0xff]
        %v5765 = vld [vmem:[#allocation2 + $0x1a0] sm:$0xff]
        %v5766 = vld [vmem:[#allocation2 + $0x1a8] sm:$0xff]
        %v5767 = vld [vmem:[#allocation2 + $0x1b0] sm:$0xff]
        %v5768 = vld [vmem:[#allocation2 + $0x1b8] sm:$0xff]
        %v5769 = vld [vmem:[#allocation2 + $0x1c0] sm:$0xff]
        %v5770 = vld [vmem:[#allocation2 + $0x1c8] sm:$0xff]
        %v5771 = vld [vmem:[#allocation2 + $0x1d0] sm:$0xff]
        %v5772 = vld [vmem:[#allocation2 + $0x1d8] sm:$0xff]
        %v5773 = vld [vmem:[#allocation2 + $0x1e0] sm:$0xff]
        %v5774 = vld [vmem:[#allocation2 + $0x1e8] sm:$0xff]
        %v5775 = vld [vmem:[#allocation2 + $0x1f0] sm:$0xff]
        %v5776 = vld [vmem:[#allocation2 + $0x1f8] sm:$0xff]
        %v5777 = vld [vmem:[#allocation2 + $0x200] sm:$0xff]
        %v5778 = vld [vmem:[#allocation2 + $0x208] sm:$0xff]
        %v5779 = vld [vmem:[#allocation2 + $0x210] sm:$0xff]
        %v5780 = vld [vmem:[#allocation2 + $0x218] sm:$0xff]
        %v5781 = vld [vmem:[#allocation2 + $0x220] sm:$0xff]
        %v5782 = vld [vmem:[#allocation2 + $0x228] sm:$0xff]
        %v5783 = vld [vmem:[#allocation2 + $0x230] sm:$0xff]
        %v5784 = vld [vmem:[#allocation2 + $0x238] sm:$0xff]
        %v5785 = vld [vmem:[#allocation2 + $0x240] sm:$0xff]
        %v5786 = vld [vmem:[#allocation2 + $0x248] sm:$0xff]
        %v5787 = vld [vmem:[#allocation2 + $0x250] sm:$0xff]
        %v5788 = vld [vmem:[#allocation2 + $0x258] sm:$0xff]
        %v5789 = vld [vmem:[#allocation2 + $0x260] sm:$0xff]
        %v5790 = vld [vmem:[#allocation2 + $0x268] sm:$0xff]
        %v5791 = vld [vmem:[#allocation2 + $0x270] sm:$0xff]
        %v5792 = vld [vmem:[#allocation2 + $0x278] sm:$0xff]
        %v5793 = vld [vmem:[#allocation2 + $0x280] sm:$0xff]
        %v5794 = vld [vmem:[#allocation2 + $0x288] sm:$0xff]
        %v5795 = vld [vmem:[#allocation2 + $0x290] sm:$0xff]
        %v5796 = vld [vmem:[#allocation2 + $0x298] sm:$0xff]
        %v5797 = vld [vmem:[#allocation2 + $0x2a0] sm:$0xff]
        %v5798 = vld [vmem:[#allocation2 + $0x2a8] sm:$0xff]
        %v5799 = vld [vmem:[#allocation2 + $0x2b0] sm:$0xff]
        %v5800 = vld [vmem:[#allocation2 + $0x2b8] sm:$0xff]
        %v5801 = vld [vmem:[#allocation2 + $0x2c0] sm:$0xff]
        %v5802 = vld [vmem:[#allocation2 + $0x2c8] sm:$0xff]
        %v5803 = vld [vmem:[#allocation2 + $0x2d0] sm:$0xff]
        %v5804 = vld [vmem:[#allocation2 + $0x2d8] sm:$0xff]
        %v5805 = vld [vmem:[#allocation2 + $0x2e0] sm:$0xff]
        %v5806 = vld [vmem:[#allocation2 + $0x2e8] sm:$0xff]
        %v5807 = vld [vmem:[#allocation2 + $0x2f0] sm:$0xff]
        %v5808 = vld [vmem:[#allocation2 + $0x2f8] sm:$0xff]
        %v5809 = vld [vmem:[#allocation2 + $0x300] sm:$0xff]
        %v5810 = vld [vmem:[#allocation2 + $0x308] sm:$0xff]
        %v5811 = vld [vmem:[#allocation2 + $0x310] sm:$0xff]
        %v5812 = vld [vmem:[#allocation2 + $0x318] sm:$0xff]
        %v5813 = vld [vmem:[#allocation2 + $0x320] sm:$0xff]
        %v5814 = vld [vmem:[#allocation2 + $0x328] sm:$0xff]
        %v5815 = vld [vmem:[#allocation2 + $0x330] sm:$0xff]
        %v5816 = vld [vmem:[#allocation2 + $0x338] sm:$0xff]
        %v5817 = vld [vmem:[#allocation2 + $0x340] sm:$0xff]
        %v5818 = vld [vmem:[#allocation2 + $0x348] sm:$0xff]
        %v5819 = vld [vmem:[#allocation2 + $0x350] sm:$0xff]
        %v5820 = vld [vmem:[#allocation2 + $0x358] sm:$0xff]
        %v5821 = vld [vmem:[#allocation2 + $0x360] sm:$0xff]
        %v5822 = vld [vmem:[#allocation2 + $0x368] sm:$0xff]
        %v5823 = vld [vmem:[#allocation2 + $0x370] sm:$0xff]
        %v5824 = vld [vmem:[#allocation2 + $0x378] sm:$0xff]
        %v5825 = vld [vmem:[#allocation2 + $0x380] sm:$0xff]
        %v5826 = vld [vmem:[#allocation2 + $0x388] sm:$0xff]
        %v5827 = vld [vmem:[#allocation2 + $0x390] sm:$0xff]
        %v5828 = vld [vmem:[#allocation2 + $0x398] sm:$0xff]
        %v5829 = vld [vmem:[#allocation2 + $0x3a0] sm:$0xff]
        %v5830 = vld [vmem:[#allocation2 + $0x3a8] sm:$0xff]
        %v5831 = vld [vmem:[#allocation2 + $0x3b0] sm:$0xff]
        %v5832 = vld [vmem:[#allocation2 + $0x3b8] sm:$0xff]
        %v5833 = vld [vmem:[#allocation2 + $0x3c0] sm:$0xff]
        %v5834 = vld [vmem:[#allocation2 + $0x3c8] sm:$0xff]
        %v5835 = vld [vmem:[#allocation2 + $0x3d0] sm:$0xff]
        %v5836 = vld [vmem:[#allocation2 + $0x3d8] sm:$0xff]
        %v5837 = vld [vmem:[#allocation2 + $0x3e0] sm:$0xff]
        %v5838 = vld [vmem:[#allocation2 + $0x3e8] sm:$0xff]
        %v5839 = vld [vmem:[#allocation2 + $0x3f0] sm:$0xff]
        %v5840 = vld [vmem:[#allocation2 + $0x3f8] sm:$0xff]
        %v5841 = vld [vmem:[%s2] sm:$0x1]
        %v5843 = vlaneseq
        %v5844 = vshrl.u32 %v5843, 7
        %v5845 = vsub.s32 0, %v5844
        %v5846 = vrot.slane %v5841, %v5845
        %v5848 = vadd.f32 %v5713, %v5846
        %v5849 = vadd.f32 %v5714, %v5846
        %v5850 = vadd.f32 %v5715, %v5846
        %v5851 = vadd.f32 %v5716, %v5846
        %v5852 = vadd.f32 %v5717, %v5846
        %v5853 = vadd.f32 %v5718, %v5846
        %v5854 = vadd.f32 %v5719, %v5846
        %v5855 = vadd.f32 %v5720, %v5846
        %v5856 = vadd.f32 %v5721, %v5846
        %v5857 = vadd.f32 %v5722, %v5846
        %v5858 = vadd.f32 %v5723, %v5846
        %v5859 = vadd.f32 %v5724, %v5846
        %v5860 = vadd.f32 %v5725, %v5846
        %v5861 = vadd.f32 %v5726, %v5846
        %v5862 = vadd.f32 %v5727, %v5846
        %v5863 = vadd.f32 %v5728, %v5846
        %v5864 = vadd.f32 %v5729, %v5846
        %v5865 = vadd.f32 %v5730, %v5846
        %v5866 = vadd.f32 %v5731, %v5846
        %v5867 = vadd.f32 %v5732, %v5846
        %v5868 = vadd.f32 %v5733, %v5846
        %v5869 = vadd.f32 %v5734, %v5846
        %v5870 = vadd.f32 %v5735, %v5846
        %v5871 = vadd.f32 %v5736, %v5846
        %v5872 = vadd.f32 %v5737, %v5846
        %v5873 = vadd.f32 %v5738, %v5846
        %v5874 = vadd.f32 %v5739, %v5846
        %v5875 = vadd.f32 %v5740, %v5846
        %v5876 = vadd.f32 %v5741, %v5846
        %v5877 = vadd.f32 %v5742, %v5846
        %v5878 = vadd.f32 %v5743, %v5846
        %v5879 = vadd.f32 %v5744, %v5846
        %v5880 = vadd.f32 %v5745, %v5846
        %v5881 = vadd.f32 %v5746, %v5846
        %v5882 = vadd.f32 %v5747, %v5846
        %v5883 = vadd.f32 %v5748, %v5846
        %v5884 = vadd.f32 %v5749, %v5846
        %v5885 = vadd.f32 %v5750, %v5846
        %v5886 = vadd.f32 %v5751, %v5846
        %v5887 = vadd.f32 %v5752, %v5846
        %v5888 = vadd.f32 %v5753, %v5846
        %v5889 = vadd.f32 %v5754, %v5846
        %v5890 = vadd.f32 %v5755, %v5846
        %v5891 = vadd.f32 %v5756, %v5846
        %v5892 = vadd.f32 %v5757, %v5846
        %v5893 = vadd.f32 %v5758, %v5846
        %v5894 = vadd.f32 %v5759, %v5846
        %v5895 = vadd.f32 %v5760, %v5846
        %v5896 = vadd.f32 %v5761, %v5846
        %v5897 = vadd.f32 %v5762, %v5846
        %v5898 = vadd.f32 %v5763, %v5846
        %v5899 = vadd.f32 %v5764, %v5846
        %v5900 = vadd.f32 %v5765, %v5846
        %v5901 = vadd.f32 %v5766, %v5846
        %v5902 = vadd.f32 %v5767, %v5846
        %v5903 = vadd.f32 %v5768, %v5846
        %v5904 = vadd.f32 %v5769, %v5846
        %v5905 = vadd.f32 %v5770, %v5846
        %v5906 = vadd.f32 %v5771, %v5846
        %v5907 = vadd.f32 %v5772, %v5846
        %v5908 = vadd.f32 %v5773, %v5846
        %v5909 = vadd.f32 %v5774, %v5846
        %v5910 = vadd.f32 %v5775, %v5846
        %v5911 = vadd.f32 %v5776, %v5846
        %v5912 = vadd.f32 %v5777, %v5846
        %v5913 = vadd.f32 %v5778, %v5846
        %v5914 = vadd.f32 %v5779, %v5846
        %v5915 = vadd.f32 %v5780, %v5846
        %v5916 = vadd.f32 %v5781, %v5846
        %v5917 = vadd.f32 %v5782, %v5846
        %v5918 = vadd.f32 %v5783, %v5846
        %v5919 = vadd.f32 %v5784, %v5846
        %v5920 = vadd.f32 %v5785, %v5846
        %v5921 = vadd.f32 %v5786, %v5846
        %v5922 = vadd.f32 %v5787, %v5846
        %v5923 = vadd.f32 %v5788, %v5846
        %v5924 = vadd.f32 %v5789, %v5846
        %v5925 = vadd.f32 %v5790, %v5846
        %v5926 = vadd.f32 %v5791, %v5846
        %v5927 = vadd.f32 %v5792, %v5846
        %v5928 = vadd.f32 %v5793, %v5846
        %v5929 = vadd.f32 %v5794, %v5846
        %v5930 = vadd.f32 %v5795, %v5846
        %v5931 = vadd.f32 %v5796, %v5846
        %v5932 = vadd.f32 %v5797, %v5846
        %v5933 = vadd.f32 %v5798, %v5846
        %v5934 = vadd.f32 %v5799, %v5846
        %v5935 = vadd.f32 %v5800, %v5846
        %v5936 = vadd.f32 %v5801, %v5846
        %v5937 = vadd.f32 %v5802, %v5846
        %v5938 = vadd.f32 %v5803, %v5846
        %v5939 = vadd.f32 %v5804, %v5846
        %v5940 = vadd.f32 %v5805, %v5846
        %v5941 = vadd.f32 %v5806, %v5846
        %v5942 = vadd.f32 %v5807, %v5846
        %v5943 = vadd.f32 %v5808, %v5846
        %v5944 = vadd.f32 %v5809, %v5846
        %v5945 = vadd.f32 %v5810, %v5846
        %v5946 = vadd.f32 %v5811, %v5846
        %v5947 = vadd.f32 %v5812, %v5846
        %v5948 = vadd.f32 %v5813, %v5846
        %v5949 = vadd.f32 %v5814, %v5846
        %v5950 = vadd.f32 %v5815, %v5846
        %v5951 = vadd.f32 %v5816, %v5846
        %v5952 = vadd.f32 %v5817, %v5846
        %v5953 = vadd.f32 %v5818, %v5846
        %v5954 = vadd.f32 %v5819, %v5846
        %v5955 = vadd.f32 %v5820, %v5846
        %v5956 = vadd.f32 %v5821, %v5846
        %v5957 = vadd.f32 %v5822, %v5846
        %v5958 = vadd.f32 %v5823, %v5846
        %v5959 = vadd.f32 %v5824, %v5846
        %v5960 = vadd.f32 %v5825, %v5846
        %v5961 = vadd.f32 %v5826, %v5846
        %v5962 = vadd.f32 %v5827, %v5846
        %v5963 = vadd.f32 %v5828, %v5846
        %v5964 = vadd.f32 %v5829, %v5846
        %v5965 = vadd.f32 %v5830, %v5846
        %v5966 = vadd.f32 %v5831, %v5846
        %v5967 = vadd.f32 %v5832, %v5846
        %v5968 = vadd.f32 %v5833, %v5846
        %v5969 = vadd.f32 %v5834, %v5846
        %v5970 = vadd.f32 %v5835, %v5846
        %v5971 = vadd.f32 %v5836, %v5846
        %v5972 = vadd.f32 %v5837, %v5846
        %v5973 = vadd.f32 %v5838, %v5846
        %v5974 = vadd.f32 %v5839, %v5846
        %v5975 = vadd.f32 %v5840, %v5846
        %v5976 = vmax.f32 %v5848, 0.0
        %v5977 = vmax.f32 %v5849, 0.0
        %v5978 = vmax.f32 %v5850, 0.0
        %v5979 = vmax.f32 %v5851, 0.0
        %v5980 = vmax.f32 %v5852, 0.0
        %v5981 = vmax.f32 %v5853, 0.0
        %v5982 = vmax.f32 %v5854, 0.0
        %v5983 = vmax.f32 %v5855, 0.0
        %v5984 = vmax.f32 %v5856, 0.0
        %v5985 = vmax.f32 %v5857, 0.0
        %v5986 = vmax.f32 %v5858, 0.0
        %v5987 = vmax.f32 %v5859, 0.0
        %v5988 = vmax.f32 %v5860, 0.0
        %v5989 = vmax.f32 %v5861, 0.0
        %v5990 = vmax.f32 %v5862, 0.0
        %v5991 = vmax.f32 %v5863, 0.0
        %v5992 = vmax.f32 %v5864, 0.0
        %v5993 = vmax.f32 %v5865, 0.0
        %v5994 = vmax.f32 %v5866, 0.0
        %v5995 = vmax.f32 %v5867, 0.0
        %v5996 = vmax.f32 %v5868, 0.0
        %v5997 = vmax.f32 %v5869, 0.0
        %v5998 = vmax.f32 %v5870, 0.0
        %v5999 = vmax.f32 %v5871, 0.0
        %v6000 = vmax.f32 %v5872, 0.0
        %v6001 = vmax.f32 %v5873, 0.0
        %v6002 = vmax.f32 %v5874, 0.0
        %v6003 = vmax.f32 %v5875, 0.0
        %v6004 = vmax.f32 %v5876, 0.0
        %v6005 = vmax.f32 %v5877, 0.0
        %v6006 = vmax.f32 %v5878, 0.0
        %v6007 = vmax.f32 %v5879, 0.0
        %v6008 = vmax.f32 %v5880, 0.0
        %v6009 = vmax.f32 %v5881, 0.0
        %v6010 = vmax.f32 %v5882, 0.0
        %v6011 = vmax.f32 %v5883, 0.0
        %v6012 = vmax.f32 %v5884, 0.0
        %v6013 = vmax.f32 %v5885, 0.0
        %v6014 = vmax.f32 %v5886, 0.0
        %v6015 = vmax.f32 %v5887, 0.0
        %v6016 = vmax.f32 %v5888, 0.0
        %v6017 = vmax.f32 %v5889, 0.0
        %v6018 = vmax.f32 %v5890, 0.0
        %v6019 = vmax.f32 %v5891, 0.0
        %v6020 = vmax.f32 %v5892, 0.0
        %v6021 = vmax.f32 %v5893, 0.0
        %v6022 = vmax.f32 %v5894, 0.0
        %v6023 = vmax.f32 %v5895, 0.0
        %v6024 = vmax.f32 %v5896, 0.0
        %v6025 = vmax.f32 %v5897, 0.0
        %v6026 = vmax.f32 %v5898, 0.0
        %v6027 = vmax.f32 %v5899, 0.0
        %v6028 = vmax.f32 %v5900, 0.0
        %v6029 = vmax.f32 %v5901, 0.0
        %v6030 = vmax.f32 %v5902, 0.0
        %v6031 = vmax.f32 %v5903, 0.0
        %v6032 = vmax.f32 %v5904, 0.0
        %v6033 = vmax.f32 %v5905, 0.0
        %v6034 = vmax.f32 %v5906, 0.0
        %v6035 = vmax.f32 %v5907, 0.0
        %v6036 = vmax.f32 %v5908, 0.0
        %v6037 = vmax.f32 %v5909, 0.0
        %v6038 = vmax.f32 %v5910, 0.0
        %v6039 = vmax.f32 %v5911, 0.0
        %v6040 = vmax.f32 %v5912, 0.0
        %v6041 = vmax.f32 %v5913, 0.0
        %v6042 = vmax.f32 %v5914, 0.0
        %v6043 = vmax.f32 %v5915, 0.0
        %v6044 = vmax.f32 %v5916, 0.0
        %v6045 = vmax.f32 %v5917, 0.0
        %v6046 = vmax.f32 %v5918, 0.0
        %v6047 = vmax.f32 %v5919, 0.0
        %v6048 = vmax.f32 %v5920, 0.0
        %v6049 = vmax.f32 %v5921, 0.0
        %v6050 = vmax.f32 %v5922, 0.0
        %v6051 = vmax.f32 %v5923, 0.0
        %v6052 = vmax.f32 %v5924, 0.0
        %v6053 = vmax.f32 %v5925, 0.0
        %v6054 = vmax.f32 %v5926, 0.0
        %v6055 = vmax.f32 %v5927, 0.0
        %v6056 = vmax.f32 %v5928, 0.0
        %v6057 = vmax.f32 %v5929, 0.0
        %v6058 = vmax.f32 %v5930, 0.0
        %v6059 = vmax.f32 %v5931, 0.0
        %v6060 = vmax.f32 %v5932, 0.0
        %v6061 = vmax.f32 %v5933, 0.0
        %v6062 = vmax.f32 %v5934, 0.0
        %v6063 = vmax.f32 %v5935, 0.0
        %v6064 = vmax.f32 %v5936, 0.0
        %v6065 = vmax.f32 %v5937, 0.0
        %v6066 = vmax.f32 %v5938, 0.0
        %v6067 = vmax.f32 %v5939, 0.0
        %v6068 = vmax.f32 %v5940, 0.0
        %v6069 = vmax.f32 %v5941, 0.0
        %v6070 = vmax.f32 %v5942, 0.0
        %v6071 = vmax.f32 %v5943, 0.0
        %v6072 = vmax.f32 %v5944, 0.0
        %v6073 = vmax.f32 %v5945, 0.0
        %v6074 = vmax.f32 %v5946, 0.0
        %v6075 = vmax.f32 %v5947, 0.0
        %v6076 = vmax.f32 %v5948, 0.0
        %v6077 = vmax.f32 %v5949, 0.0
        %v6078 = vmax.f32 %v5950, 0.0
        %v6079 = vmax.f32 %v5951, 0.0
        %v6080 = vmax.f32 %v5952, 0.0
        %v6081 = vmax.f32 %v5953, 0.0
        %v6082 = vmax.f32 %v5954, 0.0
        %v6083 = vmax.f32 %v5955, 0.0
        %v6084 = vmax.f32 %v5956, 0.0
        %v6085 = vmax.f32 %v5957, 0.0
        %v6086 = vmax.f32 %v5958, 0.0
        %v6087 = vmax.f32 %v5959, 0.0
        %v6088 = vmax.f32 %v5960, 0.0
        %v6089 = vmax.f32 %v5961, 0.0
        %v6090 = vmax.f32 %v5962, 0.0
        %v6091 = vmax.f32 %v5963, 0.0
        %v6092 = vmax.f32 %v5964, 0.0
        %v6093 = vmax.f32 %v5965, 0.0
        %v6094 = vmax.f32 %v5966, 0.0
        %v6095 = vmax.f32 %v5967, 0.0
        %v6096 = vmax.f32 %v5968, 0.0
        %v6097 = vmax.f32 %v5969, 0.0
        %v6098 = vmax.f32 %v5970, 0.0
        %v6099 = vmax.f32 %v5971, 0.0
        %v6100 = vmax.f32 %v5972, 0.0
        %v6101 = vmax.f32 %v5973, 0.0
        %v6102 = vmax.f32 %v5974, 0.0
        %v6103 = vmax.f32 %v5975, 0.0
        %v6104 = vpack.c.bf16 %v5977, %v5976
        %v6105 = vpack.c.bf16 %v5979, %v5978
        %v6106 = vpack.c.bf16 %v5981, %v5980
        %v6107 = vpack.c.bf16 %v5983, %v5982
        %v6108 = vpack.c.bf16 %v5985, %v5984
        %v6109 = vpack.c.bf16 %v5987, %v5986
        %v6110 = vpack.c.bf16 %v5989, %v5988
        %v6111 = vpack.c.bf16 %v5991, %v5990
        %v6112 = vpack.c.bf16 %v5993, %v5992
        %v6113 = vpack.c.bf16 %v5995, %v5994
        %v6114 = vpack.c.bf16 %v5997, %v5996
        %v6115 = vpack.c.bf16 %v5999, %v5998
        %v6116 = vpack.c.bf16 %v6001, %v6000
        %v6117 = vpack.c.bf16 %v6003, %v6002
        %v6118 = vpack.c.bf16 %v6005, %v6004
        %v6119 = vpack.c.bf16 %v6007, %v6006
        %v6120 = vpack.c.bf16 %v6009, %v6008
        %v6121 = vpack.c.bf16 %v6011, %v6010
        %v6122 = vpack.c.bf16 %v6013, %v6012
        %v6123 = vpack.c.bf16 %v6015, %v6014
        %v6124 = vpack.c.bf16 %v6017, %v6016
        %v6125 = vpack.c.bf16 %v6019, %v6018
        %v6126 = vpack.c.bf16 %v6021, %v6020
        %v6127 = vpack.c.bf16 %v6023, %v6022
        %v6128 = vpack.c.bf16 %v6025, %v6024
        %v6129 = vpack.c.bf16 %v6027, %v6026
        %v6130 = vpack.c.bf16 %v6029, %v6028
        %v6131 = vpack.c.bf16 %v6031, %v6030
        %v6132 = vpack.c.bf16 %v6033, %v6032
        %v6133 = vpack.c.bf16 %v6035, %v6034
        %v6134 = vpack.c.bf16 %v6037, %v6036
        %v6135 = vpack.c.bf16 %v6039, %v6038
        %v6136 = vpack.c.bf16 %v6041, %v6040
        %v6137 = vpack.c.bf16 %v6043, %v6042
        %v6138 = vpack.c.bf16 %v6045, %v6044
        %v6139 = vpack.c.bf16 %v6047, %v6046
        %v6140 = vpack.c.bf16 %v6049, %v6048
        %v6141 = vpack.c.bf16 %v6051, %v6050
        %v6142 = vpack.c.bf16 %v6053, %v6052
        %v6143 = vpack.c.bf16 %v6055, %v6054
        %v6144 = vpack.c.bf16 %v6057, %v6056
        %v6145 = vpack.c.bf16 %v6059, %v6058
        %v6146 = vpack.c.bf16 %v6061, %v6060
        %v6147 = vpack.c.bf16 %v6063, %v6062
        %v6148 = vpack.c.bf16 %v6065, %v6064
        %v6149 = vpack.c.bf16 %v6067, %v6066
        %v6150 = vpack.c.bf16 %v6069, %v6068
        %v6151 = vpack.c.bf16 %v6071, %v6070
        %v6152 = vpack.c.bf16 %v6073, %v6072
        %v6153 = vpack.c.bf16 %v6075, %v6074
        %v6154 = vpack.c.bf16 %v6077, %v6076
        %v6155 = vpack.c.bf16 %v6079, %v6078
        %v6156 = vpack.c.bf16 %v6081, %v6080
        %v6157 = vpack.c.bf16 %v6083, %v6082
        %v6158 = vpack.c.bf16 %v6085, %v6084
        %v6159 = vpack.c.bf16 %v6087, %v6086
        %v6160 = vpack.c.bf16 %v6089, %v6088
        %v6161 = vpack.c.bf16 %v6091, %v6090
        %v6162 = vpack.c.bf16 %v6093, %v6092
        %v6163 = vpack.c.bf16 %v6095, %v6094
        %v6164 = vpack.c.bf16 %v6097, %v6096
        %v6165 = vpack.c.bf16 %v6099, %v6098
        %v6166 = vpack.c.bf16 %v6101, %v6100
        %v6167 = vpack.c.bf16 %v6103, %v6102
        %v6232 = vunpack.c.l.b16 %v6104
        %v6233 = vunpack.c.h.b16 %v6104
        %v6234 = vunpack.c.l.b16 %v6105
        %v6235 = vunpack.c.h.b16 %v6105
        %v6236 = vunpack.c.l.b16 %v6106
        %v6237 = vunpack.c.h.b16 %v6106
        %v6238 = vunpack.c.l.b16 %v6107
        %v6239 = vunpack.c.h.b16 %v6107
        %v6240 = vunpack.c.l.b16 %v6108
        %v6241 = vunpack.c.h.b16 %v6108
        %v6242 = vunpack.c.l.b16 %v6109
        %v6243 = vunpack.c.h.b16 %v6109
        %v6244 = vunpack.c.l.b16 %v6110
        %v6245 = vunpack.c.h.b16 %v6110
        %v6246 = vunpack.c.l.b16 %v6111
        %v6247 = vunpack.c.h.b16 %v6111
        %v6248 = vunpack.c.l.b16 %v6112
        %v6249 = vunpack.c.h.b16 %v6112
        %v6250 = vunpack.c.l.b16 %v6113
        %v6251 = vunpack.c.h.b16 %v6113
        %v6252 = vunpack.c.l.b16 %v6114
        %v6253 = vunpack.c.h.b16 %v6114
        %v6254 = vunpack.c.l.b16 %v6115
        %v6255 = vunpack.c.h.b16 %v6115
        %v6256 = vunpack.c.l.b16 %v6116
        %v6257 = vunpack.c.h.b16 %v6116
        %v6258 = vunpack.c.l.b16 %v6117
        %v6259 = vunpack.c.h.b16 %v6117
        %v6260 = vunpack.c.l.b16 %v6118
        %v6261 = vunpack.c.h.b16 %v6118
        %v6262 = vunpack.c.l.b16 %v6119
        %v6263 = vunpack.c.h.b16 %v6119
        %v6264 = vunpack.c.l.b16 %v6120
        %v6265 = vunpack.c.h.b16 %v6120
        %v6266 = vunpack.c.l.b16 %v6121
        %v6267 = vunpack.c.h.b16 %v6121
        %v6268 = vunpack.c.l.b16 %v6122
        %v6269 = vunpack.c.h.b16 %v6122
        %v6270 = vunpack.c.l.b16 %v6123
        %v6271 = vunpack.c.h.b16 %v6123
        %v6272 = vunpack.c.l.b16 %v6124
        %v6273 = vunpack.c.h.b16 %v6124
        %v6274 = vunpack.c.l.b16 %v6125
        %v6275 = vunpack.c.h.b16 %v6125
        %v6276 = vunpack.c.l.b16 %v6126
        %v6277 = vunpack.c.h.b16 %v6126
        %v6278 = vunpack.c.l.b16 %v6127
        %v6279 = vunpack.c.h.b16 %v6127
        %v6280 = vunpack.c.l.b16 %v6128
        %v6281 = vunpack.c.h.b16 %v6128
        %v6282 = vunpack.c.l.b16 %v6129
        %v6283 = vunpack.c.h.b16 %v6129
        %v6284 = vunpack.c.l.b16 %v6130
        %v6285 = vunpack.c.h.b16 %v6130
        %v6286 = vunpack.c.l.b16 %v6131
        %v6287 = vunpack.c.h.b16 %v6131
        %v6288 = vunpack.c.l.b16 %v6132
        %v6289 = vunpack.c.h.b16 %v6132
        %v6290 = vunpack.c.l.b16 %v6133
        %v6291 = vunpack.c.h.b16 %v6133
        %v6292 = vunpack.c.l.b16 %v6134
        %v6293 = vunpack.c.h.b16 %v6134
        %v6294 = vunpack.c.l.b16 %v6135
        %v6295 = vunpack.c.h.b16 %v6135
        %v6296 = vunpack.c.l.b16 %v6136
        %v6297 = vunpack.c.h.b16 %v6136
        %v6298 = vunpack.c.l.b16 %v6137
        %v6299 = vunpack.c.h.b16 %v6137
        %v6300 = vunpack.c.l.b16 %v6138
        %v6301 = vunpack.c.h.b16 %v6138
        %v6302 = vunpack.c.l.b16 %v6139
        %v6303 = vunpack.c.h.b16 %v6139
        %v6304 = vunpack.c.l.b16 %v6140
        %v6305 = vunpack.c.h.b16 %v6140
        %v6306 = vunpack.c.l.b16 %v6141
        %v6307 = vunpack.c.h.b16 %v6141
        %v6308 = vunpack.c.l.b16 %v6142
        %v6309 = vunpack.c.h.b16 %v6142
        %v6310 = vunpack.c.l.b16 %v6143
        %v6311 = vunpack.c.h.b16 %v6143
        %v6312 = vunpack.c.l.b16 %v6144
        %v6313 = vunpack.c.h.b16 %v6144
        %v6314 = vunpack.c.l.b16 %v6145
        %v6315 = vunpack.c.h.b16 %v6145
        %v6316 = vunpack.c.l.b16 %v6146
        %v6317 = vunpack.c.h.b16 %v6146
        %v6318 = vunpack.c.l.b16 %v6147
        %v6319 = vunpack.c.h.b16 %v6147
        %v6320 = vunpack.c.l.b16 %v6148
        %v6321 = vunpack.c.h.b16 %v6148
        %v6322 = vunpack.c.l.b16 %v6149
        %v6323 = vunpack.c.h.b16 %v6149
        %v6324 = vunpack.c.l.b16 %v6150
        %v6325 = vunpack.c.h.b16 %v6150
        %v6326 = vunpack.c.l.b16 %v6151
        %v6327 = vunpack.c.h.b16 %v6151
        %v6328 = vunpack.c.l.b16 %v6152
        %v6329 = vunpack.c.h.b16 %v6152
        %v6330 = vunpack.c.l.b16 %v6153
        %v6331 = vunpack.c.h.b16 %v6153
        %v6332 = vunpack.c.l.b16 %v6154
        %v6333 = vunpack.c.h.b16 %v6154
        %v6334 = vunpack.c.l.b16 %v6155
        %v6335 = vunpack.c.h.b16 %v6155
        %v6336 = vunpack.c.l.b16 %v6156
        %v6337 = vunpack.c.h.b16 %v6156
        %v6338 = vunpack.c.l.b16 %v6157
        %v6339 = vunpack.c.h.b16 %v6157
        %v6340 = vunpack.c.l.b16 %v6158
        %v6341 = vunpack.c.h.b16 %v6158
        %v6342 = vunpack.c.l.b16 %v6159
        %v6343 = vunpack.c.h.b16 %v6159
        %v6344 = vunpack.c.l.b16 %v6160
        %v6345 = vunpack.c.h.b16 %v6160
        %v6346 = vunpack.c.l.b16 %v6161
        %v6347 = vunpack.c.h.b16 %v6161
        %v6348 = vunpack.c.l.b16 %v6162
        %v6349 = vunpack.c.h.b16 %v6162
        %v6350 = vunpack.c.l.b16 %v6163
        %v6351 = vunpack.c.h.b16 %v6163
        %v6352 = vunpack.c.l.b16 %v6164
        %v6353 = vunpack.c.h.b16 %v6164
        %v6354 = vunpack.c.l.b16 %v6165
        %v6355 = vunpack.c.h.b16 %v6165
        %v6356 = vunpack.c.l.b16 %v6166
        %v6357 = vunpack.c.h.b16 %v6166
        %v6358 = vunpack.c.l.b16 %v6167
        %v6359 = vunpack.c.h.b16 %v6167
        %v6360 = vpack.c.b16 %v6232, %v6232
        %v6361 = vpack.c.b16 %v6233, %v6233
        %v6362 = vpack.c.b16 %v6234, %v6234
        %v6363 = vpack.c.b16 %v6235, %v6235
        %v6364 = vpack.c.b16 %v6236, %v6236
        %v6365 = vpack.c.b16 %v6237, %v6237
        %v6366 = vpack.c.b16 %v6238, %v6238
        %v6367 = vpack.c.b16 %v6239, %v6239
        %v6368 = vpack.c.b16 %v6240, %v6240
        %v6369 = vpack.c.b16 %v6241, %v6241
        %v6370 = vpack.c.b16 %v6242, %v6242
        %v6371 = vpack.c.b16 %v6243, %v6243
        %v6372 = vpack.c.b16 %v6244, %v6244
        %v6373 = vpack.c.b16 %v6245, %v6245
        %v6374 = vpack.c.b16 %v6246, %v6246
        %v6375 = vpack.c.b16 %v6247, %v6247
        %v6376 = vpack.c.b16 %v6248, %v6248
        %v6377 = vpack.c.b16 %v6249, %v6249
        %v6378 = vpack.c.b16 %v6250, %v6250
        %v6379 = vpack.c.b16 %v6251, %v6251
        %v6380 = vpack.c.b16 %v6252, %v6252
        %v6381 = vpack.c.b16 %v6253, %v6253
        %v6382 = vpack.c.b16 %v6254, %v6254
        %v6383 = vpack.c.b16 %v6255, %v6255
        %v6384 = vpack.c.b16 %v6256, %v6256
        %v6385 = vpack.c.b16 %v6257, %v6257
        %v6386 = vpack.c.b16 %v6258, %v6258
        %v6387 = vpack.c.b16 %v6259, %v6259
        %v6388 = vpack.c.b16 %v6260, %v6260
        %v6389 = vpack.c.b16 %v6261, %v6261
        %v6390 = vpack.c.b16 %v6262, %v6262
        %v6391 = vpack.c.b16 %v6263, %v6263
        %v6392 = vpack.c.b16 %v6264, %v6264
        %v6393 = vpack.c.b16 %v6265, %v6265
        %v6394 = vpack.c.b16 %v6266, %v6266
        %v6395 = vpack.c.b16 %v6267, %v6267
        %v6396 = vpack.c.b16 %v6268, %v6268
        %v6397 = vpack.c.b16 %v6269, %v6269
        %v6398 = vpack.c.b16 %v6270, %v6270
        %v6399 = vpack.c.b16 %v6271, %v6271
        %v6400 = vpack.c.b16 %v6272, %v6272
        %v6401 = vpack.c.b16 %v6273, %v6273
        %v6402 = vpack.c.b16 %v6274, %v6274
        %v6403 = vpack.c.b16 %v6275, %v6275
        %v6404 = vpack.c.b16 %v6276, %v6276
        %v6405 = vpack.c.b16 %v6277, %v6277
        %v6406 = vpack.c.b16 %v6278, %v6278
        %v6407 = vpack.c.b16 %v6279, %v6279
        %v6408 = vpack.c.b16 %v6280, %v6280
        %v6409 = vpack.c.b16 %v6281, %v6281
        %v6410 = vpack.c.b16 %v6282, %v6282
        %v6411 = vpack.c.b16 %v6283, %v6283
        %v6412 = vpack.c.b16 %v6284, %v6284
        %v6413 = vpack.c.b16 %v6285, %v6285
        %v6414 = vpack.c.b16 %v6286, %v6286
        %v6415 = vpack.c.b16 %v6287, %v6287
        %v6416 = vpack.c.b16 %v6288, %v6288
        %v6417 = vpack.c.b16 %v6289, %v6289
        %v6418 = vpack.c.b16 %v6290, %v6290
        %v6419 = vpack.c.b16 %v6291, %v6291
        %v6420 = vpack.c.b16 %v6292, %v6292
        %v6421 = vpack.c.b16 %v6293, %v6293
        %v6422 = vpack.c.b16 %v6294, %v6294
        %v6423 = vpack.c.b16 %v6295, %v6295
        %v6424 = vpack.c.b16 %v6296, %v6296
        %v6425 = vpack.c.b16 %v6297, %v6297
        %v6426 = vpack.c.b16 %v6298, %v6298
        %v6427 = vpack.c.b16 %v6299, %v6299
        %v6428 = vpack.c.b16 %v6300, %v6300
        %v6429 = vpack.c.b16 %v6301, %v6301
        %v6430 = vpack.c.b16 %v6302, %v6302
        %v6431 = vpack.c.b16 %v6303, %v6303
        %v6432 = vpack.c.b16 %v6304, %v6304
        %v6433 = vpack.c.b16 %v6305, %v6305
        %v6434 = vpack.c.b16 %v6306, %v6306
        %v6435 = vpack.c.b16 %v6307, %v6307
        %v6436 = vpack.c.b16 %v6308, %v6308
        %v6437 = vpack.c.b16 %v6309, %v6309
        %v6438 = vpack.c.b16 %v6310, %v6310
        %v6439 = vpack.c.b16 %v6311, %v6311
        %v6440 = vpack.c.b16 %v6312, %v6312
        %v6441 = vpack.c.b16 %v6313, %v6313
        %v6442 = vpack.c.b16 %v6314, %v6314
        %v6443 = vpack.c.b16 %v6315, %v6315
        %v6444 = vpack.c.b16 %v6316, %v6316
        %v6445 = vpack.c.b16 %v6317, %v6317
        %v6446 = vpack.c.b16 %v6318, %v6318
        %v6447 = vpack.c.b16 %v6319, %v6319
        %v6448 = vpack.c.b16 %v6320, %v6320
        %v6449 = vpack.c.b16 %v6321, %v6321
        %v6450 = vpack.c.b16 %v6322, %v6322
        %v6451 = vpack.c.b16 %v6323, %v6323
        %v6452 = vpack.c.b16 %v6324, %v6324
        %v6453 = vpack.c.b16 %v6325, %v6325
        %v6454 = vpack.c.b16 %v6326, %v6326
        %v6455 = vpack.c.b16 %v6327, %v6327
        %v6456 = vpack.c.b16 %v6328, %v6328
        %v6457 = vpack.c.b16 %v6329, %v6329
        %v6458 = vpack.c.b16 %v6330, %v6330
        %v6459 = vpack.c.b16 %v6331, %v6331
        %v6460 = vpack.c.b16 %v6332, %v6332
        %v6461 = vpack.c.b16 %v6333, %v6333
        %v6462 = vpack.c.b16 %v6334, %v6334
        %v6463 = vpack.c.b16 %v6335, %v6335
        %v6464 = vpack.c.b16 %v6336, %v6336
        %v6465 = vpack.c.b16 %v6337, %v6337
        %v6466 = vpack.c.b16 %v6338, %v6338
        %v6467 = vpack.c.b16 %v6339, %v6339
        %v6468 = vpack.c.b16 %v6340, %v6340
        %v6469 = vpack.c.b16 %v6341, %v6341
        %v6470 = vpack.c.b16 %v6342, %v6342
        %v6471 = vpack.c.b16 %v6343, %v6343
        %v6472 = vpack.c.b16 %v6344, %v6344
        %v6473 = vpack.c.b16 %v6345, %v6345
        %v6474 = vpack.c.b16 %v6346, %v6346
        %v6475 = vpack.c.b16 %v6347, %v6347
        %v6476 = vpack.c.b16 %v6348, %v6348
        %v6477 = vpack.c.b16 %v6349, %v6349
        %v6478 = vpack.c.b16 %v6350, %v6350
        %v6479 = vpack.c.b16 %v6351, %v6351
        %v6480 = vpack.c.b16 %v6352, %v6352
        %v6481 = vpack.c.b16 %v6353, %v6353
        %v6482 = vpack.c.b16 %v6354, %v6354
        %v6483 = vpack.c.b16 %v6355, %v6355
        %v6484 = vpack.c.b16 %v6356, %v6356
        %v6485 = vpack.c.b16 %v6357, %v6357
        %v6486 = vpack.c.b16 %v6358, %v6358
        %v6487 = vpack.c.b16 %v6359, %v6359
        %vm6616 = vcmask 60416
        %6617 = vst.msk [vmem:[%s201] sm:$0xf] %vm6616, %v6360
        %6618 = vst.msk [vmem:[%s201 + $0x4] sm:$0xf] %vm6616, %v6361
        %6619 = vst.msk [vmem:[%s201 + $0x8] sm:$0xf] %vm6616, %v6362
        %6620 = vst.msk [vmem:[%s201 + $0xc] sm:$0xf] %vm6616, %v6363
        %6621 = vst.msk [vmem:[%s201 + $0x10] sm:$0xf] %vm6616, %v6364
        %6622 = vst.msk [vmem:[%s201 + $0x14] sm:$0xf] %vm6616, %v6365
        %6623 = vst.msk [vmem:[%s201 + $0x18] sm:$0xf] %vm6616, %v6366
        %6624 = vst.msk [vmem:[%s201 + $0x1c] sm:$0xf] %vm6616, %v6367
        %6625 = vst.msk [vmem:[%s201 + $0x20] sm:$0xf] %vm6616, %v6368
        %6626 = vst.msk [vmem:[%s201 + $0x24] sm:$0xf] %vm6616, %v6369
        %6627 = vst.msk [vmem:[%s201 + $0x28] sm:$0xf] %vm6616, %v6370
        %6628 = vst.msk [vmem:[%s201 + $0x2c] sm:$0xf] %vm6616, %v6371
        %6629 = vst.msk [vmem:[%s201 + $0x30] sm:$0xf] %vm6616, %v6372
        %6630 = vst.msk [vmem:[%s201 + $0x34] sm:$0xf] %vm6616, %v6373
        %6631 = vst.msk [vmem:[%s201 + $0x38] sm:$0xf] %vm6616, %v6374
        %6632 = vst.msk [vmem:[%s201 + $0x3c] sm:$0xf] %vm6616, %v6375
        %6633 = vst.msk [vmem:[%s201 + $0x40] sm:$0xf] %vm6616, %v6376
        %6634 = vst.msk [vmem:[%s201 + $0x44] sm:$0xf] %vm6616, %v6377
        %6635 = vst.msk [vmem:[%s201 + $0x48] sm:$0xf] %vm6616, %v6378
        %6636 = vst.msk [vmem:[%s201 + $0x4c] sm:$0xf] %vm6616, %v6379
        %6637 = vst.msk [vmem:[%s201 + $0x50] sm:$0xf] %vm6616, %v6380
        %6638 = vst.msk [vmem:[%s201 + $0x54] sm:$0xf] %vm6616, %v6381
        %6639 = vst.msk [vmem:[%s201 + $0x58] sm:$0xf] %vm6616, %v6382
        %6640 = vst.msk [vmem:[%s201 + $0x5c] sm:$0xf] %vm6616, %v6383
        %6641 = vst.msk [vmem:[%s201 + $0x60] sm:$0xf] %vm6616, %v6384
        %6642 = vst.msk [vmem:[%s201 + $0x64] sm:$0xf] %vm6616, %v6385
        %6643 = vst.msk [vmem:[%s201 + $0x68] sm:$0xf] %vm6616, %v6386
        %6644 = vst.msk [vmem:[%s201 + $0x6c] sm:$0xf] %vm6616, %v6387
        %6645 = vst.msk [vmem:[%s201 + $0x70] sm:$0xf] %vm6616, %v6388
        %6646 = vst.msk [vmem:[%s201 + $0x74] sm:$0xf] %vm6616, %v6389
        %6647 = vst.msk [vmem:[%s201 + $0x78] sm:$0xf] %vm6616, %v6390
        %6648 = vst.msk [vmem:[%s201 + $0x7c] sm:$0xf] %vm6616, %v6391
        %6649 = vst.msk [vmem:[%s201 + $0x80] sm:$0xf] %vm6616, %v6392
        %6650 = vst.msk [vmem:[%s201 + $0x84] sm:$0xf] %vm6616, %v6393
        %6651 = vst.msk [vmem:[%s201 + $0x88] sm:$0xf] %vm6616, %v6394
        %6652 = vst.msk [vmem:[%s201 + $0x8c] sm:$0xf] %vm6616, %v6395
        %6653 = vst.msk [vmem:[%s201 + $0x90] sm:$0xf] %vm6616, %v6396
        %6654 = vst.msk [vmem:[%s201 + $0x94] sm:$0xf] %vm6616, %v6397
        %6655 = vst.msk [vmem:[%s201 + $0x98] sm:$0xf] %vm6616, %v6398
        %6656 = vst.msk [vmem:[%s201 + $0x9c] sm:$0xf] %vm6616, %v6399
        %6657 = vst.msk [vmem:[%s201 + $0xa0] sm:$0xf] %vm6616, %v6400
        %6658 = vst.msk [vmem:[%s201 + $0xa4] sm:$0xf] %vm6616, %v6401
        %6659 = vst.msk [vmem:[%s201 + $0xa8] sm:$0xf] %vm6616, %v6402
        %6660 = vst.msk [vmem:[%s201 + $0xac] sm:$0xf] %vm6616, %v6403
        %6661 = vst.msk [vmem:[%s201 + $0xb0] sm:$0xf] %vm6616, %v6404
        %6662 = vst.msk [vmem:[%s201 + $0xb4] sm:$0xf] %vm6616, %v6405
        %6663 = vst.msk [vmem:[%s201 + $0xb8] sm:$0xf] %vm6616, %v6406
        %6664 = vst.msk [vmem:[%s201 + $0xbc] sm:$0xf] %vm6616, %v6407
        %6665 = vst.msk [vmem:[%s201 + $0xc0] sm:$0xf] %vm6616, %v6408
        %6666 = vst.msk [vmem:[%s201 + $0xc4] sm:$0xf] %vm6616, %v6409
        %6667 = vst.msk [vmem:[%s201 + $0xc8] sm:$0xf] %vm6616, %v6410
        %6668 = vst.msk [vmem:[%s201 + $0xcc] sm:$0xf] %vm6616, %v6411
        %6669 = vst.msk [vmem:[%s201 + $0xd0] sm:$0xf] %vm6616, %v6412
        %6670 = vst.msk [vmem:[%s201 + $0xd4] sm:$0xf] %vm6616, %v6413
        %6671 = vst.msk [vmem:[%s201 + $0xd8] sm:$0xf] %vm6616, %v6414
        %6672 = vst.msk [vmem:[%s201 + $0xdc] sm:$0xf] %vm6616, %v6415
        %6673 = vst.msk [vmem:[%s201 + $0xe0] sm:$0xf] %vm6616, %v6416
        %6674 = vst.msk [vmem:[%s201 + $0xe4] sm:$0xf] %vm6616, %v6417
        %6675 = vst.msk [vmem:[%s201 + $0xe8] sm:$0xf] %vm6616, %v6418
        %6676 = vst.msk [vmem:[%s201 + $0xec] sm:$0xf] %vm6616, %v6419
        %6677 = vst.msk [vmem:[%s201 + $0xf0] sm:$0xf] %vm6616, %v6420
        %6678 = vst.msk [vmem:[%s201 + $0xf4] sm:$0xf] %vm6616, %v6421
        %6679 = vst.msk [vmem:[%s201 + $0xf8] sm:$0xf] %vm6616, %v6422
        %6680 = vst.msk [vmem:[%s201 + $0xfc] sm:$0xf] %vm6616, %v6423
        %6681 = vst.msk [vmem:[%s201 + $0x100] sm:$0xf] %vm6616, %v6424
        %6682 = vst.msk [vmem:[%s201 + $0x104] sm:$0xf] %vm6616, %v6425
        %6683 = vst.msk [vmem:[%s201 + $0x108] sm:$0xf] %vm6616, %v6426
        %6684 = vst.msk [vmem:[%s201 + $0x10c] sm:$0xf] %vm6616, %v6427
        %6685 = vst.msk [vmem:[%s201 + $0x110] sm:$0xf] %vm6616, %v6428
        %6686 = vst.msk [vmem:[%s201 + $0x114] sm:$0xf] %vm6616, %v6429
        %6687 = vst.msk [vmem:[%s201 + $0x118] sm:$0xf] %vm6616, %v6430
        %6688 = vst.msk [vmem:[%s201 + $0x11c] sm:$0xf] %vm6616, %v6431
        %6689 = vst.msk [vmem:[%s201 + $0x120] sm:$0xf] %vm6616, %v6432
        %6690 = vst.msk [vmem:[%s201 + $0x124] sm:$0xf] %vm6616, %v6433
        %6691 = vst.msk [vmem:[%s201 + $0x128] sm:$0xf] %vm6616, %v6434
        %6692 = vst.msk [vmem:[%s201 + $0x12c] sm:$0xf] %vm6616, %v6435
        %6693 = vst.msk [vmem:[%s201 + $0x130] sm:$0xf] %vm6616, %v6436
        %6694 = vst.msk [vmem:[%s201 + $0x134] sm:$0xf] %vm6616, %v6437
        %6695 = vst.msk [vmem:[%s201 + $0x138] sm:$0xf] %vm6616, %v6438
        %6696 = vst.msk [vmem:[%s201 + $0x13c] sm:$0xf] %vm6616, %v6439
        %6697 = vst.msk [vmem:[%s201 + $0x140] sm:$0xf] %vm6616, %v6440
        %6698 = vst.msk [vmem:[%s201 + $0x144] sm:$0xf] %vm6616, %v6441
        %6699 = vst.msk [vmem:[%s201 + $0x148] sm:$0xf] %vm6616, %v6442
        %6700 = vst.msk [vmem:[%s201 + $0x14c] sm:$0xf] %vm6616, %v6443
        %6701 = vst.msk [vmem:[%s201 + $0x150] sm:$0xf] %vm6616, %v6444
        %6702 = vst.msk [vmem:[%s201 + $0x154] sm:$0xf] %vm6616, %v6445
        %6703 = vst.msk [vmem:[%s201 + $0x158] sm:$0xf] %vm6616, %v6446
        %6704 = vst.msk [vmem:[%s201 + $0x15c] sm:$0xf] %vm6616, %v6447
        %6705 = vst.msk [vmem:[%s201 + $0x160] sm:$0xf] %vm6616, %v6448
        %6706 = vst.msk [vmem:[%s201 + $0x164] sm:$0xf] %vm6616, %v6449
        %6707 = vst.msk [vmem:[%s201 + $0x168] sm:$0xf] %vm6616, %v6450
        %6708 = vst.msk [vmem:[%s201 + $0x16c] sm:$0xf] %vm6616, %v6451
        %6709 = vst.msk [vmem:[%s201 + $0x170] sm:$0xf] %vm6616, %v6452
        %6710 = vst.msk [vmem:[%s201 + $0x174] sm:$0xf] %vm6616, %v6453
        %6711 = vst.msk [vmem:[%s201 + $0x178] sm:$0xf] %vm6616, %v6454
        %6712 = vst.msk [vmem:[%s201 + $0x17c] sm:$0xf] %vm6616, %v6455
        %6713 = vst.msk [vmem:[%s201 + $0x180] sm:$0xf] %vm6616, %v6456
        %6714 = vst.msk [vmem:[%s201 + $0x184] sm:$0xf] %vm6616, %v6457
        %6715 = vst.msk [vmem:[%s201 + $0x188] sm:$0xf] %vm6616, %v6458
        %6716 = vst.msk [vmem:[%s201 + $0x18c] sm:$0xf] %vm6616, %v6459
        %6717 = vst.msk [vmem:[%s201 + $0x190] sm:$0xf] %vm6616, %v6460
        %6718 = vst.msk [vmem:[%s201 + $0x194] sm:$0xf] %vm6616, %v6461
        %6719 = vst.msk [vmem:[%s201 + $0x198] sm:$0xf] %vm6616, %v6462
        %6720 = vst.msk [vmem:[%s201 + $0x19c] sm:$0xf] %vm6616, %v6463
        %6721 = vst.msk [vmem:[%s201 + $0x1a0] sm:$0xf] %vm6616, %v6464
        %6722 = vst.msk [vmem:[%s201 + $0x1a4] sm:$0xf] %vm6616, %v6465
        %6723 = vst.msk [vmem:[%s201 + $0x1a8] sm:$0xf] %vm6616, %v6466
        %6724 = vst.msk [vmem:[%s201 + $0x1ac] sm:$0xf] %vm6616, %v6467
        %6725 = vst.msk [vmem:[%s201 + $0x1b0] sm:$0xf] %vm6616, %v6468
        %6726 = vst.msk [vmem:[%s201 + $0x1b4] sm:$0xf] %vm6616, %v6469
        %6727 = vst.msk [vmem:[%s201 + $0x1b8] sm:$0xf] %vm6616, %v6470
        %6728 = vst.msk [vmem:[%s201 + $0x1bc] sm:$0xf] %vm6616, %v6471
        %6729 = vst.msk [vmem:[%s201 + $0x1c0] sm:$0xf] %vm6616, %v6472
        %6730 = vst.msk [vmem:[%s201 + $0x1c4] sm:$0xf] %vm6616, %v6473
        %6731 = vst.msk [vmem:[%s201 + $0x1c8] sm:$0xf] %vm6616, %v6474
        %6732 = vst.msk [vmem:[%s201 + $0x1cc] sm:$0xf] %vm6616, %v6475
        %6733 = vst.msk [vmem:[%s201 + $0x1d0] sm:$0xf] %vm6616, %v6476
        %6734 = vst.msk [vmem:[%s201 + $0x1d4] sm:$0xf] %vm6616, %v6477
        %6735 = vst.msk [vmem:[%s201 + $0x1d8] sm:$0xf] %vm6616, %v6478
        %6736 = vst.msk [vmem:[%s201 + $0x1dc] sm:$0xf] %vm6616, %v6479
        %6737 = vst.msk [vmem:[%s201 + $0x1e0] sm:$0xf] %vm6616, %v6480
        %6738 = vst.msk [vmem:[%s201 + $0x1e4] sm:$0xf] %vm6616, %v6481
        %6739 = vst.msk [vmem:[%s201 + $0x1e8] sm:$0xf] %vm6616, %v6482
        %6740 = vst.msk [vmem:[%s201 + $0x1ec] sm:$0xf] %vm6616, %v6483
        %6741 = vst.msk [vmem:[%s201 + $0x1f0] sm:$0xf] %vm6616, %v6484
        %6742 = vst.msk [vmem:[%s201 + $0x1f4] sm:$0xf] %vm6616, %v6485
        %6743 = vst.msk [vmem:[%s201 + $0x1f8] sm:$0xf] %vm6616, %v6486
        %6744 = vst.msk [vmem:[%s201 + $0x1fc] sm:$0xf] %vm6616, %v6487
      $region40: #{_conv3x3_core.1} parent=31 // pred_fallthru
        _
      %s6745 = smul.u32 128, %s18
      %p6746 = scmp.lt.s32.totalorder %s6745, 1023
      %s6747 = scalar_select %p6746, %s6745, 1023
      %s6748 = smul.addr %s6747, 4
      %s6749 = scalar_lea.vmem %s3, %s6748
      // Predicated region
      $region41: #{_conv3x3_core.1} parent=31 // pred_check
        %p6750 = pneg %p114
      $region42: #{_conv3x3_core.1} parent=31 // pred_check_branch
        %6752 = sbr.rel (%p6750) target = $region44
      $region43: #{_conv3x3_core.1} parent=31 // pred_region
        %s6753 = smul.u32 128, %s18
      $region44: #{_conv3x3_core.1} parent=31 // pred_fallthru
        _
    $region32: #{_conv3x3_core.1} parent=5 // pred_fallthru
      _
    %p6754 = scmp.le.s32.totalorder 2, %s9
    // Predicated region
    $region45: #{_conv3x3_core.1} parent=5 // pred_check
      %p6755 = pneg %p6754
    $region46: #{_conv3x3_core.1} parent=5 // pred_check_branch
      %6757 = sbr.rel (%p6755) target = $region48
    $region47: #{_conv3x3_core.1} parent=5 // pred_region
      %s6758 = ssub.s32 %s9, 2
      // Predicated region
      $region49: #{_conv3x3_core.1} parent=47 // pred_check
        %p6759 = pneg %p120
      $region50: #{_conv3x3_core.1} parent=47 // pred_check_branch
        %6761 = sbr.rel (%p6759) target = $region52
      $region51: #{_conv3x3_core.1} parent=47 // pred_region
        %s6762 = smul.u32 128, %s20
        %p6763 = scmp.lt.s32.totalorder %s6762, 1023
        %s6764 = scalar_select %p6763, %s6762, 1023
        %s6765 = smul.addr %s6764, 4
        %s6766 = scalar_lea.vmem %s3, %s6765
      $region52: #{_conv3x3_core.1} parent=47 // pred_fallthru
        _
    $region48: #{_conv3x3_core.1} parent=5 // pred_fallthru
      _
  $region6: #{_conv3x3_core.1} parent=0 // loop_footer
    %s13 = sadd.s32 1, %s9
  $region7: #{_conv3x3_core.1} parent=0 // loop_footer_branch
    %8 = sbr.rel target = $region3
  $region8: #{_conv3x3_core.1} parent=0 // loop_exit
    _

// kernel: fused_matmul.1
$region0: #{fused_matmul.1}
  #allocation0 [shape = 'u32[]', space=smem, size = 0x4, offset = 0x4, fixed_abs, tag = 'smem constant byte address 0x4 - core index']
  #allocation1 [shape = 'u32[144,128]{1,0:T(1,128)}', space=vmem, size = 0x12000, scoped, tag = 'internal scratch']
  %s0 = inlined_call_operand.vmem [shape: bf16[8192,27], index: 0, kind: input, shape index: {}]
  %s1 = inlined_call_operand.vmem [shape: bf16[27,8], index: 1, kind: input, shape index: {}]
  %s2 = inlined_call_operand.vmem [shape: f32[1,8], index: 2, kind: input, shape index: {}]
  %s3 = inlined_call_operand.vmem [shape: bf16[8192,8], index: 3, kind: output, shape index: {}]
  %s4 = sld [smem:[#allocation0]]
  $region45: #{fused_matmul.1} parent=0
    _
  %s6 = ssub.s32 1, %s4
  %s7 = scalar_select 0, %s6, %s4
  loop: start=0, step=1, limit=10
  $region2: #{fused_matmul.1} parent=0 // loop_pre_header
    _
  $region3: #{fused_matmul.1} parent=0 // loop_header
    %s9 = sphi 0, %s13
    %p10 = scmp.ge.s32.totalorder %s9, 10
    %s19 = sphi 0, %s21
    %s22 = sphi 0, %s19
    %s23 = sphi 0, %s22
    %s39 = sphi 0, %s23
    %s43 = sphi 0, %s43
    %s45 = sphi 0, %s43
    %s46 = sphi 0, %s45
    %s60 = sphi 0, %s46
    %s64 = sphi 0, %s64
    %s66 = sphi 0, %s64
    %s67 = sphi 0, %s66
    %s81 = sphi 0, %s67
    %s87 = sphi 0, %s89
    %s90 = sphi 0, %s87
    %s91 = sphi 0, %s90
    %s107 = sphi 0, %s91
  $region4: #{fused_matmul.1} parent=0 // loop_header_branch
    %12 = sbr.rel (%p10) target = $region8
  $region5: #{fused_matmul.1} parent=0 // loop_body
    %s14 = ssub.s32 %s9, 1
    %s15 = ssub.s32 %s9, 2
    %s16 = sadd.s32 %s9, 1
    %s17 = ssub.s32 %s9, %s16
    %p18 = scmp.eq.s32.totalorder %s17, 0
    %s20 = sadd.s32 %s19, 1
    %s21 = scalar_select %p18, %s19, %s20
    %p24 = pneg %p18
    %p25 = scmp.eq.s32.totalorder %s9, 7
    %p26 = por %p24, %p25
    %p27 = scmp.ne.s32.totalorder %s19, %s22
    %p28 = scmp.eq.s32.totalorder %s9, 0
    %p29 = por %p27, %p28
    %p30 = scmp.ne.s32.totalorder %s19, %s22
    %p31 = scmp.eq.s32.totalorder %s14, 7
    %p32 = por %p30, %p31
    %p33 = scmp.ne.s32.totalorder %s22, %s23
    %p34 = scmp.eq.s32.totalorder %s14, 0
    %p35 = por %p33, %p34
    %p36 = scmp.ne.s32.totalorder %s22, %s23
    %p37 = scmp.eq.s32.totalorder %s15, 7
    %p38 = por %p36, %p37
    %p40 = scmp.ne.s32.totalorder %s23, %s39
    %p41 = scmp.eq.s32.totalorder %s15, 0
    %p42 = por %p40, %p41
    %s44 = sadd.s32 %s43, 1
    %p47 = scmp.eq.s32.totalorder %s9, 7
    %p48 = scmp.ne.s32.totalorder %s43, %s45
    %p49 = scmp.eq.s32.totalorder %s9, 0
    %p50 = por %p48, %p49
    %p51 = scmp.ne.s32.totalorder %s43, %s45
    %p52 = scmp.eq.s32.totalorder %s14, 7
    %p53 = por %p51, %p52
    %p54 = scmp.ne.s32.totalorder %s45, %s46
    %p55 = scmp.eq.s32.totalorder %s14, 0
    %p56 = por %p54, %p55
    %p57 = scmp.ne.s32.totalorder %s45, %s46
    %p58 = scmp.eq.s32.totalorder %s15, 7
    %p59 = por %p57, %p58
    %p61 = scmp.ne.s32.totalorder %s46, %s60
    %p62 = scmp.eq.s32.totalorder %s15, 0
    %p63 = por %p61, %p62
    %s65 = sadd.s32 %s64, 1
    %p68 = scmp.eq.s32.totalorder %s9, 7
    %p69 = scmp.ne.s32.totalorder %s64, %s66
    %p70 = scmp.eq.s32.totalorder %s9, 0
    %p71 = por %p69, %p70
    %p72 = scmp.ne.s32.totalorder %s64, %s66
    %p73 = scmp.eq.s32.totalorder %s14, 7
    %p74 = por %p72, %p73
    %p75 = scmp.ne.s32.totalorder %s66, %s67
    %p76 = scmp.eq.s32.totalorder %s14, 0
    %p77 = por %p75, %p76
    %p78 = scmp.ne.s32.totalorder %s66, %s67
    %p79 = scmp.eq.s32.totalorder %s15, 7
    %p80 = por %p78, %p79
    %p82 = scmp.ne.s32.totalorder %s67, %s81
    %p83 = scmp.eq.s32.totalorder %s15, 0
    %p84 = por %p82, %p83
    %s85 = ssub.s32 %s9, %s16
    %p86 = scmp.eq.s32.totalorder %s85, 0
    %s88 = sadd.s32 %s87, 1
    %s89 = scalar_select %p86, %s87, %s88
    %p92 = pneg %p86
    %p93 = scmp.eq.s32.totalorder %s9, 7
    %p94 = por %p92, %p93
    %p95 = scmp.ne.s32.totalorder %s87, %s90
    %p96 = scmp.eq.s32.totalorder %s9, 0
    %p97 = por %p95, %p96
    %p98 = scmp.ne.s32.totalorder %s87, %s90
    %p99 = scmp.eq.s32.totalorder %s14, 7
    %p100 = por %p98, %p99
    %p101 = scmp.ne.s32.totalorder %s90, %s91
    %p102 = scmp.eq.s32.totalorder %s14, 0
    %p103 = por %p101, %p102
    %p104 = scmp.ne.s32.totalorder %s90, %s91
    %p105 = scmp.eq.s32.totalorder %s15, 7
    %p106 = por %p104, %p105
    %p108 = scmp.ne.s32.totalorder %s91, %s107
    %p109 = scmp.eq.s32.totalorder %s15, 0
    %p110 = por %p108, %p109
    %p111 = scmp.le.s32.totalorder 1, %s9
    %p112 = scmp.lt.s32.totalorder %s9, 9
    %p113 = pnand %p111, %p112
    %p114 = pneg %p113
    // Predicated region
    $region9: #{fused_matmul.1} parent=5 // pred_check
      _
    $region10: #{fused_matmul.1} parent=5 // pred_check_branch
      %116 = sbr.rel (%p113) target = $region12
    $region11: #{fused_matmul.1} parent=5 // pred_region
      %s117 = ssub.s32 %s9, 1
      // Predicated region
      $region13: #{fused_matmul.1} parent=11 // pred_check
        %p118 = pneg %p56
      $region14: #{fused_matmul.1} parent=11 // pred_check_branch
        %120 = sbr.rel (%p118) target = $region16
      $region15: #{fused_matmul.1} parent=11 // pred_region
        _
      $region16: #{fused_matmul.1} parent=11 // pred_fallthru
        _
      // Predicated region
      $region17: #{fused_matmul.1} parent=11 // pred_check
        %p121 = pneg %p77
      $region18: #{fused_matmul.1} parent=11 // pred_check_branch
        %123 = sbr.rel (%p121) target = $region20
      $region19: #{fused_matmul.1} parent=11 // pred_region
        _
      $region20: #{fused_matmul.1} parent=11 // pred_fallthru
        _
    $region12: #{fused_matmul.1} parent=5 // pred_fallthru
      _
    %p124 = scmp.lt.s32.totalorder %s9, 8
    // Predicated region
    $region21: #{fused_matmul.1} parent=5 // pred_check
      %p125 = pneg %p124
    $region22: #{fused_matmul.1} parent=5 // pred_check_branch
      %127 = sbr.rel (%p125) target = $region24
    $region23: #{fused_matmul.1} parent=5 // pred_region
      // Predicated region
      $region25: #{fused_matmul.1} parent=23 // pred_check
        %p128 = pneg %p29
      $region26: #{fused_matmul.1} parent=23 // pred_check_branch
        %130 = sbr.rel (%p128) target = $region28
      $region27: #{fused_matmul.1} parent=23 // pred_region
        %s131 = smul.u32 128, %s9
        %p132 = scmp.lt.s32.totalorder %s131, 1023
        %s133 = scalar_select %p132, %s131, 1023
        %s134 = smul.addr %s133, 4
        %s135 = scalar_lea.vmem %s0, %s134
        %s136 = smul.u32 128, %s9
      $region28: #{fused_matmul.1} parent=23 // pred_fallthru
        _
    $region24: #{fused_matmul.1} parent=5 // pred_fallthru
      _
    %p137 = scmp.le.s32.totalorder 1, %s9
    %p138 = scmp.lt.s32.totalorder %s9, 9
    %p139 = pnand %p137, %p138
    %p140 = pneg %p139
    // Predicated region
    $region29: #{fused_matmul.1} parent=5 // pred_check
      _
    $region30: #{fused_matmul.1} parent=5 // pred_check_branch
      %142 = sbr.rel (%p139) target = $region32
    $region31: #{fused_matmul.1} parent=5 // pred_region
      %s143 = ssub.s32 %s9, 1
      %s144 = smul.u32 128, %s14
      %p145 = scmp.lt.s32.totalorder %s144, 1023
      %s146 = scalar_select %p145, %s144, 1023
      %s147 = smul.addr %s146, 4
      %s148 = scalar_lea.vmem %s0, %s147
      %p149 = pneg %p35
      %p150 = pneg %p32
      %p151 = pneg %p56
      %p152 = pneg %p53
      %p153 = pneg %p77
      %p154 = pneg %p74
      %p155 = pneg %p103
      %p156 = pneg %p100
      %s157 = smul.u32 128, %s14
      %p158 = scmp.lt.s32.totalorder %s157, 1023
      %s159 = scalar_select %p158, %s157, 1023
      %s160 = smul.addr %s159, 4
      %s161 = scalar_lea.vmem %s3, %s160
      %s162 = smul.u32 128, %s14
      %p163 = scmp.lt.s32.totalorder %s162, 1023
      %s164 = scalar_select %p163, %s162, 1023
      %s165 = smul.addr %s164, 4
      %s166 = scalar_lea.vmem %s0, %s165
      %s167 = smul.u32 128, %s14
      %s168 = smul.u32 128, %s14
      %p169 = scmp.lt.s32.totalorder %s168, 1023
      %s170 = scalar_select %p169, %s168, 1023
      %s171 = smul.addr %s170, 4
      %s172 = scalar_lea.vmem %s3, %s171
      %s173 = smul.u32 128, %s14
      %v175 = vld [vmem:[%s166] sm:$0xf]
      %v176 = vld [vmem:[%s166 + $0x4] sm:$0xf]
      %v177 = vld [vmem:[%s166 + $0x8] sm:$0xf]
      %v178 = vld [vmem:[%s166 + $0xc] sm:$0xf]
      %v179 = vld [vmem:[%s166 + $0x10] sm:$0xf]
      %v180 = vld [vmem:[%s166 + $0x14] sm:$0xf]
      %v181 = vld [vmem:[%s166 + $0x18] sm:$0xf]
      %v182 = vld [vmem:[%s166 + $0x1c] sm:$0xf]
      %v183 = vld [vmem:[%s166 + $0x20] sm:$0xf]
      %v184 = vld [vmem:[%s166 + $0x24] sm:$0xf]
      %v185 = vld [vmem:[%s166 + $0x28] sm:$0xf]
      %v186 = vld [vmem:[%s166 + $0x2c] sm:$0xf]
      %v187 = vld [vmem:[%s166 + $0x30] sm:$0xf]
      %v188 = vld [vmem:[%s166 + $0x34] sm:$0xf]
      %v189 = vld [vmem:[%s166 + $0x38] sm:$0xf]
      %v190 = vld [vmem:[%s166 + $0x3c] sm:$0xf]
      %v191 = vld [vmem:[%s166 + $0x40] sm:$0xf]
      %v192 = vld [vmem:[%s166 + $0x44] sm:$0xf]
      %v193 = vld [vmem:[%s166 + $0x48] sm:$0xf]
      %v194 = vld [vmem:[%s166 + $0x4c] sm:$0xf]
      %v195 = vld [vmem:[%s166 + $0x50] sm:$0xf]
      %v196 = vld [vmem:[%s166 + $0x54] sm:$0xf]
      %v197 = vld [vmem:[%s166 + $0x58] sm:$0xf]
      %v198 = vld [vmem:[%s166 + $0x5c] sm:$0xf]
      %v199 = vld [vmem:[%s166 + $0x60] sm:$0xf]
      %v200 = vld [vmem:[%s166 + $0x64] sm:$0xf]
      %v201 = vld [vmem:[%s166 + $0x68] sm:$0xf]
      %v202 = vld [vmem:[%s166 + $0x6c] sm:$0xf]
      %v203 = vld [vmem:[%s166 + $0x70] sm:$0xf]
      %v204 = vld [vmem:[%s166 + $0x74] sm:$0xf]
      %v205 = vld [vmem:[%s166 + $0x78] sm:$0xf]
      %v206 = vld [vmem:[%s166 + $0x7c] sm:$0xf]
      %v207 = vld [vmem:[%s166 + $0x80] sm:$0xf]
      %v208 = vld [vmem:[%s166 + $0x84] sm:$0xf]
      %v209 = vld [vmem:[%s166 + $0x88] sm:$0xf]
      %v210 = vld [vmem:[%s166 + $0x8c] sm:$0xf]
      %v211 = vld [vmem:[%s166 + $0x90] sm:$0xf]
      %v212 = vld [vmem:[%s166 + $0x94] sm:$0xf]
      %v213 = vld [vmem:[%s166 + $0x98] sm:$0xf]
      %v214 = vld [vmem:[%s166 + $0x9c] sm:$0xf]
      %v215 = vld [vmem:[%s166 + $0xa0] sm:$0xf]
      %v216 = vld [vmem:[%s166 + $0xa4] sm:$0xf]
      %v217 = vld [vmem:[%s166 + $0xa8] sm:$0xf]
      %v218 = vld [vmem:[%s166 + $0xac] sm:$0xf]
      %v219 = vld [vmem:[%s166 + $0xb0] sm:$0xf]
      %v220 = vld [vmem:[%s166 + $0xb4] sm:$0xf]
      %v221 = vld [vmem:[%s166 + $0xb8] sm:$0xf]
      %v222 = vld [vmem:[%s166 + $0xbc] sm:$0xf]
      %v223 = vld [vmem:[%s166 + $0xc0] sm:$0xf]
      %v224 = vld [vmem:[%s166 + $0xc4] sm:$0xf]
      %v225 = vld [vmem:[%s166 + $0xc8] sm:$0xf]
      %v226 = vld [vmem:[%s166 + $0xcc] sm:$0xf]
      %v227 = vld [vmem:[%s166 + $0xd0] sm:$0xf]
      %v228 = vld [vmem:[%s166 + $0xd4] sm:$0xf]
      %v229 = vld [vmem:[%s166 + $0xd8] sm:$0xf]
      %v230 = vld [vmem:[%s166 + $0xdc] sm:$0xf]
      %v231 = vld [vmem:[%s166 + $0xe0] sm:$0xf]
      %v232 = vld [vmem:[%s166 + $0xe4] sm:$0xf]
      %v233 = vld [vmem:[%s166 + $0xe8] sm:$0xf]
      %v234 = vld [vmem:[%s166 + $0xec] sm:$0xf]
      %v235 = vld [vmem:[%s166 + $0xf0] sm:$0xf]
      %v236 = vld [vmem:[%s166 + $0xf4] sm:$0xf]
      %v237 = vld [vmem:[%s166 + $0xf8] sm:$0xf]
      %v238 = vld [vmem:[%s166 + $0xfc] sm:$0xf]
      %v239 = vld [vmem:[%s166 + $0x100] sm:$0xf]
      %v240 = vld [vmem:[%s166 + $0x104] sm:$0xf]
      %v241 = vld [vmem:[%s166 + $0x108] sm:$0xf]
      %v242 = vld [vmem:[%s166 + $0x10c] sm:$0xf]
      %v243 = vld [vmem:[%s166 + $0x110] sm:$0xf]
      %v244 = vld [vmem:[%s166 + $0x114] sm:$0xf]
      %v245 = vld [vmem:[%s166 + $0x118] sm:$0xf]
      %v246 = vld [vmem:[%s166 + $0x11c] sm:$0xf]
      %v247 = vld [vmem:[%s166 + $0x120] sm:$0xf]
      %v248 = vld [vmem:[%s166 + $0x124] sm:$0xf]
      %v249 = vld [vmem:[%s166 + $0x128] sm:$0xf]
      %v250 = vld [vmem:[%s166 + $0x12c] sm:$0xf]
      %v251 = vld [vmem:[%s166 + $0x130] sm:$0xf]
      %v252 = vld [vmem:[%s166 + $0x134] sm:$0xf]
      %v253 = vld [vmem:[%s166 + $0x138] sm:$0xf]
      %v254 = vld [vmem:[%s166 + $0x13c] sm:$0xf]
      %v255 = vld [vmem:[%s166 + $0x140] sm:$0xf]
      %v256 = vld [vmem:[%s166 + $0x144] sm:$0xf]
      %v257 = vld [vmem:[%s166 + $0x148] sm:$0xf]
      %v258 = vld [vmem:[%s166 + $0x14c] sm:$0xf]
      %v259 = vld [vmem:[%s166 + $0x150] sm:$0xf]
      %v260 = vld [vmem:[%s166 + $0x154] sm:$0xf]
      %v261 = vld [vmem:[%s166 + $0x158] sm:$0xf]
      %v262 = vld [vmem:[%s166 + $0x15c] sm:$0xf]
      %v263 = vld [vmem:[%s166 + $0x160] sm:$0xf]
      %v264 = vld [vmem:[%s166 + $0x164] sm:$0xf]
      %v265 = vld [vmem:[%s166 + $0x168] sm:$0xf]
      %v266 = vld [vmem:[%s166 + $0x16c] sm:$0xf]
      %v267 = vld [vmem:[%s166 + $0x170] sm:$0xf]
      %v268 = vld [vmem:[%s166 + $0x174] sm:$0xf]
      %v269 = vld [vmem:[%s166 + $0x178] sm:$0xf]
      %v270 = vld [vmem:[%s166 + $0x17c] sm:$0xf]
      %v271 = vld [vmem:[%s166 + $0x180] sm:$0xf]
      %v272 = vld [vmem:[%s166 + $0x184] sm:$0xf]
      %v273 = vld [vmem:[%s166 + $0x188] sm:$0xf]
      %v274 = vld [vmem:[%s166 + $0x18c] sm:$0xf]
      %v275 = vld [vmem:[%s166 + $0x190] sm:$0xf]
      %v276 = vld [vmem:[%s166 + $0x194] sm:$0xf]
      %v277 = vld [vmem:[%s166 + $0x198] sm:$0xf]
      %v278 = vld [vmem:[%s166 + $0x19c] sm:$0xf]
      %v279 = vld [vmem:[%s166 + $0x1a0] sm:$0xf]
      %v280 = vld [vmem:[%s166 + $0x1a4] sm:$0xf]
      %v281 = vld [vmem:[%s166 + $0x1a8] sm:$0xf]
      %v282 = vld [vmem:[%s166 + $0x1ac] sm:$0xf]
      %v283 = vld [vmem:[%s166 + $0x1b0] sm:$0xf]
      %v284 = vld [vmem:[%s166 + $0x1b4] sm:$0xf]
      %v285 = vld [vmem:[%s166 + $0x1b8] sm:$0xf]
      %v286 = vld [vmem:[%s166 + $0x1bc] sm:$0xf]
      %v287 = vld [vmem:[%s166 + $0x1c0] sm:$0xf]
      %v288 = vld [vmem:[%s166 + $0x1c4] sm:$0xf]
      %v289 = vld [vmem:[%s166 + $0x1c8] sm:$0xf]
      %v290 = vld [vmem:[%s166 + $0x1cc] sm:$0xf]
      %v291 = vld [vmem:[%s166 + $0x1d0] sm:$0xf]
      %v292 = vld [vmem:[%s166 + $0x1d4] sm:$0xf]
      %v293 = vld [vmem:[%s166 + $0x1d8] sm:$0xf]
      %v294 = vld [vmem:[%s166 + $0x1dc] sm:$0xf]
      %v295 = vld [vmem:[%s166 + $0x1e0] sm:$0xf]
      %v296 = vld [vmem:[%s166 + $0x1e4] sm:$0xf]
      %v297 = vld [vmem:[%s166 + $0x1e8] sm:$0xf]
      %v298 = vld [vmem:[%s166 + $0x1ec] sm:$0xf]
      %v299 = vld [vmem:[%s166 + $0x1f0] sm:$0xf]
      %v300 = vld [vmem:[%s166 + $0x1f4] sm:$0xf]
      %v301 = vld [vmem:[%s166 + $0x1f8] sm:$0xf]
      %v302 = vld [vmem:[%s166 + $0x1fc] sm:$0xf]
      %v303 = vld [vmem:[%s1] sm:$0xf]
      %v304 = vld [vmem:[%s1 + $0x4] sm:$0xf]
      %v305 = vld [vmem:[%s1 + $0x8] sm:$0xf]
      %v306 = vld [vmem:[%s1 + $0xc] sm:$0x3]
      %v307 = vld [vmem:[%s2] sm:$0x1]
      %v309 = vlaneseq
      %v310 = vshrl.u32 %v309, 7
      %v311 = vsub.s32 0, %v310
      %v312 = vrot.slane %v307, %v311
      %v442 = vunpack.c.l.b16 %v175
      %v443 = vunpack.c.l.b16 %v176
      %v444 = vunpack.c.l.b16 %v177
      %v445 = vunpack.c.l.b16 %v178
      %v446 = vunpack.c.l.b16 %v179
      %v447 = vunpack.c.l.b16 %v180
      %v448 = vunpack.c.l.b16 %v181
      %v449 = vunpack.c.l.b16 %v182
      %v450 = vunpack.c.l.b16 %v183
      %v451 = vunpack.c.l.b16 %v184
      %v452 = vunpack.c.l.b16 %v185
      %v453 = vunpack.c.l.b16 %v186
      %v454 = vunpack.c.l.b16 %v187
      %v455 = vunpack.c.l.b16 %v188
      %v456 = vunpack.c.l.b16 %v189
      %v457 = vunpack.c.l.b16 %v190
      %v458 = vunpack.c.l.b16 %v191
      %v459 = vunpack.c.l.b16 %v192
      %v460 = vunpack.c.l.b16 %v193
      %v461 = vunpack.c.l.b16 %v194
      %v462 = vunpack.c.l.b16 %v195
      %v463 = vunpack.c.l.b16 %v196
      %v464 = vunpack.c.l.b16 %v197
      %v465 = vunpack.c.l.b16 %v198
      %v466 = vunpack.c.l.b16 %v199
      %v467 = vunpack.c.l.b16 %v200
      %v468 = vunpack.c.l.b16 %v201
      %v469 = vunpack.c.l.b16 %v202
      %v470 = vunpack.c.l.b16 %v203
      %v471 = vunpack.c.l.b16 %v204
      %v472 = vunpack.c.l.b16 %v205
      %v473 = vunpack.c.l.b16 %v206
      %v474 = vunpack.c.l.b16 %v207
      %v475 = vunpack.c.l.b16 %v208
      %v476 = vunpack.c.l.b16 %v209
      %v477 = vunpack.c.l.b16 %v210
      %v478 = vunpack.c.l.b16 %v211
      %v479 = vunpack.c.l.b16 %v212
      %v480 = vunpack.c.l.b16 %v213
      %v481 = vunpack.c.l.b16 %v214
      %v482 = vunpack.c.l.b16 %v215
      %v483 = vunpack.c.l.b16 %v216
      %v484 = vunpack.c.l.b16 %v217
      %v485 = vunpack.c.l.b16 %v218
      %v486 = vunpack.c.l.b16 %v219
      %v487 = vunpack.c.l.b16 %v220
      %v488 = vunpack.c.l.b16 %v221
      %v489 = vunpack.c.l.b16 %v222
      %v490 = vunpack.c.l.b16 %v223
      %v491 = vunpack.c.l.b16 %v224
      %v492 = vunpack.c.l.b16 %v225
      %v493 = vunpack.c.l.b16 %v226
      %v494 = vunpack.c.l.b16 %v227
      %v495 = vunpack.c.l.b16 %v228
      %v496 = vunpack.c.l.b16 %v229
      %v497 = vunpack.c.l.b16 %v230
      %v498 = vunpack.c.l.b16 %v231
      %v499 = vunpack.c.l.b16 %v232
      %v500 = vunpack.c.l.b16 %v233
      %v501 = vunpack.c.l.b16 %v234
      %v502 = vunpack.c.l.b16 %v235
      %v503 = vunpack.c.l.b16 %v236
      %v504 = vunpack.c.l.b16 %v237
      %v505 = vunpack.c.l.b16 %v238
      %v506 = vunpack.c.l.b16 %v239
      %v507 = vunpack.c.l.b16 %v240
      %v508 = vunpack.c.l.b16 %v241
      %v509 = vunpack.c.l.b16 %v242
      %v510 = vunpack.c.l.b16 %v243
      %v511 = vunpack.c.l.b16 %v244
      %v512 = vunpack.c.l.b16 %v245
      %v513 = vunpack.c.l.b16 %v246
      %v514 = vunpack.c.l.b16 %v247
      %v515 = vunpack.c.l.b16 %v248
      %v516 = vunpack.c.l.b16 %v249
      %v517 = vunpack.c.l.b16 %v250
      %v518 = vunpack.c.l.b16 %v251
      %v519 = vunpack.c.l.b16 %v252
      %v520 = vunpack.c.l.b16 %v253
      %v521 = vunpack.c.l.b16 %v254
      %v522 = vunpack.c.l.b16 %v255
      %v523 = vunpack.c.l.b16 %v256
      %v524 = vunpack.c.l.b16 %v257
      %v525 = vunpack.c.l.b16 %v258
      %v526 = vunpack.c.l.b16 %v259
      %v527 = vunpack.c.l.b16 %v260
      %v528 = vunpack.c.l.b16 %v261
      %v529 = vunpack.c.l.b16 %v262
      %v530 = vunpack.c.l.b16 %v263
      %v531 = vunpack.c.l.b16 %v264
      %v532 = vunpack.c.l.b16 %v265
      %v533 = vunpack.c.l.b16 %v266
      %v534 = vunpack.c.l.b16 %v267
      %v535 = vunpack.c.l.b16 %v268
      %v536 = vunpack.c.l.b16 %v269
      %v537 = vunpack.c.l.b16 %v270
      %v538 = vunpack.c.l.b16 %v271
      %v539 = vunpack.c.l.b16 %v272
      %v540 = vunpack.c.l.b16 %v273
      %v541 = vunpack.c.l.b16 %v274
      %v542 = vunpack.c.l.b16 %v275
      %v543 = vunpack.c.l.b16 %v276
      %v544 = vunpack.c.l.b16 %v277
      %v545 = vunpack.c.l.b16 %v278
      %v546 = vunpack.c.l.b16 %v279
      %v547 = vunpack.c.l.b16 %v280
      %v548 = vunpack.c.l.b16 %v281
      %v549 = vunpack.c.l.b16 %v282
      %v550 = vunpack.c.l.b16 %v283
      %v551 = vunpack.c.l.b16 %v284
      %v552 = vunpack.c.l.b16 %v285
      %v553 = vunpack.c.l.b16 %v286
      %v554 = vunpack.c.l.b16 %v287
      %v555 = vunpack.c.l.b16 %v288
      %v556 = vunpack.c.l.b16 %v289
      %v557 = vunpack.c.l.b16 %v290
      %v558 = vunpack.c.l.b16 %v291
      %v559 = vunpack.c.l.b16 %v292
      %v560 = vunpack.c.l.b16 %v293
      %v561 = vunpack.c.l.b16 %v294
      %v562 = vunpack.c.l.b16 %v295
      %v563 = vunpack.c.l.b16 %v296
      %v564 = vunpack.c.l.b16 %v297
      %v565 = vunpack.c.l.b16 %v298
      %v566 = vunpack.c.l.b16 %v299
      %v567 = vunpack.c.l.b16 %v300
      %v568 = vunpack.c.l.b16 %v301
      %v569 = vunpack.c.l.b16 %v302
      %v570 = vpack.c.b16 %v443, %v442
      %v571 = vpack.c.b16 %v445, %v444
      %v572 = vpack.c.b16 %v447, %v446
      %v573 = vpack.c.b16 %v449, %v448
      %v574 = vpack.c.b16 %v451, %v450
      %v575 = vpack.c.b16 %v453, %v452
      %v576 = vpack.c.b16 %v455, %v454
      %v577 = vpack.c.b16 %v457, %v456
      %v578 = vpack.c.b16 %v459, %v458
      %v579 = vpack.c.b16 %v461, %v460
      %v580 = vpack.c.b16 %v463, %v462
      %v581 = vpack.c.b16 %v465, %v464
      %v582 = vpack.c.b16 %v467, %v466
      %v583 = vpack.c.b16 %v469, %v468
      %v584 = vpack.c.b16 %v471, %v470
      %v585 = vpack.c.b16 %v473, %v472
      %v586 = vpack.c.b16 %v475, %v474
      %v587 = vpack.c.b16 %v477, %v476
      %v588 = vpack.c.b16 %v479, %v478
      %v589 = vpack.c.b16 %v481, %v480
      %v590 = vpack.c.b16 %v483, %v482
      %v591 = vpack.c.b16 %v485, %v484
      %v592 = vpack.c.b16 %v487, %v486
      %v593 = vpack.c.b16 %v489, %v488
      %v594 = vpack.c.b16 %v491, %v490
      %v595 = vpack.c.b16 %v493, %v492
      %v596 = vpack.c.b16 %v495, %v494
      %v597 = vpack.c.b16 %v497, %v496
      %v598 = vpack.c.b16 %v499, %v498
      %v599 = vpack.c.b16 %v501, %v500
      %v600 = vpack.c.b16 %v503, %v502
      %v601 = vpack.c.b16 %v505, %v504
      %v602 = vpack.c.b16 %v507, %v506
      %v603 = vpack.c.b16 %v509, %v508
      %v604 = vpack.c.b16 %v511, %v510
      %v605 = vpack.c.b16 %v513, %v512
      %v606 = vpack.c.b16 %v515, %v514
      %v607 = vpack.c.b16 %v517, %v516
      %v608 = vpack.c.b16 %v519, %v518
      %v609 = vpack.c.b16 %v521, %v520
      %v610 = vpack.c.b16 %v523, %v522
      %v611 = vpack.c.b16 %v525, %v524
      %v612 = vpack.c.b16 %v527, %v526
      %v613 = vpack.c.b16 %v529, %v528
      %v614 = vpack.c.b16 %v531, %v530
      %v615 = vpack.c.b16 %v533, %v532
      %v616 = vpack.c.b16 %v535, %v534
      %v617 = vpack.c.b16 %v537, %v536
      %v618 = vpack.c.b16 %v539, %v538
      %v619 = vpack.c.b16 %v541, %v540
      %v620 = vpack.c.b16 %v543, %v542
      %v621 = vpack.c.b16 %v545, %v544
      %v622 = vpack.c.b16 %v547, %v546
      %v623 = vpack.c.b16 %v549, %v548
      %v624 = vpack.c.b16 %v551, %v550
      %v625 = vpack.c.b16 %v553, %v552
      %v626 = vpack.c.b16 %v555, %v554
      %v627 = vpack.c.b16 %v557, %v556
      %v628 = vpack.c.b16 %v559, %v558
      %v629 = vpack.c.b16 %v561, %v560
      %v630 = vpack.c.b16 %v563, %v562
      %v631 = vpack.c.b16 %v565, %v564
      %v632 = vpack.c.b16 %v567, %v566
      %v633 = vpack.c.b16 %v569, %v568
      %v638 = vunpack.c.l.b16 %v303
      %v639 = vunpack.c.l.b16 %v304
      %v640 = vunpack.c.l.b16 %v305
      %v641 = vunpack.c.l.b16 %v306
      %v642 = vpack.c.b16 %v639, %v638
      %v643 = vpack.c.b16 %v641, %v640
      %vm645 = vcmask 220160
      %v647 = vsel %vm645, %v570, 0
      %v650 = vsel %vm645, %v571, 0
      %v653 = vsel %vm645, %v572, 0
      %v656 = vsel %vm645, %v573, 0
      %v659 = vsel %vm645, %v574, 0
      %v662 = vsel %vm645, %v575, 0
      %v665 = vsel %vm645, %v576, 0
      %v668 = vsel %vm645, %v577, 0
      %v671 = vsel %vm645, %v578, 0
      %v674 = vsel %vm645, %v579, 0
      %v677 = vsel %vm645, %v580, 0
      %v680 = vsel %vm645, %v581, 0
      %v683 = vsel %vm645, %v582, 0
      %v686 = vsel %vm645, %v583, 0
      %v689 = vsel %vm645, %v584, 0
      %v692 = vsel %vm645, %v585, 0
      %v695 = vsel %vm645, %v586, 0
      %v698 = vsel %vm645, %v587, 0
      %v701 = vsel %vm645, %v588, 0
      %v704 = vsel %vm645, %v589, 0
      %v707 = vsel %vm645, %v590, 0
      %v710 = vsel %vm645, %v591, 0
      %v713 = vsel %vm645, %v592, 0
      %v716 = vsel %vm645, %v593, 0
      %v719 = vsel %vm645, %v594, 0
      %v722 = vsel %vm645, %v595, 0
      %v725 = vsel %vm645, %v596, 0
      %v728 = vsel %vm645, %v597, 0
      %v731 = vsel %vm645, %v598, 0
      %v734 = vsel %vm645, %v599, 0
      %v737 = vsel %vm645, %v600, 0
      %v740 = vsel %vm645, %v601, 0
      %v743 = vsel %vm645, %v602, 0
      %v746 = vsel %vm645, %v603, 0
      %v749 = vsel %vm645, %v604, 0
      %v752 = vsel %vm645, %v605, 0
      %v755 = vsel %vm645, %v606, 0
      %v758 = vsel %vm645, %v607, 0
      %v761 = vsel %vm645, %v608, 0
      %v764 = vsel %vm645, %v609, 0
      %v767 = vsel %vm645, %v610, 0
      %v770 = vsel %vm645, %v611, 0
      %v773 = vsel %vm645, %v612, 0
      %v776 = vsel %vm645, %v613, 0
      %v779 = vsel %vm645, %v614, 0
      %v782 = vsel %vm645, %v615, 0
      %v785 = vsel %vm645, %v616, 0
      %v788 = vsel %vm645, %v617, 0
      %v791 = vsel %vm645, %v618, 0
      %v794 = vsel %vm645, %v619, 0
      %v797 = vsel %vm645, %v620, 0
      %v800 = vsel %vm645, %v621, 0
      %v803 = vsel %vm645, %v622, 0
      %v806 = vsel %vm645, %v623, 0
      %v809 = vsel %vm645, %v624, 0
      %v812 = vsel %vm645, %v625, 0
      %v815 = vsel %vm645, %v626, 0
      %v818 = vsel %vm645, %v627, 0
      %v821 = vsel %vm645, %v628, 0
      %v824 = vsel %vm645, %v629, 0
      %v827 = vsel %vm645, %v630, 0
      %v830 = vsel %vm645, %v631, 0
      %v833 = vsel %vm645, %v632, 0
      %v836 = vsel %vm645, %v633, 0
      %vm838 = vcmask 1044480
      %vm839 = vcmask 1045504
      %v840 = vsel %vm838, 4294967295, 65535
      %v841 = vsel %vm839, %v840, 0
      %v843 = vand.u32 %v643, %v841
      %845 = vmatprep.subr.bf16.mxu0 0
      %846 = vmatpush1.bf16.msra.mxu0 %v642
      %847 = vmatprep.subr.bf16.mxu0 0
      %848 = vmatpush1.bf16.msra.mxu0 %v843
      %849 = vmatprep.subr.bf16.mxu0 0
      %850 = vmatpush1.bf16.msra.mxu0 0
      %851 = vmatprep.subr.bf16.mxu0 0
      %852 = vmatpush1.bf16.msra.mxu0 0
      %853 = vmatprep.subr.bf16.mxu0 0
      %854 = vmatpush1.bf16.msra.mxu0 0
      %855 = vmatprep.subr.bf16.mxu0 0
      %856 = vmatpush1.bf16.msra.mxu0 0
      %857 = vmatprep.subr.bf16.mxu0 0
      %858 = vmatpush1.bf16.msra.mxu0 0
      %859 = vmatprep.subr.bf16.mxu0 0
      %860 = vmatpush1.bf16.msra.mxu0 0
      %861 = vmatprep.subr.bf16.mxu0 0
      %862 = vmatpush1.bf16.msra.mxu0 0
      %863 = vmatprep.subr.bf16.mxu0 0
      %864 = vmatpush1.bf16.msra.mxu0 0
      %865 = vmatprep.subr.bf16.mxu0 0
      %866 = vmatpush1.bf16.msra.mxu0 0
      %867 = vmatprep.subr.bf16.mxu0 0
      %868 = vmatpush1.bf16.msra.mxu0 0
      %869 = vmatprep.subr.bf16.mxu0 0
      %870 = vmatpush1.bf16.msra.mxu0 0
      %871 = vmatprep.subr.bf16.mxu0 0
      %872 = vmatpush1.bf16.msra.mxu0 0
      %873 = vmatprep.subr.bf16.mxu0 0
      %874 = vmatpush1.bf16.msra.mxu0 0
      %875 = vmatprep.subr.bf16.mxu0 0
      %876 = vmatpush1.bf16.msra.mxu0 0
      %877 = vmatprep.mubr.bf16.mxu0 0
      %878 = vmatmul.mubr.bf16.gmra.mrb[0].mxu0 %v647
      %v879 = vpop.f32.mrb[0].mxu0
      %v880 = vadd.f32 %v312, %v879
      %v881 = vpop.f32.mrb[0].mxu0
      %v882 = vpop.f32.mrb[0].mxu0
      %v883 = vadd.f32 %v312, %v882
      %v884 = vpop.f32.mrb[0].mxu0
      %885 = vmatprep.mubr.bf16.mxu0 0
      %886 = vmatmul.mubr.bf16.gmra.mrb[0].mxu0 %v650
      %v887 = vpop.f32.mrb[0].mxu0
      %v888 = vadd.f32 %v312, %v887
      %v889 = vpop.f32.mrb[0].mxu0
      %v890 = vpop.f32.mrb[0].mxu0
      %v891 = vadd.f32 %v312, %v890
      %v892 = vpop.f32.mrb[0].mxu0
      %893 = vmatprep.mubr.bf16.mxu0 0
      %894 = vmatmul.mubr.bf16.gmra.mrb[0].mxu0 %v653
      %v895 = vpop.f32.mrb[0].mxu0
      %v896 = vadd.f32 %v312, %v895
      %v897 = vpop.f32.mrb[0].mxu0
      %v898 = vpop.f32.mrb[0].mxu0
      %v899 = vadd.f32 %v312, %v898
      %v900 = vpop.f32.mrb[0].mxu0
      %901 = vmatprep.mubr.bf16.mxu0 0
      %902 = vmatmul.mubr.bf16.gmra.mrb[0].mxu0 %v656
      %v903 = vpop.f32.mrb[0].mxu0
      %v904 = vadd.f32 %v312, %v903
      %v905 = vpop.f32.mrb[0].mxu0
      %v906 = vpop.f32.mrb[0].mxu0
      %v907 = vadd.f32 %v312, %v906
      %v908 = vpop.f32.mrb[0].mxu0
      %909 = vmatprep.mubr.bf16.mxu0 0
      %910 = vmatmul.mubr.bf16.gmra.mrb[0].mxu0 %v659
      %v911 = vpop.f32.mrb[0].mxu0
      %v912 = vadd.f32 %v312, %v911
      %v913 = vpop.f32.mrb[0].mxu0
      %v914 = vpop.f32.mrb[0].mxu0
      %v915 = vadd.f32 %v312, %v914
      %v916 = vpop.f32.mrb[0].mxu0
      %917 = vmatprep.mubr.bf16.mxu0 0
      %918 = vmatmul.mubr.bf16.gmra.mrb[0].mxu0 %v662
      %v919 = vpop.f32.mrb[0].mxu0
      %v920 = vadd.f32 %v312, %v919
      %v921 = vpop.f32.mrb[0].mxu0
      %v922 = vpop.f32.mrb[0].mxu0
      %v923 = vadd.f32 %v312, %v922
      %v924 = vpop.f32.mrb[0].mxu0
      %925 = vmatprep.mubr.bf16.mxu0 0
      %926 = vmatmul.mubr.bf16.gmra.mrb[0].mxu0 %v665
      %v927 = vpop.f32.mrb[0].mxu0
      %v928 = vadd.f32 %v312, %v927
      %v929 = vpop.f32.mrb[0].mxu0
      %v930 = vpop.f32.mrb[0].mxu0
      %v931 = vadd.f32 %v312, %v930
      %v932 = vpop.f32.mrb[0].mxu0
      %933 = vmatprep.mubr.bf16.mxu0 0
      %934 = vmatmul.mubr.bf16.gmra.mrb[0].mxu0 %v668
      %v935 = vpop.f32.mrb[0].mxu0
      %v936 = vadd.f32 %v312, %v935
      %v937 = vpop.f32.mrb[0].mxu0
      %v938 = vpop.f32.mrb[0].mxu0
      %v939 = vadd.f32 %v312, %v938
      %v940 = vpop.f32.mrb[0].mxu0
      %941 = vmatprep.mubr.bf16.mxu0 0
      %942 = vmatmul.mubr.bf16.gmra.mrb[0].mxu0 %v671
      %v943 = vpop.f32.mrb[0].mxu0
      %v944 = vadd.f32 %v312, %v943
      %v945 = vpop.f32.mrb[0].mxu0
      %v946 = vpop.f32.mrb[0].mxu0
      %v947 = vadd.f32 %v312, %v946
      %v948 = vpop.f32.mrb[0].mxu0
      %949 = vmatprep.mubr.bf16.mxu0 0
      %950 = vmatmul.mubr.bf16.gmra.mrb[0].mxu0 %v674
      %v951 = vpop.f32.mrb[0].mxu0
      %v952 = vadd.f32 %v312, %v951
      %v953 = vpop.f32.mrb[0].mxu0
      %v954 = vpop.f32.mrb[0].mxu0
      %v955 = vadd.f32 %v312, %v954
      %v956 = vpop.f32.mrb[0].mxu0
      %957 = vmatprep.mubr.bf16.mxu0 0
      %958 = vmatmul.mubr.bf16.gmra.mrb[0].mxu0 %v677
      %v959 = vpop.f32.mrb[0].mxu0
      %v960 = vadd.f32 %v312, %v959
      %v961 = vpop.f32.mrb[0].mxu0
      %v962 = vpop.f32.mrb[0].mxu0
      %v963 = vadd.f32 %v312, %v962
      %v964 = vpop.f32.mrb[0].mxu0
      %965 = vmatprep.mubr.bf16.mxu0 0
      %966 = vmatmul.mubr.bf16.gmra.mrb[0].mxu0 %v680
      %v967 = vpop.f32.mrb[0].mxu0
      %v968 = vadd.f32 %v312, %v967
      %v969 = vpop.f32.mrb[0].mxu0
      %v970 = vpop.f32.mrb[0].mxu0
      %v971 = vadd.f32 %v312, %v970
      %v972 = vpop.f32.mrb[0].mxu0
      %973 = vmatprep.mubr.bf16.mxu0 0
      %974 = vmatmul.mubr.bf16.gmra.mrb[0].mxu0 %v683
      %v975 = vpop.f32.mrb[0].mxu0
      %v976 = vadd.f32 %v312, %v975
      %v977 = vpop.f32.mrb[0].mxu0
      %v978 = vpop.f32.mrb[0].mxu0
      %v979 = vadd.f32 %v312, %v978
      %v980 = vpop.f32.mrb[0].mxu0
      %981 = vmatprep.mubr.bf16.mxu0 0
      %982 = vmatmul.mubr.bf16.gmra.mrb[0].mxu0 %v686
      %v983 = vpop.f32.mrb[0].mxu0
      %v984 = vadd.f32 %v312, %v983
      %v985 = vpop.f32.mrb[0].mxu0
      %v986 = vpop.f32.mrb[0].mxu0
      %v987 = vadd.f32 %v312, %v986
      %v988 = vpop.f32.mrb[0].mxu0
      %989 = vmatprep.mubr.bf16.mxu0 0
      %990 = vmatmul.mubr.bf16.gmra.mrb[0].mxu0 %v689
      %v991 = vpop.f32.mrb[0].mxu0
      %v992 = vadd.f32 %v312, %v991
      %v993 = vpop.f32.mrb[0].mxu0
      %v994 = vpop.f32.mrb[0].mxu0
      %v995 = vadd.f32 %v312, %v994
      %v996 = vpop.f32.mrb[0].mxu0
      %997 = vmatprep.mubr.bf16.mxu0 0
      %998 = vmatmul.mubr.bf16.gmra.mrb[0].mxu0 %v692
      %v999 = vpop.f32.mrb[0].mxu0
      %v1000 = vadd.f32 %v312, %v999
      %v1001 = vpop.f32.mrb[0].mxu0
      %v1002 = vpop.f32.mrb[0].mxu0
      %v1003 = vadd.f32 %v312, %v1002
      %v1004 = vpop.f32.mrb[0].mxu0
      %1005 = vmatprep.mubr.bf16.mxu0 0
      %1006 = vmatmul.mubr.bf16.gmra.mrb[0].mxu0 %v695
      %v1007 = vpop.f32.mrb[0].mxu0
      %v1008 = vadd.f32 %v312, %v1007
      %v1009 = vpop.f32.mrb[0].mxu0
      %v1010 = vpop.f32.mrb[0].mxu0
      %v1011 = vadd.f32 %v312, %v1010
      %v1012 = vpop.f32.mrb[0].mxu0
      %1013 = vmatprep.mubr.bf16.mxu0 0
      %1014 = vmatmul.mubr.bf16.gmra.mrb[0].mxu0 %v698
      %v1015 = vpop.f32.mrb[0].mxu0
      %v1016 = vadd.f32 %v312, %v1015
      %v1017 = vpop.f32.mrb[0].mxu0
      %v1018 = vpop.f32.mrb[0].mxu0
      %v1019 = vadd.f32 %v312, %v1018
      %v1020 = vpop.f32.mrb[0].mxu0
      %1021 = vmatprep.mubr.bf16.mxu0 0
      %1022 = vmatmul.mubr.bf16.gmra.mrb[0].mxu0 %v701
      %v1023 = vpop.f32.mrb[0].mxu0
      %v1024 = vadd.f32 %v312, %v1023
      %v1025 = vpop.f32.mrb[0].mxu0
      %v1026 = vpop.f32.mrb[0].mxu0
      %v1027 = vadd.f32 %v312, %v1026
      %v1028 = vpop.f32.mrb[0].mxu0
      %1029 = vmatprep.mubr.bf16.mxu0 0
      %1030 = vmatmul.mubr.bf16.gmra.mrb[0].mxu0 %v704
      %v1031 = vpop.f32.mrb[0].mxu0
      %v1032 = vadd.f32 %v312, %v1031
      %v1033 = vpop.f32.mrb[0].mxu0
      %v1034 = vpop.f32.mrb[0].mxu0
      %v1035 = vadd.f32 %v312, %v1034
      %v1036 = vpop.f32.mrb[0].mxu0
      %1037 = vmatprep.mubr.bf16.mxu0 0
      %1038 = vmatmul.mubr.bf16.gmra.mrb[0].mxu0 %v707
      %v1039 = vpop.f32.mrb[0].mxu0
      %v1040 = vadd.f32 %v312, %v1039
      %v1041 = vpop.f32.mrb[0].mxu0
      %v1042 = vpop.f32.mrb[0].mxu0
      %v1043 = vadd.f32 %v312, %v1042
      %v1044 = vpop.f32.mrb[0].mxu0
      %1045 = vmatprep.mubr.bf16.mxu0 0
      %1046 = vmatmul.mubr.bf16.gmra.mrb[0].mxu0 %v710
      %v1047 = vpop.f32.mrb[0].mxu0
      %v1048 = vadd.f32 %v312, %v1047
      %v1049 = vpop.f32.mrb[0].mxu0
      %v1050 = vpop.f32.mrb[0].mxu0
      %v1051 = vadd.f32 %v312, %v1050
      %v1052 = vpop.f32.mrb[0].mxu0
      %1053 = vmatprep.mubr.bf16.mxu0 0
      %1054 = vmatmul.mubr.bf16.gmra.mrb[0].mxu0 %v713
      %v1055 = vpop.f32.mrb[0].mxu0
      %v1056 = vadd.f32 %v312, %v1055
      %v1057 = vpop.f32.mrb[0].mxu0
      %v1058 = vpop.f32.mrb[0].mxu0
      %v1059 = vadd.f32 %v312, %v1058
      %v1060 = vpop.f32.mrb[0].mxu0
      %1061 = vmatprep.mubr.bf16.mxu0 0
      %1062 = vmatmul.mubr.bf16.gmra.mrb[0].mxu0 %v716
      %v1063 = vpop.f32.mrb[0].mxu0
      %v1064 = vadd.f32 %v312, %v1063
      %v1065 = vpop.f32.mrb[0].mxu0
      %v1066 = vpop.f32.mrb[0].mxu0
      %v1067 = vadd.f32 %v312, %v1066
      %v1068 = vpop.f32.mrb[0].mxu0
      %1069 = vmatprep.mubr.bf16.mxu0 0
      %1070 = vmatmul.mubr.bf16.gmra.mrb[0].mxu0 %v719
      %v1071 = vpop.f32.mrb[0].mxu0
      %v1072 = vadd.f32 %v312, %v1071
      %v1073 = vpop.f32.mrb[0].mxu0
      %v1074 = vpop.f32.mrb[0].mxu0
      %v1075 = vadd.f32 %v312, %v1074
      %v1076 = vpop.f32.mrb[0].mxu0
      %1077 = vmatprep.mubr.bf16.mxu0 0
      %1078 = vmatmul.mubr.bf16.gmra.mrb[0].mxu0 %v722
      %v1079 = vpop.f32.mrb[0].mxu0
      %v1080 = vadd.f32 %v312, %v1079
      %v1081 = vpop.f32.mrb[0].mxu0
      %v1082 = vpop.f32.mrb[0].mxu0
      %v1083 = vadd.f32 %v312, %v1082
      %v1084 = vpop.f32.mrb[0].mxu0
      %1085 = vmatprep.mubr.bf16.mxu0 0
      %1086 = vmatmul.mubr.bf16.gmra.mrb[0].mxu0 %v725
      %v1087 = vpop.f32.mrb[0].mxu0
      %v1088 = vadd.f32 %v312, %v1087
      %v1089 = vpop.f32.mrb[0].mxu0
      %v1090 = vpop.f32.mrb[0].mxu0
      %v1091 = vadd.f32 %v312, %v1090
      %v1092 = vpop.f32.mrb[0].mxu0
      %1093 = vmatprep.mubr.bf16.mxu0 0
      %1094 = vmatmul.mubr.bf16.gmra.mrb[0].mxu0 %v728
      %v1095 = vpop.f32.mrb[0].mxu0
      %v1096 = vadd.f32 %v312, %v1095
      %v1097 = vpop.f32.mrb[0].mxu0
      %v1098 = vpop.f32.mrb[0].mxu0
      %v1099 = vadd.f32 %v312, %v1098
      %v1100 = vpop.f32.mrb[0].mxu0
      %1101 = vmatprep.mubr.bf16.mxu0 0
      %1102 = vmatmul.mubr.bf16.gmra.mrb[0].mxu0 %v731
      %v1103 = vpop.f32.mrb[0].mxu0
      %v1104 = vadd.f32 %v312, %v1103
      %v1105 = vpop.f32.mrb[0].mxu0
      %v1106 = vpop.f32.mrb[0].mxu0
      %v1107 = vadd.f32 %v312, %v1106
      %v1108 = vpop.f32.mrb[0].mxu0
      %1109 = vmatprep.mubr.bf16.mxu0 0
      %1110 = vmatmul.mubr.bf16.gmra.mrb[0].mxu0 %v734
      %v1111 = vpop.f32.mrb[0].mxu0
      %v1112 = vadd.f32 %v312, %v1111
      %v1113 = vpop.f32.mrb[0].mxu0
      %v1114 = vpop.f32.mrb[0].mxu0
      %v1115 = vadd.f32 %v312, %v1114
      %v1116 = vpop.f32.mrb[0].mxu0
      %1117 = vmatprep.mubr.bf16.mxu0 0
      %1118 = vmatmul.mubr.bf16.gmra.mrb[0].mxu0 %v737
      %v1119 = vpop.f32.mrb[0].mxu0
      %v1120 = vadd.f32 %v312, %v1119
      %v1121 = vpop.f32.mrb[0].mxu0
      %v1122 = vpop.f32.mrb[0].mxu0
      %v1123 = vadd.f32 %v312, %v1122
      %v1124 = vpop.f32.mrb[0].mxu0
      %1125 = vmatprep.mubr.bf16.mxu0 0
      %1126 = vmatmul.mubr.bf16.gmra.mrb[0].mxu0 %v740
      %v1127 = vpop.f32.mrb[0].mxu0
      %v1128 = vadd.f32 %v312, %v1127
      %v1129 = vpop.f32.mrb[0].mxu0
      %v1130 = vpop.f32.mrb[0].mxu0
      %v1131 = vadd.f32 %v312, %v1130
      %v1132 = vpop.f32.mrb[0].mxu0
      %1133 = vmatprep.mubr.bf16.mxu0 0
      %1134 = vmatmul.mubr.bf16.gmra.mrb[0].mxu0 %v743
      %v1135 = vpop.f32.mrb[0].mxu0
      %v1136 = vadd.f32 %v312, %v1135
      %v1137 = vpop.f32.mrb[0].mxu0
      %v1138 = vpop.f32.mrb[0].mxu0
      %v1139 = vadd.f32 %v312, %v1138
      %v1140 = vpop.f32.mrb[0].mxu0
      %1141 = vmatprep.mubr.bf16.mxu0 0
      %1142 = vmatmul.mubr.bf16.gmra.mrb[0].mxu0 %v746
      %v1143 = vpop.f32.mrb[0].mxu0
      %v1144 = vadd.f32 %v312, %v1143
      %v1145 = vpop.f32.mrb[0].mxu0
      %v1146 = vpop.f32.mrb[0].mxu0
      %v1147 = vadd.f32 %v312, %v1146
      %v1148 = vpop.f32.mrb[0].mxu0
      %1149 = vmatprep.mubr.bf16.mxu0 0
      %1150 = vmatmul.mubr.bf16.gmra.mrb[0].mxu0 %v749
      %v1151 = vpop.f32.mrb[0].mxu0
      %v1152 = vadd.f32 %v312, %v1151
      %v1153 = vpop.f32.mrb[0].mxu0
      %v1154 = vpop.f32.mrb[0].mxu0
      %v1155 = vadd.f32 %v312, %v1154
      %v1156 = vpop.f32.mrb[0].mxu0
      %1157 = vmatprep.mubr.bf16.mxu0 0
      %1158 = vmatmul.mubr.bf16.gmra.mrb[0].mxu0 %v752
      %v1159 = vpop.f32.mrb[0].mxu0
      %v1160 = vadd.f32 %v312, %v1159
      %v1161 = vpop.f32.mrb[0].mxu0
      %v1162 = vpop.f32.mrb[0].mxu0
      %v1163 = vadd.f32 %v312, %v1162
      %v1164 = vpop.f32.mrb[0].mxu0
      %1165 = vmatprep.mubr.bf16.mxu0 0
      %1166 = vmatmul.mubr.bf16.gmra.mrb[0].mxu0 %v755
      %v1167 = vpop.f32.mrb[0].mxu0
      %v1168 = vadd.f32 %v312, %v1167
      %v1169 = vpop.f32.mrb[0].mxu0
      %v1170 = vpop.f32.mrb[0].mxu0
      %v1171 = vadd.f32 %v312, %v1170
      %v1172 = vpop.f32.mrb[0].mxu0
      %1173 = vmatprep.mubr.bf16.mxu0 0
      %1174 = vmatmul.mubr.bf16.gmra.mrb[0].mxu0 %v758
      %v1175 = vpop.f32.mrb[0].mxu0
      %v1176 = vadd.f32 %v312, %v1175
      %v1177 = vpop.f32.mrb[0].mxu0
      %v1178 = vpop.f32.mrb[0].mxu0
      %v1179 = vadd.f32 %v312, %v1178
      %v1180 = vpop.f32.mrb[0].mxu0
      %1181 = vmatprep.mubr.bf16.mxu0 0
      %1182 = vmatmul.mubr.bf16.gmra.mrb[0].mxu0 %v761
      %v1183 = vpop.f32.mrb[0].mxu0
      %v1184 = vadd.f32 %v312, %v1183
      %v1185 = vpop.f32.mrb[0].mxu0
      %v1186 = vpop.f32.mrb[0].mxu0
      %v1187 = vadd.f32 %v312, %v1186
      %v1188 = vpop.f32.mrb[0].mxu0
      %1189 = vmatprep.mubr.bf16.mxu0 0
      %1190 = vmatmul.mubr.bf16.gmra.mrb[0].mxu0 %v764
      %v1191 = vpop.f32.mrb[0].mxu0
      %v1192 = vadd.f32 %v312, %v1191
      %v1193 = vpop.f32.mrb[0].mxu0
      %v1194 = vpop.f32.mrb[0].mxu0
      %v1195 = vadd.f32 %v312, %v1194
      %v1196 = vpop.f32.mrb[0].mxu0
      %1197 = vmatprep.mubr.bf16.mxu0 0
      %1198 = vmatmul.mubr.bf16.gmra.mrb[0].mxu0 %v767
      %v1199 = vpop.f32.mrb[0].mxu0
      %v1200 = vadd.f32 %v312, %v1199
      %v1201 = vpop.f32.mrb[0].mxu0
      %v1202 = vpop.f32.mrb[0].mxu0
      %v1203 = vadd.f32 %v312, %v1202
      %v1204 = vpop.f32.mrb[0].mxu0
      %1205 = vmatprep.mubr.bf16.mxu0 0
      %1206 = vmatmul.mubr.bf16.gmra.mrb[0].mxu0 %v770
      %v1207 = vpop.f32.mrb[0].mxu0
      %v1208 = vadd.f32 %v312, %v1207
      %v1209 = vpop.f32.mrb[0].mxu0
      %v1210 = vpop.f32.mrb[0].mxu0
      %v1211 = vadd.f32 %v312, %v1210
      %v1212 = vpop.f32.mrb[0].mxu0
      %1213 = vmatprep.mubr.bf16.mxu0 0
      %1214 = vmatmul.mubr.bf16.gmra.mrb[0].mxu0 %v773
      %v1215 = vpop.f32.mrb[0].mxu0
      %v1216 = vadd.f32 %v312, %v1215
      %v1217 = vpop.f32.mrb[0].mxu0
      %v1218 = vpop.f32.mrb[0].mxu0
      %v1219 = vadd.f32 %v312, %v1218
      %v1220 = vpop.f32.mrb[0].mxu0
      %1221 = vmatprep.mubr.bf16.mxu0 0
      %1222 = vmatmul.mubr.bf16.gmra.mrb[0].mxu0 %v776
      %v1223 = vpop.f32.mrb[0].mxu0
      %v1224 = vadd.f32 %v312, %v1223
      %v1225 = vpop.f32.mrb[0].mxu0
      %v1226 = vpop.f32.mrb[0].mxu0
      %v1227 = vadd.f32 %v312, %v1226
      %v1228 = vpop.f32.mrb[0].mxu0
      %1229 = vmatprep.mubr.bf16.mxu0 0
      %1230 = vmatmul.mubr.bf16.gmra.mrb[0].mxu0 %v779
      %v1231 = vpop.f32.mrb[0].mxu0
      %v1232 = vadd.f32 %v312, %v1231
      %v1233 = vpop.f32.mrb[0].mxu0
      %v1234 = vpop.f32.mrb[0].mxu0
      %v1235 = vadd.f32 %v312, %v1234
      %v1236 = vpop.f32.mrb[0].mxu0
      %1237 = vmatprep.mubr.bf16.mxu0 0
      %1238 = vmatmul.mubr.bf16.gmra.mrb[0].mxu0 %v782
      %v1239 = vpop.f32.mrb[0].mxu0
      %v1240 = vadd.f32 %v312, %v1239
      %v1241 = vpop.f32.mrb[0].mxu0
      %v1242 = vpop.f32.mrb[0].mxu0
      %v1243 = vadd.f32 %v312, %v1242
      %v1244 = vpop.f32.mrb[0].mxu0
      %1245 = vmatprep.mubr.bf16.mxu0 0
      %1246 = vmatmul.mubr.bf16.gmra.mrb[0].mxu0 %v785
      %v1247 = vpop.f32.mrb[0].mxu0
      %v1248 = vadd.f32 %v312, %v1247
      %v1249 = vpop.f32.mrb[0].mxu0
      %v1250 = vpop.f32.mrb[0].mxu0
      %v1251 = vadd.f32 %v312, %v1250
      %v1252 = vpop.f32.mrb[0].mxu0
      %1253 = vmatprep.mubr.bf16.mxu0 0
      %1254 = vmatmul.mubr.bf16.gmra.mrb[0].mxu0 %v788
      %v1255 = vpop.f32.mrb[0].mxu0
      %v1256 = vadd.f32 %v312, %v1255
      %v1257 = vpop.f32.mrb[0].mxu0
      %v1258 = vpop.f32.mrb[0].mxu0
      %v1259 = vadd.f32 %v312, %v1258
      %v1260 = vpop.f32.mrb[0].mxu0
      %1261 = vmatprep.mubr.bf16.mxu0 0
      %1262 = vmatmul.mubr.bf16.gmra.mrb[0].mxu0 %v791
      %v1263 = vpop.f32.mrb[0].mxu0
      %v1264 = vadd.f32 %v312, %v1263
      %v1265 = vpop.f32.mrb[0].mxu0
      %v1266 = vpop.f32.mrb[0].mxu0
      %v1267 = vadd.f32 %v312, %v1266
      %v1268 = vpop.f32.mrb[0].mxu0
      %1269 = vmatprep.mubr.bf16.mxu0 0
      %1270 = vmatmul.mubr.bf16.gmra.mrb[0].mxu0 %v794
      %v1271 = vpop.f32.mrb[0].mxu0
      %v1272 = vadd.f32 %v312, %v1271
      %v1273 = vpop.f32.mrb[0].mxu0
      %v1274 = vpop.f32.mrb[0].mxu0
      %v1275 = vadd.f32 %v312, %v1274
      %v1276 = vpop.f32.mrb[0].mxu0
      %1277 = vmatprep.mubr.bf16.mxu0 0
      %1278 = vmatmul.mubr.bf16.gmra.mrb[0].mxu0 %v797
      %v1279 = vpop.f32.mrb[0].mxu0
      %v1280 = vadd.f32 %v312, %v1279
      %v1281 = vpop.f32.mrb[0].mxu0
      %v1282 = vpop.f32.mrb[0].mxu0
      %v1283 = vadd.f32 %v312, %v1282
      %v1284 = vpop.f32.mrb[0].mxu0
      %1285 = vmatprep.mubr.bf16.mxu0 0
      %1286 = vmatmul.mubr.bf16.gmra.mrb[0].mxu0 %v800
      %v1287 = vpop.f32.mrb[0].mxu0
      %v1288 = vadd.f32 %v312, %v1287
      %v1289 = vpop.f32.mrb[0].mxu0
      %v1290 = vpop.f32.mrb[0].mxu0
      %v1291 = vadd.f32 %v312, %v1290
      %v1292 = vpop.f32.mrb[0].mxu0
      %1293 = vmatprep.mubr.bf16.mxu0 0
      %1294 = vmatmul.mubr.bf16.gmra.mrb[0].mxu0 %v803
      %v1295 = vpop.f32.mrb[0].mxu0
      %v1296 = vadd.f32 %v312, %v1295
      %v1297 = vpop.f32.mrb[0].mxu0
      %v1298 = vpop.f32.mrb[0].mxu0
      %v1299 = vadd.f32 %v312, %v1298
      %v1300 = vpop.f32.mrb[0].mxu0
      %1301 = vmatprep.mubr.bf16.mxu0 0
      %1302 = vmatmul.mubr.bf16.gmra.mrb[0].mxu0 %v806
      %v1303 = vpop.f32.mrb[0].mxu0
      %v1304 = vadd.f32 %v312, %v1303
      %v1305 = vpop.f32.mrb[0].mxu0
      %v1306 = vpop.f32.mrb[0].mxu0
      %v1307 = vadd.f32 %v312, %v1306
      %v1308 = vpop.f32.mrb[0].mxu0
      %1309 = vmatprep.mubr.bf16.mxu0 0
      %1310 = vmatmul.mubr.bf16.gmra.mrb[0].mxu0 %v809
      %v1311 = vpop.f32.mrb[0].mxu0
      %v1312 = vadd.f32 %v312, %v1311
      %v1313 = vpop.f32.mrb[0].mxu0
      %v1314 = vpop.f32.mrb[0].mxu0
      %v1315 = vadd.f32 %v312, %v1314
      %v1316 = vpop.f32.mrb[0].mxu0
      %1317 = vmatprep.mubr.bf16.mxu0 0
      %1318 = vmatmul.mubr.bf16.gmra.mrb[0].mxu0 %v812
      %v1319 = vpop.f32.mrb[0].mxu0
      %v1320 = vadd.f32 %v312, %v1319
      %v1321 = vpop.f32.mrb[0].mxu0
      %v1322 = vpop.f32.mrb[0].mxu0
      %v1323 = vadd.f32 %v312, %v1322
      %v1324 = vpop.f32.mrb[0].mxu0
      %1325 = vmatprep.mubr.bf16.mxu0 0
      %1326 = vmatmul.mubr.bf16.gmra.mrb[0].mxu0 %v815
      %v1327 = vpop.f32.mrb[0].mxu0
      %v1328 = vadd.f32 %v312, %v1327
      %v1329 = vpop.f32.mrb[0].mxu0
      %v1330 = vpop.f32.mrb[0].mxu0
      %v1331 = vadd.f32 %v312, %v1330
      %v1332 = vpop.f32.mrb[0].mxu0
      %1333 = vmatprep.mubr.bf16.mxu0 0
      %1334 = vmatmul.mubr.bf16.gmra.mrb[0].mxu0 %v818
      %v1335 = vpop.f32.mrb[0].mxu0
      %v1336 = vadd.f32 %v312, %v1335
      %v1337 = vpop.f32.mrb[0].mxu0
      %v1338 = vpop.f32.mrb[0].mxu0
      %v1339 = vadd.f32 %v312, %v1338
      %v1340 = vpop.f32.mrb[0].mxu0
      %1341 = vmatprep.mubr.bf16.mxu0 0
      %1342 = vmatmul.mubr.bf16.gmra.mrb[0].mxu0 %v821
      %v1343 = vpop.f32.mrb[0].mxu0
      %v1344 = vadd.f32 %v312, %v1343
      %v1345 = vpop.f32.mrb[0].mxu0
      %v1346 = vpop.f32.mrb[0].mxu0
      %v1347 = vadd.f32 %v312, %v1346
      %v1348 = vpop.f32.mrb[0].mxu0
      %1349 = vmatprep.mubr.bf16.mxu0 0
      %1350 = vmatmul.mubr.bf16.gmra.mrb[0].mxu0 %v824
      %v1351 = vpop.f32.mrb[0].mxu0
      %v1352 = vadd.f32 %v312, %v1351
      %v1353 = vpop.f32.mrb[0].mxu0
      %v1354 = vpop.f32.mrb[0].mxu0
      %v1355 = vadd.f32 %v312, %v1354
      %v1356 = vpop.f32.mrb[0].mxu0
      %1357 = vmatprep.mubr.bf16.mxu0 0
      %1358 = vmatmul.mubr.bf16.gmra.mrb[0].mxu0 %v827
      %v1359 = vpop.f32.mrb[0].mxu0
      %v1360 = vadd.f32 %v312, %v1359
      %v1361 = vpop.f32.mrb[0].mxu0
      %v1362 = vpop.f32.mrb[0].mxu0
      %v1363 = vadd.f32 %v312, %v1362
      %v1364 = vpop.f32.mrb[0].mxu0
      %1365 = vmatprep.mubr.bf16.mxu0 0
      %1366 = vmatmul.mubr.bf16.gmra.mrb[0].mxu0 %v830
      %v1367 = vpop.f32.mrb[0].mxu0
      %v1368 = vadd.f32 %v312, %v1367
      %v1369 = vpop.f32.mrb[0].mxu0
      %v1370 = vpop.f32.mrb[0].mxu0
      %v1371 = vadd.f32 %v312, %v1370
      %v1372 = vpop.f32.mrb[0].mxu0
      %1373 = vmatprep.mubr.bf16.mxu0 0
      %1374 = vmatmul.mubr.bf16.gmra.mrb[0].mxu0 %v833
      %v1375 = vpop.f32.mrb[0].mxu0
      %v1376 = vadd.f32 %v312, %v1375
      %v1377 = vpop.f32.mrb[0].mxu0
      %v1378 = vpop.f32.mrb[0].mxu0
      %v1379 = vadd.f32 %v312, %v1378
      %v1380 = vpop.f32.mrb[0].mxu0
      %1381 = vmatprep.mubr.bf16.mxu0 0
      %1382 = vmatmul.mubr.bf16.gmra.mrb[0].mxu0 %v836
      %v1383 = vpop.f32.mrb[0].mxu0
      %v1384 = vadd.f32 %v312, %v1383
      %v1385 = vpop.f32.mrb[0].mxu0
      %v1386 = vpop.f32.mrb[0].mxu0
      %v1387 = vadd.f32 %v312, %v1386
      %v1388 = vpop.f32.mrb[0].mxu0
      %1389 = vdwg.mxu0
      %v1390 = vmax.f32 %v880, 0.0
      %v1391 = vmax.f32 %v883, 0.0
      %v1392 = vmax.f32 %v888, 0.0
      %v1393 = vmax.f32 %v891, 0.0
      %v1394 = vmax.f32 %v896, 0.0
      %v1395 = vmax.f32 %v899, 0.0
      %v1396 = vmax.f32 %v904, 0.0
      %v1397 = vmax.f32 %v907, 0.0
      %v1398 = vmax.f32 %v912, 0.0
      %v1399 = vmax.f32 %v915, 0.0
      %v1400 = vmax.f32 %v920, 0.0
      %v1401 = vmax.f32 %v923, 0.0
      %v1402 = vmax.f32 %v928, 0.0
      %v1403 = vmax.f32 %v931, 0.0
      %v1404 = vmax.f32 %v936, 0.0
      %v1405 = vmax.f32 %v939, 0.0
      %v1406 = vmax.f32 %v944, 0.0
      %v1407 = vmax.f32 %v947, 0.0
      %v1408 = vmax.f32 %v952, 0.0
      %v1409 = vmax.f32 %v955, 0.0
      %v1410 = vmax.f32 %v960, 0.0
      %v1411 = vmax.f32 %v963, 0.0
      %v1412 = vmax.f32 %v968, 0.0
      %v1413 = vmax.f32 %v971, 0.0
      %v1414 = vmax.f32 %v976, 0.0
      %v1415 = vmax.f32 %v979, 0.0
      %v1416 = vmax.f32 %v984, 0.0
      %v1417 = vmax.f32 %v987, 0.0
      %v1418 = vmax.f32 %v992, 0.0
      %v1419 = vmax.f32 %v995, 0.0
      %v1420 = vmax.f32 %v1000, 0.0
      %v1421 = vmax.f32 %v1003, 0.0
      %v1422 = vmax.f32 %v1008, 0.0
      %v1423 = vmax.f32 %v1011, 0.0
      %v1424 = vmax.f32 %v1016, 0.0
      %v1425 = vmax.f32 %v1019, 0.0
      %v1426 = vmax.f32 %v1024, 0.0
      %v1427 = vmax.f32 %v1027, 0.0
      %v1428 = vmax.f32 %v1032, 0.0
      %v1429 = vmax.f32 %v1035, 0.0
      %v1430 = vmax.f32 %v1040, 0.0
      %v1431 = vmax.f32 %v1043, 0.0
      %v1432 = vmax.f32 %v1048, 0.0
      %v1433 = vmax.f32 %v1051, 0.0
      %v1434 = vmax.f32 %v1056, 0.0
      %v1435 = vmax.f32 %v1059, 0.0
      %v1436 = vmax.f32 %v1064, 0.0
      %v1437 = vmax.f32 %v1067, 0.0
      %v1438 = vmax.f32 %v1072, 0.0
      %v1439 = vmax.f32 %v1075, 0.0
      %v1440 = vmax.f32 %v1080, 0.0
      %v1441 = vmax.f32 %v1083, 0.0
      %v1442 = vmax.f32 %v1088, 0.0
      %v1443 = vmax.f32 %v1091, 0.0
      %v1444 = vmax.f32 %v1096, 0.0
      %v1445 = vmax.f32 %v1099, 0.0
      %v1446 = vmax.f32 %v1104, 0.0
      %v1447 = vmax.f32 %v1107, 0.0
      %v1448 = vmax.f32 %v1112, 0.0
      %v1449 = vmax.f32 %v1115, 0.0
      %v1450 = vmax.f32 %v1120, 0.0
      %v1451 = vmax.f32 %v1123, 0.0
      %v1452 = vmax.f32 %v1128, 0.0
      %v1453 = vmax.f32 %v1131, 0.0
      %v1454 = vmax.f32 %v1136, 0.0
      %v1455 = vmax.f32 %v1139, 0.0
      %v1456 = vmax.f32 %v1144, 0.0
      %v1457 = vmax.f32 %v1147, 0.0
      %v1458 = vmax.f32 %v1152, 0.0
      %v1459 = vmax.f32 %v1155, 0.0
      %v1460 = vmax.f32 %v1160, 0.0
      %v1461 = vmax.f32 %v1163, 0.0
      %v1462 = vmax.f32 %v1168, 0.0
      %v1463 = vmax.f32 %v1171, 0.0
      %v1464 = vmax.f32 %v1176, 0.0
      %v1465 = vmax.f32 %v1179, 0.0
      %v1466 = vmax.f32 %v1184, 0.0
      %v1467 = vmax.f32 %v1187, 0.0
      %v1468 = vmax.f32 %v1192, 0.0
      %v1469 = vmax.f32 %v1195, 0.0
      %v1470 = vmax.f32 %v1200, 0.0
      %v1471 = vmax.f32 %v1203, 0.0
      %v1472 = vmax.f32 %v1208, 0.0
      %v1473 = vmax.f32 %v1211, 0.0
      %v1474 = vmax.f32 %v1216, 0.0
      %v1475 = vmax.f32 %v1219, 0.0
      %v1476 = vmax.f32 %v1224, 0.0
      %v1477 = vmax.f32 %v1227, 0.0
      %v1478 = vmax.f32 %v1232, 0.0
      %v1479 = vmax.f32 %v1235, 0.0
      %v1480 = vmax.f32 %v1240, 0.0
      %v1481 = vmax.f32 %v1243, 0.0
      %v1482 = vmax.f32 %v1248, 0.0
      %v1483 = vmax.f32 %v1251, 0.0
      %v1484 = vmax.f32 %v1256, 0.0
      %v1485 = vmax.f32 %v1259, 0.0
      %v1486 = vmax.f32 %v1264, 0.0
      %v1487 = vmax.f32 %v1267, 0.0
      %v1488 = vmax.f32 %v1272, 0.0
      %v1489 = vmax.f32 %v1275, 0.0
      %v1490 = vmax.f32 %v1280, 0.0
      %v1491 = vmax.f32 %v1283, 0.0
      %v1492 = vmax.f32 %v1288, 0.0
      %v1493 = vmax.f32 %v1291, 0.0
      %v1494 = vmax.f32 %v1296, 0.0
      %v1495 = vmax.f32 %v1299, 0.0
      %v1496 = vmax.f32 %v1304, 0.0
      %v1497 = vmax.f32 %v1307, 0.0
      %v1498 = vmax.f32 %v1312, 0.0
      %v1499 = vmax.f32 %v1315, 0.0
      %v1500 = vmax.f32 %v1320, 0.0
      %v1501 = vmax.f32 %v1323, 0.0
      %v1502 = vmax.f32 %v1328, 0.0
      %v1503 = vmax.f32 %v1331, 0.0
      %v1504 = vmax.f32 %v1336, 0.0
      %v1505 = vmax.f32 %v1339, 0.0
      %v1506 = vmax.f32 %v1344, 0.0
      %v1507 = vmax.f32 %v1347, 0.0
      %v1508 = vmax.f32 %v1352, 0.0
      %v1509 = vmax.f32 %v1355, 0.0
      %v1510 = vmax.f32 %v1360, 0.0
      %v1511 = vmax.f32 %v1363, 0.0
      %v1512 = vmax.f32 %v1368, 0.0
      %v1513 = vmax.f32 %v1371, 0.0
      %v1514 = vmax.f32 %v1376, 0.0
      %v1515 = vmax.f32 %v1379, 0.0
      %v1516 = vmax.f32 %v1384, 0.0
      %v1517 = vmax.f32 %v1387, 0.0
      %v1518 = vpack.c.bf16 %v1391, %v1390
      %v1519 = vpack.c.bf16 %v1393, %v1392
      %v1520 = vpack.c.bf16 %v1395, %v1394
      %v1521 = vpack.c.bf16 %v1397, %v1396
      %v1522 = vpack.c.bf16 %v1399, %v1398
      %v1523 = vpack.c.bf16 %v1401, %v1400
      %v1524 = vpack.c.bf16 %v1403, %v1402
      %v1525 = vpack.c.bf16 %v1405, %v1404
      %v1526 = vpack.c.bf16 %v1407, %v1406
      %v1527 = vpack.c.bf16 %v1409, %v1408
      %v1528 = vpack.c.bf16 %v1411, %v1410
      %v1529 = vpack.c.bf16 %v1413, %v1412
      %v1530 = vpack.c.bf16 %v1415, %v1414
      %v1531 = vpack.c.bf16 %v1417, %v1416
      %v1532 = vpack.c.bf16 %v1419, %v1418
      %v1533 = vpack.c.bf16 %v1421, %v1420
      %v1534 = vpack.c.bf16 %v1423, %v1422
      %v1535 = vpack.c.bf16 %v1425, %v1424
      %v1536 = vpack.c.bf16 %v1427, %v1426
      %v1537 = vpack.c.bf16 %v1429, %v1428
      %v1538 = vpack.c.bf16 %v1431, %v1430
      %v1539 = vpack.c.bf16 %v1433, %v1432
      %v1540 = vpack.c.bf16 %v1435, %v1434
      %v1541 = vpack.c.bf16 %v1437, %v1436
      %v1542 = vpack.c.bf16 %v1439, %v1438
      %v1543 = vpack.c.bf16 %v1441, %v1440
      %v1544 = vpack.c.bf16 %v1443, %v1442
      %v1545 = vpack.c.bf16 %v1445, %v1444
      %v1546 = vpack.c.bf16 %v1447, %v1446
      %v1547 = vpack.c.bf16 %v1449, %v1448
      %v1548 = vpack.c.bf16 %v1451, %v1450
      %v1549 = vpack.c.bf16 %v1453, %v1452
      %v1550 = vpack.c.bf16 %v1455, %v1454
      %v1551 = vpack.c.bf16 %v1457, %v1456
      %v1552 = vpack.c.bf16 %v1459, %v1458
      %v1553 = vpack.c.bf16 %v1461, %v1460
      %v1554 = vpack.c.bf16 %v1463, %v1462
      %v1555 = vpack.c.bf16 %v1465, %v1464
      %v1556 = vpack.c.bf16 %v1467, %v1466
      %v1557 = vpack.c.bf16 %v1469, %v1468
      %v1558 = vpack.c.bf16 %v1471, %v1470
      %v1559 = vpack.c.bf16 %v1473, %v1472
      %v1560 = vpack.c.bf16 %v1475, %v1474
      %v1561 = vpack.c.bf16 %v1477, %v1476
      %v1562 = vpack.c.bf16 %v1479, %v1478
      %v1563 = vpack.c.bf16 %v1481, %v1480
      %v1564 = vpack.c.bf16 %v1483, %v1482
      %v1565 = vpack.c.bf16 %v1485, %v1484
      %v1566 = vpack.c.bf16 %v1487, %v1486
      %v1567 = vpack.c.bf16 %v1489, %v1488
      %v1568 = vpack.c.bf16 %v1491, %v1490
      %v1569 = vpack.c.bf16 %v1493, %v1492
      %v1570 = vpack.c.bf16 %v1495, %v1494
      %v1571 = vpack.c.bf16 %v1497, %v1496
      %v1572 = vpack.c.bf16 %v1499, %v1498
      %v1573 = vpack.c.bf16 %v1501, %v1500
      %v1574 = vpack.c.bf16 %v1503, %v1502
      %v1575 = vpack.c.bf16 %v1505, %v1504
      %v1576 = vpack.c.bf16 %v1507, %v1506
      %v1577 = vpack.c.bf16 %v1509, %v1508
      %v1578 = vpack.c.bf16 %v1511, %v1510
      %v1579 = vpack.c.bf16 %v1513, %v1512
      %v1580 = vpack.c.bf16 %v1515, %v1514
      %v1581 = vpack.c.bf16 %v1517, %v1516
      %v1646 = vunpack.c.l.b16 %v1518
      %v1647 = vunpack.c.h.b16 %v1518
      %v1648 = vunpack.c.l.b16 %v1519
      %v1649 = vunpack.c.h.b16 %v1519
      %v1650 = vunpack.c.l.b16 %v1520
      %v1651 = vunpack.c.h.b16 %v1520
      %v1652 = vunpack.c.l.b16 %v1521
      %v1653 = vunpack.c.h.b16 %v1521
      %v1654 = vunpack.c.l.b16 %v1522
      %v1655 = vunpack.c.h.b16 %v1522
      %v1656 = vunpack.c.l.b16 %v1523
      %v1657 = vunpack.c.h.b16 %v1523
      %v1658 = vunpack.c.l.b16 %v1524
      %v1659 = vunpack.c.h.b16 %v1524
      %v1660 = vunpack.c.l.b16 %v1525
      %v1661 = vunpack.c.h.b16 %v1525
      %v1662 = vunpack.c.l.b16 %v1526
      %v1663 = vunpack.c.h.b16 %v1526
      %v1664 = vunpack.c.l.b16 %v1527
      %v1665 = vunpack.c.h.b16 %v1527
      %v1666 = vunpack.c.l.b16 %v1528
      %v1667 = vunpack.c.h.b16 %v1528
      %v1668 = vunpack.c.l.b16 %v1529
      %v1669 = vunpack.c.h.b16 %v1529
      %v1670 = vunpack.c.l.b16 %v1530
      %v1671 = vunpack.c.h.b16 %v1530
      %v1672 = vunpack.c.l.b16 %v1531
      %v1673 = vunpack.c.h.b16 %v1531
      %v1674 = vunpack.c.l.b16 %v1532
      %v1675 = vunpack.c.h.b16 %v1532
      %v1676 = vunpack.c.l.b16 %v1533
      %v1677 = vunpack.c.h.b16 %v1533
      %v1678 = vunpack.c.l.b16 %v1534
      %v1679 = vunpack.c.h.b16 %v1534
      %v1680 = vunpack.c.l.b16 %v1535
      %v1681 = vunpack.c.h.b16 %v1535
      %v1682 = vunpack.c.l.b16 %v1536
      %v1683 = vunpack.c.h.b16 %v1536
      %v1684 = vunpack.c.l.b16 %v1537
      %v1685 = vunpack.c.h.b16 %v1537
      %v1686 = vunpack.c.l.b16 %v1538
      %v1687 = vunpack.c.h.b16 %v1538
      %v1688 = vunpack.c.l.b16 %v1539
      %v1689 = vunpack.c.h.b16 %v1539
      %v1690 = vunpack.c.l.b16 %v1540
      %v1691 = vunpack.c.h.b16 %v1540
      %v1692 = vunpack.c.l.b16 %v1541
      %v1693 = vunpack.c.h.b16 %v1541
      %v1694 = vunpack.c.l.b16 %v1542
      %v1695 = vunpack.c.h.b16 %v1542
      %v1696 = vunpack.c.l.b16 %v1543
      %v1697 = vunpack.c.h.b16 %v1543
      %v1698 = vunpack.c.l.b16 %v1544
      %v1699 = vunpack.c.h.b16 %v1544
      %v1700 = vunpack.c.l.b16 %v1545
      %v1701 = vunpack.c.h.b16 %v1545
      %v1702 = vunpack.c.l.b16 %v1546
      %v1703 = vunpack.c.h.b16 %v1546
      %v1704 = vunpack.c.l.b16 %v1547
      %v1705 = vunpack.c.h.b16 %v1547
      %v1706 = vunpack.c.l.b16 %v1548
      %v1707 = vunpack.c.h.b16 %v1548
      %v1708 = vunpack.c.l.b16 %v1549
      %v1709 = vunpack.c.h.b16 %v1549
      %v1710 = vunpack.c.l.b16 %v1550
      %v1711 = vunpack.c.h.b16 %v1550
      %v1712 = vunpack.c.l.b16 %v1551
      %v1713 = vunpack.c.h.b16 %v1551
      %v1714 = vunpack.c.l.b16 %v1552
      %v1715 = vunpack.c.h.b16 %v1552
      %v1716 = vunpack.c.l.b16 %v1553
      %v1717 = vunpack.c.h.b16 %v1553
      %v1718 = vunpack.c.l.b16 %v1554
      %v1719 = vunpack.c.h.b16 %v1554
      %v1720 = vunpack.c.l.b16 %v1555
      %v1721 = vunpack.c.h.b16 %v1555
      %v1722 = vunpack.c.l.b16 %v1556
      %v1723 = vunpack.c.h.b16 %v1556
      %v1724 = vunpack.c.l.b16 %v1557
      %v1725 = vunpack.c.h.b16 %v1557
      %v1726 = vunpack.c.l.b16 %v1558
      %v1727 = vunpack.c.h.b16 %v1558
      %v1728 = vunpack.c.l.b16 %v1559
      %v1729 = vunpack.c.h.b16 %v1559
      %v1730 = vunpack.c.l.b16 %v1560
      %v1731 = vunpack.c.h.b16 %v1560
      %v1732 = vunpack.c.l.b16 %v1561
      %v1733 = vunpack.c.h.b16 %v1561
      %v1734 = vunpack.c.l.b16 %v1562
      %v1735 = vunpack.c.h.b16 %v1562
      %v1736 = vunpack.c.l.b16 %v1563
      %v1737 = vunpack.c.h.b16 %v1563
      %v1738 = vunpack.c.l.b16 %v1564
      %v1739 = vunpack.c.h.b16 %v1564
      %v1740 = vunpack.c.l.b16 %v1565
      %v1741 = vunpack.c.h.b16 %v1565
      %v1742 = vunpack.c.l.b16 %v1566
      %v1743 = vunpack.c.h.b16 %v1566
      %v1744 = vunpack.c.l.b16 %v1567
      %v1745 = vunpack.c.h.b16 %v1567
      %v1746 = vunpack.c.l.b16 %v1568
      %v1747 = vunpack.c.h.b16 %v1568
      %v1748 = vunpack.c.l.b16 %v1569
      %v1749 = vunpack.c.h.b16 %v1569
      %v1750 = vunpack.c.l.b16 %v1570
      %v1751 = vunpack.c.h.b16 %v1570
      %v1752 = vunpack.c.l.b16 %v1571
      %v1753 = vunpack.c.h.b16 %v1571
      %v1754 = vunpack.c.l.b16 %v1572
      %v1755 = vunpack.c.h.b16 %v1572
      %v1756 = vunpack.c.l.b16 %v1573
      %v1757 = vunpack.c.h.b16 %v1573
      %v1758 = vunpack.c.l.b16 %v1574
      %v1759 = vunpack.c.h.b16 %v1574
      %v1760 = vunpack.c.l.b16 %v1575
      %v1761 = vunpack.c.h.b16 %v1575
      %v1762 = vunpack.c.l.b16 %v1576
      %v1763 = vunpack.c.h.b16 %v1576
      %v1764 = vunpack.c.l.b16 %v1577
      %v1765 = vunpack.c.h.b16 %v1577
      %v1766 = vunpack.c.l.b16 %v1578
      %v1767 = vunpack.c.h.b16 %v1578
      %v1768 = vunpack.c.l.b16 %v1579
      %v1769 = vunpack.c.h.b16 %v1579
      %v1770 = vunpack.c.l.b16 %v1580
      %v1771 = vunpack.c.h.b16 %v1580
      %v1772 = vunpack.c.l.b16 %v1581
      %v1773 = vunpack.c.h.b16 %v1581
      %v1774 = vpack.c.b16 %v1646, %v1646
      %v1775 = vpack.c.b16 %v1647, %v1647
      %v1776 = vpack.c.b16 %v1648, %v1648
      %v1777 = vpack.c.b16 %v1649, %v1649
      %v1778 = vpack.c.b16 %v1650, %v1650
      %v1779 = vpack.c.b16 %v1651, %v1651
      %v1780 = vpack.c.b16 %v1652, %v1652
      %v1781 = vpack.c.b16 %v1653, %v1653
      %v1782 = vpack.c.b16 %v1654, %v1654
      %v1783 = vpack.c.b16 %v1655, %v1655
      %v1784 = vpack.c.b16 %v1656, %v1656
      %v1785 = vpack.c.b16 %v1657, %v1657
      %v1786 = vpack.c.b16 %v1658, %v1658
      %v1787 = vpack.c.b16 %v1659, %v1659
      %v1788 = vpack.c.b16 %v1660, %v1660
      %v1789 = vpack.c.b16 %v1661, %v1661
      %v1790 = vpack.c.b16 %v1662, %v1662
      %v1791 = vpack.c.b16 %v1663, %v1663
      %v1792 = vpack.c.b16 %v1664, %v1664
      %v1793 = vpack.c.b16 %v1665, %v1665
      %v1794 = vpack.c.b16 %v1666, %v1666
      %v1795 = vpack.c.b16 %v1667, %v1667
      %v1796 = vpack.c.b16 %v1668, %v1668
      %v1797 = vpack.c.b16 %v1669, %v1669
      %v1798 = vpack.c.b16 %v1670, %v1670
      %v1799 = vpack.c.b16 %v1671, %v1671
      %v1800 = vpack.c.b16 %v1672, %v1672
      %v1801 = vpack.c.b16 %v1673, %v1673
      %v1802 = vpack.c.b16 %v1674, %v1674
      %v1803 = vpack.c.b16 %v1675, %v1675
      %v1804 = vpack.c.b16 %v1676, %v1676
      %v1805 = vpack.c.b16 %v1677, %v1677
      %v1806 = vpack.c.b16 %v1678, %v1678
      %v1807 = vpack.c.b16 %v1679, %v1679
      %v1808 = vpack.c.b16 %v1680, %v1680
      %v1809 = vpack.c.b16 %v1681, %v1681
      %v1810 = vpack.c.b16 %v1682, %v1682
      %v1811 = vpack.c.b16 %v1683, %v1683
      %v1812 = vpack.c.b16 %v1684, %v1684
      %v1813 = vpack.c.b16 %v1685, %v1685
      %v1814 = vpack.c.b16 %v1686, %v1686
      %v1815 = vpack.c.b16 %v1687, %v1687
      %v1816 = vpack.c.b16 %v1688, %v1688
      %v1817 = vpack.c.b16 %v1689, %v1689
      %v1818 = vpack.c.b16 %v1690, %v1690
      %v1819 = vpack.c.b16 %v1691, %v1691
      %v1820 = vpack.c.b16 %v1692, %v1692
      %v1821 = vpack.c.b16 %v1693, %v1693
      %v1822 = vpack.c.b16 %v1694, %v1694
      %v1823 = vpack.c.b16 %v1695, %v1695
      %v1824 = vpack.c.b16 %v1696, %v1696
      %v1825 = vpack.c.b16 %v1697, %v1697
      %v1826 = vpack.c.b16 %v1698, %v1698
      %v1827 = vpack.c.b16 %v1699, %v1699
      %v1828 = vpack.c.b16 %v1700, %v1700
      %v1829 = vpack.c.b16 %v1701, %v1701
      %v1830 = vpack.c.b16 %v1702, %v1702
      %v1831 = vpack.c.b16 %v1703, %v1703
      %v1832 = vpack.c.b16 %v1704, %v1704
      %v1833 = vpack.c.b16 %v1705, %v1705
      %v1834 = vpack.c.b16 %v1706, %v1706
      %v1835 = vpack.c.b16 %v1707, %v1707
      %v1836 = vpack.c.b16 %v1708, %v1708
      %v1837 = vpack.c.b16 %v1709, %v1709
      %v1838 = vpack.c.b16 %v1710, %v1710
      %v1839 = vpack.c.b16 %v1711, %v1711
      %v1840 = vpack.c.b16 %v1712, %v1712
      %v1841 = vpack.c.b16 %v1713, %v1713
      %v1842 = vpack.c.b16 %v1714, %v1714
      %v1843 = vpack.c.b16 %v1715, %v1715
      %v1844 = vpack.c.b16 %v1716, %v1716
      %v1845 = vpack.c.b16 %v1717, %v1717
      %v1846 = vpack.c.b16 %v1718, %v1718
      %v1847 = vpack.c.b16 %v1719, %v1719
      %v1848 = vpack.c.b16 %v1720, %v1720
      %v1849 = vpack.c.b16 %v1721, %v1721
      %v1850 = vpack.c.b16 %v1722, %v1722
      %v1851 = vpack.c.b16 %v1723, %v1723
      %v1852 = vpack.c.b16 %v1724, %v1724
      %v1853 = vpack.c.b16 %v1725, %v1725
      %v1854 = vpack.c.b16 %v1726, %v1726
      %v1855 = vpack.c.b16 %v1727, %v1727
      %v1856 = vpack.c.b16 %v1728, %v1728
      %v1857 = vpack.c.b16 %v1729, %v1729
      %v1858 = vpack.c.b16 %v1730, %v1730
      %v1859 = vpack.c.b16 %v1731, %v1731
      %v1860 = vpack.c.b16 %v1732, %v1732
      %v1861 = vpack.c.b16 %v1733, %v1733
      %v1862 = vpack.c.b16 %v1734, %v1734
      %v1863 = vpack.c.b16 %v1735, %v1735
      %v1864 = vpack.c.b16 %v1736, %v1736
      %v1865 = vpack.c.b16 %v1737, %v1737
      %v1866 = vpack.c.b16 %v1738, %v1738
      %v1867 = vpack.c.b16 %v1739, %v1739
      %v1868 = vpack.c.b16 %v1740, %v1740
      %v1869 = vpack.c.b16 %v1741, %v1741
      %v1870 = vpack.c.b16 %v1742, %v1742
      %v1871 = vpack.c.b16 %v1743, %v1743
      %v1872 = vpack.c.b16 %v1744, %v1744
      %v1873 = vpack.c.b16 %v1745, %v1745
      %v1874 = vpack.c.b16 %v1746, %v1746
      %v1875 = vpack.c.b16 %v1747, %v1747
      %v1876 = vpack.c.b16 %v1748, %v1748
      %v1877 = vpack.c.b16 %v1749, %v1749
      %v1878 = vpack.c.b16 %v1750, %v1750
      %v1879 = vpack.c.b16 %v1751, %v1751
      %v1880 = vpack.c.b16 %v1752, %v1752
      %v1881 = vpack.c.b16 %v1753, %v1753
      %v1882 = vpack.c.b16 %v1754, %v1754
      %v1883 = vpack.c.b16 %v1755, %v1755
      %v1884 = vpack.c.b16 %v1756, %v1756
      %v1885 = vpack.c.b16 %v1757, %v1757
      %v1886 = vpack.c.b16 %v1758, %v1758
      %v1887 = vpack.c.b16 %v1759, %v1759
      %v1888 = vpack.c.b16 %v1760, %v1760
      %v1889 = vpack.c.b16 %v1761, %v1761
      %v1890 = vpack.c.b16 %v1762, %v1762
      %v1891 = vpack.c.b16 %v1763, %v1763
      %v1892 = vpack.c.b16 %v1764, %v1764
      %v1893 = vpack.c.b16 %v1765, %v1765
      %v1894 = vpack.c.b16 %v1766, %v1766
      %v1895 = vpack.c.b16 %v1767, %v1767
      %v1896 = vpack.c.b16 %v1768, %v1768
      %v1897 = vpack.c.b16 %v1769, %v1769
      %v1898 = vpack.c.b16 %v1770, %v1770
      %v1899 = vpack.c.b16 %v1771, %v1771
      %v1900 = vpack.c.b16 %v1772, %v1772
      %v1901 = vpack.c.b16 %v1773, %v1773
      %vm2030 = vcmask 60416
      %2031 = vst.msk [vmem:[%s172] sm:$0xf] %vm2030, %v1774
      %2032 = vst.msk [vmem:[%s172 + $0x4] sm:$0xf] %vm2030, %v1775
      %2033 = vst.msk [vmem:[%s172 + $0x8] sm:$0xf] %vm2030, %v1776
      %2034 = vst.msk [vmem:[%s172 + $0xc] sm:$0xf] %vm2030, %v1777
      %2035 = vst.msk [vmem:[%s172 + $0x10] sm:$0xf] %vm2030, %v1778
      %2036 = vst.msk [vmem:[%s172 + $0x14] sm:$0xf] %vm2030, %v1779
      %2037 = vst.msk [vmem:[%s172 + $0x18] sm:$0xf] %vm2030, %v1780
      %2038 = vst.msk [vmem:[%s172 + $0x1c] sm:$0xf] %vm2030, %v1781
      %2039 = vst.msk [vmem:[%s172 + $0x20] sm:$0xf] %vm2030, %v1782
      %2040 = vst.msk [vmem:[%s172 + $0x24] sm:$0xf] %vm2030, %v1783
      %2041 = vst.msk [vmem:[%s172 + $0x28] sm:$0xf] %vm2030, %v1784
      %2042 = vst.msk [vmem:[%s172 + $0x2c] sm:$0xf] %vm2030, %v1785
      %2043 = vst.msk [vmem:[%s172 + $0x30] sm:$0xf] %vm2030, %v1786
      %2044 = vst.msk [vmem:[%s172 + $0x34] sm:$0xf] %vm2030, %v1787
      %2045 = vst.msk [vmem:[%s172 + $0x38] sm:$0xf] %vm2030, %v1788
      %2046 = vst.msk [vmem:[%s172 + $0x3c] sm:$0xf] %vm2030, %v1789
      %2047 = vst.msk [vmem:[%s172 + $0x40] sm:$0xf] %vm2030, %v1790
      %2048 = vst.msk [vmem:[%s172 + $0x44] sm:$0xf] %vm2030, %v1791
      %2049 = vst.msk [vmem:[%s172 + $0x48] sm:$0xf] %vm2030, %v1792
      %2050 = vst.msk [vmem:[%s172 + $0x4c] sm:$0xf] %vm2030, %v1793
      %2051 = vst.msk [vmem:[%s172 + $0x50] sm:$0xf] %vm2030, %v1794
      %2052 = vst.msk [vmem:[%s172 + $0x54] sm:$0xf] %vm2030, %v1795
      %2053 = vst.msk [vmem:[%s172 + $0x58] sm:$0xf] %vm2030, %v1796
      %2054 = vst.msk [vmem:[%s172 + $0x5c] sm:$0xf] %vm2030, %v1797
      %2055 = vst.msk [vmem:[%s172 + $0x60] sm:$0xf] %vm2030, %v1798
      %2056 = vst.msk [vmem:[%s172 + $0x64] sm:$0xf] %vm2030, %v1799
      %2057 = vst.msk [vmem:[%s172 + $0x68] sm:$0xf] %vm2030, %v1800
      %2058 = vst.msk [vmem:[%s172 + $0x6c] sm:$0xf] %vm2030, %v1801
      %2059 = vst.msk [vmem:[%s172 + $0x70] sm:$0xf] %vm2030, %v1802
      %2060 = vst.msk [vmem:[%s172 + $0x74] sm:$0xf] %vm2030, %v1803
      %2061 = vst.msk [vmem:[%s172 + $0x78] sm:$0xf] %vm2030, %v1804
      %2062 = vst.msk [vmem:[%s172 + $0x7c] sm:$0xf] %vm2030, %v1805
      %2063 = vst.msk [vmem:[%s172 + $0x80] sm:$0xf] %vm2030, %v1806
      %2064 = vst.msk [vmem:[%s172 + $0x84] sm:$0xf] %vm2030, %v1807
      %2065 = vst.msk [vmem:[%s172 + $0x88] sm:$0xf] %vm2030, %v1808
      %2066 = vst.msk [vmem:[%s172 + $0x8c] sm:$0xf] %vm2030, %v1809
      %2067 = vst.msk [vmem:[%s172 + $0x90] sm:$0xf] %vm2030, %v1810
      %2068 = vst.msk [vmem:[%s172 + $0x94] sm:$0xf] %vm2030, %v1811
      %2069 = vst.msk [vmem:[%s172 + $0x98] sm:$0xf] %vm2030, %v1812
      %2070 = vst.msk [vmem:[%s172 + $0x9c] sm:$0xf] %vm2030, %v1813
      %2071 = vst.msk [vmem:[%s172 + $0xa0] sm:$0xf] %vm2030, %v1814
      %2072 = vst.msk [vmem:[%s172 + $0xa4] sm:$0xf] %vm2030, %v1815
      %2073 = vst.msk [vmem:[%s172 + $0xa8] sm:$0xf] %vm2030, %v1816
      %2074 = vst.msk [vmem:[%s172 + $0xac] sm:$0xf] %vm2030, %v1817
      %2075 = vst.msk [vmem:[%s172 + $0xb0] sm:$0xf] %vm2030, %v1818
      %2076 = vst.msk [vmem:[%s172 + $0xb4] sm:$0xf] %vm2030, %v1819
      %2077 = vst.msk [vmem:[%s172 + $0xb8] sm:$0xf] %vm2030, %v1820
      %2078 = vst.msk [vmem:[%s172 + $0xbc] sm:$0xf] %vm2030, %v1821
      %2079 = vst.msk [vmem:[%s172 + $0xc0] sm:$0xf] %vm2030, %v1822
      %2080 = vst.msk [vmem:[%s172 + $0xc4] sm:$0xf] %vm2030, %v1823
      %2081 = vst.msk [vmem:[%s172 + $0xc8] sm:$0xf] %vm2030, %v1824
      %2082 = vst.msk [vmem:[%s172 + $0xcc] sm:$0xf] %vm2030, %v1825
      %2083 = vst.msk [vmem:[%s172 + $0xd0] sm:$0xf] %vm2030, %v1826
      %2084 = vst.msk [vmem:[%s172 + $0xd4] sm:$0xf] %vm2030, %v1827
      %2085 = vst.msk [vmem:[%s172 + $0xd8] sm:$0xf] %vm2030, %v1828
      %2086 = vst.msk [vmem:[%s172 + $0xdc] sm:$0xf] %vm2030, %v1829
      %2087 = vst.msk [vmem:[%s172 + $0xe0] sm:$0xf] %vm2030, %v1830
      %2088 = vst.msk [vmem:[%s172 + $0xe4] sm:$0xf] %vm2030, %v1831
      %2089 = vst.msk [vmem:[%s172 + $0xe8] sm:$0xf] %vm2030, %v1832
      %2090 = vst.msk [vmem:[%s172 + $0xec] sm:$0xf] %vm2030, %v1833
      %2091 = vst.msk [vmem:[%s172 + $0xf0] sm:$0xf] %vm2030, %v1834
      %2092 = vst.msk [vmem:[%s172 + $0xf4] sm:$0xf] %vm2030, %v1835
      %2093 = vst.msk [vmem:[%s172 + $0xf8] sm:$0xf] %vm2030, %v1836
      %2094 = vst.msk [vmem:[%s172 + $0xfc] sm:$0xf] %vm2030, %v1837
      %2095 = vst.msk [vmem:[%s172 + $0x100] sm:$0xf] %vm2030, %v1838
      %2096 = vst.msk [vmem:[%s172 + $0x104] sm:$0xf] %vm2030, %v1839
      %2097 = vst.msk [vmem:[%s172 + $0x108] sm:$0xf] %vm2030, %v1840
      %2098 = vst.msk [vmem:[%s172 + $0x10c] sm:$0xf] %vm2030, %v1841
      %2099 = vst.msk [vmem:[%s172 + $0x110] sm:$0xf] %vm2030, %v1842
      %2100 = vst.msk [vmem:[%s172 + $0x114] sm:$0xf] %vm2030, %v1843
      %2101 = vst.msk [vmem:[%s172 + $0x118] sm:$0xf] %vm2030, %v1844
      %2102 = vst.msk [vmem:[%s172 + $0x11c] sm:$0xf] %vm2030, %v1845
      %2103 = vst.msk [vmem:[%s172 + $0x120] sm:$0xf] %vm2030, %v1846
      %2104 = vst.msk [vmem:[%s172 + $0x124] sm:$0xf] %vm2030, %v1847
      %2105 = vst.msk [vmem:[%s172 + $0x128] sm:$0xf] %vm2030, %v1848
      %2106 = vst.msk [vmem:[%s172 + $0x12c] sm:$0xf] %vm2030, %v1849
      %2107 = vst.msk [vmem:[%s172 + $0x130] sm:$0xf] %vm2030, %v1850
      %2108 = vst.msk [vmem:[%s172 + $0x134] sm:$0xf] %vm2030, %v1851
      %2109 = vst.msk [vmem:[%s172 + $0x138] sm:$0xf] %vm2030, %v1852
      %2110 = vst.msk [vmem:[%s172 + $0x13c] sm:$0xf] %vm2030, %v1853
      %2111 = vst.msk [vmem:[%s172 + $0x140] sm:$0xf] %vm2030, %v1854
      %2112 = vst.msk [vmem:[%s172 + $0x144] sm:$0xf] %vm2030, %v1855
      %2113 = vst.msk [vmem:[%s172 + $0x148] sm:$0xf] %vm2030, %v1856
      %2114 = vst.msk [vmem:[%s172 + $0x14c] sm:$0xf] %vm2030, %v1857
      %2115 = vst.msk [vmem:[%s172 + $0x150] sm:$0xf] %vm2030, %v1858
      %2116 = vst.msk [vmem:[%s172 + $0x154] sm:$0xf] %vm2030, %v1859
      %2117 = vst.msk [vmem:[%s172 + $0x158] sm:$0xf] %vm2030, %v1860
      %2118 = vst.msk [vmem:[%s172 + $0x15c] sm:$0xf] %vm2030, %v1861
      %2119 = vst.msk [vmem:[%s172 + $0x160] sm:$0xf] %vm2030, %v1862
      %2120 = vst.msk [vmem:[%s172 + $0x164] sm:$0xf] %vm2030, %v1863
      %2121 = vst.msk [vmem:[%s172 + $0x168] sm:$0xf] %vm2030, %v1864
      %2122 = vst.msk [vmem:[%s172 + $0x16c] sm:$0xf] %vm2030, %v1865
      %2123 = vst.msk [vmem:[%s172 + $0x170] sm:$0xf] %vm2030, %v1866
      %2124 = vst.msk [vmem:[%s172 + $0x174] sm:$0xf] %vm2030, %v1867
      %2125 = vst.msk [vmem:[%s172 + $0x178] sm:$0xf] %vm2030, %v1868
      %2126 = vst.msk [vmem:[%s172 + $0x17c] sm:$0xf] %vm2030, %v1869
      %2127 = vst.msk [vmem:[%s172 + $0x180] sm:$0xf] %vm2030, %v1870
      %2128 = vst.msk [vmem:[%s172 + $0x184] sm:$0xf] %vm2030, %v1871
      %2129 = vst.msk [vmem:[%s172 + $0x188] sm:$0xf] %vm2030, %v1872
      %2130 = vst.msk [vmem:[%s172 + $0x18c] sm:$0xf] %vm2030, %v1873
      %2131 = vst.msk [vmem:[%s172 + $0x190] sm:$0xf] %vm2030, %v1874
      %2132 = vst.msk [vmem:[%s172 + $0x194] sm:$0xf] %vm2030, %v1875
      %2133 = vst.msk [vmem:[%s172 + $0x198] sm:$0xf] %vm2030, %v1876
      %2134 = vst.msk [vmem:[%s172 + $0x19c] sm:$0xf] %vm2030, %v1877
      %2135 = vst.msk [vmem:[%s172 + $0x1a0] sm:$0xf] %vm2030, %v1878
      %2136 = vst.msk [vmem:[%s172 + $0x1a4] sm:$0xf] %vm2030, %v1879
      %2137 = vst.msk [vmem:[%s172 + $0x1a8] sm:$0xf] %vm2030, %v1880
      %2138 = vst.msk [vmem:[%s172 + $0x1ac] sm:$0xf] %vm2030, %v1881
      %2139 = vst.msk [vmem:[%s172 + $0x1b0] sm:$0xf] %vm2030, %v1882
      %2140 = vst.msk [vmem:[%s172 + $0x1b4] sm:$0xf] %vm2030, %v1883
      %2141 = vst.msk [vmem:[%s172 + $0x1b8] sm:$0xf] %vm2030, %v1884
      %2142 = vst.msk [vmem:[%s172 + $0x1bc] sm:$0xf] %vm2030, %v1885
      %2143 = vst.msk [vmem:[%s172 + $0x1c0] sm:$0xf] %vm2030, %v1886
      %2144 = vst.msk [vmem:[%s172 + $0x1c4] sm:$0xf] %vm2030, %v1887
      %2145 = vst.msk [vmem:[%s172 + $0x1c8] sm:$0xf] %vm2030, %v1888
      %2146 = vst.msk [vmem:[%s172 + $0x1cc] sm:$0xf] %vm2030, %v1889
      %2147 = vst.msk [vmem:[%s172 + $0x1d0] sm:$0xf] %vm2030, %v1890
      %2148 = vst.msk [vmem:[%s172 + $0x1d4] sm:$0xf] %vm2030, %v1891
      %2149 = vst.msk [vmem:[%s172 + $0x1d8] sm:$0xf] %vm2030, %v1892
      %2150 = vst.msk [vmem:[%s172 + $0x1dc] sm:$0xf] %vm2030, %v1893
      %2151 = vst.msk [vmem:[%s172 + $0x1e0] sm:$0xf] %vm2030, %v1894
      %2152 = vst.msk [vmem:[%s172 + $0x1e4] sm:$0xf] %vm2030, %v1895
      %2153 = vst.msk [vmem:[%s172 + $0x1e8] sm:$0xf] %vm2030, %v1896
      %2154 = vst.msk [vmem:[%s172 + $0x1ec] sm:$0xf] %vm2030, %v1897
      %2155 = vst.msk [vmem:[%s172 + $0x1f0] sm:$0xf] %vm2030, %v1898
      %2156 = vst.msk [vmem:[%s172 + $0x1f4] sm:$0xf] %vm2030, %v1899
      %2157 = vst.msk [vmem:[%s172 + $0x1f8] sm:$0xf] %vm2030, %v1900
      %2158 = vst.msk [vmem:[%s172 + $0x1fc] sm:$0xf] %vm2030, %v1901
      %s2159 = smul.u32 128, %s14
      %p2160 = scmp.lt.s32.totalorder %s2159, 1023
      %s2161 = scalar_select %p2160, %s2159, 1023
      %s2162 = smul.addr %s2161, 4
      %s2163 = scalar_lea.vmem %s3, %s2162
      // Predicated region
      $region33: #{fused_matmul.1} parent=31 // pred_check
        %p2164 = pneg %p100
      $region34: #{fused_matmul.1} parent=31 // pred_check_branch
        %2166 = sbr.rel (%p2164) target = $region36
      $region35: #{fused_matmul.1} parent=31 // pred_region
        %s2167 = smul.u32 128, %s14
      $region36: #{fused_matmul.1} parent=31 // pred_fallthru
        _
    $region32: #{fused_matmul.1} parent=5 // pred_fallthru
      _
    %p2168 = scmp.le.s32.totalorder 2, %s9
    // Predicated region
    $region37: #{fused_matmul.1} parent=5 // pred_check
      %p2169 = pneg %p2168
    $region38: #{fused_matmul.1} parent=5 // pred_check_branch
      %2171 = sbr.rel (%p2169) target = $region40
    $region39: #{fused_matmul.1} parent=5 // pred_region
      %s2172 = ssub.s32 %s9, 2
      // Predicated region
      $region41: #{fused_matmul.1} parent=39 // pred_check
        %p2173 = pneg %p106
      $region42: #{fused_matmul.1} parent=39 // pred_check_branch
        %2175 = sbr.rel (%p2173) target = $region44
      $region43: #{fused_matmul.1} parent=39 // pred_region
        %s2176 = smul.u32 128, %s15
        %p2177 = scmp.lt.s32.totalorder %s2176, 1023
        %s2178 = scalar_select %p2177, %s2176, 1023
        %s2179 = smul.addr %s2178, 4
        %s2180 = scalar_lea.vmem %s3, %s2179
      $region44: #{fused_matmul.1} parent=39 // pred_fallthru
        _
    $region40: #{fused_matmul.1} parent=5 // pred_fallthru
      _
  $region6: #{fused_matmul.1} parent=0 // loop_footer
    %s13 = sadd.s32 1, %s9
  $region7: #{fused_matmul.1} parent=0 // loop_footer_branch
    %8 = sbr.rel target = $region3
  $region8: #{fused_matmul.1} parent=0 // loop_exit
    _

</llo_original>
